<compile_context>
chip_gen: v7x
topology: tpu7x:2x2x1
jax: 0.10.0
libtpu: 0.0.40
codegen_flags: <defaults>
</compile_context>

<pallas_src>
import numpy as np
import jax
import jax.numpy as jnp
from jax.experimental import pallas as pl
from jax.experimental.pallas import tpu as pltpu


HALO = 8            # zero-halo rows kept around every activation (8-aligned)
SEQ_LEN = 2048      # fixed by the PyTorch forward: input_seq.view(-1, 1, 2048)
CONV_ARCHS = ((1, 64), (1, 128), (1, 256), (1, 512))   # last stage must be 512
NUM_CLASSES = 10
POOL_OUT = 9        # AdaptiveAvgPool1d(9)
HIDDEN = 500        # classifier hidden width
HIDDEN_PAD = 512    # padded to a lane-friendly width (extra cols are exact 0s)


# ---------------------------------------------------------------------------
# Kernels
# ---------------------------------------------------------------------------

def _conv_relu(x_ref, w_ref, b_ref, L):
    """3-tap Conv1d(padding=1) + bias + ReLU on a halo'd (L+2*HALO, Cin) tile."""
    x_prev = x_ref[pl.ds(HALO - 1, L), :]    # x[l-1]  (row HALO-1 is zero)
    x_mid = x_ref[pl.ds(HALO, L), :]         # x[l]    (aligned)
    x_next = x_ref[pl.ds(HALO + 1, L), :]    # x[l+1]  (row L+HALO is zero)
    acc = jnp.dot(x_mid, w_ref[1], preferred_element_type=jnp.float32)
    acc = acc + jnp.dot(x_prev, w_ref[0], preferred_element_type=jnp.float32)
    acc = acc + jnp.dot(x_next, w_ref[2], preferred_element_type=jnp.float32)
    return jnp.maximum(acc + b_ref[...], 0.0)


def _store_halo(o_ref, data, L):
    """Write `data` (L rows) framed by 8 zero rows on each side (aligned)."""
    cout = o_ref.shape[1]
    zeros = jnp.zeros((HALO, cout), jnp.float32)
    o_ref[pl.ds(0, HALO), :] = zeros
    o_ref[pl.ds(L + HALO, HALO), :] = zeros
    o_ref[pl.ds(HALO, L), :] = data


def make_conv_kernel(L, pool, avg):
    """Conv1d(k=3,p=1)+ReLU, optionally fused with MaxPool1d(2,2) and (last
    stage) with the AdaptiveAvgPool1d(9) matmul."""
    Lh = L // 2

    if not pool:
        def kernel(x_ref, w_ref, b_ref, o_ref):
            _store_halo(o_ref, _conv_relu(x_ref, w_ref, b_ref, L), L)
        return kernel

    def _conv_relu_maxpool(x_ref, w_ref, b_ref, conv_ref):
        conv_ref[...] = _conv_relu(x_ref, w_ref, b_ref, L)
        # MaxPool1d(2,2): elementwise max of even/odd rows (stride-2 reads,
        # all in VMEM -- no unpooled activation ever reaches HBM).
        return jnp.maximum(conv_ref[pl.ds(0, Lh, stride=2), :],
                           conv_ref[pl.ds(1, Lh, stride=2), :])

    if avg:
        def kernel(x_ref, w_ref, b_ref, p_ref, o_ref, conv_ref):
            pooled = _conv_relu_maxpool(x_ref, w_ref, b_ref, conv_ref)
            # AdaptiveAvgPool1d(9) as a (9, Lh) pooling matrix matmul.
            o_ref[...] = jnp.dot(p_ref[...], pooled,
                                 preferred_element_type=jnp.float32)
        return kernel

    def kernel(x_ref, w_ref, b_ref, o_ref, conv_ref):
        _store_halo(o_ref, _conv_relu_maxpool(x_ref, w_ref, b_ref, conv_ref),
                    Lh)
    return kernel


def fc1_kernel(x_ref, w_ref, b_ref, o_ref, acc_ref):
    # grid = (Dout tiles [parallel], K tiles [arbitrary, innermost]).
    @pl.when(pl.program_id(1) == 0)
    def _():
        acc_ref[...] = jnp.zeros_like(acc_ref)

    acc_ref[...] += jnp.dot(x_ref[...], w_ref[...],
                            preferred_element_type=jnp.float32)

    @pl.when(pl.program_id(1) == pl.num_programs(1) - 1)
    def _():
        o_ref[...] = jnp.maximum(acc_ref[...] + b_ref[...], 0.0)


def fc2_kernel(x_ref, w_ref, b_ref, o_ref):
    o_ref[...] = jnp.dot(x_ref[...], w_ref[...],
                         preferred_element_type=jnp.float32) + b_ref[...]


# ---------------------------------------------------------------------------
# Wrappers (pallas_call glue)
# ---------------------------------------------------------------------------

def adaptive_pool_matrix(L, out_size):
    """PyTorch AdaptiveAvgPool1d windowing as an (out_size, L) matrix."""
    P = np.zeros((out_size, L), dtype=np.float32)
    for i in range(out_size):
        start = (i * L) // out_size
        end = -((-(i + 1) * L) // out_size)      # ceil((i+1)*L/out_size)
        P[i, start:end] = 1.0 / (end - start)
    return jnp.asarray(P)


def conv_stage(x_h, w, b, *, pool, avg):
    """x_h: (B, L+2*HALO, Cin) halo'd activation, w: (3, Cin, Cout), b: (Cout,).
    Returns a halo'd (B, L(/2)+2*HALO, Cout) activation, or (B, 9, Cout) when
    avg=True (final stage: maxpool + adaptive avgpool fused in)."""
    B, Lp, Cin = x_h.shape
    L = Lp - 2 * HALO
    Cout = w.shape[-1]
    Lh = L // 2

    in_specs = [
        pl.BlockSpec((None, Lp, Cin), lambda i: (i, 0, 0)),
        pl.BlockSpec((3, Cin, Cout), lambda i: (0, 0, 0)),
        pl.BlockSpec((1, Cout), lambda i: (0, 0)),
    ]
    args = [x_h, w, b.reshape(1, Cout)]
    scratch_shapes = []

    if pool:
        scratch_shapes = [pltpu.VMEM((L, Cout), jnp.float32)]
        if avg:
            P = adaptive_pool_matrix(Lh, POOL_OUT)
            in_specs.append(pl.BlockSpec((POOL_OUT, Lh), lambda i: (0, 0)))
            args.append(P)
            out_len = POOL_OUT
        else:
            out_len = Lh + 2 * HALO
    else:
        out_len = L + 2 * HALO

    return pl.pallas_call(
        make_conv_kernel(L, pool, avg),
        out_shape=jax.ShapeDtypeStruct((B, out_len, Cout), jnp.float32),
        grid=(B,),
        in_specs=in_specs,
        out_specs=pl.BlockSpec((None, out_len, Cout), lambda i: (i, 0, 0)),
        scratch_shapes=scratch_shapes,
        compiler_params=pltpu.CompilerParams(
            dimension_semantics=("parallel",)),
    )(*args)


def fc1_relu(x, w, b, *, tn=256, tk=512):
    """relu(x @ w + b) with the (K, N) weight streamed in (tk, tn) tiles."""
    B, K = x.shape
    N = w.shape[1]
    assert K % tk == 0 and N % tn == 0
    return pl.pallas_call(
        fc1_kernel,
        out_shape=jax.ShapeDtypeStruct((B, N), jnp.float32),
        grid=(N // tn, K // tk),
        in_specs=[
            pl.BlockSpec((B, tk), lambda n, k: (0, k)),
            pl.BlockSpec((tk, tn), lambda n, k: (k, n)),
            pl.BlockSpec((1, tn), lambda n, k: (0, n)),
        ],
        out_specs=pl.BlockSpec((B, tn), lambda n, k: (0, n)),
        scratch_shapes=[pltpu.VMEM((B, tn), jnp.float32)],
        compiler_params=pltpu.CompilerParams(
            dimension_semantics=("parallel", "arbitrary")),
    )(x, w, b.reshape(1, N))


def fc2(x, w, b):
    """Plain linear: x (B, D) @ w (D, N) + b.  Tiny (20 KB weight)."""
    B, D = x.shape
    N = w.shape[1]
    return pl.pallas_call(
        fc2_kernel,
        out_shape=jax.ShapeDtypeStruct((B, N), jnp.float32),
        grid=(1,),
        in_specs=[
            pl.BlockSpec((B, D), lambda i: (0, 0)),
            pl.BlockSpec((D, N), lambda i: (0, 0)),
            pl.BlockSpec((1, N), lambda i: (0, 0)),
        ],
        out_specs=pl.BlockSpec((B, N), lambda i: (0, 0)),
    )(x, w, b.reshape(1, N))


# ---------------------------------------------------------------------------
# Model: parameters + forward
# ---------------------------------------------------------------------------

def init_params(key, conv_archs=CONV_ARCHS, num_classes=NUM_CLASSES,
                input_channels=1):
    n_keys = 2 * sum(n for n, _ in conv_archs) + 4
    keys = iter(jax.random.split(key, n_keys))
    stages = []
    cin = input_channels
    for num_convs, cout in conv_archs:
        stage = []
        for _ in range(num_convs):
            fan_in = cin * 3
            # stored as (3, Cin, Cout) == transpose of torch Conv1d (Cout,Cin,3)
            w = jax.random.normal(next(keys), (3, cin, cout),
                                  jnp.float32) / (fan_in ** 0.5)
            bb = jax.random.normal(next(keys), (cout,), jnp.float32) * 0.01
            stage.append((w, bb))
            cin = cout
        stages.append(stage)

    d_feat = conv_archs[-1][1] * POOL_OUT            # 512 * 9
    # FC1 weight stored as (d_feat, HIDDEN_PAD) with rows indexed j*C + c
    # (j = pooled position, c = channel): a fixed permutation of torch's
    # Linear(512*9, 500) weight^T whose rows are indexed c*9 + j.  This makes
    # PyTorch's channel-major flatten a free row-major reshape on (B, 9, 512).
    # Output columns [HIDDEN:HIDDEN_PAD) are zero (exact no-ops).
    w1 = jax.random.normal(next(keys), (d_feat, HIDDEN),
                           jnp.float32) / (d_feat ** 0.5)
    b1 = jax.random.normal(next(keys), (HIDDEN,), jnp.float32) * 0.01
    w1p = jnp.pad(w1, ((0, 0), (0, HIDDEN_PAD - HIDDEN)))
    b1p = jnp.pad(b1, ((0, HIDDEN_PAD - HIDDEN),))

    w2 = jax.random.normal(next(keys), (HIDDEN, num_classes),
                           jnp.float32) / (HIDDEN ** 0.5)
    b2 = jax.random.normal(next(keys), (num_classes,), jnp.float32) * 0.01
    w2p = jnp.pad(w2, ((0, HIDDEN_PAD - HIDDEN), (0, 0)))   # zero rows: no-op

    return {"stages": stages, "w1p": w1p, "b1p": b1p, "w2p": w2p, "b2": b2}


def cnn_forward(x, params):
    B = x.size // SEQ_LEN
    sig = x.reshape(B, SEQ_LEN).astype(jnp.float32)   # torch view(-1, 1, 2048)
    # 8-row zero halo around the tiny raw signal (replaces per-stage jnp.pad).
    h = jnp.pad(sig, ((0, 0), (HALO, HALO)))[:, :, None]      # (B, 2064, 1)
    # TODO(synk): stage-1 input block is (L+16, 1), i.e. lane-sparse; a fully
    # lane-dense formulation would need an in-kernel transpose and is skipped.

    stages = params["stages"]
    for si, stage in enumerate(stages):
        last_stage = si == len(stages) - 1
        for ci, (w, bb) in enumerate(stage):
            last_conv = ci == len(stage) - 1
            h = conv_stage(h, w, bb, pool=last_conv,
                           avg=last_conv and last_stage)

    # h: (B, 9, C_last); row-major flatten matches the row order of w1p.
    flat = h.reshape(B, -1)
    assert flat.shape[1] == params["w1p"].shape[0]
    hidden = fc1_relu(flat, params["w1p"], params["b1p"])     # (B, 512)
    # TODO(synk): Dropout(0.5) is eval-mode identity here (no RNG masking).
    return fc2(hidden, params["w2p"], params["b2"])           # (B, 10)


if __name__ == "__main__":
    root = jax.random.PRNGKey(0)
    pkey, xkey = jax.random.split(root)
    params = init_params(pkey)
    # batch=2 sequences of length 2048 (length fixed by the forward pass)
    x = jax.random.normal(xkey, (2, SEQ_LEN), dtype=jnp.float32)
    out = cnn_forward(x, params)
    out = jax.block_until_ready(out)
    assert out.shape == (2, NUM_CLASSES), out.shape
    assert bool(jnp.all(jnp.isfinite(out)))
    print("KERNEL_OK")
</pallas_src>

<mosaic_0001>
module attributes {stable_mosaic.version = 11 : i64} {
  func.func @kernel(%arg0: i32, %arg1: memref<1x2064x1xf32, #tpu.memory_space<vmem>>, %arg2: memref<3x1x64xf32, #tpu.memory_space<vmem>>, %arg3: memref<1x64xf32, #tpu.memory_space<vmem>>, %arg4: memref<1x1040x64xf32, #tpu.memory_space<vmem>>, %arg5: memref<2048x64xf32, #tpu.memory_space<vmem>>) attributes {dimension_semantics = [#tpu.dimension_semantics<parallel>], iteration_bounds = array<i64: 2>, scalar_prefetch = 0 : i64, scratch_operands = 1 : i64, tpu.core_type = #tpu.core_type<tc>, window_params = [{transform_indices = @transform_0, window_bounds = array<i64: 1, 2064, 1>}, {pipeline_mode = #tpu.pipeline_mode<synchronous>, transform_indices = @transform_1, window_bounds = array<i64: 3, 1, 64>}, {pipeline_mode = #tpu.pipeline_mode<synchronous>, transform_indices = @transform_2, window_bounds = array<i64: 1, 64>}, {transform_indices = @transform_3, window_bounds = array<i64: 1, 1040, 64>}]} {
    %c0 = arith.constant 0 : index
    %c7 = arith.constant 7 : index
    %c0_0 = arith.constant 0 : index
    %0 = vector.load %arg1[%c0, %c7, %c0_0] : memref<1x2064x1xf32, #tpu.memory_space<vmem>>, vector<1x2048x1xf32>
    %1 = vector.shape_cast %0 : vector<1x2048x1xf32> to vector<2048x1xf32>
    %c0_1 = arith.constant 0 : index
    %c8 = arith.constant 8 : index
    %c0_2 = arith.constant 0 : index
    %2 = vector.load %arg1[%c0_1, %c8, %c0_2] : memref<1x2064x1xf32, #tpu.memory_space<vmem>>, vector<1x2048x1xf32>
    %3 = vector.shape_cast %2 : vector<1x2048x1xf32> to vector<2048x1xf32>
    %c0_3 = arith.constant 0 : index
    %c9 = arith.constant 9 : index
    %c0_4 = arith.constant 0 : index
    %4 = vector.load %arg1[%c0_3, %c9, %c0_4] : memref<1x2064x1xf32, #tpu.memory_space<vmem>>, vector<1x2048x1xf32>
    %5 = vector.shape_cast %4 : vector<1x2048x1xf32> to vector<2048x1xf32>
    %c1 = arith.constant 1 : index
    %c0_5 = arith.constant 0 : index
    %c0_6 = arith.constant 0 : index
    %6 = vector.load %arg2[%c1, %c0_5, %c0_6] : memref<3x1x64xf32, #tpu.memory_space<vmem>>, vector<1x1x64xf32>
    %7 = vector.shape_cast %6 : vector<1x1x64xf32> to vector<1x64xf32>
    %cst = arith.constant dense<0.000000e+00> : vector<2048x64xf32>
    %8 = tpu.matmul %3, %7, %cst {dimension_numbers = #tpu.dot_dimension_numbers<[1], [0], [0], [1], [0, 0, 1, 1], [], []>} : vector<2048x1xf32>, vector<1x64xf32>, vector<2048x64xf32> -> vector<2048x64xf32>
    %c0_7 = arith.constant 0 : index
    %c0_8 = arith.constant 0 : index
    %c0_9 = arith.constant 0 : index
    %9 = vector.load %arg2[%c0_7, %c0_8, %c0_9] : memref<3x1x64xf32, #tpu.memory_space<vmem>>, vector<1x1x64xf32>
    %10 = vector.shape_cast %9 : vector<1x1x64xf32> to vector<1x64xf32>
    %cst_10 = arith.constant dense<0.000000e+00> : vector<2048x64xf32>
    %11 = tpu.matmul %1, %10, %cst_10 {dimension_numbers = #tpu.dot_dimension_numbers<[1], [0], [0], [1], [0, 0, 1, 1], [], []>} : vector<2048x1xf32>, vector<1x64xf32>, vector<2048x64xf32> -> vector<2048x64xf32>
    %12 = arith.addf %8, %11 : vector<2048x64xf32>
    %c2 = arith.constant 2 : index
    %c0_11 = arith.constant 0 : index
    %c0_12 = arith.constant 0 : index
    %13 = vector.load %arg2[%c2, %c0_11, %c0_12] : memref<3x1x64xf32, #tpu.memory_space<vmem>>, vector<1x1x64xf32>
    %14 = vector.shape_cast %13 : vector<1x1x64xf32> to vector<1x64xf32>
    %cst_13 = arith.constant dense<0.000000e+00> : vector<2048x64xf32>
    %15 = tpu.matmul %5, %14, %cst_13 {dimension_numbers = #tpu.dot_dimension_numbers<[1], [0], [0], [1], [0, 0, 1, 1], [], []>} : vector<2048x1xf32>, vector<1x64xf32>, vector<2048x64xf32> -> vector<2048x64xf32>
    %16 = arith.addf %12, %15 : vector<2048x64xf32>
    %c0_14 = arith.constant 0 : index
    %c0_15 = arith.constant 0 : index
    %17 = vector.load %arg3[%c0_14, %c0_15] : memref<1x64xf32, #tpu.memory_space<vmem>>, vector<1x64xf32>
    %18 = vector.broadcast %17 : vector<1x64xf32> to vector<2048x64xf32>
    %19 = arith.addf %16, %18 : vector<2048x64xf32>
    %cst_16 = arith.constant 0.000000e+00 : f32
    %20 = vector.broadcast %cst_16 : f32 to vector<2048x64xf32>
    %21 = arith.maximumf %19, %20 : vector<2048x64xf32>
    %c0_17 = arith.constant 0 : index
    %c0_18 = arith.constant 0 : index
    %22 = vector.load %arg5[%c0_17, %c0_18] : memref<2048x64xf32, #tpu.memory_space<vmem>>, vector<2048x64xf32>
    tpu.vector_store %arg5[%c0_17, %c0_18], %21 {strides = array<i32>} : memref<2048x64xf32, #tpu.memory_space<vmem>>, vector<2048x64xf32>,
    %c0_19 = arith.constant 0 : index
    %c0_20 = arith.constant 0 : index
    %23 = tpu.strided_load %arg5[%c0_19, %c0_20] {strides = array<i32: 2, 1>} : memref<2048x64xf32, #tpu.memory_space<vmem>>, vector<1024x64xf32>
    %c1_21 = arith.constant 1 : index
    %c0_22 = arith.constant 0 : index
    %24 = tpu.strided_load %arg5[%c1_21, %c0_22] {strides = array<i32: 2, 1>} : memref<2048x64xf32, #tpu.memory_space<vmem>>, vector<1024x64xf32>
    %25 = arith.maximumf %23, %24 : vector<1024x64xf32>
    %cst_23 = arith.constant 0.000000e+00 : f32
    %26 = vector.broadcast %cst_23 : f32 to vector<8x64xf32>
    %c0_24 = arith.constant 0 : index
    %c0_25 = arith.constant 0 : index
    %c0_26 = arith.constant 0 : index
    %27 = vector.load %arg4[%c0_24, %c0_25, %c0_26] : memref<1x1040x64xf32, #tpu.memory_space<vmem>>, vector<1x8x64xf32>
    %28 = vector.shape_cast %27 : vector<1x8x64xf32> to vector<8x64xf32>
    %29 = vector.shape_cast %26 : vector<8x64xf32> to vector<1x8x64xf32>
    tpu.vector_store %arg4[%c0_24, %c0_25, %c0_26], %29 {strides = array<i32>} : memref<1x1040x64xf32, #tpu.memory_space<vmem>>, vector<1x8x64xf32>,
    %c0_27 = arith.constant 0 : index
    %c1032 = arith.constant 1032 : index
    %c0_28 = arith.constant 0 : index
    %30 = vector.load %arg4[%c0_27, %c1032, %c0_28] : memref<1x1040x64xf32, #tpu.memory_space<vmem>>, vector<1x8x64xf32>
    %31 = vector.shape_cast %30 : vector<1x8x64xf32> to vector<8x64xf32>
    %32 = vector.shape_cast %26 : vector<8x64xf32> to vector<1x8x64xf32>
    tpu.vector_store %arg4[%c0_27, %c1032, %c0_28], %32 {strides = array<i32>} : memref<1x1040x64xf32, #tpu.memory_space<vmem>>, vector<1x8x64xf32>,
    %c0_29 = arith.constant 0 : index
    %c8_30 = arith.constant 8 : index
    %c0_31 = arith.constant 0 : index
    %33 = vector.load %arg4[%c0_29, %c8_30, %c0_31] : memref<1x1040x64xf32, #tpu.memory_space<vmem>>, vector<1x1024x64xf32>
    %34 = vector.shape_cast %33 : vector<1x1024x64xf32> to vector<1024x64xf32>
    %35 = vector.shape_cast %25 : vector<1024x64xf32> to vector<1x1024x64xf32>
    tpu.vector_store %arg4[%c0_29, %c8_30, %c0_31], %35 {strides = array<i32>} : memref<1x1040x64xf32, #tpu.memory_space<vmem>>, vector<1x1024x64xf32>,
    return
  }
  func.func @transform_0(%arg0: i32) -> (i32, i32, i32) {
    %c0_i32 = arith.constant 0 : i32
    %c0_i32_0 = arith.constant 0 : i32
    %c0_i32_1 = arith.constant 0 : i32
    return %arg0, %c0_i32, %c0_i32_0 : i32, i32, i32
  }
  func.func @transform_1(%arg0: i32) -> (i32, i32, i32) {
    %c0_i32 = arith.constant 0 : i32
    %c0_i32_0 = arith.constant 0 : i32
    %c0_i32_1 = arith.constant 0 : i32
    %c0_i32_2 = arith.constant 0 : i32
    return %c0_i32, %c0_i32_0, %c0_i32_1 : i32, i32, i32
  }
  func.func @transform_2(%arg0: i32) -> (i32, i32) {
    %c0_i32 = arith.constant 0 : i32
    %c0_i32_0 = arith.constant 0 : i32
    %c0_i32_1 = arith.constant 0 : i32
    return %c0_i32, %c0_i32_0 : i32, i32
  }
  func.func @transform_3(%arg0: i32) -> (i32, i32, i32) {
    %c0_i32 = arith.constant 0 : i32
    %c0_i32_0 = arith.constant 0 : i32
    %c0_i32_1 = arith.constant 0 : i32
    return %arg0, %c0_i32, %c0_i32_0 : i32, i32, i32
  }
}

</mosaic_0001>

<llo_original>
// kernel: tpu_custom_call.1
$region0: #{tpu_custom_call.1}
  #allocation0 [shape = 'u32[]', space=smem, size = 0x4, offset = 0x4, fixed_abs, tag = 'smem constant byte address 0x4 - core index']
  #allocation1 [shape = 'u32[144,128]{1,0:T(1,128)}', space=vmem, size = 0x12000, scoped, tag = 'internal scratch']
  #allocation2 [shape = 'f32[2048,64]{1,0:T(8,128)}', space=vmem, size = 0x100000, scoped, tag = 'scratch operand']
  %s0 = inlined_call_operand.vmem [shape: f32[2,2064,1], index: 0, kind: input, shape index: {}]
  %s1 = inlined_call_operand.vmem [shape: f32[3,1,64], index: 1, kind: input, shape index: {}]
  %s2 = inlined_call_operand.vmem [shape: f32[1,64], index: 2, kind: input, shape index: {}]
  %s3 = inlined_call_operand.vmem [shape: f32[2,1040,64], index: 3, kind: output, shape index: {}]
  %s4 = sld [smem:[#allocation0]]
  $region45: #{tpu_custom_call.1} parent=0
    _
  %s6 = ssub.s32 1, %s4
  %s7 = scalar_select 0, %s6, %s4
  loop: start=0, step=1, limit=4
  $region2: #{tpu_custom_call.1} parent=0 // loop_pre_header
    _
  $region3: #{tpu_custom_call.1} parent=0 // loop_header
    %s9 = sphi 0, %s13
    %p10 = scmp.ge.s32.totalorder %s9, 4
    %s19 = sphi 0, %s21
    %s22 = sphi 0, %s19
    %s23 = sphi 0, %s22
    %s39 = sphi 0, %s23
    %s43 = sphi 0, %s43
    %s45 = sphi 0, %s43
    %s46 = sphi 0, %s45
    %s60 = sphi 0, %s46
    %s64 = sphi 0, %s64
    %s66 = sphi 0, %s64
    %s67 = sphi 0, %s66
    %s81 = sphi 0, %s67
    %s87 = sphi 0, %s89
    %s90 = sphi 0, %s87
    %s91 = sphi 0, %s90
    %s107 = sphi 0, %s91
  $region4: #{tpu_custom_call.1} parent=0 // loop_header_branch
    %12 = sbr.rel (%p10) target = $region8
  $region5: #{tpu_custom_call.1} parent=0 // loop_body
    %s14 = ssub.s32 %s9, 1
    %s15 = ssub.s32 %s9, 2
    %s16 = sadd.s32 %s9, 1
    %s17 = ssub.s32 %s9, %s16
    %p18 = scmp.eq.s32.totalorder %s17, 0
    %s20 = sadd.s32 %s19, 1
    %s21 = scalar_select %p18, %s19, %s20
    %p24 = pneg %p18
    %p25 = scmp.eq.s32.totalorder %s9, 1
    %p26 = por %p24, %p25
    %p27 = scmp.ne.s32.totalorder %s19, %s22
    %p28 = scmp.eq.s32.totalorder %s9, 0
    %p29 = por %p27, %p28
    %p30 = scmp.ne.s32.totalorder %s19, %s22
    %p31 = scmp.eq.s32.totalorder %s14, 1
    %p32 = por %p30, %p31
    %p33 = scmp.ne.s32.totalorder %s22, %s23
    %p34 = scmp.eq.s32.totalorder %s14, 0
    %p35 = por %p33, %p34
    %p36 = scmp.ne.s32.totalorder %s22, %s23
    %p37 = scmp.eq.s32.totalorder %s15, 1
    %p38 = por %p36, %p37
    %p40 = scmp.ne.s32.totalorder %s23, %s39
    %p41 = scmp.eq.s32.totalorder %s15, 0
    %p42 = por %p40, %p41
    %s44 = sadd.s32 %s43, 1
    %p47 = scmp.eq.s32.totalorder %s9, 1
    %p48 = scmp.ne.s32.totalorder %s43, %s45
    %p49 = scmp.eq.s32.totalorder %s9, 0
    %p50 = por %p48, %p49
    %p51 = scmp.ne.s32.totalorder %s43, %s45
    %p52 = scmp.eq.s32.totalorder %s14, 1
    %p53 = por %p51, %p52
    %p54 = scmp.ne.s32.totalorder %s45, %s46
    %p55 = scmp.eq.s32.totalorder %s14, 0
    %p56 = por %p54, %p55
    %p57 = scmp.ne.s32.totalorder %s45, %s46
    %p58 = scmp.eq.s32.totalorder %s15, 1
    %p59 = por %p57, %p58
    %p61 = scmp.ne.s32.totalorder %s46, %s60
    %p62 = scmp.eq.s32.totalorder %s15, 0
    %p63 = por %p61, %p62
    %s65 = sadd.s32 %s64, 1
    %p68 = scmp.eq.s32.totalorder %s9, 1
    %p69 = scmp.ne.s32.totalorder %s64, %s66
    %p70 = scmp.eq.s32.totalorder %s9, 0
    %p71 = por %p69, %p70
    %p72 = scmp.ne.s32.totalorder %s64, %s66
    %p73 = scmp.eq.s32.totalorder %s14, 1
    %p74 = por %p72, %p73
    %p75 = scmp.ne.s32.totalorder %s66, %s67
    %p76 = scmp.eq.s32.totalorder %s14, 0
    %p77 = por %p75, %p76
    %p78 = scmp.ne.s32.totalorder %s66, %s67
    %p79 = scmp.eq.s32.totalorder %s15, 1
    %p80 = por %p78, %p79
    %p82 = scmp.ne.s32.totalorder %s67, %s81
    %p83 = scmp.eq.s32.totalorder %s15, 0
    %p84 = por %p82, %p83
    %s85 = ssub.s32 %s9, %s16
    %p86 = scmp.eq.s32.totalorder %s85, 0
    %s88 = sadd.s32 %s87, 1
    %s89 = scalar_select %p86, %s87, %s88
    %p92 = pneg %p86
    %p93 = scmp.eq.s32.totalorder %s9, 1
    %p94 = por %p92, %p93
    %p95 = scmp.ne.s32.totalorder %s87, %s90
    %p96 = scmp.eq.s32.totalorder %s9, 0
    %p97 = por %p95, %p96
    %p98 = scmp.ne.s32.totalorder %s87, %s90
    %p99 = scmp.eq.s32.totalorder %s14, 1
    %p100 = por %p98, %p99
    %p101 = scmp.ne.s32.totalorder %s90, %s91
    %p102 = scmp.eq.s32.totalorder %s14, 0
    %p103 = por %p101, %p102
    %p104 = scmp.ne.s32.totalorder %s90, %s91
    %p105 = scmp.eq.s32.totalorder %s15, 1
    %p106 = por %p104, %p105
    %p108 = scmp.ne.s32.totalorder %s91, %s107
    %p109 = scmp.eq.s32.totalorder %s15, 0
    %p110 = por %p108, %p109
    %p111 = scmp.le.s32.totalorder 1, %s9
    %p112 = scmp.lt.s32.totalorder %s9, 3
    %p113 = pnand %p111, %p112
    %p114 = pneg %p113
    // Predicated region
    $region9: #{tpu_custom_call.1} parent=5 // pred_check
      _
    $region10: #{tpu_custom_call.1} parent=5 // pred_check_branch
      %116 = sbr.rel (%p113) target = $region12
    $region11: #{tpu_custom_call.1} parent=5 // pred_region
      %s117 = ssub.s32 %s9, 1
      // Predicated region
      $region13: #{tpu_custom_call.1} parent=11 // pred_check
        %p118 = pneg %p56
      $region14: #{tpu_custom_call.1} parent=11 // pred_check_branch
        %120 = sbr.rel (%p118) target = $region16
      $region15: #{tpu_custom_call.1} parent=11 // pred_region
        _
      $region16: #{tpu_custom_call.1} parent=11 // pred_fallthru
        _
      // Predicated region
      $region17: #{tpu_custom_call.1} parent=11 // pred_check
        %p121 = pneg %p77
      $region18: #{tpu_custom_call.1} parent=11 // pred_check_branch
        %123 = sbr.rel (%p121) target = $region20
      $region19: #{tpu_custom_call.1} parent=11 // pred_region
        _
      $region20: #{tpu_custom_call.1} parent=11 // pred_fallthru
        _
    $region12: #{tpu_custom_call.1} parent=5 // pred_fallthru
      _
    %p124 = scmp.lt.s32.totalorder %s9, 2
    // Predicated region
    $region21: #{tpu_custom_call.1} parent=5 // pred_check
      %p125 = pneg %p124
    $region22: #{tpu_custom_call.1} parent=5 // pred_check_branch
      %127 = sbr.rel (%p125) target = $region24
    $region23: #{tpu_custom_call.1} parent=5 // pred_region
      // Predicated region
      $region25: #{tpu_custom_call.1} parent=23 // pred_check
        %p128 = pneg %p29
      $region26: #{tpu_custom_call.1} parent=23 // pred_check_branch
        %130 = sbr.rel (%p128) target = $region28
      $region27: #{tpu_custom_call.1} parent=23 // pred_region
        %p131 = scmp.lt.s32.totalorder %s9, 1
        %s132 = scalar_select %p131, %s9, 1
        %s133 = smul.addr %s132, 258
        %s134 = smul.addr %s133, 8
        %s135 = scalar_lea.vmem %s0, %s134
      $region28: #{tpu_custom_call.1} parent=23 // pred_fallthru
        _
    $region24: #{tpu_custom_call.1} parent=5 // pred_fallthru
      _
    %p136 = scmp.le.s32.totalorder 1, %s9
    %p137 = scmp.lt.s32.totalorder %s9, 3
    %p138 = pnand %p136, %p137
    %p139 = pneg %p138
    // Predicated region
    $region29: #{tpu_custom_call.1} parent=5 // pred_check
      _
    $region30: #{tpu_custom_call.1} parent=5 // pred_check_branch
      %141 = sbr.rel (%p138) target = $region32
    $region31: #{tpu_custom_call.1} parent=5 // pred_region
      %s142 = ssub.s32 %s9, 1
      %p143 = scmp.lt.s32.totalorder %s14, 1
      %s144 = scalar_select %p143, %s14, 1
      %s145 = smul.addr %s144, 258
      %s146 = smul.addr %s145, 8
      %s147 = scalar_lea.vmem %s0, %s146
      %p148 = pneg %p35
      %p149 = pneg %p32
      %p150 = pneg %p56
      %p151 = pneg %p53
      %p152 = pneg %p77
      %p153 = pneg %p74
      %p154 = pneg %p103
      %p155 = pneg %p100
      %p156 = scmp.lt.s32.totalorder %s14, 1
      %s157 = scalar_select %p156, %s14, 1
      %s158 = smul.addr %s157, 130
      %s159 = smul.addr %s158, 8
      %s160 = scalar_lea.vmem %s3, %s159
      %p161 = scmp.lt.s32.totalorder %s14, 1
      %s162 = scalar_select %p161, %s14, 1
      %s163 = smul.addr %s162, 258
      %s164 = smul.addr %s163, 8
      %s165 = scalar_lea.vmem %s0, %s164
      %p166 = scmp.lt.s32.totalorder %s14, 1
      %s167 = scalar_select %p166, %s14, 1
      %s168 = smul.addr %s167, 130
      %s169 = smul.addr %s168, 8
      %s170 = scalar_lea.vmem %s3, %s169
      %v171 = vld [vmem:[%s165 + $0x7] sm:$0xff]
      %v172 = vld [vmem:[%s165 + $0xf] sm:$0xff]
      %v173 = vld [vmem:[%s165 + $0x17] sm:$0xff]
      %v174 = vld [vmem:[%s165 + $0x1f] sm:$0xff]
      %v175 = vld [vmem:[%s165 + $0x27] sm:$0xff]
      %v176 = vld [vmem:[%s165 + $0x2f] sm:$0xff]
      %v177 = vld [vmem:[%s165 + $0x37] sm:$0xff]
      %v178 = vld [vmem:[%s165 + $0x3f] sm:$0xff]
      %v179 = vld [vmem:[%s165 + $0x47] sm:$0xff]
      %v180 = vld [vmem:[%s165 + $0x4f] sm:$0xff]
      %v181 = vld [vmem:[%s165 + $0x57] sm:$0xff]
      %v182 = vld [vmem:[%s165 + $0x5f] sm:$0xff]
      %v183 = vld [vmem:[%s165 + $0x67] sm:$0xff]
      %v184 = vld [vmem:[%s165 + $0x6f] sm:$0xff]
      %v185 = vld [vmem:[%s165 + $0x77] sm:$0xff]
      %v186 = vld [vmem:[%s165 + $0x7f] sm:$0xff]
      %v187 = vld [vmem:[%s165 + $0x87] sm:$0xff]
      %v188 = vld [vmem:[%s165 + $0x8f] sm:$0xff]
      %v189 = vld [vmem:[%s165 + $0x97] sm:$0xff]
      %v190 = vld [vmem:[%s165 + $0x9f] sm:$0xff]
      %v191 = vld [vmem:[%s165 + $0xa7] sm:$0xff]
      %v192 = vld [vmem:[%s165 + $0xaf] sm:$0xff]
      %v193 = vld [vmem:[%s165 + $0xb7] sm:$0xff]
      %v194 = vld [vmem:[%s165 + $0xbf] sm:$0xff]
      %v195 = vld [vmem:[%s165 + $0xc7] sm:$0xff]
      %v196 = vld [vmem:[%s165 + $0xcf] sm:$0xff]
      %v197 = vld [vmem:[%s165 + $0xd7] sm:$0xff]
      %v198 = vld [vmem:[%s165 + $0xdf] sm:$0xff]
      %v199 = vld [vmem:[%s165 + $0xe7] sm:$0xff]
      %v200 = vld [vmem:[%s165 + $0xef] sm:$0xff]
      %v201 = vld [vmem:[%s165 + $0xf7] sm:$0xff]
      %v202 = vld [vmem:[%s165 + $0xff] sm:$0xff]
      %v203 = vld [vmem:[%s165 + $0x107] sm:$0xff]
      %v204 = vld [vmem:[%s165 + $0x10f] sm:$0xff]
      %v205 = vld [vmem:[%s165 + $0x117] sm:$0xff]
      %v206 = vld [vmem:[%s165 + $0x11f] sm:$0xff]
      %v207 = vld [vmem:[%s165 + $0x127] sm:$0xff]
      %v208 = vld [vmem:[%s165 + $0x12f] sm:$0xff]
      %v209 = vld [vmem:[%s165 + $0x137] sm:$0xff]
      %v210 = vld [vmem:[%s165 + $0x13f] sm:$0xff]
      %v211 = vld [vmem:[%s165 + $0x147] sm:$0xff]
      %v212 = vld [vmem:[%s165 + $0x14f] sm:$0xff]
      %v213 = vld [vmem:[%s165 + $0x157] sm:$0xff]
      %v214 = vld [vmem:[%s165 + $0x15f] sm:$0xff]
      %v215 = vld [vmem:[%s165 + $0x167] sm:$0xff]
      %v216 = vld [vmem:[%s165 + $0x16f] sm:$0xff]
      %v217 = vld [vmem:[%s165 + $0x177] sm:$0xff]
      %v218 = vld [vmem:[%s165 + $0x17f] sm:$0xff]
      %v219 = vld [vmem:[%s165 + $0x187] sm:$0xff]
      %v220 = vld [vmem:[%s165 + $0x18f] sm:$0xff]
      %v221 = vld [vmem:[%s165 + $0x197] sm:$0xff]
      %v222 = vld [vmem:[%s165 + $0x19f] sm:$0xff]
      %v223 = vld [vmem:[%s165 + $0x1a7] sm:$0xff]
      %v224 = vld [vmem:[%s165 + $0x1af] sm:$0xff]
      %v225 = vld [vmem:[%s165 + $0x1b7] sm:$0xff]
      %v226 = vld [vmem:[%s165 + $0x1bf] sm:$0xff]
      %v227 = vld [vmem:[%s165 + $0x1c7] sm:$0xff]
      %v228 = vld [vmem:[%s165 + $0x1cf] sm:$0xff]
      %v229 = vld [vmem:[%s165 + $0x1d7] sm:$0xff]
      %v230 = vld [vmem:[%s165 + $0x1df] sm:$0xff]
      %v231 = vld [vmem:[%s165 + $0x1e7] sm:$0xff]
      %v232 = vld [vmem:[%s165 + $0x1ef] sm:$0xff]
      %v233 = vld [vmem:[%s165 + $0x1f7] sm:$0xff]
      %v234 = vld [vmem:[%s165 + $0x1ff] sm:$0xff]
      %v235 = vld [vmem:[%s165 + $0x207] sm:$0xff]
      %v236 = vld [vmem:[%s165 + $0x20f] sm:$0xff]
      %v237 = vld [vmem:[%s165 + $0x217] sm:$0xff]
      %v238 = vld [vmem:[%s165 + $0x21f] sm:$0xff]
      %v239 = vld [vmem:[%s165 + $0x227] sm:$0xff]
      %v240 = vld [vmem:[%s165 + $0x22f] sm:$0xff]
      %v241 = vld [vmem:[%s165 + $0x237] sm:$0xff]
      %v242 = vld [vmem:[%s165 + $0x23f] sm:$0xff]
      %v243 = vld [vmem:[%s165 + $0x247] sm:$0xff]
      %v244 = vld [vmem:[%s165 + $0x24f] sm:$0xff]
      %v245 = vld [vmem:[%s165 + $0x257] sm:$0xff]
      %v246 = vld [vmem:[%s165 + $0x25f] sm:$0xff]
      %v247 = vld [vmem:[%s165 + $0x267] sm:$0xff]
      %v248 = vld [vmem:[%s165 + $0x26f] sm:$0xff]
      %v249 = vld [vmem:[%s165 + $0x277] sm:$0xff]
      %v250 = vld [vmem:[%s165 + $0x27f] sm:$0xff]
      %v251 = vld [vmem:[%s165 + $0x287] sm:$0xff]
      %v252 = vld [vmem:[%s165 + $0x28f] sm:$0xff]
      %v253 = vld [vmem:[%s165 + $0x297] sm:$0xff]
      %v254 = vld [vmem:[%s165 + $0x29f] sm:$0xff]
      %v255 = vld [vmem:[%s165 + $0x2a7] sm:$0xff]
      %v256 = vld [vmem:[%s165 + $0x2af] sm:$0xff]
      %v257 = vld [vmem:[%s165 + $0x2b7] sm:$0xff]
      %v258 = vld [vmem:[%s165 + $0x2bf] sm:$0xff]
      %v259 = vld [vmem:[%s165 + $0x2c7] sm:$0xff]
      %v260 = vld [vmem:[%s165 + $0x2cf] sm:$0xff]
      %v261 = vld [vmem:[%s165 + $0x2d7] sm:$0xff]
      %v262 = vld [vmem:[%s165 + $0x2df] sm:$0xff]
      %v263 = vld [vmem:[%s165 + $0x2e7] sm:$0xff]
      %v264 = vld [vmem:[%s165 + $0x2ef] sm:$0xff]
      %v265 = vld [vmem:[%s165 + $0x2f7] sm:$0xff]
      %v266 = vld [vmem:[%s165 + $0x2ff] sm:$0xff]
      %v267 = vld [vmem:[%s165 + $0x307] sm:$0xff]
      %v268 = vld [vmem:[%s165 + $0x30f] sm:$0xff]
      %v269 = vld [vmem:[%s165 + $0x317] sm:$0xff]
      %v270 = vld [vmem:[%s165 + $0x31f] sm:$0xff]
      %v271 = vld [vmem:[%s165 + $0x327] sm:$0xff]
      %v272 = vld [vmem:[%s165 + $0x32f] sm:$0xff]
      %v273 = vld [vmem:[%s165 + $0x337] sm:$0xff]
      %v274 = vld [vmem:[%s165 + $0x33f] sm:$0xff]
      %v275 = vld [vmem:[%s165 + $0x347] sm:$0xff]
      %v276 = vld [vmem:[%s165 + $0x34f] sm:$0xff]
      %v277 = vld [vmem:[%s165 + $0x357] sm:$0xff]
      %v278 = vld [vmem:[%s165 + $0x35f] sm:$0xff]
      %v279 = vld [vmem:[%s165 + $0x367] sm:$0xff]
      %v280 = vld [vmem:[%s165 + $0x36f] sm:$0xff]
      %v281 = vld [vmem:[%s165 + $0x377] sm:$0xff]
      %v282 = vld [vmem:[%s165 + $0x37f] sm:$0xff]
      %v283 = vld [vmem:[%s165 + $0x387] sm:$0xff]
      %v284 = vld [vmem:[%s165 + $0x38f] sm:$0xff]
      %v285 = vld [vmem:[%s165 + $0x397] sm:$0xff]
      %v286 = vld [vmem:[%s165 + $0x39f] sm:$0xff]
      %v287 = vld [vmem:[%s165 + $0x3a7] sm:$0xff]
      %v288 = vld [vmem:[%s165 + $0x3af] sm:$0xff]
      %v289 = vld [vmem:[%s165 + $0x3b7] sm:$0xff]
      %v290 = vld [vmem:[%s165 + $0x3bf] sm:$0xff]
      %v291 = vld [vmem:[%s165 + $0x3c7] sm:$0xff]
      %v292 = vld [vmem:[%s165 + $0x3cf] sm:$0xff]
      %v293 = vld [vmem:[%s165 + $0x3d7] sm:$0xff]
      %v294 = vld [vmem:[%s165 + $0x3df] sm:$0xff]
      %v295 = vld [vmem:[%s165 + $0x3e7] sm:$0xff]
      %v296 = vld [vmem:[%s165 + $0x3ef] sm:$0xff]
      %v297 = vld [vmem:[%s165 + $0x3f7] sm:$0xff]
      %v298 = vld [vmem:[%s165 + $0x3ff] sm:$0xff]
      %v299 = vld [vmem:[%s165 + $0x407] sm:$0xff]
      %v300 = vld [vmem:[%s165 + $0x40f] sm:$0xff]
      %v301 = vld [vmem:[%s165 + $0x417] sm:$0xff]
      %v302 = vld [vmem:[%s165 + $0x41f] sm:$0xff]
      %v303 = vld [vmem:[%s165 + $0x427] sm:$0xff]
      %v304 = vld [vmem:[%s165 + $0x42f] sm:$0xff]
      %v305 = vld [vmem:[%s165 + $0x437] sm:$0xff]
      %v306 = vld [vmem:[%s165 + $0x43f] sm:$0xff]
      %v307 = vld [vmem:[%s165 + $0x447] sm:$0xff]
      %v308 = vld [vmem:[%s165 + $0x44f] sm:$0xff]
      %v309 = vld [vmem:[%s165 + $0x457] sm:$0xff]
      %v310 = vld [vmem:[%s165 + $0x45f] sm:$0xff]
      %v311 = vld [vmem:[%s165 + $0x467] sm:$0xff]
      %v312 = vld [vmem:[%s165 + $0x46f] sm:$0xff]
      %v313 = vld [vmem:[%s165 + $0x477] sm:$0xff]
      %v314 = vld [vmem:[%s165 + $0x47f] sm:$0xff]
      %v315 = vld [vmem:[%s165 + $0x487] sm:$0xff]
      %v316 = vld [vmem:[%s165 + $0x48f] sm:$0xff]
      %v317 = vld [vmem:[%s165 + $0x497] sm:$0xff]
      %v318 = vld [vmem:[%s165 + $0x49f] sm:$0xff]
      %v319 = vld [vmem:[%s165 + $0x4a7] sm:$0xff]
      %v320 = vld [vmem:[%s165 + $0x4af] sm:$0xff]
      %v321 = vld [vmem:[%s165 + $0x4b7] sm:$0xff]
      %v322 = vld [vmem:[%s165 + $0x4bf] sm:$0xff]
      %v323 = vld [vmem:[%s165 + $0x4c7] sm:$0xff]
      %v324 = vld [vmem:[%s165 + $0x4cf] sm:$0xff]
      %v325 = vld [vmem:[%s165 + $0x4d7] sm:$0xff]
      %v326 = vld [vmem:[%s165 + $0x4df] sm:$0xff]
      %v327 = vld [vmem:[%s165 + $0x4e7] sm:$0xff]
      %v328 = vld [vmem:[%s165 + $0x4ef] sm:$0xff]
      %v329 = vld [vmem:[%s165 + $0x4f7] sm:$0xff]
      %v330 = vld [vmem:[%s165 + $0x4ff] sm:$0xff]
      %v331 = vld [vmem:[%s165 + $0x507] sm:$0xff]
      %v332 = vld [vmem:[%s165 + $0x50f] sm:$0xff]
      %v333 = vld [vmem:[%s165 + $0x517] sm:$0xff]
      %v334 = vld [vmem:[%s165 + $0x51f] sm:$0xff]
      %v335 = vld [vmem:[%s165 + $0x527] sm:$0xff]
      %v336 = vld [vmem:[%s165 + $0x52f] sm:$0xff]
      %v337 = vld [vmem:[%s165 + $0x537] sm:$0xff]
      %v338 = vld [vmem:[%s165 + $0x53f] sm:$0xff]
      %v339 = vld [vmem:[%s165 + $0x547] sm:$0xff]
      %v340 = vld [vmem:[%s165 + $0x54f] sm:$0xff]
      %v341 = vld [vmem:[%s165 + $0x557] sm:$0xff]
      %v342 = vld [vmem:[%s165 + $0x55f] sm:$0xff]
      %v343 = vld [vmem:[%s165 + $0x567] sm:$0xff]
      %v344 = vld [vmem:[%s165 + $0x56f] sm:$0xff]
      %v345 = vld [vmem:[%s165 + $0x577] sm:$0xff]
      %v346 = vld [vmem:[%s165 + $0x57f] sm:$0xff]
      %v347 = vld [vmem:[%s165 + $0x587] sm:$0xff]
      %v348 = vld [vmem:[%s165 + $0x58f] sm:$0xff]
      %v349 = vld [vmem:[%s165 + $0x597] sm:$0xff]
      %v350 = vld [vmem:[%s165 + $0x59f] sm:$0xff]
      %v351 = vld [vmem:[%s165 + $0x5a7] sm:$0xff]
      %v352 = vld [vmem:[%s165 + $0x5af] sm:$0xff]
      %v353 = vld [vmem:[%s165 + $0x5b7] sm:$0xff]
      %v354 = vld [vmem:[%s165 + $0x5bf] sm:$0xff]
      %v355 = vld [vmem:[%s165 + $0x5c7] sm:$0xff]
      %v356 = vld [vmem:[%s165 + $0x5cf] sm:$0xff]
      %v357 = vld [vmem:[%s165 + $0x5d7] sm:$0xff]
      %v358 = vld [vmem:[%s165 + $0x5df] sm:$0xff]
      %v359 = vld [vmem:[%s165 + $0x5e7] sm:$0xff]
      %v360 = vld [vmem:[%s165 + $0x5ef] sm:$0xff]
      %v361 = vld [vmem:[%s165 + $0x5f7] sm:$0xff]
      %v362 = vld [vmem:[%s165 + $0x5ff] sm:$0xff]
      %v363 = vld [vmem:[%s165 + $0x607] sm:$0xff]
      %v364 = vld [vmem:[%s165 + $0x60f] sm:$0xff]
      %v365 = vld [vmem:[%s165 + $0x617] sm:$0xff]
      %v366 = vld [vmem:[%s165 + $0x61f] sm:$0xff]
      %v367 = vld [vmem:[%s165 + $0x627] sm:$0xff]
      %v368 = vld [vmem:[%s165 + $0x62f] sm:$0xff]
      %v369 = vld [vmem:[%s165 + $0x637] sm:$0xff]
      %v370 = vld [vmem:[%s165 + $0x63f] sm:$0xff]
      %v371 = vld [vmem:[%s165 + $0x647] sm:$0xff]
      %v372 = vld [vmem:[%s165 + $0x64f] sm:$0xff]
      %v373 = vld [vmem:[%s165 + $0x657] sm:$0xff]
      %v374 = vld [vmem:[%s165 + $0x65f] sm:$0xff]
      %v375 = vld [vmem:[%s165 + $0x667] sm:$0xff]
      %v376 = vld [vmem:[%s165 + $0x66f] sm:$0xff]
      %v377 = vld [vmem:[%s165 + $0x677] sm:$0xff]
      %v378 = vld [vmem:[%s165 + $0x67f] sm:$0xff]
      %v379 = vld [vmem:[%s165 + $0x687] sm:$0xff]
      %v380 = vld [vmem:[%s165 + $0x68f] sm:$0xff]
      %v381 = vld [vmem:[%s165 + $0x697] sm:$0xff]
      %v382 = vld [vmem:[%s165 + $0x69f] sm:$0xff]
      %v383 = vld [vmem:[%s165 + $0x6a7] sm:$0xff]
      %v384 = vld [vmem:[%s165 + $0x6af] sm:$0xff]
      %v385 = vld [vmem:[%s165 + $0x6b7] sm:$0xff]
      %v386 = vld [vmem:[%s165 + $0x6bf] sm:$0xff]
      %v387 = vld [vmem:[%s165 + $0x6c7] sm:$0xff]
      %v388 = vld [vmem:[%s165 + $0x6cf] sm:$0xff]
      %v389 = vld [vmem:[%s165 + $0x6d7] sm:$0xff]
      %v390 = vld [vmem:[%s165 + $0x6df] sm:$0xff]
      %v391 = vld [vmem:[%s165 + $0x6e7] sm:$0xff]
      %v392 = vld [vmem:[%s165 + $0x6ef] sm:$0xff]
      %v393 = vld [vmem:[%s165 + $0x6f7] sm:$0xff]
      %v394 = vld [vmem:[%s165 + $0x6ff] sm:$0xff]
      %v395 = vld [vmem:[%s165 + $0x707] sm:$0xff]
      %v396 = vld [vmem:[%s165 + $0x70f] sm:$0xff]
      %v397 = vld [vmem:[%s165 + $0x717] sm:$0xff]
      %v398 = vld [vmem:[%s165 + $0x71f] sm:$0xff]
      %v399 = vld [vmem:[%s165 + $0x727] sm:$0xff]
      %v400 = vld [vmem:[%s165 + $0x72f] sm:$0xff]
      %v401 = vld [vmem:[%s165 + $0x737] sm:$0xff]
      %v402 = vld [vmem:[%s165 + $0x73f] sm:$0xff]
      %v403 = vld [vmem:[%s165 + $0x747] sm:$0xff]
      %v404 = vld [vmem:[%s165 + $0x74f] sm:$0xff]
      %v405 = vld [vmem:[%s165 + $0x757] sm:$0xff]
      %v406 = vld [vmem:[%s165 + $0x75f] sm:$0xff]
      %v407 = vld [vmem:[%s165 + $0x767] sm:$0xff]
      %v408 = vld [vmem:[%s165 + $0x76f] sm:$0xff]
      %v409 = vld [vmem:[%s165 + $0x777] sm:$0xff]
      %v410 = vld [vmem:[%s165 + $0x77f] sm:$0xff]
      %v411 = vld [vmem:[%s165 + $0x787] sm:$0xff]
      %v412 = vld [vmem:[%s165 + $0x78f] sm:$0xff]
      %v413 = vld [vmem:[%s165 + $0x797] sm:$0xff]
      %v414 = vld [vmem:[%s165 + $0x79f] sm:$0xff]
      %v415 = vld [vmem:[%s165 + $0x7a7] sm:$0xff]
      %v416 = vld [vmem:[%s165 + $0x7af] sm:$0xff]
      %v417 = vld [vmem:[%s165 + $0x7b7] sm:$0xff]
      %v418 = vld [vmem:[%s165 + $0x7bf] sm:$0xff]
      %v419 = vld [vmem:[%s165 + $0x7c7] sm:$0xff]
      %v420 = vld [vmem:[%s165 + $0x7cf] sm:$0xff]
      %v421 = vld [vmem:[%s165 + $0x7d7] sm:$0xff]
      %v422 = vld [vmem:[%s165 + $0x7df] sm:$0xff]
      %v423 = vld [vmem:[%s165 + $0x7e7] sm:$0xff]
      %v424 = vld [vmem:[%s165 + $0x7ef] sm:$0xff]
      %v425 = vld [vmem:[%s165 + $0x7f7] sm:$0xff]
      %v426 = vld [vmem:[%s165 + $0x7ff] sm:$0xff]
      %v427 = vld [vmem:[%s165 + $0x8] sm:$0xff]
      %v428 = vld [vmem:[%s165 + $0x10] sm:$0xff]
      %v429 = vld [vmem:[%s165 + $0x18] sm:$0xff]
      %v430 = vld [vmem:[%s165 + $0x20] sm:$0xff]
      %v431 = vld [vmem:[%s165 + $0x28] sm:$0xff]
      %v432 = vld [vmem:[%s165 + $0x30] sm:$0xff]
      %v433 = vld [vmem:[%s165 + $0x38] sm:$0xff]
      %v434 = vld [vmem:[%s165 + $0x40] sm:$0xff]
      %v435 = vld [vmem:[%s165 + $0x48] sm:$0xff]
      %v436 = vld [vmem:[%s165 + $0x50] sm:$0xff]
      %v437 = vld [vmem:[%s165 + $0x58] sm:$0xff]
      %v438 = vld [vmem:[%s165 + $0x60] sm:$0xff]
      %v439 = vld [vmem:[%s165 + $0x68] sm:$0xff]
      %v440 = vld [vmem:[%s165 + $0x70] sm:$0xff]
      %v441 = vld [vmem:[%s165 + $0x78] sm:$0xff]
      %v442 = vld [vmem:[%s165 + $0x80] sm:$0xff]
      %v443 = vld [vmem:[%s165 + $0x88] sm:$0xff]
      %v444 = vld [vmem:[%s165 + $0x90] sm:$0xff]
      %v445 = vld [vmem:[%s165 + $0x98] sm:$0xff]
      %v446 = vld [vmem:[%s165 + $0xa0] sm:$0xff]
      %v447 = vld [vmem:[%s165 + $0xa8] sm:$0xff]
      %v448 = vld [vmem:[%s165 + $0xb0] sm:$0xff]
      %v449 = vld [vmem:[%s165 + $0xb8] sm:$0xff]
      %v450 = vld [vmem:[%s165 + $0xc0] sm:$0xff]
      %v451 = vld [vmem:[%s165 + $0xc8] sm:$0xff]
      %v452 = vld [vmem:[%s165 + $0xd0] sm:$0xff]
      %v453 = vld [vmem:[%s165 + $0xd8] sm:$0xff]
      %v454 = vld [vmem:[%s165 + $0xe0] sm:$0xff]
      %v455 = vld [vmem:[%s165 + $0xe8] sm:$0xff]
      %v456 = vld [vmem:[%s165 + $0xf0] sm:$0xff]
      %v457 = vld [vmem:[%s165 + $0xf8] sm:$0xff]
      %v458 = vld [vmem:[%s165 + $0x100] sm:$0xff]
      %v459 = vld [vmem:[%s165 + $0x108] sm:$0xff]
      %v460 = vld [vmem:[%s165 + $0x110] sm:$0xff]
      %v461 = vld [vmem:[%s165 + $0x118] sm:$0xff]
      %v462 = vld [vmem:[%s165 + $0x120] sm:$0xff]
      %v463 = vld [vmem:[%s165 + $0x128] sm:$0xff]
      %v464 = vld [vmem:[%s165 + $0x130] sm:$0xff]
      %v465 = vld [vmem:[%s165 + $0x138] sm:$0xff]
      %v466 = vld [vmem:[%s165 + $0x140] sm:$0xff]
      %v467 = vld [vmem:[%s165 + $0x148] sm:$0xff]
      %v468 = vld [vmem:[%s165 + $0x150] sm:$0xff]
      %v469 = vld [vmem:[%s165 + $0x158] sm:$0xff]
      %v470 = vld [vmem:[%s165 + $0x160] sm:$0xff]
      %v471 = vld [vmem:[%s165 + $0x168] sm:$0xff]
      %v472 = vld [vmem:[%s165 + $0x170] sm:$0xff]
      %v473 = vld [vmem:[%s165 + $0x178] sm:$0xff]
      %v474 = vld [vmem:[%s165 + $0x180] sm:$0xff]
      %v475 = vld [vmem:[%s165 + $0x188] sm:$0xff]
      %v476 = vld [vmem:[%s165 + $0x190] sm:$0xff]
      %v477 = vld [vmem:[%s165 + $0x198] sm:$0xff]
      %v478 = vld [vmem:[%s165 + $0x1a0] sm:$0xff]
      %v479 = vld [vmem:[%s165 + $0x1a8] sm:$0xff]
      %v480 = vld [vmem:[%s165 + $0x1b0] sm:$0xff]
      %v481 = vld [vmem:[%s165 + $0x1b8] sm:$0xff]
      %v482 = vld [vmem:[%s165 + $0x1c0] sm:$0xff]
      %v483 = vld [vmem:[%s165 + $0x1c8] sm:$0xff]
      %v484 = vld [vmem:[%s165 + $0x1d0] sm:$0xff]
      %v485 = vld [vmem:[%s165 + $0x1d8] sm:$0xff]
      %v486 = vld [vmem:[%s165 + $0x1e0] sm:$0xff]
      %v487 = vld [vmem:[%s165 + $0x1e8] sm:$0xff]
      %v488 = vld [vmem:[%s165 + $0x1f0] sm:$0xff]
      %v489 = vld [vmem:[%s165 + $0x1f8] sm:$0xff]
      %v490 = vld [vmem:[%s165 + $0x200] sm:$0xff]
      %v491 = vld [vmem:[%s165 + $0x208] sm:$0xff]
      %v492 = vld [vmem:[%s165 + $0x210] sm:$0xff]
      %v493 = vld [vmem:[%s165 + $0x218] sm:$0xff]
      %v494 = vld [vmem:[%s165 + $0x220] sm:$0xff]
      %v495 = vld [vmem:[%s165 + $0x228] sm:$0xff]
      %v496 = vld [vmem:[%s165 + $0x230] sm:$0xff]
      %v497 = vld [vmem:[%s165 + $0x238] sm:$0xff]
      %v498 = vld [vmem:[%s165 + $0x240] sm:$0xff]
      %v499 = vld [vmem:[%s165 + $0x248] sm:$0xff]
      %v500 = vld [vmem:[%s165 + $0x250] sm:$0xff]
      %v501 = vld [vmem:[%s165 + $0x258] sm:$0xff]
      %v502 = vld [vmem:[%s165 + $0x260] sm:$0xff]
      %v503 = vld [vmem:[%s165 + $0x268] sm:$0xff]
      %v504 = vld [vmem:[%s165 + $0x270] sm:$0xff]
      %v505 = vld [vmem:[%s165 + $0x278] sm:$0xff]
      %v506 = vld [vmem:[%s165 + $0x280] sm:$0xff]
      %v507 = vld [vmem:[%s165 + $0x288] sm:$0xff]
      %v508 = vld [vmem:[%s165 + $0x290] sm:$0xff]
      %v509 = vld [vmem:[%s165 + $0x298] sm:$0xff]
      %v510 = vld [vmem:[%s165 + $0x2a0] sm:$0xff]
      %v511 = vld [vmem:[%s165 + $0x2a8] sm:$0xff]
      %v512 = vld [vmem:[%s165 + $0x2b0] sm:$0xff]
      %v513 = vld [vmem:[%s165 + $0x2b8] sm:$0xff]
      %v514 = vld [vmem:[%s165 + $0x2c0] sm:$0xff]
      %v515 = vld [vmem:[%s165 + $0x2c8] sm:$0xff]
      %v516 = vld [vmem:[%s165 + $0x2d0] sm:$0xff]
      %v517 = vld [vmem:[%s165 + $0x2d8] sm:$0xff]
      %v518 = vld [vmem:[%s165 + $0x2e0] sm:$0xff]
      %v519 = vld [vmem:[%s165 + $0x2e8] sm:$0xff]
      %v520 = vld [vmem:[%s165 + $0x2f0] sm:$0xff]
      %v521 = vld [vmem:[%s165 + $0x2f8] sm:$0xff]
      %v522 = vld [vmem:[%s165 + $0x300] sm:$0xff]
      %v523 = vld [vmem:[%s165 + $0x308] sm:$0xff]
      %v524 = vld [vmem:[%s165 + $0x310] sm:$0xff]
      %v525 = vld [vmem:[%s165 + $0x318] sm:$0xff]
      %v526 = vld [vmem:[%s165 + $0x320] sm:$0xff]
      %v527 = vld [vmem:[%s165 + $0x328] sm:$0xff]
      %v528 = vld [vmem:[%s165 + $0x330] sm:$0xff]
      %v529 = vld [vmem:[%s165 + $0x338] sm:$0xff]
      %v530 = vld [vmem:[%s165 + $0x340] sm:$0xff]
      %v531 = vld [vmem:[%s165 + $0x348] sm:$0xff]
      %v532 = vld [vmem:[%s165 + $0x350] sm:$0xff]
      %v533 = vld [vmem:[%s165 + $0x358] sm:$0xff]
      %v534 = vld [vmem:[%s165 + $0x360] sm:$0xff]
      %v535 = vld [vmem:[%s165 + $0x368] sm:$0xff]
      %v536 = vld [vmem:[%s165 + $0x370] sm:$0xff]
      %v537 = vld [vmem:[%s165 + $0x378] sm:$0xff]
      %v538 = vld [vmem:[%s165 + $0x380] sm:$0xff]
      %v539 = vld [vmem:[%s165 + $0x388] sm:$0xff]
      %v540 = vld [vmem:[%s165 + $0x390] sm:$0xff]
      %v541 = vld [vmem:[%s165 + $0x398] sm:$0xff]
      %v542 = vld [vmem:[%s165 + $0x3a0] sm:$0xff]
      %v543 = vld [vmem:[%s165 + $0x3a8] sm:$0xff]
      %v544 = vld [vmem:[%s165 + $0x3b0] sm:$0xff]
      %v545 = vld [vmem:[%s165 + $0x3b8] sm:$0xff]
      %v546 = vld [vmem:[%s165 + $0x3c0] sm:$0xff]
      %v547 = vld [vmem:[%s165 + $0x3c8] sm:$0xff]
      %v548 = vld [vmem:[%s165 + $0x3d0] sm:$0xff]
      %v549 = vld [vmem:[%s165 + $0x3d8] sm:$0xff]
      %v550 = vld [vmem:[%s165 + $0x3e0] sm:$0xff]
      %v551 = vld [vmem:[%s165 + $0x3e8] sm:$0xff]
      %v552 = vld [vmem:[%s165 + $0x3f0] sm:$0xff]
      %v553 = vld [vmem:[%s165 + $0x3f8] sm:$0xff]
      %v554 = vld [vmem:[%s165 + $0x400] sm:$0xff]
      %v555 = vld [vmem:[%s165 + $0x408] sm:$0xff]
      %v556 = vld [vmem:[%s165 + $0x410] sm:$0xff]
      %v557 = vld [vmem:[%s165 + $0x418] sm:$0xff]
      %v558 = vld [vmem:[%s165 + $0x420] sm:$0xff]
      %v559 = vld [vmem:[%s165 + $0x428] sm:$0xff]
      %v560 = vld [vmem:[%s165 + $0x430] sm:$0xff]
      %v561 = vld [vmem:[%s165 + $0x438] sm:$0xff]
      %v562 = vld [vmem:[%s165 + $0x440] sm:$0xff]
      %v563 = vld [vmem:[%s165 + $0x448] sm:$0xff]
      %v564 = vld [vmem:[%s165 + $0x450] sm:$0xff]
      %v565 = vld [vmem:[%s165 + $0x458] sm:$0xff]
      %v566 = vld [vmem:[%s165 + $0x460] sm:$0xff]
      %v567 = vld [vmem:[%s165 + $0x468] sm:$0xff]
      %v568 = vld [vmem:[%s165 + $0x470] sm:$0xff]
      %v569 = vld [vmem:[%s165 + $0x478] sm:$0xff]
      %v570 = vld [vmem:[%s165 + $0x480] sm:$0xff]
      %v571 = vld [vmem:[%s165 + $0x488] sm:$0xff]
      %v572 = vld [vmem:[%s165 + $0x490] sm:$0xff]
      %v573 = vld [vmem:[%s165 + $0x498] sm:$0xff]
      %v574 = vld [vmem:[%s165 + $0x4a0] sm:$0xff]
      %v575 = vld [vmem:[%s165 + $0x4a8] sm:$0xff]
      %v576 = vld [vmem:[%s165 + $0x4b0] sm:$0xff]
      %v577 = vld [vmem:[%s165 + $0x4b8] sm:$0xff]
      %v578 = vld [vmem:[%s165 + $0x4c0] sm:$0xff]
      %v579 = vld [vmem:[%s165 + $0x4c8] sm:$0xff]
      %v580 = vld [vmem:[%s165 + $0x4d0] sm:$0xff]
      %v581 = vld [vmem:[%s165 + $0x4d8] sm:$0xff]
      %v582 = vld [vmem:[%s165 + $0x4e0] sm:$0xff]
      %v583 = vld [vmem:[%s165 + $0x4e8] sm:$0xff]
      %v584 = vld [vmem:[%s165 + $0x4f0] sm:$0xff]
      %v585 = vld [vmem:[%s165 + $0x4f8] sm:$0xff]
      %v586 = vld [vmem:[%s165 + $0x500] sm:$0xff]
      %v587 = vld [vmem:[%s165 + $0x508] sm:$0xff]
      %v588 = vld [vmem:[%s165 + $0x510] sm:$0xff]
      %v589 = vld [vmem:[%s165 + $0x518] sm:$0xff]
      %v590 = vld [vmem:[%s165 + $0x520] sm:$0xff]
      %v591 = vld [vmem:[%s165 + $0x528] sm:$0xff]
      %v592 = vld [vmem:[%s165 + $0x530] sm:$0xff]
      %v593 = vld [vmem:[%s165 + $0x538] sm:$0xff]
      %v594 = vld [vmem:[%s165 + $0x540] sm:$0xff]
      %v595 = vld [vmem:[%s165 + $0x548] sm:$0xff]
      %v596 = vld [vmem:[%s165 + $0x550] sm:$0xff]
      %v597 = vld [vmem:[%s165 + $0x558] sm:$0xff]
      %v598 = vld [vmem:[%s165 + $0x560] sm:$0xff]
      %v599 = vld [vmem:[%s165 + $0x568] sm:$0xff]
      %v600 = vld [vmem:[%s165 + $0x570] sm:$0xff]
      %v601 = vld [vmem:[%s165 + $0x578] sm:$0xff]
      %v602 = vld [vmem:[%s165 + $0x580] sm:$0xff]
      %v603 = vld [vmem:[%s165 + $0x588] sm:$0xff]
      %v604 = vld [vmem:[%s165 + $0x590] sm:$0xff]
      %v605 = vld [vmem:[%s165 + $0x598] sm:$0xff]
      %v606 = vld [vmem:[%s165 + $0x5a0] sm:$0xff]
      %v607 = vld [vmem:[%s165 + $0x5a8] sm:$0xff]
      %v608 = vld [vmem:[%s165 + $0x5b0] sm:$0xff]
      %v609 = vld [vmem:[%s165 + $0x5b8] sm:$0xff]
      %v610 = vld [vmem:[%s165 + $0x5c0] sm:$0xff]
      %v611 = vld [vmem:[%s165 + $0x5c8] sm:$0xff]
      %v612 = vld [vmem:[%s165 + $0x5d0] sm:$0xff]
      %v613 = vld [vmem:[%s165 + $0x5d8] sm:$0xff]
      %v614 = vld [vmem:[%s165 + $0x5e0] sm:$0xff]
      %v615 = vld [vmem:[%s165 + $0x5e8] sm:$0xff]
      %v616 = vld [vmem:[%s165 + $0x5f0] sm:$0xff]
      %v617 = vld [vmem:[%s165 + $0x5f8] sm:$0xff]
      %v618 = vld [vmem:[%s165 + $0x600] sm:$0xff]
      %v619 = vld [vmem:[%s165 + $0x608] sm:$0xff]
      %v620 = vld [vmem:[%s165 + $0x610] sm:$0xff]
      %v621 = vld [vmem:[%s165 + $0x618] sm:$0xff]
      %v622 = vld [vmem:[%s165 + $0x620] sm:$0xff]
      %v623 = vld [vmem:[%s165 + $0x628] sm:$0xff]
      %v624 = vld [vmem:[%s165 + $0x630] sm:$0xff]
      %v625 = vld [vmem:[%s165 + $0x638] sm:$0xff]
      %v626 = vld [vmem:[%s165 + $0x640] sm:$0xff]
      %v627 = vld [vmem:[%s165 + $0x648] sm:$0xff]
      %v628 = vld [vmem:[%s165 + $0x650] sm:$0xff]
      %v629 = vld [vmem:[%s165 + $0x658] sm:$0xff]
      %v630 = vld [vmem:[%s165 + $0x660] sm:$0xff]
      %v631 = vld [vmem:[%s165 + $0x668] sm:$0xff]
      %v632 = vld [vmem:[%s165 + $0x670] sm:$0xff]
      %v633 = vld [vmem:[%s165 + $0x678] sm:$0xff]
      %v634 = vld [vmem:[%s165 + $0x680] sm:$0xff]
      %v635 = vld [vmem:[%s165 + $0x688] sm:$0xff]
      %v636 = vld [vmem:[%s165 + $0x690] sm:$0xff]
      %v637 = vld [vmem:[%s165 + $0x698] sm:$0xff]
      %v638 = vld [vmem:[%s165 + $0x6a0] sm:$0xff]
      %v639 = vld [vmem:[%s165 + $0x6a8] sm:$0xff]
      %v640 = vld [vmem:[%s165 + $0x6b0] sm:$0xff]
      %v641 = vld [vmem:[%s165 + $0x6b8] sm:$0xff]
      %v642 = vld [vmem:[%s165 + $0x6c0] sm:$0xff]
      %v643 = vld [vmem:[%s165 + $0x6c8] sm:$0xff]
      %v644 = vld [vmem:[%s165 + $0x6d0] sm:$0xff]
      %v645 = vld [vmem:[%s165 + $0x6d8] sm:$0xff]
      %v646 = vld [vmem:[%s165 + $0x6e0] sm:$0xff]
      %v647 = vld [vmem:[%s165 + $0x6e8] sm:$0xff]
      %v648 = vld [vmem:[%s165 + $0x6f0] sm:$0xff]
      %v649 = vld [vmem:[%s165 + $0x6f8] sm:$0xff]
      %v650 = vld [vmem:[%s165 + $0x700] sm:$0xff]
      %v651 = vld [vmem:[%s165 + $0x708] sm:$0xff]
      %v652 = vld [vmem:[%s165 + $0x710] sm:$0xff]
      %v653 = vld [vmem:[%s165 + $0x718] sm:$0xff]
      %v654 = vld [vmem:[%s165 + $0x720] sm:$0xff]
      %v655 = vld [vmem:[%s165 + $0x728] sm:$0xff]
      %v656 = vld [vmem:[%s165 + $0x730] sm:$0xff]
      %v657 = vld [vmem:[%s165 + $0x738] sm:$0xff]
      %v658 = vld [vmem:[%s165 + $0x740] sm:$0xff]
      %v659 = vld [vmem:[%s165 + $0x748] sm:$0xff]
      %v660 = vld [vmem:[%s165 + $0x750] sm:$0xff]
      %v661 = vld [vmem:[%s165 + $0x758] sm:$0xff]
      %v662 = vld [vmem:[%s165 + $0x760] sm:$0xff]
      %v663 = vld [vmem:[%s165 + $0x768] sm:$0xff]
      %v664 = vld [vmem:[%s165 + $0x770] sm:$0xff]
      %v665 = vld [vmem:[%s165 + $0x778] sm:$0xff]
      %v666 = vld [vmem:[%s165 + $0x780] sm:$0xff]
      %v667 = vld [vmem:[%s165 + $0x788] sm:$0xff]
      %v668 = vld [vmem:[%s165 + $0x790] sm:$0xff]
      %v669 = vld [vmem:[%s165 + $0x798] sm:$0xff]
      %v670 = vld [vmem:[%s165 + $0x7a0] sm:$0xff]
      %v671 = vld [vmem:[%s165 + $0x7a8] sm:$0xff]
      %v672 = vld [vmem:[%s165 + $0x7b0] sm:$0xff]
      %v673 = vld [vmem:[%s165 + $0x7b8] sm:$0xff]
      %v674 = vld [vmem:[%s165 + $0x7c0] sm:$0xff]
      %v675 = vld [vmem:[%s165 + $0x7c8] sm:$0xff]
      %v676 = vld [vmem:[%s165 + $0x7d0] sm:$0xff]
      %v677 = vld [vmem:[%s165 + $0x7d8] sm:$0xff]
      %v678 = vld [vmem:[%s165 + $0x7e0] sm:$0xff]
      %v679 = vld [vmem:[%s165 + $0x7e8] sm:$0xff]
      %v680 = vld [vmem:[%s165 + $0x7f0] sm:$0xff]
      %v681 = vld [vmem:[%s165 + $0x7f8] sm:$0xff]
      %v682 = vld [vmem:[%s165 + $0x800] sm:$0xff]
      %v683 = vld [vmem:[%s165 + $0x9] sm:$0xff]
      %v684 = vld [vmem:[%s165 + $0x11] sm:$0xff]
      %v685 = vld [vmem:[%s165 + $0x19] sm:$0xff]
      %v686 = vld [vmem:[%s165 + $0x21] sm:$0xff]
      %v687 = vld [vmem:[%s165 + $0x29] sm:$0xff]
      %v688 = vld [vmem:[%s165 + $0x31] sm:$0xff]
      %v689 = vld [vmem:[%s165 + $0x39] sm:$0xff]
      %v690 = vld [vmem:[%s165 + $0x41] sm:$0xff]
      %v691 = vld [vmem:[%s165 + $0x49] sm:$0xff]
      %v692 = vld [vmem:[%s165 + $0x51] sm:$0xff]
      %v693 = vld [vmem:[%s165 + $0x59] sm:$0xff]
      %v694 = vld [vmem:[%s165 + $0x61] sm:$0xff]
      %v695 = vld [vmem:[%s165 + $0x69] sm:$0xff]
      %v696 = vld [vmem:[%s165 + $0x71] sm:$0xff]
      %v697 = vld [vmem:[%s165 + $0x79] sm:$0xff]
      %v698 = vld [vmem:[%s165 + $0x81] sm:$0xff]
      %v699 = vld [vmem:[%s165 + $0x89] sm:$0xff]
      %v700 = vld [vmem:[%s165 + $0x91] sm:$0xff]
      %v701 = vld [vmem:[%s165 + $0x99] sm:$0xff]
      %v702 = vld [vmem:[%s165 + $0xa1] sm:$0xff]
      %v703 = vld [vmem:[%s165 + $0xa9] sm:$0xff]
      %v704 = vld [vmem:[%s165 + $0xb1] sm:$0xff]
      %v705 = vld [vmem:[%s165 + $0xb9] sm:$0xff]
      %v706 = vld [vmem:[%s165 + $0xc1] sm:$0xff]
      %v707 = vld [vmem:[%s165 + $0xc9] sm:$0xff]
      %v708 = vld [vmem:[%s165 + $0xd1] sm:$0xff]
      %v709 = vld [vmem:[%s165 + $0xd9] sm:$0xff]
      %v710 = vld [vmem:[%s165 + $0xe1] sm:$0xff]
      %v711 = vld [vmem:[%s165 + $0xe9] sm:$0xff]
      %v712 = vld [vmem:[%s165 + $0xf1] sm:$0xff]
      %v713 = vld [vmem:[%s165 + $0xf9] sm:$0xff]
      %v714 = vld [vmem:[%s165 + $0x101] sm:$0xff]
      %v715 = vld [vmem:[%s165 + $0x109] sm:$0xff]
      %v716 = vld [vmem:[%s165 + $0x111] sm:$0xff]
      %v717 = vld [vmem:[%s165 + $0x119] sm:$0xff]
      %v718 = vld [vmem:[%s165 + $0x121] sm:$0xff]
      %v719 = vld [vmem:[%s165 + $0x129] sm:$0xff]
      %v720 = vld [vmem:[%s165 + $0x131] sm:$0xff]
      %v721 = vld [vmem:[%s165 + $0x139] sm:$0xff]
      %v722 = vld [vmem:[%s165 + $0x141] sm:$0xff]
      %v723 = vld [vmem:[%s165 + $0x149] sm:$0xff]
      %v724 = vld [vmem:[%s165 + $0x151] sm:$0xff]
      %v725 = vld [vmem:[%s165 + $0x159] sm:$0xff]
      %v726 = vld [vmem:[%s165 + $0x161] sm:$0xff]
      %v727 = vld [vmem:[%s165 + $0x169] sm:$0xff]
      %v728 = vld [vmem:[%s165 + $0x171] sm:$0xff]
      %v729 = vld [vmem:[%s165 + $0x179] sm:$0xff]
      %v730 = vld [vmem:[%s165 + $0x181] sm:$0xff]
      %v731 = vld [vmem:[%s165 + $0x189] sm:$0xff]
      %v732 = vld [vmem:[%s165 + $0x191] sm:$0xff]
      %v733 = vld [vmem:[%s165 + $0x199] sm:$0xff]
      %v734 = vld [vmem:[%s165 + $0x1a1] sm:$0xff]
      %v735 = vld [vmem:[%s165 + $0x1a9] sm:$0xff]
      %v736 = vld [vmem:[%s165 + $0x1b1] sm:$0xff]
      %v737 = vld [vmem:[%s165 + $0x1b9] sm:$0xff]
      %v738 = vld [vmem:[%s165 + $0x1c1] sm:$0xff]
      %v739 = vld [vmem:[%s165 + $0x1c9] sm:$0xff]
      %v740 = vld [vmem:[%s165 + $0x1d1] sm:$0xff]
      %v741 = vld [vmem:[%s165 + $0x1d9] sm:$0xff]
      %v742 = vld [vmem:[%s165 + $0x1e1] sm:$0xff]
      %v743 = vld [vmem:[%s165 + $0x1e9] sm:$0xff]
      %v744 = vld [vmem:[%s165 + $0x1f1] sm:$0xff]
      %v745 = vld [vmem:[%s165 + $0x1f9] sm:$0xff]
      %v746 = vld [vmem:[%s165 + $0x201] sm:$0xff]
      %v747 = vld [vmem:[%s165 + $0x209] sm:$0xff]
      %v748 = vld [vmem:[%s165 + $0x211] sm:$0xff]
      %v749 = vld [vmem:[%s165 + $0x219] sm:$0xff]
      %v750 = vld [vmem:[%s165 + $0x221] sm:$0xff]
      %v751 = vld [vmem:[%s165 + $0x229] sm:$0xff]
      %v752 = vld [vmem:[%s165 + $0x231] sm:$0xff]
      %v753 = vld [vmem:[%s165 + $0x239] sm:$0xff]
      %v754 = vld [vmem:[%s165 + $0x241] sm:$0xff]
      %v755 = vld [vmem:[%s165 + $0x249] sm:$0xff]
      %v756 = vld [vmem:[%s165 + $0x251] sm:$0xff]
      %v757 = vld [vmem:[%s165 + $0x259] sm:$0xff]
      %v758 = vld [vmem:[%s165 + $0x261] sm:$0xff]
      %v759 = vld [vmem:[%s165 + $0x269] sm:$0xff]
      %v760 = vld [vmem:[%s165 + $0x271] sm:$0xff]
      %v761 = vld [vmem:[%s165 + $0x279] sm:$0xff]
      %v762 = vld [vmem:[%s165 + $0x281] sm:$0xff]
      %v763 = vld [vmem:[%s165 + $0x289] sm:$0xff]
      %v764 = vld [vmem:[%s165 + $0x291] sm:$0xff]
      %v765 = vld [vmem:[%s165 + $0x299] sm:$0xff]
      %v766 = vld [vmem:[%s165 + $0x2a1] sm:$0xff]
      %v767 = vld [vmem:[%s165 + $0x2a9] sm:$0xff]
      %v768 = vld [vmem:[%s165 + $0x2b1] sm:$0xff]
      %v769 = vld [vmem:[%s165 + $0x2b9] sm:$0xff]
      %v770 = vld [vmem:[%s165 + $0x2c1] sm:$0xff]
      %v771 = vld [vmem:[%s165 + $0x2c9] sm:$0xff]
      %v772 = vld [vmem:[%s165 + $0x2d1] sm:$0xff]
      %v773 = vld [vmem:[%s165 + $0x2d9] sm:$0xff]
      %v774 = vld [vmem:[%s165 + $0x2e1] sm:$0xff]
      %v775 = vld [vmem:[%s165 + $0x2e9] sm:$0xff]
      %v776 = vld [vmem:[%s165 + $0x2f1] sm:$0xff]
      %v777 = vld [vmem:[%s165 + $0x2f9] sm:$0xff]
      %v778 = vld [vmem:[%s165 + $0x301] sm:$0xff]
      %v779 = vld [vmem:[%s165 + $0x309] sm:$0xff]
      %v780 = vld [vmem:[%s165 + $0x311] sm:$0xff]
      %v781 = vld [vmem:[%s165 + $0x319] sm:$0xff]
      %v782 = vld [vmem:[%s165 + $0x321] sm:$0xff]
      %v783 = vld [vmem:[%s165 + $0x329] sm:$0xff]
      %v784 = vld [vmem:[%s165 + $0x331] sm:$0xff]
      %v785 = vld [vmem:[%s165 + $0x339] sm:$0xff]
      %v786 = vld [vmem:[%s165 + $0x341] sm:$0xff]
      %v787 = vld [vmem:[%s165 + $0x349] sm:$0xff]
      %v788 = vld [vmem:[%s165 + $0x351] sm:$0xff]
      %v789 = vld [vmem:[%s165 + $0x359] sm:$0xff]
      %v790 = vld [vmem:[%s165 + $0x361] sm:$0xff]
      %v791 = vld [vmem:[%s165 + $0x369] sm:$0xff]
      %v792 = vld [vmem:[%s165 + $0x371] sm:$0xff]
      %v793 = vld [vmem:[%s165 + $0x379] sm:$0xff]
      %v794 = vld [vmem:[%s165 + $0x381] sm:$0xff]
      %v795 = vld [vmem:[%s165 + $0x389] sm:$0xff]
      %v796 = vld [vmem:[%s165 + $0x391] sm:$0xff]
      %v797 = vld [vmem:[%s165 + $0x399] sm:$0xff]
      %v798 = vld [vmem:[%s165 + $0x3a1] sm:$0xff]
      %v799 = vld [vmem:[%s165 + $0x3a9] sm:$0xff]
      %v800 = vld [vmem:[%s165 + $0x3b1] sm:$0xff]
      %v801 = vld [vmem:[%s165 + $0x3b9] sm:$0xff]
      %v802 = vld [vmem:[%s165 + $0x3c1] sm:$0xff]
      %v803 = vld [vmem:[%s165 + $0x3c9] sm:$0xff]
      %v804 = vld [vmem:[%s165 + $0x3d1] sm:$0xff]
      %v805 = vld [vmem:[%s165 + $0x3d9] sm:$0xff]
      %v806 = vld [vmem:[%s165 + $0x3e1] sm:$0xff]
      %v807 = vld [vmem:[%s165 + $0x3e9] sm:$0xff]
      %v808 = vld [vmem:[%s165 + $0x3f1] sm:$0xff]
      %v809 = vld [vmem:[%s165 + $0x3f9] sm:$0xff]
      %v810 = vld [vmem:[%s165 + $0x401] sm:$0xff]
      %v811 = vld [vmem:[%s165 + $0x409] sm:$0xff]
      %v812 = vld [vmem:[%s165 + $0x411] sm:$0xff]
      %v813 = vld [vmem:[%s165 + $0x419] sm:$0xff]
      %v814 = vld [vmem:[%s165 + $0x421] sm:$0xff]
      %v815 = vld [vmem:[%s165 + $0x429] sm:$0xff]
      %v816 = vld [vmem:[%s165 + $0x431] sm:$0xff]
      %v817 = vld [vmem:[%s165 + $0x439] sm:$0xff]
      %v818 = vld [vmem:[%s165 + $0x441] sm:$0xff]
      %v819 = vld [vmem:[%s165 + $0x449] sm:$0xff]
      %v820 = vld [vmem:[%s165 + $0x451] sm:$0xff]
      %v821 = vld [vmem:[%s165 + $0x459] sm:$0xff]
      %v822 = vld [vmem:[%s165 + $0x461] sm:$0xff]
      %v823 = vld [vmem:[%s165 + $0x469] sm:$0xff]
      %v824 = vld [vmem:[%s165 + $0x471] sm:$0xff]
      %v825 = vld [vmem:[%s165 + $0x479] sm:$0xff]
      %v826 = vld [vmem:[%s165 + $0x481] sm:$0xff]
      %v827 = vld [vmem:[%s165 + $0x489] sm:$0xff]
      %v828 = vld [vmem:[%s165 + $0x491] sm:$0xff]
      %v829 = vld [vmem:[%s165 + $0x499] sm:$0xff]
      %v830 = vld [vmem:[%s165 + $0x4a1] sm:$0xff]
      %v831 = vld [vmem:[%s165 + $0x4a9] sm:$0xff]
      %v832 = vld [vmem:[%s165 + $0x4b1] sm:$0xff]
      %v833 = vld [vmem:[%s165 + $0x4b9] sm:$0xff]
      %v834 = vld [vmem:[%s165 + $0x4c1] sm:$0xff]
      %v835 = vld [vmem:[%s165 + $0x4c9] sm:$0xff]
      %v836 = vld [vmem:[%s165 + $0x4d1] sm:$0xff]
      %v837 = vld [vmem:[%s165 + $0x4d9] sm:$0xff]
      %v838 = vld [vmem:[%s165 + $0x4e1] sm:$0xff]
      %v839 = vld [vmem:[%s165 + $0x4e9] sm:$0xff]
      %v840 = vld [vmem:[%s165 + $0x4f1] sm:$0xff]
      %v841 = vld [vmem:[%s165 + $0x4f9] sm:$0xff]
      %v842 = vld [vmem:[%s165 + $0x501] sm:$0xff]
      %v843 = vld [vmem:[%s165 + $0x509] sm:$0xff]
      %v844 = vld [vmem:[%s165 + $0x511] sm:$0xff]
      %v845 = vld [vmem:[%s165 + $0x519] sm:$0xff]
      %v846 = vld [vmem:[%s165 + $0x521] sm:$0xff]
      %v847 = vld [vmem:[%s165 + $0x529] sm:$0xff]
      %v848 = vld [vmem:[%s165 + $0x531] sm:$0xff]
      %v849 = vld [vmem:[%s165 + $0x539] sm:$0xff]
      %v850 = vld [vmem:[%s165 + $0x541] sm:$0xff]
      %v851 = vld [vmem:[%s165 + $0x549] sm:$0xff]
      %v852 = vld [vmem:[%s165 + $0x551] sm:$0xff]
      %v853 = vld [vmem:[%s165 + $0x559] sm:$0xff]
      %v854 = vld [vmem:[%s165 + $0x561] sm:$0xff]
      %v855 = vld [vmem:[%s165 + $0x569] sm:$0xff]
      %v856 = vld [vmem:[%s165 + $0x571] sm:$0xff]
      %v857 = vld [vmem:[%s165 + $0x579] sm:$0xff]
      %v858 = vld [vmem:[%s165 + $0x581] sm:$0xff]
      %v859 = vld [vmem:[%s165 + $0x589] sm:$0xff]
      %v860 = vld [vmem:[%s165 + $0x591] sm:$0xff]
      %v861 = vld [vmem:[%s165 + $0x599] sm:$0xff]
      %v862 = vld [vmem:[%s165 + $0x5a1] sm:$0xff]
      %v863 = vld [vmem:[%s165 + $0x5a9] sm:$0xff]
      %v864 = vld [vmem:[%s165 + $0x5b1] sm:$0xff]
      %v865 = vld [vmem:[%s165 + $0x5b9] sm:$0xff]
      %v866 = vld [vmem:[%s165 + $0x5c1] sm:$0xff]
      %v867 = vld [vmem:[%s165 + $0x5c9] sm:$0xff]
      %v868 = vld [vmem:[%s165 + $0x5d1] sm:$0xff]
      %v869 = vld [vmem:[%s165 + $0x5d9] sm:$0xff]
      %v870 = vld [vmem:[%s165 + $0x5e1] sm:$0xff]
      %v871 = vld [vmem:[%s165 + $0x5e9] sm:$0xff]
      %v872 = vld [vmem:[%s165 + $0x5f1] sm:$0xff]
      %v873 = vld [vmem:[%s165 + $0x5f9] sm:$0xff]
      %v874 = vld [vmem:[%s165 + $0x601] sm:$0xff]
      %v875 = vld [vmem:[%s165 + $0x609] sm:$0xff]
      %v876 = vld [vmem:[%s165 + $0x611] sm:$0xff]
      %v877 = vld [vmem:[%s165 + $0x619] sm:$0xff]
      %v878 = vld [vmem:[%s165 + $0x621] sm:$0xff]
      %v879 = vld [vmem:[%s165 + $0x629] sm:$0xff]
      %v880 = vld [vmem:[%s165 + $0x631] sm:$0xff]
      %v881 = vld [vmem:[%s165 + $0x639] sm:$0xff]
      %v882 = vld [vmem:[%s165 + $0x641] sm:$0xff]
      %v883 = vld [vmem:[%s165 + $0x649] sm:$0xff]
      %v884 = vld [vmem:[%s165 + $0x651] sm:$0xff]
      %v885 = vld [vmem:[%s165 + $0x659] sm:$0xff]
      %v886 = vld [vmem:[%s165 + $0x661] sm:$0xff]
      %v887 = vld [vmem:[%s165 + $0x669] sm:$0xff]
      %v888 = vld [vmem:[%s165 + $0x671] sm:$0xff]
      %v889 = vld [vmem:[%s165 + $0x679] sm:$0xff]
      %v890 = vld [vmem:[%s165 + $0x681] sm:$0xff]
      %v891 = vld [vmem:[%s165 + $0x689] sm:$0xff]
      %v892 = vld [vmem:[%s165 + $0x691] sm:$0xff]
      %v893 = vld [vmem:[%s165 + $0x699] sm:$0xff]
      %v894 = vld [vmem:[%s165 + $0x6a1] sm:$0xff]
      %v895 = vld [vmem:[%s165 + $0x6a9] sm:$0xff]
      %v896 = vld [vmem:[%s165 + $0x6b1] sm:$0xff]
      %v897 = vld [vmem:[%s165 + $0x6b9] sm:$0xff]
      %v898 = vld [vmem:[%s165 + $0x6c1] sm:$0xff]
      %v899 = vld [vmem:[%s165 + $0x6c9] sm:$0xff]
      %v900 = vld [vmem:[%s165 + $0x6d1] sm:$0xff]
      %v901 = vld [vmem:[%s165 + $0x6d9] sm:$0xff]
      %v902 = vld [vmem:[%s165 + $0x6e1] sm:$0xff]
      %v903 = vld [vmem:[%s165 + $0x6e9] sm:$0xff]
      %v904 = vld [vmem:[%s165 + $0x6f1] sm:$0xff]
      %v905 = vld [vmem:[%s165 + $0x6f9] sm:$0xff]
      %v906 = vld [vmem:[%s165 + $0x701] sm:$0xff]
      %v907 = vld [vmem:[%s165 + $0x709] sm:$0xff]
      %v908 = vld [vmem:[%s165 + $0x711] sm:$0xff]
      %v909 = vld [vmem:[%s165 + $0x719] sm:$0xff]
      %v910 = vld [vmem:[%s165 + $0x721] sm:$0xff]
      %v911 = vld [vmem:[%s165 + $0x729] sm:$0xff]
      %v912 = vld [vmem:[%s165 + $0x731] sm:$0xff]
      %v913 = vld [vmem:[%s165 + $0x739] sm:$0xff]
      %v914 = vld [vmem:[%s165 + $0x741] sm:$0xff]
      %v915 = vld [vmem:[%s165 + $0x749] sm:$0xff]
      %v916 = vld [vmem:[%s165 + $0x751] sm:$0xff]
      %v917 = vld [vmem:[%s165 + $0x759] sm:$0xff]
      %v918 = vld [vmem:[%s165 + $0x761] sm:$0xff]
      %v919 = vld [vmem:[%s165 + $0x769] sm:$0xff]
      %v920 = vld [vmem:[%s165 + $0x771] sm:$0xff]
      %v921 = vld [vmem:[%s165 + $0x779] sm:$0xff]
      %v922 = vld [vmem:[%s165 + $0x781] sm:$0xff]
      %v923 = vld [vmem:[%s165 + $0x789] sm:$0xff]
      %v924 = vld [vmem:[%s165 + $0x791] sm:$0xff]
      %v925 = vld [vmem:[%s165 + $0x799] sm:$0xff]
      %v926 = vld [vmem:[%s165 + $0x7a1] sm:$0xff]
      %v927 = vld [vmem:[%s165 + $0x7a9] sm:$0xff]
      %v928 = vld [vmem:[%s165 + $0x7b1] sm:$0xff]
      %v929 = vld [vmem:[%s165 + $0x7b9] sm:$0xff]
      %v930 = vld [vmem:[%s165 + $0x7c1] sm:$0xff]
      %v931 = vld [vmem:[%s165 + $0x7c9] sm:$0xff]
      %v932 = vld [vmem:[%s165 + $0x7d1] sm:$0xff]
      %v933 = vld [vmem:[%s165 + $0x7d9] sm:$0xff]
      %v934 = vld [vmem:[%s165 + $0x7e1] sm:$0xff]
      %v935 = vld [vmem:[%s165 + $0x7e9] sm:$0xff]
      %v936 = vld [vmem:[%s165 + $0x7f1] sm:$0xff]
      %v937 = vld [vmem:[%s165 + $0x7f9] sm:$0xff]
      %v938 = vld [vmem:[%s165 + $0x801] sm:$0xff]
      %s939 = scalar_lea.vmem %s1, 1
      %v940 = vld [vmem:[%s939] sm:$0x1]
      %v941 = vld [vmem:[%s1] sm:$0x1]
      %vm942 = vcmask 7168
      %v944 = vsel %vm942, %v171, 0
      %v947 = vsel %vm942, %v172, 0
      %v950 = vsel %vm942, %v173, 0
      %v953 = vsel %vm942, %v174, 0
      %v956 = vsel %vm942, %v175, 0
      %v959 = vsel %vm942, %v176, 0
      %v962 = vsel %vm942, %v177, 0
      %v965 = vsel %vm942, %v178, 0
      %v968 = vsel %vm942, %v179, 0
      %v971 = vsel %vm942, %v180, 0
      %v974 = vsel %vm942, %v181, 0
      %v977 = vsel %vm942, %v182, 0
      %v980 = vsel %vm942, %v183, 0
      %v983 = vsel %vm942, %v184, 0
      %v986 = vsel %vm942, %v185, 0
      %v989 = vsel %vm942, %v186, 0
      %v992 = vsel %vm942, %v187, 0
      %v995 = vsel %vm942, %v188, 0
      %v998 = vsel %vm942, %v189, 0
      %v1001 = vsel %vm942, %v190, 0
      %v1004 = vsel %vm942, %v191, 0
      %v1007 = vsel %vm942, %v192, 0
      %v1010 = vsel %vm942, %v193, 0
      %v1013 = vsel %vm942, %v194, 0
      %v1016 = vsel %vm942, %v195, 0
      %v1019 = vsel %vm942, %v196, 0
      %v1022 = vsel %vm942, %v197, 0
      %v1025 = vsel %vm942, %v198, 0
      %v1028 = vsel %vm942, %v199, 0
      %v1031 = vsel %vm942, %v200, 0
      %v1034 = vsel %vm942, %v201, 0
      %v1037 = vsel %vm942, %v202, 0
      %v1040 = vsel %vm942, %v203, 0
      %v1043 = vsel %vm942, %v204, 0
      %v1046 = vsel %vm942, %v205, 0
      %v1049 = vsel %vm942, %v206, 0
      %v1052 = vsel %vm942, %v207, 0
      %v1055 = vsel %vm942, %v208, 0
      %v1058 = vsel %vm942, %v209, 0
      %v1061 = vsel %vm942, %v210, 0
      %v1064 = vsel %vm942, %v211, 0
      %v1067 = vsel %vm942, %v212, 0
      %v1070 = vsel %vm942, %v213, 0
      %v1073 = vsel %vm942, %v214, 0
      %v1076 = vsel %vm942, %v215, 0
      %v1079 = vsel %vm942, %v216, 0
      %v1082 = vsel %vm942, %v217, 0
      %v1085 = vsel %vm942, %v218, 0
      %v1088 = vsel %vm942, %v219, 0
      %v1091 = vsel %vm942, %v220, 0
      %v1094 = vsel %vm942, %v221, 0
      %v1097 = vsel %vm942, %v222, 0
      %v1100 = vsel %vm942, %v223, 0
      %v1103 = vsel %vm942, %v224, 0
      %v1106 = vsel %vm942, %v225, 0
      %v1109 = vsel %vm942, %v226, 0
      %v1112 = vsel %vm942, %v227, 0
      %v1115 = vsel %vm942, %v228, 0
      %v1118 = vsel %vm942, %v229, 0
      %v1121 = vsel %vm942, %v230, 0
      %v1124 = vsel %vm942, %v231, 0
      %v1127 = vsel %vm942, %v232, 0
      %v1130 = vsel %vm942, %v233, 0
      %v1133 = vsel %vm942, %v234, 0
      %v1136 = vsel %vm942, %v235, 0
      %v1139 = vsel %vm942, %v236, 0
      %v1142 = vsel %vm942, %v237, 0
      %v1145 = vsel %vm942, %v238, 0
      %v1148 = vsel %vm942, %v239, 0
      %v1151 = vsel %vm942, %v240, 0
      %v1154 = vsel %vm942, %v241, 0
      %v1157 = vsel %vm942, %v242, 0
      %v1160 = vsel %vm942, %v243, 0
      %v1163 = vsel %vm942, %v244, 0
      %v1166 = vsel %vm942, %v245, 0
      %v1169 = vsel %vm942, %v246, 0
      %v1172 = vsel %vm942, %v247, 0
      %v1175 = vsel %vm942, %v248, 0
      %v1178 = vsel %vm942, %v249, 0
      %v1181 = vsel %vm942, %v250, 0
      %v1184 = vsel %vm942, %v251, 0
      %v1187 = vsel %vm942, %v252, 0
      %v1190 = vsel %vm942, %v253, 0
      %v1193 = vsel %vm942, %v254, 0
      %v1196 = vsel %vm942, %v255, 0
      %v1199 = vsel %vm942, %v256, 0
      %v1202 = vsel %vm942, %v257, 0
      %v1205 = vsel %vm942, %v258, 0
      %v1208 = vsel %vm942, %v259, 0
      %v1211 = vsel %vm942, %v260, 0
      %v1214 = vsel %vm942, %v261, 0
      %v1217 = vsel %vm942, %v262, 0
      %v1220 = vsel %vm942, %v263, 0
      %v1223 = vsel %vm942, %v264, 0
      %v1226 = vsel %vm942, %v265, 0
      %v1229 = vsel %vm942, %v266, 0
      %v1232 = vsel %vm942, %v267, 0
      %v1235 = vsel %vm942, %v268, 0
      %v1238 = vsel %vm942, %v269, 0
      %v1241 = vsel %vm942, %v270, 0
      %v1244 = vsel %vm942, %v271, 0
      %v1247 = vsel %vm942, %v272, 0
      %v1250 = vsel %vm942, %v273, 0
      %v1253 = vsel %vm942, %v274, 0
      %v1256 = vsel %vm942, %v275, 0
      %v1259 = vsel %vm942, %v276, 0
      %v1262 = vsel %vm942, %v277, 0
      %v1265 = vsel %vm942, %v278, 0
      %v1268 = vsel %vm942, %v279, 0
      %v1271 = vsel %vm942, %v280, 0
      %v1274 = vsel %vm942, %v281, 0
      %v1277 = vsel %vm942, %v282, 0
      %v1280 = vsel %vm942, %v283, 0
      %v1283 = vsel %vm942, %v284, 0
      %v1286 = vsel %vm942, %v285, 0
      %v1289 = vsel %vm942, %v286, 0
      %v1292 = vsel %vm942, %v287, 0
      %v1295 = vsel %vm942, %v288, 0
      %v1298 = vsel %vm942, %v289, 0
      %v1301 = vsel %vm942, %v290, 0
      %v1304 = vsel %vm942, %v291, 0
      %v1307 = vsel %vm942, %v292, 0
      %v1310 = vsel %vm942, %v293, 0
      %v1313 = vsel %vm942, %v294, 0
      %v1316 = vsel %vm942, %v295, 0
      %v1319 = vsel %vm942, %v296, 0
      %v1322 = vsel %vm942, %v297, 0
      %v1325 = vsel %vm942, %v298, 0
      %v1328 = vsel %vm942, %v299, 0
      %v1331 = vsel %vm942, %v300, 0
      %v1334 = vsel %vm942, %v301, 0
      %v1337 = vsel %vm942, %v302, 0
      %v1340 = vsel %vm942, %v303, 0
      %v1343 = vsel %vm942, %v304, 0
      %v1346 = vsel %vm942, %v305, 0
      %v1349 = vsel %vm942, %v306, 0
      %v1352 = vsel %vm942, %v307, 0
      %v1355 = vsel %vm942, %v308, 0
      %v1358 = vsel %vm942, %v309, 0
      %v1361 = vsel %vm942, %v310, 0
      %v1364 = vsel %vm942, %v311, 0
      %v1367 = vsel %vm942, %v312, 0
      %v1370 = vsel %vm942, %v313, 0
      %v1373 = vsel %vm942, %v314, 0
      %v1376 = vsel %vm942, %v315, 0
      %v1379 = vsel %vm942, %v316, 0
      %v1382 = vsel %vm942, %v317, 0
      %v1385 = vsel %vm942, %v318, 0
      %v1388 = vsel %vm942, %v319, 0
      %v1391 = vsel %vm942, %v320, 0
      %v1394 = vsel %vm942, %v321, 0
      %v1397 = vsel %vm942, %v322, 0
      %v1400 = vsel %vm942, %v323, 0
      %v1403 = vsel %vm942, %v324, 0
      %v1406 = vsel %vm942, %v325, 0
      %v1409 = vsel %vm942, %v326, 0
      %v1412 = vsel %vm942, %v327, 0
      %v1415 = vsel %vm942, %v328, 0
      %v1418 = vsel %vm942, %v329, 0
      %v1421 = vsel %vm942, %v330, 0
      %v1424 = vsel %vm942, %v331, 0
      %v1427 = vsel %vm942, %v332, 0
      %v1430 = vsel %vm942, %v333, 0
      %v1433 = vsel %vm942, %v334, 0
      %v1436 = vsel %vm942, %v335, 0
      %v1439 = vsel %vm942, %v336, 0
      %v1442 = vsel %vm942, %v337, 0
      %v1445 = vsel %vm942, %v338, 0
      %v1448 = vsel %vm942, %v339, 0
      %v1451 = vsel %vm942, %v340, 0
      %v1454 = vsel %vm942, %v341, 0
      %v1457 = vsel %vm942, %v342, 0
      %v1460 = vsel %vm942, %v343, 0
      %v1463 = vsel %vm942, %v344, 0
      %v1466 = vsel %vm942, %v345, 0
      %v1469 = vsel %vm942, %v346, 0
      %v1472 = vsel %vm942, %v347, 0
      %v1475 = vsel %vm942, %v348, 0
      %v1478 = vsel %vm942, %v349, 0
      %v1481 = vsel %vm942, %v350, 0
      %v1484 = vsel %vm942, %v351, 0
      %v1487 = vsel %vm942, %v352, 0
      %v1490 = vsel %vm942, %v353, 0
      %v1493 = vsel %vm942, %v354, 0
      %v1496 = vsel %vm942, %v355, 0
      %v1499 = vsel %vm942, %v356, 0
      %v1502 = vsel %vm942, %v357, 0
      %v1505 = vsel %vm942, %v358, 0
      %v1508 = vsel %vm942, %v359, 0
      %v1511 = vsel %vm942, %v360, 0
      %v1514 = vsel %vm942, %v361, 0
      %v1517 = vsel %vm942, %v362, 0
      %v1520 = vsel %vm942, %v363, 0
      %v1523 = vsel %vm942, %v364, 0
      %v1526 = vsel %vm942, %v365, 0
      %v1529 = vsel %vm942, %v366, 0
      %v1532 = vsel %vm942, %v367, 0
      %v1535 = vsel %vm942, %v368, 0
      %v1538 = vsel %vm942, %v369, 0
      %v1541 = vsel %vm942, %v370, 0
      %v1544 = vsel %vm942, %v371, 0
      %v1547 = vsel %vm942, %v372, 0
      %v1550 = vsel %vm942, %v373, 0
      %v1553 = vsel %vm942, %v374, 0
      %v1556 = vsel %vm942, %v375, 0
      %v1559 = vsel %vm942, %v376, 0
      %v1562 = vsel %vm942, %v377, 0
      %v1565 = vsel %vm942, %v378, 0
      %v1568 = vsel %vm942, %v379, 0
      %v1571 = vsel %vm942, %v380, 0
      %v1574 = vsel %vm942, %v381, 0
      %v1577 = vsel %vm942, %v382, 0
      %v1580 = vsel %vm942, %v383, 0
      %v1583 = vsel %vm942, %v384, 0
      %v1586 = vsel %vm942, %v385, 0
      %v1589 = vsel %vm942, %v386, 0
      %v1592 = vsel %vm942, %v387, 0
      %v1595 = vsel %vm942, %v388, 0
      %v1598 = vsel %vm942, %v389, 0
      %v1601 = vsel %vm942, %v390, 0
      %v1604 = vsel %vm942, %v391, 0
      %v1607 = vsel %vm942, %v392, 0
      %v1610 = vsel %vm942, %v393, 0
      %v1613 = vsel %vm942, %v394, 0
      %v1616 = vsel %vm942, %v395, 0
      %v1619 = vsel %vm942, %v396, 0
      %v1622 = vsel %vm942, %v397, 0
      %v1625 = vsel %vm942, %v398, 0
      %v1628 = vsel %vm942, %v399, 0
      %v1631 = vsel %vm942, %v400, 0
      %v1634 = vsel %vm942, %v401, 0
      %v1637 = vsel %vm942, %v402, 0
      %v1640 = vsel %vm942, %v403, 0
      %v1643 = vsel %vm942, %v404, 0
      %v1646 = vsel %vm942, %v405, 0
      %v1649 = vsel %vm942, %v406, 0
      %v1652 = vsel %vm942, %v407, 0
      %v1655 = vsel %vm942, %v408, 0
      %v1658 = vsel %vm942, %v409, 0
      %v1661 = vsel %vm942, %v410, 0
      %v1664 = vsel %vm942, %v411, 0
      %v1667 = vsel %vm942, %v412, 0
      %v1670 = vsel %vm942, %v413, 0
      %v1673 = vsel %vm942, %v414, 0
      %v1676 = vsel %vm942, %v415, 0
      %v1679 = vsel %vm942, %v416, 0
      %v1682 = vsel %vm942, %v417, 0
      %v1685 = vsel %vm942, %v418, 0
      %v1688 = vsel %vm942, %v419, 0
      %v1691 = vsel %vm942, %v420, 0
      %v1694 = vsel %vm942, %v421, 0
      %v1697 = vsel %vm942, %v422, 0
      %v1700 = vsel %vm942, %v423, 0
      %v1703 = vsel %vm942, %v424, 0
      %v1706 = vsel %vm942, %v425, 0
      %v1709 = vsel %vm942, %v426, 0
      %vm1711 = vcmask 1040384
      %v1713 = vsel %vm1711, %v941, 0
      %1715 = vmatprep.subr.mxu0 0.0
      %1716 = vmatpush1.msra.mxu0 %v1713
      %1717 = vmatprep.subr.mxu0 0.0
      %1718 = vmatpush1.msra.mxu0 0.0
      %1719 = vmatprep.subr.mxu0 0.0
      %1720 = vmatpush1.msra.mxu0 0.0
      %1721 = vmatprep.subr.mxu0 0.0
      %1722 = vmatpush1.msra.mxu0 0.0
      %1723 = vmatprep.subr.mxu0 0.0
      %1724 = vmatpush1.msra.mxu0 0.0
      %1725 = vmatprep.subr.mxu0 0.0
      %1726 = vmatpush1.msra.mxu0 0.0
      %1727 = vmatprep.subr.mxu0 0.0
      %1728 = vmatpush1.msra.mxu0 0.0
      %1729 = vmatprep.subr.mxu0 0.0
      %1730 = vmatpush1.msra.mxu0 0.0
      %1731 = vmatprep.subr.mxu0 0.0
      %1732 = vmatpush1.msra.mxu0 0.0
      %1733 = vmatprep.subr.mxu0 0.0
      %1734 = vmatpush1.msra.mxu0 0.0
      %1735 = vmatprep.subr.mxu0 0.0
      %1736 = vmatpush1.msra.mxu0 0.0
      %1737 = vmatprep.subr.mxu0 0.0
      %1738 = vmatpush1.msra.mxu0 0.0
      %1739 = vmatprep.subr.mxu0 0.0
      %1740 = vmatpush1.msra.mxu0 0.0
      %1741 = vmatprep.subr.mxu0 0.0
      %1742 = vmatpush1.msra.mxu0 0.0
      %1743 = vmatprep.subr.mxu0 0.0
      %1744 = vmatpush1.msra.mxu0 0.0
      %1745 = vmatprep.subr.mxu0 0.0
      %1746 = vmatpush1.msra.mxu0 0.0
      %1747 = vmatprep.subr.mxu0 0.0
      %1748 = vmatpush1.msra.mxu0 0.0
      %1749 = vmatprep.subr.mxu0 0.0
      %1750 = vmatpush1.msra.mxu0 0.0
      %1751 = vmatprep.subr.mxu0 0.0
      %1752 = vmatpush1.msra.mxu0 0.0
      %1753 = vmatprep.subr.mxu0 0.0
      %1754 = vmatpush1.msra.mxu0 0.0
      %1755 = vmatprep.subr.mxu0 0.0
      %1756 = vmatpush1.msra.mxu0 0.0
      %1757 = vmatprep.subr.mxu0 0.0
      %1758 = vmatpush1.msra.mxu0 0.0
      %1759 = vmatprep.subr.mxu0 0.0
      %1760 = vmatpush1.msra.mxu0 0.0
      %1761 = vmatprep.subr.mxu0 0.0
      %1762 = vmatpush1.msra.mxu0 0.0
      %1763 = vmatprep.subr.mxu0 0.0
      %1764 = vmatpush1.msra.mxu0 0.0
      %1765 = vmatprep.subr.mxu0 0.0
      %1766 = vmatpush1.msra.mxu0 0.0
      %1767 = vmatprep.subr.mxu0 0.0
      %1768 = vmatpush1.msra.mxu0 0.0
      %1769 = vmatprep.subr.mxu0 0.0
      %1770 = vmatpush1.msra.mxu0 0.0
      %1771 = vmatprep.subr.mxu0 0.0
      %1772 = vmatpush1.msra.mxu0 0.0
      %1773 = vmatprep.subr.mxu0 0.0
      %1774 = vmatpush1.msra.mxu0 0.0
      %1775 = vmatprep.subr.mxu0 0.0
      %1776 = vmatpush1.msra.mxu0 0.0
      %1777 = vmatprep.subr.mxu0 0.0
      %1778 = vmatpush1.msra.mxu0 0.0
      %1779 = vmatprep.mubr.f32.mxu0 0.0
      %1780 = vmatmul.mubr.f32.gmra.mrb[0].mxu0 %v944
      %v1781 = vpop.f32.mrb[0].mxu0
      %v1782 = vadd.f32 0.0, %v1781
      %v1783 = vpop.f32.mrb[0].mxu0
      %1784 = vmatprep.mubr.f32.mxu0 0.0
      %1785 = vmatmul.mubr.f32.gmra.mrb[0].mxu0 %v947
      %v1786 = vpop.f32.mrb[0].mxu0
      %v1787 = vadd.f32 0.0, %v1786
      %v1788 = vpop.f32.mrb[0].mxu0
      %1789 = vmatprep.mubr.f32.mxu0 0.0
      %1790 = vmatmul.mubr.f32.gmra.mrb[0].mxu0 %v950
      %v1791 = vpop.f32.mrb[0].mxu0
      %v1792 = vadd.f32 0.0, %v1791
      %v1793 = vpop.f32.mrb[0].mxu0
      %1794 = vmatprep.mubr.f32.mxu0 0.0
      %1795 = vmatmul.mubr.f32.gmra.mrb[0].mxu0 %v953
      %v1796 = vpop.f32.mrb[0].mxu0
      %v1797 = vadd.f32 0.0, %v1796
      %v1798 = vpop.f32.mrb[0].mxu0
      %1799 = vmatprep.mubr.f32.mxu0 0.0
      %1800 = vmatmul.mubr.f32.gmra.mrb[0].mxu0 %v956
      %v1801 = vpop.f32.mrb[0].mxu0
      %v1802 = vadd.f32 0.0, %v1801
      %v1803 = vpop.f32.mrb[0].mxu0
      %1804 = vmatprep.mubr.f32.mxu0 0.0
      %1805 = vmatmul.mubr.f32.gmra.mrb[0].mxu0 %v959
      %v1806 = vpop.f32.mrb[0].mxu0
      %v1807 = vadd.f32 0.0, %v1806
      %v1808 = vpop.f32.mrb[0].mxu0
      %1809 = vmatprep.mubr.f32.mxu0 0.0
      %1810 = vmatmul.mubr.f32.gmra.mrb[0].mxu0 %v962
      %v1811 = vpop.f32.mrb[0].mxu0
      %v1812 = vadd.f32 0.0, %v1811
      %v1813 = vpop.f32.mrb[0].mxu0
      %1814 = vmatprep.mubr.f32.mxu0 0.0
      %1815 = vmatmul.mubr.f32.gmra.mrb[0].mxu0 %v965
      %v1816 = vpop.f32.mrb[0].mxu0
      %v1817 = vadd.f32 0.0, %v1816
      %v1818 = vpop.f32.mrb[0].mxu0
      %1819 = vmatprep.mubr.f32.mxu0 0.0
      %1820 = vmatmul.mubr.f32.gmra.mrb[0].mxu0 %v968
      %v1821 = vpop.f32.mrb[0].mxu0
      %v1822 = vadd.f32 0.0, %v1821
      %v1823 = vpop.f32.mrb[0].mxu0
      %1824 = vmatprep.mubr.f32.mxu0 0.0
      %1825 = vmatmul.mubr.f32.gmra.mrb[0].mxu0 %v971
      %v1826 = vpop.f32.mrb[0].mxu0
      %v1827 = vadd.f32 0.0, %v1826
      %v1828 = vpop.f32.mrb[0].mxu0
      %1829 = vmatprep.mubr.f32.mxu0 0.0
      %1830 = vmatmul.mubr.f32.gmra.mrb[0].mxu0 %v974
      %v1831 = vpop.f32.mrb[0].mxu0
      %v1832 = vadd.f32 0.0, %v1831
      %v1833 = vpop.f32.mrb[0].mxu0
      %1834 = vmatprep.mubr.f32.mxu0 0.0
      %1835 = vmatmul.mubr.f32.gmra.mrb[0].mxu0 %v977
      %v1836 = vpop.f32.mrb[0].mxu0
      %v1837 = vadd.f32 0.0, %v1836
      %v1838 = vpop.f32.mrb[0].mxu0
      %1839 = vmatprep.mubr.f32.mxu0 0.0
      %1840 = vmatmul.mubr.f32.gmra.mrb[0].mxu0 %v980
      %v1841 = vpop.f32.mrb[0].mxu0
      %v1842 = vadd.f32 0.0, %v1841
      %v1843 = vpop.f32.mrb[0].mxu0
      %1844 = vmatprep.mubr.f32.mxu0 0.0
      %1845 = vmatmul.mubr.f32.gmra.mrb[0].mxu0 %v983
      %v1846 = vpop.f32.mrb[0].mxu0
      %v1847 = vadd.f32 0.0, %v1846
      %v1848 = vpop.f32.mrb[0].mxu0
      %1849 = vmatprep.mubr.f32.mxu0 0.0
      %1850 = vmatmul.mubr.f32.gmra.mrb[0].mxu0 %v986
      %v1851 = vpop.f32.mrb[0].mxu0
      %v1852 = vadd.f32 0.0, %v1851
      %v1853 = vpop.f32.mrb[0].mxu0
      %1854 = vmatprep.mubr.f32.mxu0 0.0
      %1855 = vmatmul.mubr.f32.gmra.mrb[0].mxu0 %v989
      %v1856 = vpop.f32.mrb[0].mxu0
      %v1857 = vadd.f32 0.0, %v1856
      %v1858 = vpop.f32.mrb[0].mxu0
      %1859 = vmatprep.mubr.f32.mxu0 0.0
      %1860 = vmatmul.mubr.f32.gmra.mrb[0].mxu0 %v992
      %v1861 = vpop.f32.mrb[0].mxu0
      %v1862 = vadd.f32 0.0, %v1861
      %v1863 = vpop.f32.mrb[0].mxu0
      %1864 = vmatprep.mubr.f32.mxu0 0.0
      %1865 = vmatmul.mubr.f32.gmra.mrb[0].mxu0 %v995
      %v1866 = vpop.f32.mrb[0].mxu0
      %v1867 = vadd.f32 0.0, %v1866
      %v1868 = vpop.f32.mrb[0].mxu0
      %1869 = vmatprep.mubr.f32.mxu0 0.0
      %1870 = vmatmul.mubr.f32.gmra.mrb[0].mxu0 %v998
      %v1871 = vpop.f32.mrb[0].mxu0
      %v1872 = vadd.f32 0.0, %v1871
      %v1873 = vpop.f32.mrb[0].mxu0
      %1874 = vmatprep.mubr.f32.mxu0 0.0
      %1875 = vmatmul.mubr.f32.gmra.mrb[0].mxu0 %v1001
      %v1876 = vpop.f32.mrb[0].mxu0
      %v1877 = vadd.f32 0.0, %v1876
      %v1878 = vpop.f32.mrb[0].mxu0
      %1879 = vmatprep.mubr.f32.mxu0 0.0
      %1880 = vmatmul.mubr.f32.gmra.mrb[0].mxu0 %v1004
      %v1881 = vpop.f32.mrb[0].mxu0
      %v1882 = vadd.f32 0.0, %v1881
      %v1883 = vpop.f32.mrb[0].mxu0
      %1884 = vmatprep.mubr.f32.mxu0 0.0
      %1885 = vmatmul.mubr.f32.gmra.mrb[0].mxu0 %v1007
      %v1886 = vpop.f32.mrb[0].mxu0
      %v1887 = vadd.f32 0.0, %v1886
      %v1888 = vpop.f32.mrb[0].mxu0
      %1889 = vmatprep.mubr.f32.mxu0 0.0
      %1890 = vmatmul.mubr.f32.gmra.mrb[0].mxu0 %v1010
      %v1891 = vpop.f32.mrb[0].mxu0
      %v1892 = vadd.f32 0.0, %v1891
      %v1893 = vpop.f32.mrb[0].mxu0
      %1894 = vmatprep.mubr.f32.mxu0 0.0
      %1895 = vmatmul.mubr.f32.gmra.mrb[0].mxu0 %v1013
      %v1896 = vpop.f32.mrb[0].mxu0
      %v1897 = vadd.f32 0.0, %v1896
      %v1898 = vpop.f32.mrb[0].mxu0
      %1899 = vmatprep.mubr.f32.mxu0 0.0
      %1900 = vmatmul.mubr.f32.gmra.mrb[0].mxu0 %v1016
      %v1901 = vpop.f32.mrb[0].mxu0
      %v1902 = vadd.f32 0.0, %v1901
      %v1903 = vpop.f32.mrb[0].mxu0
      %1904 = vmatprep.mubr.f32.mxu0 0.0
      %1905 = vmatmul.mubr.f32.gmra.mrb[0].mxu0 %v1019
      %v1906 = vpop.f32.mrb[0].mxu0
      %v1907 = vadd.f32 0.0, %v1906
      %v1908 = vpop.f32.mrb[0].mxu0
      %1909 = vmatprep.mubr.f32.mxu0 0.0
      %1910 = vmatmul.mubr.f32.gmra.mrb[0].mxu0 %v1022
      %v1911 = vpop.f32.mrb[0].mxu0
      %v1912 = vadd.f32 0.0, %v1911
      %v1913 = vpop.f32.mrb[0].mxu0
      %1914 = vmatprep.mubr.f32.mxu0 0.0
      %1915 = vmatmul.mubr.f32.gmra.mrb[0].mxu0 %v1025
      %v1916 = vpop.f32.mrb[0].mxu0
      %v1917 = vadd.f32 0.0, %v1916
      %v1918 = vpop.f32.mrb[0].mxu0
      %1919 = vmatprep.mubr.f32.mxu0 0.0
      %1920 = vmatmul.mubr.f32.gmra.mrb[0].mxu0 %v1028
      %v1921 = vpop.f32.mrb[0].mxu0
      %v1922 = vadd.f32 0.0, %v1921
      %v1923 = vpop.f32.mrb[0].mxu0
      %1924 = vmatprep.mubr.f32.mxu0 0.0
      %1925 = vmatmul.mubr.f32.gmra.mrb[0].mxu0 %v1031
      %v1926 = vpop.f32.mrb[0].mxu0
      %v1927 = vadd.f32 0.0, %v1926
      %v1928 = vpop.f32.mrb[0].mxu0
      %1929 = vmatprep.mubr.f32.mxu0 0.0
      %1930 = vmatmul.mubr.f32.gmra.mrb[0].mxu0 %v1034
      %v1931 = vpop.f32.mrb[0].mxu0
      %v1932 = vadd.f32 0.0, %v1931
      %v1933 = vpop.f32.mrb[0].mxu0
      %1934 = vmatprep.mubr.f32.mxu0 0.0
      %1935 = vmatmul.mubr.f32.gmra.mrb[0].mxu0 %v1037
      %v1936 = vpop.f32.mrb[0].mxu0
      %v1937 = vadd.f32 0.0, %v1936
      %v1938 = vpop.f32.mrb[0].mxu0
      %1939 = vmatprep.mubr.f32.mxu0 0.0
      %1940 = vmatmul.mubr.f32.gmra.mrb[0].mxu0 %v1040
      %v1941 = vpop.f32.mrb[0].mxu0
      %v1942 = vadd.f32 0.0, %v1941
      %v1943 = vpop.f32.mrb[0].mxu0
      %1944 = vmatprep.mubr.f32.mxu0 0.0
      %1945 = vmatmul.mubr.f32.gmra.mrb[0].mxu0 %v1043
      %v1946 = vpop.f32.mrb[0].mxu0
      %v1947 = vadd.f32 0.0, %v1946
      %v1948 = vpop.f32.mrb[0].mxu0
      %1949 = vmatprep.mubr.f32.mxu0 0.0
      %1950 = vmatmul.mubr.f32.gmra.mrb[0].mxu0 %v1046
      %v1951 = vpop.f32.mrb[0].mxu0
      %v1952 = vadd.f32 0.0, %v1951
      %v1953 = vpop.f32.mrb[0].mxu0
      %1954 = vmatprep.mubr.f32.mxu0 0.0
      %1955 = vmatmul.mubr.f32.gmra.mrb[0].mxu0 %v1049
      %v1956 = vpop.f32.mrb[0].mxu0
      %v1957 = vadd.f32 0.0, %v1956
      %v1958 = vpop.f32.mrb[0].mxu0
      %1959 = vmatprep.mubr.f32.mxu0 0.0
      %1960 = vmatmul.mubr.f32.gmra.mrb[0].mxu0 %v1052
      %v1961 = vpop.f32.mrb[0].mxu0
      %v1962 = vadd.f32 0.0, %v1961
      %v1963 = vpop.f32.mrb[0].mxu0
      %1964 = vmatprep.mubr.f32.mxu0 0.0
      %1965 = vmatmul.mubr.f32.gmra.mrb[0].mxu0 %v1055
      %v1966 = vpop.f32.mrb[0].mxu0
      %v1967 = vadd.f32 0.0, %v1966
      %v1968 = vpop.f32.mrb[0].mxu0
      %1969 = vmatprep.mubr.f32.mxu0 0.0
      %1970 = vmatmul.mubr.f32.gmra.mrb[0].mxu0 %v1058
      %v1971 = vpop.f32.mrb[0].mxu0
      %v1972 = vadd.f32 0.0, %v1971
      %v1973 = vpop.f32.mrb[0].mxu0
      %1974 = vmatprep.mubr.f32.mxu0 0.0
      %1975 = vmatmul.mubr.f32.gmra.mrb[0].mxu0 %v1061
      %v1976 = vpop.f32.mrb[0].mxu0
      %v1977 = vadd.f32 0.0, %v1976
      %v1978 = vpop.f32.mrb[0].mxu0
      %1979 = vmatprep.mubr.f32.mxu0 0.0
      %1980 = vmatmul.mubr.f32.gmra.mrb[0].mxu0 %v1064
      %v1981 = vpop.f32.mrb[0].mxu0
      %v1982 = vadd.f32 0.0, %v1981
      %v1983 = vpop.f32.mrb[0].mxu0
      %1984 = vmatprep.mubr.f32.mxu0 0.0
      %1985 = vmatmul.mubr.f32.gmra.mrb[0].mxu0 %v1067
      %v1986 = vpop.f32.mrb[0].mxu0
      %v1987 = vadd.f32 0.0, %v1986
      %v1988 = vpop.f32.mrb[0].mxu0
      %1989 = vmatprep.mubr.f32.mxu0 0.0
      %1990 = vmatmul.mubr.f32.gmra.mrb[0].mxu0 %v1070
      %v1991 = vpop.f32.mrb[0].mxu0
      %v1992 = vadd.f32 0.0, %v1991
      %v1993 = vpop.f32.mrb[0].mxu0
      %1994 = vmatprep.mubr.f32.mxu0 0.0
      %1995 = vmatmul.mubr.f32.gmra.mrb[0].mxu0 %v1073
      %v1996 = vpop.f32.mrb[0].mxu0
      %v1997 = vadd.f32 0.0, %v1996
      %v1998 = vpop.f32.mrb[0].mxu0
      %1999 = vmatprep.mubr.f32.mxu0 0.0
      %2000 = vmatmul.mubr.f32.gmra.mrb[0].mxu0 %v1076
      %v2001 = vpop.f32.mrb[0].mxu0
      %v2002 = vadd.f32 0.0, %v2001
      %v2003 = vpop.f32.mrb[0].mxu0
      %2004 = vmatprep.mubr.f32.mxu0 0.0
      %2005 = vmatmul.mubr.f32.gmra.mrb[0].mxu0 %v1079
      %v2006 = vpop.f32.mrb[0].mxu0
      %v2007 = vadd.f32 0.0, %v2006
      %v2008 = vpop.f32.mrb[0].mxu0
      %2009 = vmatprep.mubr.f32.mxu0 0.0
      %2010 = vmatmul.mubr.f32.gmra.mrb[0].mxu0 %v1082
      %v2011 = vpop.f32.mrb[0].mxu0
      %v2012 = vadd.f32 0.0, %v2011
      %v2013 = vpop.f32.mrb[0].mxu0
      %2014 = vmatprep.mubr.f32.mxu0 0.0
      %2015 = vmatmul.mubr.f32.gmra.mrb[0].mxu0 %v1085
      %v2016 = vpop.f32.mrb[0].mxu0
      %v2017 = vadd.f32 0.0, %v2016
      %v2018 = vpop.f32.mrb[0].mxu0
      %2019 = vmatprep.mubr.f32.mxu0 0.0
      %2020 = vmatmul.mubr.f32.gmra.mrb[0].mxu0 %v1088
      %v2021 = vpop.f32.mrb[0].mxu0
      %v2022 = vadd.f32 0.0, %v2021
      %v2023 = vpop.f32.mrb[0].mxu0
      %2024 = vmatprep.mubr.f32.mxu0 0.0
      %2025 = vmatmul.mubr.f32.gmra.mrb[0].mxu0 %v1091
      %v2026 = vpop.f32.mrb[0].mxu0
      %v2027 = vadd.f32 0.0, %v2026
      %v2028 = vpop.f32.mrb[0].mxu0
      %2029 = vmatprep.mubr.f32.mxu0 0.0
      %2030 = vmatmul.mubr.f32.gmra.mrb[0].mxu0 %v1094
      %v2031 = vpop.f32.mrb[0].mxu0
      %v2032 = vadd.f32 0.0, %v2031
      %v2033 = vpop.f32.mrb[0].mxu0
      %2034 = vmatprep.mubr.f32.mxu0 0.0
      %2035 = vmatmul.mubr.f32.gmra.mrb[0].mxu0 %v1097
      %v2036 = vpop.f32.mrb[0].mxu0
      %v2037 = vadd.f32 0.0, %v2036
      %v2038 = vpop.f32.mrb[0].mxu0
      %2039 = vmatprep.mubr.f32.mxu0 0.0
      %2040 = vmatmul.mubr.f32.gmra.mrb[0].mxu0 %v1100
      %v2041 = vpop.f32.mrb[0].mxu0
      %v2042 = vadd.f32 0.0, %v2041
      %v2043 = vpop.f32.mrb[0].mxu0
      %2044 = vmatprep.mubr.f32.mxu0 0.0
      %2045 = vmatmul.mubr.f32.gmra.mrb[0].mxu0 %v1103
      %v2046 = vpop.f32.mrb[0].mxu0
      %v2047 = vadd.f32 0.0, %v2046
      %v2048 = vpop.f32.mrb[0].mxu0
      %2049 = vmatprep.mubr.f32.mxu0 0.0
      %2050 = vmatmul.mubr.f32.gmra.mrb[0].mxu0 %v1106
      %v2051 = vpop.f32.mrb[0].mxu0
      %v2052 = vadd.f32 0.0, %v2051
      %v2053 = vpop.f32.mrb[0].mxu0
      %2054 = vmatprep.mubr.f32.mxu0 0.0
      %2055 = vmatmul.mubr.f32.gmra.mrb[0].mxu0 %v1109
      %v2056 = vpop.f32.mrb[0].mxu0
      %v2057 = vadd.f32 0.0, %v2056
      %v2058 = vpop.f32.mrb[0].mxu0
      %2059 = vmatprep.mubr.f32.mxu0 0.0
      %2060 = vmatmul.mubr.f32.gmra.mrb[0].mxu0 %v1112
      %v2061 = vpop.f32.mrb[0].mxu0
      %v2062 = vadd.f32 0.0, %v2061
      %v2063 = vpop.f32.mrb[0].mxu0
      %2064 = vmatprep.mubr.f32.mxu0 0.0
      %2065 = vmatmul.mubr.f32.gmra.mrb[0].mxu0 %v1115
      %v2066 = vpop.f32.mrb[0].mxu0
      %v2067 = vadd.f32 0.0, %v2066
      %v2068 = vpop.f32.mrb[0].mxu0
      %2069 = vmatprep.mubr.f32.mxu0 0.0
      %2070 = vmatmul.mubr.f32.gmra.mrb[0].mxu0 %v1118
      %v2071 = vpop.f32.mrb[0].mxu0
      %v2072 = vadd.f32 0.0, %v2071
      %v2073 = vpop.f32.mrb[0].mxu0
      %2074 = vmatprep.mubr.f32.mxu0 0.0
      %2075 = vmatmul.mubr.f32.gmra.mrb[0].mxu0 %v1121
      %v2076 = vpop.f32.mrb[0].mxu0
      %v2077 = vadd.f32 0.0, %v2076
      %v2078 = vpop.f32.mrb[0].mxu0
      %2079 = vmatprep.mubr.f32.mxu0 0.0
      %2080 = vmatmul.mubr.f32.gmra.mrb[0].mxu0 %v1124
      %v2081 = vpop.f32.mrb[0].mxu0
      %v2082 = vadd.f32 0.0, %v2081
      %v2083 = vpop.f32.mrb[0].mxu0
      %2084 = vmatprep.mubr.f32.mxu0 0.0
      %2085 = vmatmul.mubr.f32.gmra.mrb[0].mxu0 %v1127
      %v2086 = vpop.f32.mrb[0].mxu0
      %v2087 = vadd.f32 0.0, %v2086
      %v2088 = vpop.f32.mrb[0].mxu0
      %2089 = vmatprep.mubr.f32.mxu0 0.0
      %2090 = vmatmul.mubr.f32.gmra.mrb[0].mxu0 %v1130
      %v2091 = vpop.f32.mrb[0].mxu0
      %v2092 = vadd.f32 0.0, %v2091
      %v2093 = vpop.f32.mrb[0].mxu0
      %2094 = vmatprep.mubr.f32.mxu0 0.0
      %2095 = vmatmul.mubr.f32.gmra.mrb[0].mxu0 %v1133
      %v2096 = vpop.f32.mrb[0].mxu0
      %v2097 = vadd.f32 0.0, %v2096
      %v2098 = vpop.f32.mrb[0].mxu0
      %2099 = vmatprep.mubr.f32.mxu0 0.0
      %2100 = vmatmul.mubr.f32.gmra.mrb[0].mxu0 %v1136
      %v2101 = vpop.f32.mrb[0].mxu0
      %v2102 = vadd.f32 0.0, %v2101
      %v2103 = vpop.f32.mrb[0].mxu0
      %2104 = vmatprep.mubr.f32.mxu0 0.0
      %2105 = vmatmul.mubr.f32.gmra.mrb[0].mxu0 %v1139
      %v2106 = vpop.f32.mrb[0].mxu0
      %v2107 = vadd.f32 0.0, %v2106
      %v2108 = vpop.f32.mrb[0].mxu0
      %2109 = vmatprep.mubr.f32.mxu0 0.0
      %2110 = vmatmul.mubr.f32.gmra.mrb[0].mxu0 %v1142
      %v2111 = vpop.f32.mrb[0].mxu0
      %v2112 = vadd.f32 0.0, %v2111
      %v2113 = vpop.f32.mrb[0].mxu0
      %2114 = vmatprep.mubr.f32.mxu0 0.0
      %2115 = vmatmul.mubr.f32.gmra.mrb[0].mxu0 %v1145
      %v2116 = vpop.f32.mrb[0].mxu0
      %v2117 = vadd.f32 0.0, %v2116
      %v2118 = vpop.f32.mrb[0].mxu0
      %2119 = vmatprep.mubr.f32.mxu0 0.0
      %2120 = vmatmul.mubr.f32.gmra.mrb[0].mxu0 %v1148
      %v2121 = vpop.f32.mrb[0].mxu0
      %v2122 = vadd.f32 0.0, %v2121
      %v2123 = vpop.f32.mrb[0].mxu0
      %2124 = vmatprep.mubr.f32.mxu0 0.0
      %2125 = vmatmul.mubr.f32.gmra.mrb[0].mxu0 %v1151
      %v2126 = vpop.f32.mrb[0].mxu0
      %v2127 = vadd.f32 0.0, %v2126
      %v2128 = vpop.f32.mrb[0].mxu0
      %2129 = vmatprep.mubr.f32.mxu0 0.0
      %2130 = vmatmul.mubr.f32.gmra.mrb[0].mxu0 %v1154
      %v2131 = vpop.f32.mrb[0].mxu0
      %v2132 = vadd.f32 0.0, %v2131
      %v2133 = vpop.f32.mrb[0].mxu0
      %2134 = vmatprep.mubr.f32.mxu0 0.0
      %2135 = vmatmul.mubr.f32.gmra.mrb[0].mxu0 %v1157
      %v2136 = vpop.f32.mrb[0].mxu0
      %v2137 = vadd.f32 0.0, %v2136
      %v2138 = vpop.f32.mrb[0].mxu0
      %2139 = vmatprep.mubr.f32.mxu0 0.0
      %2140 = vmatmul.mubr.f32.gmra.mrb[0].mxu0 %v1160
      %v2141 = vpop.f32.mrb[0].mxu0
      %v2142 = vadd.f32 0.0, %v2141
      %v2143 = vpop.f32.mrb[0].mxu0
      %2144 = vmatprep.mubr.f32.mxu0 0.0
      %2145 = vmatmul.mubr.f32.gmra.mrb[0].mxu0 %v1163
      %v2146 = vpop.f32.mrb[0].mxu0
      %v2147 = vadd.f32 0.0, %v2146
      %v2148 = vpop.f32.mrb[0].mxu0
      %2149 = vmatprep.mubr.f32.mxu0 0.0
      %2150 = vmatmul.mubr.f32.gmra.mrb[0].mxu0 %v1166
      %v2151 = vpop.f32.mrb[0].mxu0
      %v2152 = vadd.f32 0.0, %v2151
      %v2153 = vpop.f32.mrb[0].mxu0
      %2154 = vmatprep.mubr.f32.mxu0 0.0
      %2155 = vmatmul.mubr.f32.gmra.mrb[0].mxu0 %v1169
      %v2156 = vpop.f32.mrb[0].mxu0
      %v2157 = vadd.f32 0.0, %v2156
      %v2158 = vpop.f32.mrb[0].mxu0
      %2159 = vmatprep.mubr.f32.mxu0 0.0
      %2160 = vmatmul.mubr.f32.gmra.mrb[0].mxu0 %v1172
      %v2161 = vpop.f32.mrb[0].mxu0
      %v2162 = vadd.f32 0.0, %v2161
      %v2163 = vpop.f32.mrb[0].mxu0
      %2164 = vmatprep.mubr.f32.mxu0 0.0
      %2165 = vmatmul.mubr.f32.gmra.mrb[0].mxu0 %v1175
      %v2166 = vpop.f32.mrb[0].mxu0
      %v2167 = vadd.f32 0.0, %v2166
      %v2168 = vpop.f32.mrb[0].mxu0
      %2169 = vmatprep.mubr.f32.mxu0 0.0
      %2170 = vmatmul.mubr.f32.gmra.mrb[0].mxu0 %v1178
      %v2171 = vpop.f32.mrb[0].mxu0
      %v2172 = vadd.f32 0.0, %v2171
      %v2173 = vpop.f32.mrb[0].mxu0
      %2174 = vmatprep.mubr.f32.mxu0 0.0
      %2175 = vmatmul.mubr.f32.gmra.mrb[0].mxu0 %v1181
      %v2176 = vpop.f32.mrb[0].mxu0
      %v2177 = vadd.f32 0.0, %v2176
      %v2178 = vpop.f32.mrb[0].mxu0
      %2179 = vmatprep.mubr.f32.mxu0 0.0
      %2180 = vmatmul.mubr.f32.gmra.mrb[0].mxu0 %v1184
      %v2181 = vpop.f32.mrb[0].mxu0
      %v2182 = vadd.f32 0.0, %v2181
      %v2183 = vpop.f32.mrb[0].mxu0
      %2184 = vmatprep.mubr.f32.mxu0 0.0
      %2185 = vmatmul.mubr.f32.gmra.mrb[0].mxu0 %v1187
      %v2186 = vpop.f32.mrb[0].mxu0
      %v2187 = vadd.f32 0.0, %v2186
      %v2188 = vpop.f32.mrb[0].mxu0
      %2189 = vmatprep.mubr.f32.mxu0 0.0
      %2190 = vmatmul.mubr.f32.gmra.mrb[0].mxu0 %v1190
      %v2191 = vpop.f32.mrb[0].mxu0
      %v2192 = vadd.f32 0.0, %v2191
      %v2193 = vpop.f32.mrb[0].mxu0
      %2194 = vmatprep.mubr.f32.mxu0 0.0
      %2195 = vmatmul.mubr.f32.gmra.mrb[0].mxu0 %v1193
      %v2196 = vpop.f32.mrb[0].mxu0
      %v2197 = vadd.f32 0.0, %v2196
      %v2198 = vpop.f32.mrb[0].mxu0
      %2199 = vmatprep.mubr.f32.mxu0 0.0
      %2200 = vmatmul.mubr.f32.gmra.mrb[0].mxu0 %v1196
      %v2201 = vpop.f32.mrb[0].mxu0
      %v2202 = vadd.f32 0.0, %v2201
      %v2203 = vpop.f32.mrb[0].mxu0
      %2204 = vmatprep.mubr.f32.mxu0 0.0
      %2205 = vmatmul.mubr.f32.gmra.mrb[0].mxu0 %v1199
      %v2206 = vpop.f32.mrb[0].mxu0
      %v2207 = vadd.f32 0.0, %v2206
      %v2208 = vpop.f32.mrb[0].mxu0
      %2209 = vmatprep.mubr.f32.mxu0 0.0
      %2210 = vmatmul.mubr.f32.gmra.mrb[0].mxu0 %v1202
      %v2211 = vpop.f32.mrb[0].mxu0
      %v2212 = vadd.f32 0.0, %v2211
      %v2213 = vpop.f32.mrb[0].mxu0
      %2214 = vmatprep.mubr.f32.mxu0 0.0
      %2215 = vmatmul.mubr.f32.gmra.mrb[0].mxu0 %v1205
      %v2216 = vpop.f32.mrb[0].mxu0
      %v2217 = vadd.f32 0.0, %v2216
      %v2218 = vpop.f32.mrb[0].mxu0
      %2219 = vmatprep.mubr.f32.mxu0 0.0
      %2220 = vmatmul.mubr.f32.gmra.mrb[0].mxu0 %v1208
      %v2221 = vpop.f32.mrb[0].mxu0
      %v2222 = vadd.f32 0.0, %v2221
      %v2223 = vpop.f32.mrb[0].mxu0
      %2224 = vmatprep.mubr.f32.mxu0 0.0
      %2225 = vmatmul.mubr.f32.gmra.mrb[0].mxu0 %v1211
      %v2226 = vpop.f32.mrb[0].mxu0
      %v2227 = vadd.f32 0.0, %v2226
      %v2228 = vpop.f32.mrb[0].mxu0
      %2229 = vmatprep.mubr.f32.mxu0 0.0
      %2230 = vmatmul.mubr.f32.gmra.mrb[0].mxu0 %v1214
      %v2231 = vpop.f32.mrb[0].mxu0
      %v2232 = vadd.f32 0.0, %v2231
      %v2233 = vpop.f32.mrb[0].mxu0
      %2234 = vmatprep.mubr.f32.mxu0 0.0
      %2235 = vmatmul.mubr.f32.gmra.mrb[0].mxu0 %v1217
      %v2236 = vpop.f32.mrb[0].mxu0
      %v2237 = vadd.f32 0.0, %v2236
      %v2238 = vpop.f32.mrb[0].mxu0
      %2239 = vmatprep.mubr.f32.mxu0 0.0
      %2240 = vmatmul.mubr.f32.gmra.mrb[0].mxu0 %v1220
      %v2241 = vpop.f32.mrb[0].mxu0
      %v2242 = vadd.f32 0.0, %v2241
      %v2243 = vpop.f32.mrb[0].mxu0
      %2244 = vmatprep.mubr.f32.mxu0 0.0
      %2245 = vmatmul.mubr.f32.gmra.mrb[0].mxu0 %v1223
      %v2246 = vpop.f32.mrb[0].mxu0
      %v2247 = vadd.f32 0.0, %v2246
      %v2248 = vpop.f32.mrb[0].mxu0
      %2249 = vmatprep.mubr.f32.mxu0 0.0
      %2250 = vmatmul.mubr.f32.gmra.mrb[0].mxu0 %v1226
      %v2251 = vpop.f32.mrb[0].mxu0
      %v2252 = vadd.f32 0.0, %v2251
      %v2253 = vpop.f32.mrb[0].mxu0
      %2254 = vmatprep.mubr.f32.mxu0 0.0
      %2255 = vmatmul.mubr.f32.gmra.mrb[0].mxu0 %v1229
      %v2256 = vpop.f32.mrb[0].mxu0
      %v2257 = vadd.f32 0.0, %v2256
      %v2258 = vpop.f32.mrb[0].mxu0
      %2259 = vmatprep.mubr.f32.mxu0 0.0
      %2260 = vmatmul.mubr.f32.gmra.mrb[0].mxu0 %v1232
      %v2261 = vpop.f32.mrb[0].mxu0
      %v2262 = vadd.f32 0.0, %v2261
      %v2263 = vpop.f32.mrb[0].mxu0
      %2264 = vmatprep.mubr.f32.mxu0 0.0
      %2265 = vmatmul.mubr.f32.gmra.mrb[0].mxu0 %v1235
      %v2266 = vpop.f32.mrb[0].mxu0
      %v2267 = vadd.f32 0.0, %v2266
      %v2268 = vpop.f32.mrb[0].mxu0
      %2269 = vmatprep.mubr.f32.mxu0 0.0
      %2270 = vmatmul.mubr.f32.gmra.mrb[0].mxu0 %v1238
      %v2271 = vpop.f32.mrb[0].mxu0
      %v2272 = vadd.f32 0.0, %v2271
      %v2273 = vpop.f32.mrb[0].mxu0
      %2274 = vmatprep.mubr.f32.mxu0 0.0
      %2275 = vmatmul.mubr.f32.gmra.mrb[0].mxu0 %v1241
      %v2276 = vpop.f32.mrb[0].mxu0
      %v2277 = vadd.f32 0.0, %v2276
      %v2278 = vpop.f32.mrb[0].mxu0
      %2279 = vmatprep.mubr.f32.mxu0 0.0
      %2280 = vmatmul.mubr.f32.gmra.mrb[0].mxu0 %v1244
      %v2281 = vpop.f32.mrb[0].mxu0
      %v2282 = vadd.f32 0.0, %v2281
      %v2283 = vpop.f32.mrb[0].mxu0
      %2284 = vmatprep.mubr.f32.mxu0 0.0
      %2285 = vmatmul.mubr.f32.gmra.mrb[0].mxu0 %v1247
      %v2286 = vpop.f32.mrb[0].mxu0
      %v2287 = vadd.f32 0.0, %v2286
      %v2288 = vpop.f32.mrb[0].mxu0
      %2289 = vmatprep.mubr.f32.mxu0 0.0
      %2290 = vmatmul.mubr.f32.gmra.mrb[0].mxu0 %v1250
      %v2291 = vpop.f32.mrb[0].mxu0
      %v2292 = vadd.f32 0.0, %v2291
      %v2293 = vpop.f32.mrb[0].mxu0
      %2294 = vmatprep.mubr.f32.mxu0 0.0
      %2295 = vmatmul.mubr.f32.gmra.mrb[0].mxu0 %v1253
      %v2296 = vpop.f32.mrb[0].mxu0
      %v2297 = vadd.f32 0.0, %v2296
      %v2298 = vpop.f32.mrb[0].mxu0
      %2299 = vmatprep.mubr.f32.mxu0 0.0
      %2300 = vmatmul.mubr.f32.gmra.mrb[0].mxu0 %v1256
      %v2301 = vpop.f32.mrb[0].mxu0
      %v2302 = vadd.f32 0.0, %v2301
      %v2303 = vpop.f32.mrb[0].mxu0
      %2304 = vmatprep.mubr.f32.mxu0 0.0
      %2305 = vmatmul.mubr.f32.gmra.mrb[0].mxu0 %v1259
      %v2306 = vpop.f32.mrb[0].mxu0
      %v2307 = vadd.f32 0.0, %v2306
      %v2308 = vpop.f32.mrb[0].mxu0
      %2309 = vmatprep.mubr.f32.mxu0 0.0
      %2310 = vmatmul.mubr.f32.gmra.mrb[0].mxu0 %v1262
      %v2311 = vpop.f32.mrb[0].mxu0
      %v2312 = vadd.f32 0.0, %v2311
      %v2313 = vpop.f32.mrb[0].mxu0
      %2314 = vmatprep.mubr.f32.mxu0 0.0
      %2315 = vmatmul.mubr.f32.gmra.mrb[0].mxu0 %v1265
      %v2316 = vpop.f32.mrb[0].mxu0
      %v2317 = vadd.f32 0.0, %v2316
      %v2318 = vpop.f32.mrb[0].mxu0
      %2319 = vmatprep.mubr.f32.mxu0 0.0
      %2320 = vmatmul.mubr.f32.gmra.mrb[0].mxu0 %v1268
      %v2321 = vpop.f32.mrb[0].mxu0
      %v2322 = vadd.f32 0.0, %v2321
      %v2323 = vpop.f32.mrb[0].mxu0
      %2324 = vmatprep.mubr.f32.mxu0 0.0
      %2325 = vmatmul.mubr.f32.gmra.mrb[0].mxu0 %v1271
      %v2326 = vpop.f32.mrb[0].mxu0
      %v2327 = vadd.f32 0.0, %v2326
      %v2328 = vpop.f32.mrb[0].mxu0
      %2329 = vmatprep.mubr.f32.mxu0 0.0
      %2330 = vmatmul.mubr.f32.gmra.mrb[0].mxu0 %v1274
      %v2331 = vpop.f32.mrb[0].mxu0
      %v2332 = vadd.f32 0.0, %v2331
      %v2333 = vpop.f32.mrb[0].mxu0
      %2334 = vmatprep.mubr.f32.mxu0 0.0
      %2335 = vmatmul.mubr.f32.gmra.mrb[0].mxu0 %v1277
      %v2336 = vpop.f32.mrb[0].mxu0
      %v2337 = vadd.f32 0.0, %v2336
      %v2338 = vpop.f32.mrb[0].mxu0
      %2339 = vmatprep.mubr.f32.mxu0 0.0
      %2340 = vmatmul.mubr.f32.gmra.mrb[0].mxu0 %v1280
      %v2341 = vpop.f32.mrb[0].mxu0
      %v2342 = vadd.f32 0.0, %v2341
      %v2343 = vpop.f32.mrb[0].mxu0
      %2344 = vmatprep.mubr.f32.mxu0 0.0
      %2345 = vmatmul.mubr.f32.gmra.mrb[0].mxu0 %v1283
      %v2346 = vpop.f32.mrb[0].mxu0
      %v2347 = vadd.f32 0.0, %v2346
      %v2348 = vpop.f32.mrb[0].mxu0
      %2349 = vmatprep.mubr.f32.mxu0 0.0
      %2350 = vmatmul.mubr.f32.gmra.mrb[0].mxu0 %v1286
      %v2351 = vpop.f32.mrb[0].mxu0
      %v2352 = vadd.f32 0.0, %v2351
      %v2353 = vpop.f32.mrb[0].mxu0
      %2354 = vmatprep.mubr.f32.mxu0 0.0
      %2355 = vmatmul.mubr.f32.gmra.mrb[0].mxu0 %v1289
      %v2356 = vpop.f32.mrb[0].mxu0
      %v2357 = vadd.f32 0.0, %v2356
      %v2358 = vpop.f32.mrb[0].mxu0
      %2359 = vmatprep.mubr.f32.mxu0 0.0
      %2360 = vmatmul.mubr.f32.gmra.mrb[0].mxu0 %v1292
      %v2361 = vpop.f32.mrb[0].mxu0
      %v2362 = vadd.f32 0.0, %v2361
      %v2363 = vpop.f32.mrb[0].mxu0
      %2364 = vmatprep.mubr.f32.mxu0 0.0
      %2365 = vmatmul.mubr.f32.gmra.mrb[0].mxu0 %v1295
      %v2366 = vpop.f32.mrb[0].mxu0
      %v2367 = vadd.f32 0.0, %v2366
      %v2368 = vpop.f32.mrb[0].mxu0
      %2369 = vmatprep.mubr.f32.mxu0 0.0
      %2370 = vmatmul.mubr.f32.gmra.mrb[0].mxu0 %v1298
      %v2371 = vpop.f32.mrb[0].mxu0
      %v2372 = vadd.f32 0.0, %v2371
      %v2373 = vpop.f32.mrb[0].mxu0
      %2374 = vmatprep.mubr.f32.mxu0 0.0
      %2375 = vmatmul.mubr.f32.gmra.mrb[0].mxu0 %v1301
      %v2376 = vpop.f32.mrb[0].mxu0
      %v2377 = vadd.f32 0.0, %v2376
      %v2378 = vpop.f32.mrb[0].mxu0
      %2379 = vmatprep.mubr.f32.mxu0 0.0
      %2380 = vmatmul.mubr.f32.gmra.mrb[0].mxu0 %v1304
      %v2381 = vpop.f32.mrb[0].mxu0
      %v2382 = vadd.f32 0.0, %v2381
      %v2383 = vpop.f32.mrb[0].mxu0
      %2384 = vmatprep.mubr.f32.mxu0 0.0
      %2385 = vmatmul.mubr.f32.gmra.mrb[0].mxu0 %v1307
      %v2386 = vpop.f32.mrb[0].mxu0
      %v2387 = vadd.f32 0.0, %v2386
      %v2388 = vpop.f32.mrb[0].mxu0
      %2389 = vmatprep.mubr.f32.mxu0 0.0
      %2390 = vmatmul.mubr.f32.gmra.mrb[0].mxu0 %v1310
      %v2391 = vpop.f32.mrb[0].mxu0
      %v2392 = vadd.f32 0.0, %v2391
      %v2393 = vpop.f32.mrb[0].mxu0
      %2394 = vmatprep.mubr.f32.mxu0 0.0
      %2395 = vmatmul.mubr.f32.gmra.mrb[0].mxu0 %v1313
      %v2396 = vpop.f32.mrb[0].mxu0
      %v2397 = vadd.f32 0.0, %v2396
      %v2398 = vpop.f32.mrb[0].mxu0
      %2399 = vmatprep.mubr.f32.mxu0 0.0
      %2400 = vmatmul.mubr.f32.gmra.mrb[0].mxu0 %v1316
      %v2401 = vpop.f32.mrb[0].mxu0
      %v2402 = vadd.f32 0.0, %v2401
      %v2403 = vpop.f32.mrb[0].mxu0
      %2404 = vmatprep.mubr.f32.mxu0 0.0
      %2405 = vmatmul.mubr.f32.gmra.mrb[0].mxu0 %v1319
      %v2406 = vpop.f32.mrb[0].mxu0
      %v2407 = vadd.f32 0.0, %v2406
      %v2408 = vpop.f32.mrb[0].mxu0
      %2409 = vmatprep.mubr.f32.mxu0 0.0
      %2410 = vmatmul.mubr.f32.gmra.mrb[0].mxu0 %v1322
      %v2411 = vpop.f32.mrb[0].mxu0
      %v2412 = vadd.f32 0.0, %v2411
      %v2413 = vpop.f32.mrb[0].mxu0
      %2414 = vmatprep.mubr.f32.mxu0 0.0
      %2415 = vmatmul.mubr.f32.gmra.mrb[0].mxu0 %v1325
      %v2416 = vpop.f32.mrb[0].mxu0
      %v2417 = vadd.f32 0.0, %v2416
      %v2418 = vpop.f32.mrb[0].mxu0
      %2419 = vmatprep.mubr.f32.mxu0 0.0
      %2420 = vmatmul.mubr.f32.gmra.mrb[0].mxu0 %v1328
      %v2421 = vpop.f32.mrb[0].mxu0
      %v2422 = vadd.f32 0.0, %v2421
      %v2423 = vpop.f32.mrb[0].mxu0
      %2424 = vmatprep.mubr.f32.mxu0 0.0
      %2425 = vmatmul.mubr.f32.gmra.mrb[0].mxu0 %v1331
      %v2426 = vpop.f32.mrb[0].mxu0
      %v2427 = vadd.f32 0.0, %v2426
      %v2428 = vpop.f32.mrb[0].mxu0
      %2429 = vmatprep.mubr.f32.mxu0 0.0
      %2430 = vmatmul.mubr.f32.gmra.mrb[0].mxu0 %v1334
      %v2431 = vpop.f32.mrb[0].mxu0
      %v2432 = vadd.f32 0.0, %v2431
      %v2433 = vpop.f32.mrb[0].mxu0
      %2434 = vmatprep.mubr.f32.mxu0 0.0
      %2435 = vmatmul.mubr.f32.gmra.mrb[0].mxu0 %v1337
      %v2436 = vpop.f32.mrb[0].mxu0
      %v2437 = vadd.f32 0.0, %v2436
      %v2438 = vpop.f32.mrb[0].mxu0
      %2439 = vmatprep.mubr.f32.mxu0 0.0
      %2440 = vmatmul.mubr.f32.gmra.mrb[0].mxu0 %v1340
      %v2441 = vpop.f32.mrb[0].mxu0
      %v2442 = vadd.f32 0.0, %v2441
      %v2443 = vpop.f32.mrb[0].mxu0
      %2444 = vmatprep.mubr.f32.mxu0 0.0
      %2445 = vmatmul.mubr.f32.gmra.mrb[0].mxu0 %v1343
      %v2446 = vpop.f32.mrb[0].mxu0
      %v2447 = vadd.f32 0.0, %v2446
      %v2448 = vpop.f32.mrb[0].mxu0
      %2449 = vmatprep.mubr.f32.mxu0 0.0
      %2450 = vmatmul.mubr.f32.gmra.mrb[0].mxu0 %v1346
      %v2451 = vpop.f32.mrb[0].mxu0
      %v2452 = vadd.f32 0.0, %v2451
      %v2453 = vpop.f32.mrb[0].mxu0
      %2454 = vmatprep.mubr.f32.mxu0 0.0
      %2455 = vmatmul.mubr.f32.gmra.mrb[0].mxu0 %v1349
      %v2456 = vpop.f32.mrb[0].mxu0
      %v2457 = vadd.f32 0.0, %v2456
      %v2458 = vpop.f32.mrb[0].mxu0
      %2459 = vmatprep.mubr.f32.mxu0 0.0
      %2460 = vmatmul.mubr.f32.gmra.mrb[0].mxu0 %v1352
      %v2461 = vpop.f32.mrb[0].mxu0
      %v2462 = vadd.f32 0.0, %v2461
      %v2463 = vpop.f32.mrb[0].mxu0
      %2464 = vmatprep.mubr.f32.mxu0 0.0
      %2465 = vmatmul.mubr.f32.gmra.mrb[0].mxu0 %v1355
      %v2466 = vpop.f32.mrb[0].mxu0
      %v2467 = vadd.f32 0.0, %v2466
      %v2468 = vpop.f32.mrb[0].mxu0
      %2469 = vmatprep.mubr.f32.mxu0 0.0
      %2470 = vmatmul.mubr.f32.gmra.mrb[0].mxu0 %v1358
      %v2471 = vpop.f32.mrb[0].mxu0
      %v2472 = vadd.f32 0.0, %v2471
      %v2473 = vpop.f32.mrb[0].mxu0
      %2474 = vmatprep.mubr.f32.mxu0 0.0
      %2475 = vmatmul.mubr.f32.gmra.mrb[0].mxu0 %v1361
      %v2476 = vpop.f32.mrb[0].mxu0
      %v2477 = vadd.f32 0.0, %v2476
      %v2478 = vpop.f32.mrb[0].mxu0
      %2479 = vmatprep.mubr.f32.mxu0 0.0
      %2480 = vmatmul.mubr.f32.gmra.mrb[0].mxu0 %v1364
      %v2481 = vpop.f32.mrb[0].mxu0
      %v2482 = vadd.f32 0.0, %v2481
      %v2483 = vpop.f32.mrb[0].mxu0
      %2484 = vmatprep.mubr.f32.mxu0 0.0
      %2485 = vmatmul.mubr.f32.gmra.mrb[0].mxu0 %v1367
      %v2486 = vpop.f32.mrb[0].mxu0
      %v2487 = vadd.f32 0.0, %v2486
      %v2488 = vpop.f32.mrb[0].mxu0
      %2489 = vmatprep.mubr.f32.mxu0 0.0
      %2490 = vmatmul.mubr.f32.gmra.mrb[0].mxu0 %v1370
      %v2491 = vpop.f32.mrb[0].mxu0
      %v2492 = vadd.f32 0.0, %v2491
      %v2493 = vpop.f32.mrb[0].mxu0
      %2494 = vmatprep.mubr.f32.mxu0 0.0
      %2495 = vmatmul.mubr.f32.gmra.mrb[0].mxu0 %v1373
      %v2496 = vpop.f32.mrb[0].mxu0
      %v2497 = vadd.f32 0.0, %v2496
      %v2498 = vpop.f32.mrb[0].mxu0
      %2499 = vmatprep.mubr.f32.mxu0 0.0
      %2500 = vmatmul.mubr.f32.gmra.mrb[0].mxu0 %v1376
      %v2501 = vpop.f32.mrb[0].mxu0
      %v2502 = vadd.f32 0.0, %v2501
      %v2503 = vpop.f32.mrb[0].mxu0
      %2504 = vmatprep.mubr.f32.mxu0 0.0
      %2505 = vmatmul.mubr.f32.gmra.mrb[0].mxu0 %v1379
      %v2506 = vpop.f32.mrb[0].mxu0
      %v2507 = vadd.f32 0.0, %v2506
      %v2508 = vpop.f32.mrb[0].mxu0
      %2509 = vmatprep.mubr.f32.mxu0 0.0
      %2510 = vmatmul.mubr.f32.gmra.mrb[0].mxu0 %v1382
      %v2511 = vpop.f32.mrb[0].mxu0
      %v2512 = vadd.f32 0.0, %v2511
      %v2513 = vpop.f32.mrb[0].mxu0
      %2514 = vmatprep.mubr.f32.mxu0 0.0
      %2515 = vmatmul.mubr.f32.gmra.mrb[0].mxu0 %v1385
      %v2516 = vpop.f32.mrb[0].mxu0
      %v2517 = vadd.f32 0.0, %v2516
      %v2518 = vpop.f32.mrb[0].mxu0
      %2519 = vmatprep.mubr.f32.mxu0 0.0
      %2520 = vmatmul.mubr.f32.gmra.mrb[0].mxu0 %v1388
      %v2521 = vpop.f32.mrb[0].mxu0
      %v2522 = vadd.f32 0.0, %v2521
      %v2523 = vpop.f32.mrb[0].mxu0
      %2524 = vmatprep.mubr.f32.mxu0 0.0
      %2525 = vmatmul.mubr.f32.gmra.mrb[0].mxu0 %v1391
      %v2526 = vpop.f32.mrb[0].mxu0
      %v2527 = vadd.f32 0.0, %v2526
      %v2528 = vpop.f32.mrb[0].mxu0
      %2529 = vmatprep.mubr.f32.mxu0 0.0
      %2530 = vmatmul.mubr.f32.gmra.mrb[0].mxu0 %v1394
      %v2531 = vpop.f32.mrb[0].mxu0
      %v2532 = vadd.f32 0.0, %v2531
      %v2533 = vpop.f32.mrb[0].mxu0
      %2534 = vmatprep.mubr.f32.mxu0 0.0
      %2535 = vmatmul.mubr.f32.gmra.mrb[0].mxu0 %v1397
      %v2536 = vpop.f32.mrb[0].mxu0
      %v2537 = vadd.f32 0.0, %v2536
      %v2538 = vpop.f32.mrb[0].mxu0
      %2539 = vmatprep.mubr.f32.mxu0 0.0
      %2540 = vmatmul.mubr.f32.gmra.mrb[0].mxu0 %v1400
      %v2541 = vpop.f32.mrb[0].mxu0
      %v2542 = vadd.f32 0.0, %v2541
      %v2543 = vpop.f32.mrb[0].mxu0
      %2544 = vmatprep.mubr.f32.mxu0 0.0
      %2545 = vmatmul.mubr.f32.gmra.mrb[0].mxu0 %v1403
      %v2546 = vpop.f32.mrb[0].mxu0
      %v2547 = vadd.f32 0.0, %v2546
      %v2548 = vpop.f32.mrb[0].mxu0
      %2549 = vmatprep.mubr.f32.mxu0 0.0
      %2550 = vmatmul.mubr.f32.gmra.mrb[0].mxu0 %v1406
      %v2551 = vpop.f32.mrb[0].mxu0
      %v2552 = vadd.f32 0.0, %v2551
      %v2553 = vpop.f32.mrb[0].mxu0
      %2554 = vmatprep.mubr.f32.mxu0 0.0
      %2555 = vmatmul.mubr.f32.gmra.mrb[0].mxu0 %v1409
      %v2556 = vpop.f32.mrb[0].mxu0
      %v2557 = vadd.f32 0.0, %v2556
      %v2558 = vpop.f32.mrb[0].mxu0
      %2559 = vmatprep.mubr.f32.mxu0 0.0
      %2560 = vmatmul.mubr.f32.gmra.mrb[0].mxu0 %v1412
      %v2561 = vpop.f32.mrb[0].mxu0
      %v2562 = vadd.f32 0.0, %v2561
      %v2563 = vpop.f32.mrb[0].mxu0
      %2564 = vmatprep.mubr.f32.mxu0 0.0
      %2565 = vmatmul.mubr.f32.gmra.mrb[0].mxu0 %v1415
      %v2566 = vpop.f32.mrb[0].mxu0
      %v2567 = vadd.f32 0.0, %v2566
      %v2568 = vpop.f32.mrb[0].mxu0
      %2569 = vmatprep.mubr.f32.mxu0 0.0
      %2570 = vmatmul.mubr.f32.gmra.mrb[0].mxu0 %v1418
      %v2571 = vpop.f32.mrb[0].mxu0
      %v2572 = vadd.f32 0.0, %v2571
      %v2573 = vpop.f32.mrb[0].mxu0
      %2574 = vmatprep.mubr.f32.mxu0 0.0
      %2575 = vmatmul.mubr.f32.gmra.mrb[0].mxu0 %v1421
      %v2576 = vpop.f32.mrb[0].mxu0
      %v2577 = vadd.f32 0.0, %v2576
      %v2578 = vpop.f32.mrb[0].mxu0
      %2579 = vmatprep.mubr.f32.mxu0 0.0
      %2580 = vmatmul.mubr.f32.gmra.mrb[0].mxu0 %v1424
      %v2581 = vpop.f32.mrb[0].mxu0
      %v2582 = vadd.f32 0.0, %v2581
      %v2583 = vpop.f32.mrb[0].mxu0
      %2584 = vmatprep.mubr.f32.mxu0 0.0
      %2585 = vmatmul.mubr.f32.gmra.mrb[0].mxu0 %v1427
      %v2586 = vpop.f32.mrb[0].mxu0
      %v2587 = vadd.f32 0.0, %v2586
      %v2588 = vpop.f32.mrb[0].mxu0
      %2589 = vmatprep.mubr.f32.mxu0 0.0
      %2590 = vmatmul.mubr.f32.gmra.mrb[0].mxu0 %v1430
      %v2591 = vpop.f32.mrb[0].mxu0
      %v2592 = vadd.f32 0.0, %v2591
      %v2593 = vpop.f32.mrb[0].mxu0
      %2594 = vmatprep.mubr.f32.mxu0 0.0
      %2595 = vmatmul.mubr.f32.gmra.mrb[0].mxu0 %v1433
      %v2596 = vpop.f32.mrb[0].mxu0
      %v2597 = vadd.f32 0.0, %v2596
      %v2598 = vpop.f32.mrb[0].mxu0
      %2599 = vmatprep.mubr.f32.mxu0 0.0
      %2600 = vmatmul.mubr.f32.gmra.mrb[0].mxu0 %v1436
      %v2601 = vpop.f32.mrb[0].mxu0
      %v2602 = vadd.f32 0.0, %v2601
      %v2603 = vpop.f32.mrb[0].mxu0
      %2604 = vmatprep.mubr.f32.mxu0 0.0
      %2605 = vmatmul.mubr.f32.gmra.mrb[0].mxu0 %v1439
      %v2606 = vpop.f32.mrb[0].mxu0
      %v2607 = vadd.f32 0.0, %v2606
      %v2608 = vpop.f32.mrb[0].mxu0
      %2609 = vmatprep.mubr.f32.mxu0 0.0
      %2610 = vmatmul.mubr.f32.gmra.mrb[0].mxu0 %v1442
      %v2611 = vpop.f32.mrb[0].mxu0
      %v2612 = vadd.f32 0.0, %v2611
      %v2613 = vpop.f32.mrb[0].mxu0
      %2614 = vmatprep.mubr.f32.mxu0 0.0
      %2615 = vmatmul.mubr.f32.gmra.mrb[0].mxu0 %v1445
      %v2616 = vpop.f32.mrb[0].mxu0
      %v2617 = vadd.f32 0.0, %v2616
      %v2618 = vpop.f32.mrb[0].mxu0
      %2619 = vmatprep.mubr.f32.mxu0 0.0
      %2620 = vmatmul.mubr.f32.gmra.mrb[0].mxu0 %v1448
      %v2621 = vpop.f32.mrb[0].mxu0
      %v2622 = vadd.f32 0.0, %v2621
      %v2623 = vpop.f32.mrb[0].mxu0
      %2624 = vmatprep.mubr.f32.mxu0 0.0
      %2625 = vmatmul.mubr.f32.gmra.mrb[0].mxu0 %v1451
      %v2626 = vpop.f32.mrb[0].mxu0
      %v2627 = vadd.f32 0.0, %v2626
      %v2628 = vpop.f32.mrb[0].mxu0
      %2629 = vmatprep.mubr.f32.mxu0 0.0
      %2630 = vmatmul.mubr.f32.gmra.mrb[0].mxu0 %v1454
      %v2631 = vpop.f32.mrb[0].mxu0
      %v2632 = vadd.f32 0.0, %v2631
      %v2633 = vpop.f32.mrb[0].mxu0
      %2634 = vmatprep.mubr.f32.mxu0 0.0
      %2635 = vmatmul.mubr.f32.gmra.mrb[0].mxu0 %v1457
      %v2636 = vpop.f32.mrb[0].mxu0
      %v2637 = vadd.f32 0.0, %v2636
      %v2638 = vpop.f32.mrb[0].mxu0
      %2639 = vmatprep.mubr.f32.mxu0 0.0
      %2640 = vmatmul.mubr.f32.gmra.mrb[0].mxu0 %v1460
      %v2641 = vpop.f32.mrb[0].mxu0
      %v2642 = vadd.f32 0.0, %v2641
      %v2643 = vpop.f32.mrb[0].mxu0
      %2644 = vmatprep.mubr.f32.mxu0 0.0
      %2645 = vmatmul.mubr.f32.gmra.mrb[0].mxu0 %v1463
      %v2646 = vpop.f32.mrb[0].mxu0
      %v2647 = vadd.f32 0.0, %v2646
      %v2648 = vpop.f32.mrb[0].mxu0
      %2649 = vmatprep.mubr.f32.mxu0 0.0
      %2650 = vmatmul.mubr.f32.gmra.mrb[0].mxu0 %v1466
      %v2651 = vpop.f32.mrb[0].mxu0
      %v2652 = vadd.f32 0.0, %v2651
      %v2653 = vpop.f32.mrb[0].mxu0
      %2654 = vmatprep.mubr.f32.mxu0 0.0
      %2655 = vmatmul.mubr.f32.gmra.mrb[0].mxu0 %v1469
      %v2656 = vpop.f32.mrb[0].mxu0
      %v2657 = vadd.f32 0.0, %v2656
      %v2658 = vpop.f32.mrb[0].mxu0
      %2659 = vmatprep.mubr.f32.mxu0 0.0
      %2660 = vmatmul.mubr.f32.gmra.mrb[0].mxu0 %v1472
      %v2661 = vpop.f32.mrb[0].mxu0
      %v2662 = vadd.f32 0.0, %v2661
      %v2663 = vpop.f32.mrb[0].mxu0
      %2664 = vmatprep.mubr.f32.mxu0 0.0
      %2665 = vmatmul.mubr.f32.gmra.mrb[0].mxu0 %v1475
      %v2666 = vpop.f32.mrb[0].mxu0
      %v2667 = vadd.f32 0.0, %v2666
      %v2668 = vpop.f32.mrb[0].mxu0
      %2669 = vmatprep.mubr.f32.mxu0 0.0
      %2670 = vmatmul.mubr.f32.gmra.mrb[0].mxu0 %v1478
      %v2671 = vpop.f32.mrb[0].mxu0
      %v2672 = vadd.f32 0.0, %v2671
      %v2673 = vpop.f32.mrb[0].mxu0
      %2674 = vmatprep.mubr.f32.mxu0 0.0
      %2675 = vmatmul.mubr.f32.gmra.mrb[0].mxu0 %v1481
      %v2676 = vpop.f32.mrb[0].mxu0
      %v2677 = vadd.f32 0.0, %v2676
      %v2678 = vpop.f32.mrb[0].mxu0
      %2679 = vmatprep.mubr.f32.mxu0 0.0
      %2680 = vmatmul.mubr.f32.gmra.mrb[0].mxu0 %v1484
      %v2681 = vpop.f32.mrb[0].mxu0
      %v2682 = vadd.f32 0.0, %v2681
      %v2683 = vpop.f32.mrb[0].mxu0
      %2684 = vmatprep.mubr.f32.mxu0 0.0
      %2685 = vmatmul.mubr.f32.gmra.mrb[0].mxu0 %v1487
      %v2686 = vpop.f32.mrb[0].mxu0
      %v2687 = vadd.f32 0.0, %v2686
      %v2688 = vpop.f32.mrb[0].mxu0
      %2689 = vmatprep.mubr.f32.mxu0 0.0
      %2690 = vmatmul.mubr.f32.gmra.mrb[0].mxu0 %v1490
      %v2691 = vpop.f32.mrb[0].mxu0
      %v2692 = vadd.f32 0.0, %v2691
      %v2693 = vpop.f32.mrb[0].mxu0
      %2694 = vmatprep.mubr.f32.mxu0 0.0
      %2695 = vmatmul.mubr.f32.gmra.mrb[0].mxu0 %v1493
      %v2696 = vpop.f32.mrb[0].mxu0
      %v2697 = vadd.f32 0.0, %v2696
      %v2698 = vpop.f32.mrb[0].mxu0
      %2699 = vmatprep.mubr.f32.mxu0 0.0
      %2700 = vmatmul.mubr.f32.gmra.mrb[0].mxu0 %v1496
      %v2701 = vpop.f32.mrb[0].mxu0
      %v2702 = vadd.f32 0.0, %v2701
      %v2703 = vpop.f32.mrb[0].mxu0
      %2704 = vmatprep.mubr.f32.mxu0 0.0
      %2705 = vmatmul.mubr.f32.gmra.mrb[0].mxu0 %v1499
      %v2706 = vpop.f32.mrb[0].mxu0
      %v2707 = vadd.f32 0.0, %v2706
      %v2708 = vpop.f32.mrb[0].mxu0
      %2709 = vmatprep.mubr.f32.mxu0 0.0
      %2710 = vmatmul.mubr.f32.gmra.mrb[0].mxu0 %v1502
      %v2711 = vpop.f32.mrb[0].mxu0
      %v2712 = vadd.f32 0.0, %v2711
      %v2713 = vpop.f32.mrb[0].mxu0
      %2714 = vmatprep.mubr.f32.mxu0 0.0
      %2715 = vmatmul.mubr.f32.gmra.mrb[0].mxu0 %v1505
      %v2716 = vpop.f32.mrb[0].mxu0
      %v2717 = vadd.f32 0.0, %v2716
      %v2718 = vpop.f32.mrb[0].mxu0
      %2719 = vmatprep.mubr.f32.mxu0 0.0
      %2720 = vmatmul.mubr.f32.gmra.mrb[0].mxu0 %v1508
      %v2721 = vpop.f32.mrb[0].mxu0
      %v2722 = vadd.f32 0.0, %v2721
      %v2723 = vpop.f32.mrb[0].mxu0
      %2724 = vmatprep.mubr.f32.mxu0 0.0
      %2725 = vmatmul.mubr.f32.gmra.mrb[0].mxu0 %v1511
      %v2726 = vpop.f32.mrb[0].mxu0
      %v2727 = vadd.f32 0.0, %v2726
      %v2728 = vpop.f32.mrb[0].mxu0
      %2729 = vmatprep.mubr.f32.mxu0 0.0
      %2730 = vmatmul.mubr.f32.gmra.mrb[0].mxu0 %v1514
      %v2731 = vpop.f32.mrb[0].mxu0
      %v2732 = vadd.f32 0.0, %v2731
      %v2733 = vpop.f32.mrb[0].mxu0
      %2734 = vmatprep.mubr.f32.mxu0 0.0
      %2735 = vmatmul.mubr.f32.gmra.mrb[0].mxu0 %v1517
      %v2736 = vpop.f32.mrb[0].mxu0
      %v2737 = vadd.f32 0.0, %v2736
      %v2738 = vpop.f32.mrb[0].mxu0
      %2739 = vmatprep.mubr.f32.mxu0 0.0
      %2740 = vmatmul.mubr.f32.gmra.mrb[0].mxu0 %v1520
      %v2741 = vpop.f32.mrb[0].mxu0
      %v2742 = vadd.f32 0.0, %v2741
      %v2743 = vpop.f32.mrb[0].mxu0
      %2744 = vmatprep.mubr.f32.mxu0 0.0
      %2745 = vmatmul.mubr.f32.gmra.mrb[0].mxu0 %v1523
      %v2746 = vpop.f32.mrb[0].mxu0
      %v2747 = vadd.f32 0.0, %v2746
      %v2748 = vpop.f32.mrb[0].mxu0
      %2749 = vmatprep.mubr.f32.mxu0 0.0
      %2750 = vmatmul.mubr.f32.gmra.mrb[0].mxu0 %v1526
      %v2751 = vpop.f32.mrb[0].mxu0
      %v2752 = vadd.f32 0.0, %v2751
      %v2753 = vpop.f32.mrb[0].mxu0
      %2754 = vmatprep.mubr.f32.mxu0 0.0
      %2755 = vmatmul.mubr.f32.gmra.mrb[0].mxu0 %v1529
      %v2756 = vpop.f32.mrb[0].mxu0
      %v2757 = vadd.f32 0.0, %v2756
      %v2758 = vpop.f32.mrb[0].mxu0
      %2759 = vmatprep.mubr.f32.mxu0 0.0
      %2760 = vmatmul.mubr.f32.gmra.mrb[0].mxu0 %v1532
      %v2761 = vpop.f32.mrb[0].mxu0
      %v2762 = vadd.f32 0.0, %v2761
      %v2763 = vpop.f32.mrb[0].mxu0
      %2764 = vmatprep.mubr.f32.mxu0 0.0
      %2765 = vmatmul.mubr.f32.gmra.mrb[0].mxu0 %v1535
      %v2766 = vpop.f32.mrb[0].mxu0
      %v2767 = vadd.f32 0.0, %v2766
      %v2768 = vpop.f32.mrb[0].mxu0
      %2769 = vmatprep.mubr.f32.mxu0 0.0
      %2770 = vmatmul.mubr.f32.gmra.mrb[0].mxu0 %v1538
      %v2771 = vpop.f32.mrb[0].mxu0
      %v2772 = vadd.f32 0.0, %v2771
      %v2773 = vpop.f32.mrb[0].mxu0
      %2774 = vmatprep.mubr.f32.mxu0 0.0
      %2775 = vmatmul.mubr.f32.gmra.mrb[0].mxu0 %v1541
      %v2776 = vpop.f32.mrb[0].mxu0
      %v2777 = vadd.f32 0.0, %v2776
      %v2778 = vpop.f32.mrb[0].mxu0
      %2779 = vmatprep.mubr.f32.mxu0 0.0
      %2780 = vmatmul.mubr.f32.gmra.mrb[0].mxu0 %v1544
      %v2781 = vpop.f32.mrb[0].mxu0
      %v2782 = vadd.f32 0.0, %v2781
      %v2783 = vpop.f32.mrb[0].mxu0
      %2784 = vmatprep.mubr.f32.mxu0 0.0
      %2785 = vmatmul.mubr.f32.gmra.mrb[0].mxu0 %v1547
      %v2786 = vpop.f32.mrb[0].mxu0
      %v2787 = vadd.f32 0.0, %v2786
      %v2788 = vpop.f32.mrb[0].mxu0
      %2789 = vmatprep.mubr.f32.mxu0 0.0
      %2790 = vmatmul.mubr.f32.gmra.mrb[0].mxu0 %v1550
      %v2791 = vpop.f32.mrb[0].mxu0
      %v2792 = vadd.f32 0.0, %v2791
      %v2793 = vpop.f32.mrb[0].mxu0
      %2794 = vmatprep.mubr.f32.mxu0 0.0
      %2795 = vmatmul.mubr.f32.gmra.mrb[0].mxu0 %v1553
      %v2796 = vpop.f32.mrb[0].mxu0
      %v2797 = vadd.f32 0.0, %v2796
      %v2798 = vpop.f32.mrb[0].mxu0
      %2799 = vmatprep.mubr.f32.mxu0 0.0
      %2800 = vmatmul.mubr.f32.gmra.mrb[0].mxu0 %v1556
      %v2801 = vpop.f32.mrb[0].mxu0
      %v2802 = vadd.f32 0.0, %v2801
      %v2803 = vpop.f32.mrb[0].mxu0
      %2804 = vmatprep.mubr.f32.mxu0 0.0
      %2805 = vmatmul.mubr.f32.gmra.mrb[0].mxu0 %v1559
      %v2806 = vpop.f32.mrb[0].mxu0
      %v2807 = vadd.f32 0.0, %v2806
      %v2808 = vpop.f32.mrb[0].mxu0
      %2809 = vmatprep.mubr.f32.mxu0 0.0
      %2810 = vmatmul.mubr.f32.gmra.mrb[0].mxu0 %v1562
      %v2811 = vpop.f32.mrb[0].mxu0
      %v2812 = vadd.f32 0.0, %v2811
      %v2813 = vpop.f32.mrb[0].mxu0
      %2814 = vmatprep.mubr.f32.mxu0 0.0
      %2815 = vmatmul.mubr.f32.gmra.mrb[0].mxu0 %v1565
      %v2816 = vpop.f32.mrb[0].mxu0
      %v2817 = vadd.f32 0.0, %v2816
      %v2818 = vpop.f32.mrb[0].mxu0
      %2819 = vmatprep.mubr.f32.mxu0 0.0
      %2820 = vmatmul.mubr.f32.gmra.mrb[0].mxu0 %v1568
      %v2821 = vpop.f32.mrb[0].mxu0
      %v2822 = vadd.f32 0.0, %v2821
      %v2823 = vpop.f32.mrb[0].mxu0
      %2824 = vmatprep.mubr.f32.mxu0 0.0
      %2825 = vmatmul.mubr.f32.gmra.mrb[0].mxu0 %v1571
      %v2826 = vpop.f32.mrb[0].mxu0
      %v2827 = vadd.f32 0.0, %v2826
      %v2828 = vpop.f32.mrb[0].mxu0
      %2829 = vmatprep.mubr.f32.mxu0 0.0
      %2830 = vmatmul.mubr.f32.gmra.mrb[0].mxu0 %v1574
      %v2831 = vpop.f32.mrb[0].mxu0
      %v2832 = vadd.f32 0.0, %v2831
      %v2833 = vpop.f32.mrb[0].mxu0
      %2834 = vmatprep.mubr.f32.mxu0 0.0
      %2835 = vmatmul.mubr.f32.gmra.mrb[0].mxu0 %v1577
      %v2836 = vpop.f32.mrb[0].mxu0
      %v2837 = vadd.f32 0.0, %v2836
      %v2838 = vpop.f32.mrb[0].mxu0
      %2839 = vmatprep.mubr.f32.mxu0 0.0
      %2840 = vmatmul.mubr.f32.gmra.mrb[0].mxu0 %v1580
      %v2841 = vpop.f32.mrb[0].mxu0
      %v2842 = vadd.f32 0.0, %v2841
      %v2843 = vpop.f32.mrb[0].mxu0
      %2844 = vmatprep.mubr.f32.mxu0 0.0
      %2845 = vmatmul.mubr.f32.gmra.mrb[0].mxu0 %v1583
      %v2846 = vpop.f32.mrb[0].mxu0
      %v2847 = vadd.f32 0.0, %v2846
      %v2848 = vpop.f32.mrb[0].mxu0
      %2849 = vmatprep.mubr.f32.mxu0 0.0
      %2850 = vmatmul.mubr.f32.gmra.mrb[0].mxu0 %v1586
      %v2851 = vpop.f32.mrb[0].mxu0
      %v2852 = vadd.f32 0.0, %v2851
      %v2853 = vpop.f32.mrb[0].mxu0
      %2854 = vmatprep.mubr.f32.mxu0 0.0
      %2855 = vmatmul.mubr.f32.gmra.mrb[0].mxu0 %v1589
      %v2856 = vpop.f32.mrb[0].mxu0
      %v2857 = vadd.f32 0.0, %v2856
      %v2858 = vpop.f32.mrb[0].mxu0
      %2859 = vmatprep.mubr.f32.mxu0 0.0
      %2860 = vmatmul.mubr.f32.gmra.mrb[0].mxu0 %v1592
      %v2861 = vpop.f32.mrb[0].mxu0
      %v2862 = vadd.f32 0.0, %v2861
      %v2863 = vpop.f32.mrb[0].mxu0
      %2864 = vmatprep.mubr.f32.mxu0 0.0
      %2865 = vmatmul.mubr.f32.gmra.mrb[0].mxu0 %v1595
      %v2866 = vpop.f32.mrb[0].mxu0
      %v2867 = vadd.f32 0.0, %v2866
      %v2868 = vpop.f32.mrb[0].mxu0
      %2869 = vmatprep.mubr.f32.mxu0 0.0
      %2870 = vmatmul.mubr.f32.gmra.mrb[0].mxu0 %v1598
      %v2871 = vpop.f32.mrb[0].mxu0
      %v2872 = vadd.f32 0.0, %v2871
      %v2873 = vpop.f32.mrb[0].mxu0
      %2874 = vmatprep.mubr.f32.mxu0 0.0
      %2875 = vmatmul.mubr.f32.gmra.mrb[0].mxu0 %v1601
      %v2876 = vpop.f32.mrb[0].mxu0
      %v2877 = vadd.f32 0.0, %v2876
      %v2878 = vpop.f32.mrb[0].mxu0
      %2879 = vmatprep.mubr.f32.mxu0 0.0
      %2880 = vmatmul.mubr.f32.gmra.mrb[0].mxu0 %v1604
      %v2881 = vpop.f32.mrb[0].mxu0
      %v2882 = vadd.f32 0.0, %v2881
      %v2883 = vpop.f32.mrb[0].mxu0
      %2884 = vmatprep.mubr.f32.mxu0 0.0
      %2885 = vmatmul.mubr.f32.gmra.mrb[0].mxu0 %v1607
      %v2886 = vpop.f32.mrb[0].mxu0
      %v2887 = vadd.f32 0.0, %v2886
      %v2888 = vpop.f32.mrb[0].mxu0
      %2889 = vmatprep.mubr.f32.mxu0 0.0
      %2890 = vmatmul.mubr.f32.gmra.mrb[0].mxu0 %v1610
      %v2891 = vpop.f32.mrb[0].mxu0
      %v2892 = vadd.f32 0.0, %v2891
      %v2893 = vpop.f32.mrb[0].mxu0
      %2894 = vmatprep.mubr.f32.mxu0 0.0
      %2895 = vmatmul.mubr.f32.gmra.mrb[0].mxu0 %v1613
      %v2896 = vpop.f32.mrb[0].mxu0
      %v2897 = vadd.f32 0.0, %v2896
      %v2898 = vpop.f32.mrb[0].mxu0
      %2899 = vmatprep.mubr.f32.mxu0 0.0
      %2900 = vmatmul.mubr.f32.gmra.mrb[0].mxu0 %v1616
      %v2901 = vpop.f32.mrb[0].mxu0
      %v2902 = vadd.f32 0.0, %v2901
      %v2903 = vpop.f32.mrb[0].mxu0
      %2904 = vmatprep.mubr.f32.mxu0 0.0
      %2905 = vmatmul.mubr.f32.gmra.mrb[0].mxu0 %v1619
      %v2906 = vpop.f32.mrb[0].mxu0
      %v2907 = vadd.f32 0.0, %v2906
      %v2908 = vpop.f32.mrb[0].mxu0
      %2909 = vmatprep.mubr.f32.mxu0 0.0
      %2910 = vmatmul.mubr.f32.gmra.mrb[0].mxu0 %v1622
      %v2911 = vpop.f32.mrb[0].mxu0
      %v2912 = vadd.f32 0.0, %v2911
      %v2913 = vpop.f32.mrb[0].mxu0
      %2914 = vmatprep.mubr.f32.mxu0 0.0
      %2915 = vmatmul.mubr.f32.gmra.mrb[0].mxu0 %v1625
      %v2916 = vpop.f32.mrb[0].mxu0
      %v2917 = vadd.f32 0.0, %v2916
      %v2918 = vpop.f32.mrb[0].mxu0
      %2919 = vmatprep.mubr.f32.mxu0 0.0
      %2920 = vmatmul.mubr.f32.gmra.mrb[0].mxu0 %v1628
      %v2921 = vpop.f32.mrb[0].mxu0
      %v2922 = vadd.f32 0.0, %v2921
      %v2923 = vpop.f32.mrb[0].mxu0
      %2924 = vmatprep.mubr.f32.mxu0 0.0
      %2925 = vmatmul.mubr.f32.gmra.mrb[0].mxu0 %v1631
      %v2926 = vpop.f32.mrb[0].mxu0
      %v2927 = vadd.f32 0.0, %v2926
      %v2928 = vpop.f32.mrb[0].mxu0
      %2929 = vmatprep.mubr.f32.mxu0 0.0
      %2930 = vmatmul.mubr.f32.gmra.mrb[0].mxu0 %v1634
      %v2931 = vpop.f32.mrb[0].mxu0
      %v2932 = vadd.f32 0.0, %v2931
      %v2933 = vpop.f32.mrb[0].mxu0
      %2934 = vmatprep.mubr.f32.mxu0 0.0
      %2935 = vmatmul.mubr.f32.gmra.mrb[0].mxu0 %v1637
      %v2936 = vpop.f32.mrb[0].mxu0
      %v2937 = vadd.f32 0.0, %v2936
      %v2938 = vpop.f32.mrb[0].mxu0
      %2939 = vmatprep.mubr.f32.mxu0 0.0
      %2940 = vmatmul.mubr.f32.gmra.mrb[0].mxu0 %v1640
      %v2941 = vpop.f32.mrb[0].mxu0
      %v2942 = vadd.f32 0.0, %v2941
      %v2943 = vpop.f32.mrb[0].mxu0
      %2944 = vmatprep.mubr.f32.mxu0 0.0
      %2945 = vmatmul.mubr.f32.gmra.mrb[0].mxu0 %v1643
      %v2946 = vpop.f32.mrb[0].mxu0
      %v2947 = vadd.f32 0.0, %v2946
      %v2948 = vpop.f32.mrb[0].mxu0
      %2949 = vmatprep.mubr.f32.mxu0 0.0
      %2950 = vmatmul.mubr.f32.gmra.mrb[0].mxu0 %v1646
      %v2951 = vpop.f32.mrb[0].mxu0
      %v2952 = vadd.f32 0.0, %v2951
      %v2953 = vpop.f32.mrb[0].mxu0
      %2954 = vmatprep.mubr.f32.mxu0 0.0
      %2955 = vmatmul.mubr.f32.gmra.mrb[0].mxu0 %v1649
      %v2956 = vpop.f32.mrb[0].mxu0
      %v2957 = vadd.f32 0.0, %v2956
      %v2958 = vpop.f32.mrb[0].mxu0
      %2959 = vmatprep.mubr.f32.mxu0 0.0
      %2960 = vmatmul.mubr.f32.gmra.mrb[0].mxu0 %v1652
      %v2961 = vpop.f32.mrb[0].mxu0
      %v2962 = vadd.f32 0.0, %v2961
      %v2963 = vpop.f32.mrb[0].mxu0
      %2964 = vmatprep.mubr.f32.mxu0 0.0
      %2965 = vmatmul.mubr.f32.gmra.mrb[0].mxu0 %v1655
      %v2966 = vpop.f32.mrb[0].mxu0
      %v2967 = vadd.f32 0.0, %v2966
      %v2968 = vpop.f32.mrb[0].mxu0
      %2969 = vmatprep.mubr.f32.mxu0 0.0
      %2970 = vmatmul.mubr.f32.gmra.mrb[0].mxu0 %v1658
      %v2971 = vpop.f32.mrb[0].mxu0
      %v2972 = vadd.f32 0.0, %v2971
      %v2973 = vpop.f32.mrb[0].mxu0
      %2974 = vmatprep.mubr.f32.mxu0 0.0
      %2975 = vmatmul.mubr.f32.gmra.mrb[0].mxu0 %v1661
      %v2976 = vpop.f32.mrb[0].mxu0
      %v2977 = vadd.f32 0.0, %v2976
      %v2978 = vpop.f32.mrb[0].mxu0
      %2979 = vmatprep.mubr.f32.mxu0 0.0
      %2980 = vmatmul.mubr.f32.gmra.mrb[0].mxu0 %v1664
      %v2981 = vpop.f32.mrb[0].mxu0
      %v2982 = vadd.f32 0.0, %v2981
      %v2983 = vpop.f32.mrb[0].mxu0
      %2984 = vmatprep.mubr.f32.mxu0 0.0
      %2985 = vmatmul.mubr.f32.gmra.mrb[0].mxu0 %v1667
      %v2986 = vpop.f32.mrb[0].mxu0
      %v2987 = vadd.f32 0.0, %v2986
      %v2988 = vpop.f32.mrb[0].mxu0
      %2989 = vmatprep.mubr.f32.mxu0 0.0
      %2990 = vmatmul.mubr.f32.gmra.mrb[0].mxu0 %v1670
      %v2991 = vpop.f32.mrb[0].mxu0
      %v2992 = vadd.f32 0.0, %v2991
      %v2993 = vpop.f32.mrb[0].mxu0
      %2994 = vmatprep.mubr.f32.mxu0 0.0
      %2995 = vmatmul.mubr.f32.gmra.mrb[0].mxu0 %v1673
      %v2996 = vpop.f32.mrb[0].mxu0
      %v2997 = vadd.f32 0.0, %v2996
      %v2998 = vpop.f32.mrb[0].mxu0
      %2999 = vmatprep.mubr.f32.mxu0 0.0
      %3000 = vmatmul.mubr.f32.gmra.mrb[0].mxu0 %v1676
      %v3001 = vpop.f32.mrb[0].mxu0
      %v3002 = vadd.f32 0.0, %v3001
      %v3003 = vpop.f32.mrb[0].mxu0
      %3004 = vmatprep.mubr.f32.mxu0 0.0
      %3005 = vmatmul.mubr.f32.gmra.mrb[0].mxu0 %v1679
      %v3006 = vpop.f32.mrb[0].mxu0
      %v3007 = vadd.f32 0.0, %v3006
      %v3008 = vpop.f32.mrb[0].mxu0
      %3009 = vmatprep.mubr.f32.mxu0 0.0
      %3010 = vmatmul.mubr.f32.gmra.mrb[0].mxu0 %v1682
      %v3011 = vpop.f32.mrb[0].mxu0
      %v3012 = vadd.f32 0.0, %v3011
      %v3013 = vpop.f32.mrb[0].mxu0
      %3014 = vmatprep.mubr.f32.mxu0 0.0
      %3015 = vmatmul.mubr.f32.gmra.mrb[0].mxu0 %v1685
      %v3016 = vpop.f32.mrb[0].mxu0
      %v3017 = vadd.f32 0.0, %v3016
      %v3018 = vpop.f32.mrb[0].mxu0
      %3019 = vmatprep.mubr.f32.mxu0 0.0
      %3020 = vmatmul.mubr.f32.gmra.mrb[0].mxu0 %v1688
      %v3021 = vpop.f32.mrb[0].mxu0
      %v3022 = vadd.f32 0.0, %v3021
      %v3023 = vpop.f32.mrb[0].mxu0
      %3024 = vmatprep.mubr.f32.mxu0 0.0
      %3025 = vmatmul.mubr.f32.gmra.mrb[0].mxu0 %v1691
      %v3026 = vpop.f32.mrb[0].mxu0
      %v3027 = vadd.f32 0.0, %v3026
      %v3028 = vpop.f32.mrb[0].mxu0
      %3029 = vmatprep.mubr.f32.mxu0 0.0
      %3030 = vmatmul.mubr.f32.gmra.mrb[0].mxu0 %v1694
      %v3031 = vpop.f32.mrb[0].mxu0
      %v3032 = vadd.f32 0.0, %v3031
      %v3033 = vpop.f32.mrb[0].mxu0
      %3034 = vmatprep.mubr.f32.mxu0 0.0
      %3035 = vmatmul.mubr.f32.gmra.mrb[0].mxu0 %v1697
      %v3036 = vpop.f32.mrb[0].mxu0
      %v3037 = vadd.f32 0.0, %v3036
      %v3038 = vpop.f32.mrb[0].mxu0
      %3039 = vmatprep.mubr.f32.mxu0 0.0
      %3040 = vmatmul.mubr.f32.gmra.mrb[0].mxu0 %v1700
      %v3041 = vpop.f32.mrb[0].mxu0
      %v3042 = vadd.f32 0.0, %v3041
      %v3043 = vpop.f32.mrb[0].mxu0
      %3044 = vmatprep.mubr.f32.mxu0 0.0
      %3045 = vmatmul.mubr.f32.gmra.mrb[0].mxu0 %v1703
      %v3046 = vpop.f32.mrb[0].mxu0
      %v3047 = vadd.f32 0.0, %v3046
      %v3048 = vpop.f32.mrb[0].mxu0
      %3049 = vmatprep.mubr.f32.mxu0 0.0
      %3050 = vmatmul.mubr.f32.gmra.mrb[0].mxu0 %v1706
      %v3051 = vpop.f32.mrb[0].mxu0
      %v3052 = vadd.f32 0.0, %v3051
      %v3053 = vpop.f32.mrb[0].mxu0
      %3054 = vmatprep.mubr.f32.mxu0 0.0
      %3055 = vmatmul.mubr.f32.gmra.mrb[0].mxu0 %v1709
      %v3056 = vpop.f32.mrb[0].mxu0
      %v3057 = vadd.f32 0.0, %v3056
      %v3058 = vpop.f32.mrb[0].mxu0
      %3059 = vdwg.mxu0
      %v3061 = vsel %vm942, %v427, 0
      %v3064 = vsel %vm942, %v428, 0
      %v3067 = vsel %vm942, %v429, 0
      %v3070 = vsel %vm942, %v430, 0
      %v3073 = vsel %vm942, %v431, 0
      %v3076 = vsel %vm942, %v432, 0
      %v3079 = vsel %vm942, %v433, 0
      %v3082 = vsel %vm942, %v434, 0
      %v3085 = vsel %vm942, %v435, 0
      %v3088 = vsel %vm942, %v436, 0
      %v3091 = vsel %vm942, %v437, 0
      %v3094 = vsel %vm942, %v438, 0
      %v3097 = vsel %vm942, %v439, 0
      %v3100 = vsel %vm942, %v440, 0
      %v3103 = vsel %vm942, %v441, 0
      %v3106 = vsel %vm942, %v442, 0
      %v3109 = vsel %vm942, %v443, 0
      %v3112 = vsel %vm942, %v444, 0
      %v3115 = vsel %vm942, %v445, 0
      %v3118 = vsel %vm942, %v446, 0
      %v3121 = vsel %vm942, %v447, 0
      %v3124 = vsel %vm942, %v448, 0
      %v3127 = vsel %vm942, %v449, 0
      %v3130 = vsel %vm942, %v450, 0
      %v3133 = vsel %vm942, %v451, 0
      %v3136 = vsel %vm942, %v452, 0
      %v3139 = vsel %vm942, %v453, 0
      %v3142 = vsel %vm942, %v454, 0
      %v3145 = vsel %vm942, %v455, 0
      %v3148 = vsel %vm942, %v456, 0
      %v3151 = vsel %vm942, %v457, 0
      %v3154 = vsel %vm942, %v458, 0
      %v3157 = vsel %vm942, %v459, 0
      %v3160 = vsel %vm942, %v460, 0
      %v3163 = vsel %vm942, %v461, 0
      %v3166 = vsel %vm942, %v462, 0
      %v3169 = vsel %vm942, %v463, 0
      %v3172 = vsel %vm942, %v464, 0
      %v3175 = vsel %vm942, %v465, 0
      %v3178 = vsel %vm942, %v466, 0
      %v3181 = vsel %vm942, %v467, 0
      %v3184 = vsel %vm942, %v468, 0
      %v3187 = vsel %vm942, %v469, 0
      %v3190 = vsel %vm942, %v470, 0
      %v3193 = vsel %vm942, %v471, 0
      %v3196 = vsel %vm942, %v472, 0
      %v3199 = vsel %vm942, %v473, 0
      %v3202 = vsel %vm942, %v474, 0
      %v3205 = vsel %vm942, %v475, 0
      %v3208 = vsel %vm942, %v476, 0
      %v3211 = vsel %vm942, %v477, 0
      %v3214 = vsel %vm942, %v478, 0
      %v3217 = vsel %vm942, %v479, 0
      %v3220 = vsel %vm942, %v480, 0
      %v3223 = vsel %vm942, %v481, 0
      %v3226 = vsel %vm942, %v482, 0
      %v3229 = vsel %vm942, %v483, 0
      %v3232 = vsel %vm942, %v484, 0
      %v3235 = vsel %vm942, %v485, 0
      %v3238 = vsel %vm942, %v486, 0
      %v3241 = vsel %vm942, %v487, 0
      %v3244 = vsel %vm942, %v488, 0
      %v3247 = vsel %vm942, %v489, 0
      %v3250 = vsel %vm942, %v490, 0
      %v3253 = vsel %vm942, %v491, 0
      %v3256 = vsel %vm942, %v492, 0
      %v3259 = vsel %vm942, %v493, 0
      %v3262 = vsel %vm942, %v494, 0
      %v3265 = vsel %vm942, %v495, 0
      %v3268 = vsel %vm942, %v496, 0
      %v3271 = vsel %vm942, %v497, 0
      %v3274 = vsel %vm942, %v498, 0
      %v3277 = vsel %vm942, %v499, 0
      %v3280 = vsel %vm942, %v500, 0
      %v3283 = vsel %vm942, %v501, 0
      %v3286 = vsel %vm942, %v502, 0
      %v3289 = vsel %vm942, %v503, 0
      %v3292 = vsel %vm942, %v504, 0
      %v3295 = vsel %vm942, %v505, 0
      %v3298 = vsel %vm942, %v506, 0
      %v3301 = vsel %vm942, %v507, 0
      %v3304 = vsel %vm942, %v508, 0
      %v3307 = vsel %vm942, %v509, 0
      %v3310 = vsel %vm942, %v510, 0
      %v3313 = vsel %vm942, %v511, 0
      %v3316 = vsel %vm942, %v512, 0
      %v3319 = vsel %vm942, %v513, 0
      %v3322 = vsel %vm942, %v514, 0
      %v3325 = vsel %vm942, %v515, 0
      %v3328 = vsel %vm942, %v516, 0
      %v3331 = vsel %vm942, %v517, 0
      %v3334 = vsel %vm942, %v518, 0
      %v3337 = vsel %vm942, %v519, 0
      %v3340 = vsel %vm942, %v520, 0
      %v3343 = vsel %vm942, %v521, 0
      %v3346 = vsel %vm942, %v522, 0
      %v3349 = vsel %vm942, %v523, 0
      %v3352 = vsel %vm942, %v524, 0
      %v3355 = vsel %vm942, %v525, 0
      %v3358 = vsel %vm942, %v526, 0
      %v3361 = vsel %vm942, %v527, 0
      %v3364 = vsel %vm942, %v528, 0
      %v3367 = vsel %vm942, %v529, 0
      %v3370 = vsel %vm942, %v530, 0
      %v3373 = vsel %vm942, %v531, 0
      %v3376 = vsel %vm942, %v532, 0
      %v3379 = vsel %vm942, %v533, 0
      %v3382 = vsel %vm942, %v534, 0
      %v3385 = vsel %vm942, %v535, 0
      %v3388 = vsel %vm942, %v536, 0
      %v3391 = vsel %vm942, %v537, 0
      %v3394 = vsel %vm942, %v538, 0
      %v3397 = vsel %vm942, %v539, 0
      %v3400 = vsel %vm942, %v540, 0
      %v3403 = vsel %vm942, %v541, 0
      %v3406 = vsel %vm942, %v542, 0
      %v3409 = vsel %vm942, %v543, 0
      %v3412 = vsel %vm942, %v544, 0
      %v3415 = vsel %vm942, %v545, 0
      %v3418 = vsel %vm942, %v546, 0
      %v3421 = vsel %vm942, %v547, 0
      %v3424 = vsel %vm942, %v548, 0
      %v3427 = vsel %vm942, %v549, 0
      %v3430 = vsel %vm942, %v550, 0
      %v3433 = vsel %vm942, %v551, 0
      %v3436 = vsel %vm942, %v552, 0
      %v3439 = vsel %vm942, %v553, 0
      %v3442 = vsel %vm942, %v554, 0
      %v3445 = vsel %vm942, %v555, 0
      %v3448 = vsel %vm942, %v556, 0
      %v3451 = vsel %vm942, %v557, 0
      %v3454 = vsel %vm942, %v558, 0
      %v3457 = vsel %vm942, %v559, 0
      %v3460 = vsel %vm942, %v560, 0
      %v3463 = vsel %vm942, %v561, 0
      %v3466 = vsel %vm942, %v562, 0
      %v3469 = vsel %vm942, %v563, 0
      %v3472 = vsel %vm942, %v564, 0
      %v3475 = vsel %vm942, %v565, 0
      %v3478 = vsel %vm942, %v566, 0
      %v3481 = vsel %vm942, %v567, 0
      %v3484 = vsel %vm942, %v568, 0
      %v3487 = vsel %vm942, %v569, 0
      %v3490 = vsel %vm942, %v570, 0
      %v3493 = vsel %vm942, %v571, 0
      %v3496 = vsel %vm942, %v572, 0
      %v3499 = vsel %vm942, %v573, 0
      %v3502 = vsel %vm942, %v574, 0
      %v3505 = vsel %vm942, %v575, 0
      %v3508 = vsel %vm942, %v576, 0
      %v3511 = vsel %vm942, %v577, 0
      %v3514 = vsel %vm942, %v578, 0
      %v3517 = vsel %vm942, %v579, 0
      %v3520 = vsel %vm942, %v580, 0
      %v3523 = vsel %vm942, %v581, 0
      %v3526 = vsel %vm942, %v582, 0
      %v3529 = vsel %vm942, %v583, 0
      %v3532 = vsel %vm942, %v584, 0
      %v3535 = vsel %vm942, %v585, 0
      %v3538 = vsel %vm942, %v586, 0
      %v3541 = vsel %vm942, %v587, 0
      %v3544 = vsel %vm942, %v588, 0
      %v3547 = vsel %vm942, %v589, 0
      %v3550 = vsel %vm942, %v590, 0
      %v3553 = vsel %vm942, %v591, 0
      %v3556 = vsel %vm942, %v592, 0
      %v3559 = vsel %vm942, %v593, 0
      %v3562 = vsel %vm942, %v594, 0
      %v3565 = vsel %vm942, %v595, 0
      %v3568 = vsel %vm942, %v596, 0
      %v3571 = vsel %vm942, %v597, 0
      %v3574 = vsel %vm942, %v598, 0
      %v3577 = vsel %vm942, %v599, 0
      %v3580 = vsel %vm942, %v600, 0
      %v3583 = vsel %vm942, %v601, 0
      %v3586 = vsel %vm942, %v602, 0
      %v3589 = vsel %vm942, %v603, 0
      %v3592 = vsel %vm942, %v604, 0
      %v3595 = vsel %vm942, %v605, 0
      %v3598 = vsel %vm942, %v606, 0
      %v3601 = vsel %vm942, %v607, 0
      %v3604 = vsel %vm942, %v608, 0
      %v3607 = vsel %vm942, %v609, 0
      %v3610 = vsel %vm942, %v610, 0
      %v3613 = vsel %vm942, %v611, 0
      %v3616 = vsel %vm942, %v612, 0
      %v3619 = vsel %vm942, %v613, 0
      %v3622 = vsel %vm942, %v614, 0
      %v3625 = vsel %vm942, %v615, 0
      %v3628 = vsel %vm942, %v616, 0
      %v3631 = vsel %vm942, %v617, 0
      %v3634 = vsel %vm942, %v618, 0
      %v3637 = vsel %vm942, %v619, 0
      %v3640 = vsel %vm942, %v620, 0
      %v3643 = vsel %vm942, %v621, 0
      %v3646 = vsel %vm942, %v622, 0
      %v3649 = vsel %vm942, %v623, 0
      %v3652 = vsel %vm942, %v624, 0
      %v3655 = vsel %vm942, %v625, 0
      %v3658 = vsel %vm942, %v626, 0
      %v3661 = vsel %vm942, %v627, 0
      %v3664 = vsel %vm942, %v628, 0
      %v3667 = vsel %vm942, %v629, 0
      %v3670 = vsel %vm942, %v630, 0
      %v3673 = vsel %vm942, %v631, 0
      %v3676 = vsel %vm942, %v632, 0
      %v3679 = vsel %vm942, %v633, 0
      %v3682 = vsel %vm942, %v634, 0
      %v3685 = vsel %vm942, %v635, 0
      %v3688 = vsel %vm942, %v636, 0
      %v3691 = vsel %vm942, %v637, 0
      %v3694 = vsel %vm942, %v638, 0
      %v3697 = vsel %vm942, %v639, 0
      %v3700 = vsel %vm942, %v640, 0
      %v3703 = vsel %vm942, %v641, 0
      %v3706 = vsel %vm942, %v642, 0
      %v3709 = vsel %vm942, %v643, 0
      %v3712 = vsel %vm942, %v644, 0
      %v3715 = vsel %vm942, %v645, 0
      %v3718 = vsel %vm942, %v646, 0
      %v3721 = vsel %vm942, %v647, 0
      %v3724 = vsel %vm942, %v648, 0
      %v3727 = vsel %vm942, %v649, 0
      %v3730 = vsel %vm942, %v650, 0
      %v3733 = vsel %vm942, %v651, 0
      %v3736 = vsel %vm942, %v652, 0
      %v3739 = vsel %vm942, %v653, 0
      %v3742 = vsel %vm942, %v654, 0
      %v3745 = vsel %vm942, %v655, 0
      %v3748 = vsel %vm942, %v656, 0
      %v3751 = vsel %vm942, %v657, 0
      %v3754 = vsel %vm942, %v658, 0
      %v3757 = vsel %vm942, %v659, 0
      %v3760 = vsel %vm942, %v660, 0
      %v3763 = vsel %vm942, %v661, 0
      %v3766 = vsel %vm942, %v662, 0
      %v3769 = vsel %vm942, %v663, 0
      %v3772 = vsel %vm942, %v664, 0
      %v3775 = vsel %vm942, %v665, 0
      %v3778 = vsel %vm942, %v666, 0
      %v3781 = vsel %vm942, %v667, 0
      %v3784 = vsel %vm942, %v668, 0
      %v3787 = vsel %vm942, %v669, 0
      %v3790 = vsel %vm942, %v670, 0
      %v3793 = vsel %vm942, %v671, 0
      %v3796 = vsel %vm942, %v672, 0
      %v3799 = vsel %vm942, %v673, 0
      %v3802 = vsel %vm942, %v674, 0
      %v3805 = vsel %vm942, %v675, 0
      %v3808 = vsel %vm942, %v676, 0
      %v3811 = vsel %vm942, %v677, 0
      %v3814 = vsel %vm942, %v678, 0
      %v3817 = vsel %vm942, %v679, 0
      %v3820 = vsel %vm942, %v680, 0
      %v3823 = vsel %vm942, %v681, 0
      %v3826 = vsel %vm942, %v682, 0
      %v3829 = vsel %vm1711, %v940, 0
      %3831 = vmatprep.subr.mxu0 0.0
      %3832 = vmatpush1.msra.mxu0 %v3829
      %3833 = vmatprep.subr.mxu0 0.0
      %3834 = vmatpush1.msra.mxu0 0.0
      %3835 = vmatprep.subr.mxu0 0.0
      %3836 = vmatpush1.msra.mxu0 0.0
      %3837 = vmatprep.subr.mxu0 0.0
      %3838 = vmatpush1.msra.mxu0 0.0
      %3839 = vmatprep.subr.mxu0 0.0
      %3840 = vmatpush1.msra.mxu0 0.0
      %3841 = vmatprep.subr.mxu0 0.0
      %3842 = vmatpush1.msra.mxu0 0.0
      %3843 = vmatprep.subr.mxu0 0.0
      %3844 = vmatpush1.msra.mxu0 0.0
      %3845 = vmatprep.subr.mxu0 0.0
      %3846 = vmatpush1.msra.mxu0 0.0
      %3847 = vmatprep.subr.mxu0 0.0
      %3848 = vmatpush1.msra.mxu0 0.0
      %3849 = vmatprep.subr.mxu0 0.0
      %3850 = vmatpush1.msra.mxu0 0.0
      %3851 = vmatprep.subr.mxu0 0.0
      %3852 = vmatpush1.msra.mxu0 0.0
      %3853 = vmatprep.subr.mxu0 0.0
      %3854 = vmatpush1.msra.mxu0 0.0
      %3855 = vmatprep.subr.mxu0 0.0
      %3856 = vmatpush1.msra.mxu0 0.0
      %3857 = vmatprep.subr.mxu0 0.0
      %3858 = vmatpush1.msra.mxu0 0.0
      %3859 = vmatprep.subr.mxu0 0.0
      %3860 = vmatpush1.msra.mxu0 0.0
      %3861 = vmatprep.subr.mxu0 0.0
      %3862 = vmatpush1.msra.mxu0 0.0
      %3863 = vmatprep.subr.mxu0 0.0
      %3864 = vmatpush1.msra.mxu0 0.0
      %3865 = vmatprep.subr.mxu0 0.0
      %3866 = vmatpush1.msra.mxu0 0.0
      %3867 = vmatprep.subr.mxu0 0.0
      %3868 = vmatpush1.msra.mxu0 0.0
      %3869 = vmatprep.subr.mxu0 0.0
      %3870 = vmatpush1.msra.mxu0 0.0
      %3871 = vmatprep.subr.mxu0 0.0
      %3872 = vmatpush1.msra.mxu0 0.0
      %3873 = vmatprep.subr.mxu0 0.0
      %3874 = vmatpush1.msra.mxu0 0.0
      %3875 = vmatprep.subr.mxu0 0.0
      %3876 = vmatpush1.msra.mxu0 0.0
      %3877 = vmatprep.subr.mxu0 0.0
      %3878 = vmatpush1.msra.mxu0 0.0
      %3879 = vmatprep.subr.mxu0 0.0
      %3880 = vmatpush1.msra.mxu0 0.0
      %3881 = vmatprep.subr.mxu0 0.0
      %3882 = vmatpush1.msra.mxu0 0.0
      %3883 = vmatprep.subr.mxu0 0.0
      %3884 = vmatpush1.msra.mxu0 0.0
      %3885 = vmatprep.subr.mxu0 0.0
      %3886 = vmatpush1.msra.mxu0 0.0
      %3887 = vmatprep.subr.mxu0 0.0
      %3888 = vmatpush1.msra.mxu0 0.0
      %3889 = vmatprep.subr.mxu0 0.0
      %3890 = vmatpush1.msra.mxu0 0.0
      %3891 = vmatprep.subr.mxu0 0.0
      %3892 = vmatpush1.msra.mxu0 0.0
      %3893 = vmatprep.subr.mxu0 0.0
      %3894 = vmatpush1.msra.mxu0 0.0
      %3895 = vmatprep.mubr.f32.mxu0 0.0
      %3896 = vmatmul.mubr.f32.gmra.mrb[0].mxu0 %v3061
      %v3897 = vpop.f32.mrb[0].mxu0
      %v3898 = vadd.f32 %v1782, %v3897
      %v3899 = vpop.f32.mrb[0].mxu0
      %3900 = vmatprep.mubr.f32.mxu0 0.0
      %3901 = vmatmul.mubr.f32.gmra.mrb[0].mxu0 %v3064
      %v3902 = vpop.f32.mrb[0].mxu0
      %v3903 = vadd.f32 %v1787, %v3902
      %v3904 = vpop.f32.mrb[0].mxu0
      %3905 = vmatprep.mubr.f32.mxu0 0.0
      %3906 = vmatmul.mubr.f32.gmra.mrb[0].mxu0 %v3067
      %v3907 = vpop.f32.mrb[0].mxu0
      %v3908 = vadd.f32 %v1792, %v3907
      %v3909 = vpop.f32.mrb[0].mxu0
      %3910 = vmatprep.mubr.f32.mxu0 0.0
      %3911 = vmatmul.mubr.f32.gmra.mrb[0].mxu0 %v3070
      %v3912 = vpop.f32.mrb[0].mxu0
      %v3913 = vadd.f32 %v1797, %v3912
      %v3914 = vpop.f32.mrb[0].mxu0
      %3915 = vmatprep.mubr.f32.mxu0 0.0
      %3916 = vmatmul.mubr.f32.gmra.mrb[0].mxu0 %v3073
      %v3917 = vpop.f32.mrb[0].mxu0
      %v3918 = vadd.f32 %v1802, %v3917
      %v3919 = vpop.f32.mrb[0].mxu0
      %3920 = vmatprep.mubr.f32.mxu0 0.0
      %3921 = vmatmul.mubr.f32.gmra.mrb[0].mxu0 %v3076
      %v3922 = vpop.f32.mrb[0].mxu0
      %v3923 = vadd.f32 %v1807, %v3922
      %v3924 = vpop.f32.mrb[0].mxu0
      %3925 = vmatprep.mubr.f32.mxu0 0.0
      %3926 = vmatmul.mubr.f32.gmra.mrb[0].mxu0 %v3079
      %v3927 = vpop.f32.mrb[0].mxu0
      %v3928 = vadd.f32 %v1812, %v3927
      %v3929 = vpop.f32.mrb[0].mxu0
      %3930 = vmatprep.mubr.f32.mxu0 0.0
      %3931 = vmatmul.mubr.f32.gmra.mrb[0].mxu0 %v3082
      %v3932 = vpop.f32.mrb[0].mxu0
      %v3933 = vadd.f32 %v1817, %v3932
      %v3934 = vpop.f32.mrb[0].mxu0
      %3935 = vmatprep.mubr.f32.mxu0 0.0
      %3936 = vmatmul.mubr.f32.gmra.mrb[0].mxu0 %v3085
      %v3937 = vpop.f32.mrb[0].mxu0
      %v3938 = vadd.f32 %v1822, %v3937
      %v3939 = vpop.f32.mrb[0].mxu0
      %3940 = vmatprep.mubr.f32.mxu0 0.0
      %3941 = vmatmul.mubr.f32.gmra.mrb[0].mxu0 %v3088
      %v3942 = vpop.f32.mrb[0].mxu0
      %v3943 = vadd.f32 %v1827, %v3942
      %v3944 = vpop.f32.mrb[0].mxu0
      %3945 = vmatprep.mubr.f32.mxu0 0.0
      %3946 = vmatmul.mubr.f32.gmra.mrb[0].mxu0 %v3091
      %v3947 = vpop.f32.mrb[0].mxu0
      %v3948 = vadd.f32 %v1832, %v3947
      %v3949 = vpop.f32.mrb[0].mxu0
      %3950 = vmatprep.mubr.f32.mxu0 0.0
      %3951 = vmatmul.mubr.f32.gmra.mrb[0].mxu0 %v3094
      %v3952 = vpop.f32.mrb[0].mxu0
      %v3953 = vadd.f32 %v1837, %v3952
      %v3954 = vpop.f32.mrb[0].mxu0
      %3955 = vmatprep.mubr.f32.mxu0 0.0
      %3956 = vmatmul.mubr.f32.gmra.mrb[0].mxu0 %v3097
      %v3957 = vpop.f32.mrb[0].mxu0
      %v3958 = vadd.f32 %v1842, %v3957
      %v3959 = vpop.f32.mrb[0].mxu0
      %3960 = vmatprep.mubr.f32.mxu0 0.0
      %3961 = vmatmul.mubr.f32.gmra.mrb[0].mxu0 %v3100
      %v3962 = vpop.f32.mrb[0].mxu0
      %v3963 = vadd.f32 %v1847, %v3962
      %v3964 = vpop.f32.mrb[0].mxu0
      %3965 = vmatprep.mubr.f32.mxu0 0.0
      %3966 = vmatmul.mubr.f32.gmra.mrb[0].mxu0 %v3103
      %v3967 = vpop.f32.mrb[0].mxu0
      %v3968 = vadd.f32 %v1852, %v3967
      %v3969 = vpop.f32.mrb[0].mxu0
      %3970 = vmatprep.mubr.f32.mxu0 0.0
      %3971 = vmatmul.mubr.f32.gmra.mrb[0].mxu0 %v3106
      %v3972 = vpop.f32.mrb[0].mxu0
      %v3973 = vadd.f32 %v1857, %v3972
      %v3974 = vpop.f32.mrb[0].mxu0
      %3975 = vmatprep.mubr.f32.mxu0 0.0
      %3976 = vmatmul.mubr.f32.gmra.mrb[0].mxu0 %v3109
      %v3977 = vpop.f32.mrb[0].mxu0
      %v3978 = vadd.f32 %v1862, %v3977
      %v3979 = vpop.f32.mrb[0].mxu0
      %3980 = vmatprep.mubr.f32.mxu0 0.0
      %3981 = vmatmul.mubr.f32.gmra.mrb[0].mxu0 %v3112
      %v3982 = vpop.f32.mrb[0].mxu0
      %v3983 = vadd.f32 %v1867, %v3982
      %v3984 = vpop.f32.mrb[0].mxu0
      %3985 = vmatprep.mubr.f32.mxu0 0.0
      %3986 = vmatmul.mubr.f32.gmra.mrb[0].mxu0 %v3115
      %v3987 = vpop.f32.mrb[0].mxu0
      %v3988 = vadd.f32 %v1872, %v3987
      %v3989 = vpop.f32.mrb[0].mxu0
      %3990 = vmatprep.mubr.f32.mxu0 0.0
      %3991 = vmatmul.mubr.f32.gmra.mrb[0].mxu0 %v3118
      %v3992 = vpop.f32.mrb[0].mxu0
      %v3993 = vadd.f32 %v1877, %v3992
      %v3994 = vpop.f32.mrb[0].mxu0
      %3995 = vmatprep.mubr.f32.mxu0 0.0
      %3996 = vmatmul.mubr.f32.gmra.mrb[0].mxu0 %v3121
      %v3997 = vpop.f32.mrb[0].mxu0
      %v3998 = vadd.f32 %v1882, %v3997
      %v3999 = vpop.f32.mrb[0].mxu0
      %4000 = vmatprep.mubr.f32.mxu0 0.0
      %4001 = vmatmul.mubr.f32.gmra.mrb[0].mxu0 %v3124
      %v4002 = vpop.f32.mrb[0].mxu0
      %v4003 = vadd.f32 %v1887, %v4002
      %v4004 = vpop.f32.mrb[0].mxu0
      %4005 = vmatprep.mubr.f32.mxu0 0.0
      %4006 = vmatmul.mubr.f32.gmra.mrb[0].mxu0 %v3127
      %v4007 = vpop.f32.mrb[0].mxu0
      %v4008 = vadd.f32 %v1892, %v4007
      %v4009 = vpop.f32.mrb[0].mxu0
      %4010 = vmatprep.mubr.f32.mxu0 0.0
      %4011 = vmatmul.mubr.f32.gmra.mrb[0].mxu0 %v3130
      %v4012 = vpop.f32.mrb[0].mxu0
      %v4013 = vadd.f32 %v1897, %v4012
      %v4014 = vpop.f32.mrb[0].mxu0
      %4015 = vmatprep.mubr.f32.mxu0 0.0
      %4016 = vmatmul.mubr.f32.gmra.mrb[0].mxu0 %v3133
      %v4017 = vpop.f32.mrb[0].mxu0
      %v4018 = vadd.f32 %v1902, %v4017
      %v4019 = vpop.f32.mrb[0].mxu0
      %4020 = vmatprep.mubr.f32.mxu0 0.0
      %4021 = vmatmul.mubr.f32.gmra.mrb[0].mxu0 %v3136
      %v4022 = vpop.f32.mrb[0].mxu0
      %v4023 = vadd.f32 %v1907, %v4022
      %v4024 = vpop.f32.mrb[0].mxu0
      %4025 = vmatprep.mubr.f32.mxu0 0.0
      %4026 = vmatmul.mubr.f32.gmra.mrb[0].mxu0 %v3139
      %v4027 = vpop.f32.mrb[0].mxu0
      %v4028 = vadd.f32 %v1912, %v4027
      %v4029 = vpop.f32.mrb[0].mxu0
      %4030 = vmatprep.mubr.f32.mxu0 0.0
      %4031 = vmatmul.mubr.f32.gmra.mrb[0].mxu0 %v3142
      %v4032 = vpop.f32.mrb[0].mxu0
      %v4033 = vadd.f32 %v1917, %v4032
      %v4034 = vpop.f32.mrb[0].mxu0
      %4035 = vmatprep.mubr.f32.mxu0 0.0
      %4036 = vmatmul.mubr.f32.gmra.mrb[0].mxu0 %v3145
      %v4037 = vpop.f32.mrb[0].mxu0
      %v4038 = vadd.f32 %v1922, %v4037
      %v4039 = vpop.f32.mrb[0].mxu0
      %4040 = vmatprep.mubr.f32.mxu0 0.0
      %4041 = vmatmul.mubr.f32.gmra.mrb[0].mxu0 %v3148
      %v4042 = vpop.f32.mrb[0].mxu0
      %v4043 = vadd.f32 %v1927, %v4042
      %v4044 = vpop.f32.mrb[0].mxu0
      %4045 = vmatprep.mubr.f32.mxu0 0.0
      %4046 = vmatmul.mubr.f32.gmra.mrb[0].mxu0 %v3151
      %v4047 = vpop.f32.mrb[0].mxu0
      %v4048 = vadd.f32 %v1932, %v4047
      %v4049 = vpop.f32.mrb[0].mxu0
      %4050 = vmatprep.mubr.f32.mxu0 0.0
      %4051 = vmatmul.mubr.f32.gmra.mrb[0].mxu0 %v3154
      %v4052 = vpop.f32.mrb[0].mxu0
      %v4053 = vadd.f32 %v1937, %v4052
      %v4054 = vpop.f32.mrb[0].mxu0
      %4055 = vmatprep.mubr.f32.mxu0 0.0
      %4056 = vmatmul.mubr.f32.gmra.mrb[0].mxu0 %v3157
      %v4057 = vpop.f32.mrb[0].mxu0
      %v4058 = vadd.f32 %v1942, %v4057
      %v4059 = vpop.f32.mrb[0].mxu0
      %4060 = vmatprep.mubr.f32.mxu0 0.0
      %4061 = vmatmul.mubr.f32.gmra.mrb[0].mxu0 %v3160
      %v4062 = vpop.f32.mrb[0].mxu0
      %v4063 = vadd.f32 %v1947, %v4062
      %v4064 = vpop.f32.mrb[0].mxu0
      %4065 = vmatprep.mubr.f32.mxu0 0.0
      %4066 = vmatmul.mubr.f32.gmra.mrb[0].mxu0 %v3163
      %v4067 = vpop.f32.mrb[0].mxu0
      %v4068 = vadd.f32 %v1952, %v4067
      %v4069 = vpop.f32.mrb[0].mxu0
      %4070 = vmatprep.mubr.f32.mxu0 0.0
      %4071 = vmatmul.mubr.f32.gmra.mrb[0].mxu0 %v3166
      %v4072 = vpop.f32.mrb[0].mxu0
      %v4073 = vadd.f32 %v1957, %v4072
      %v4074 = vpop.f32.mrb[0].mxu0
      %4075 = vmatprep.mubr.f32.mxu0 0.0
      %4076 = vmatmul.mubr.f32.gmra.mrb[0].mxu0 %v3169
      %v4077 = vpop.f32.mrb[0].mxu0
      %v4078 = vadd.f32 %v1962, %v4077
      %v4079 = vpop.f32.mrb[0].mxu0
      %4080 = vmatprep.mubr.f32.mxu0 0.0
      %4081 = vmatmul.mubr.f32.gmra.mrb[0].mxu0 %v3172
      %v4082 = vpop.f32.mrb[0].mxu0
      %v4083 = vadd.f32 %v1967, %v4082
      %v4084 = vpop.f32.mrb[0].mxu0
      %4085 = vmatprep.mubr.f32.mxu0 0.0
      %4086 = vmatmul.mubr.f32.gmra.mrb[0].mxu0 %v3175
      %v4087 = vpop.f32.mrb[0].mxu0
      %v4088 = vadd.f32 %v1972, %v4087
      %v4089 = vpop.f32.mrb[0].mxu0
      %4090 = vmatprep.mubr.f32.mxu0 0.0
      %4091 = vmatmul.mubr.f32.gmra.mrb[0].mxu0 %v3178
      %v4092 = vpop.f32.mrb[0].mxu0
      %v4093 = vadd.f32 %v1977, %v4092
      %v4094 = vpop.f32.mrb[0].mxu0
      %4095 = vmatprep.mubr.f32.mxu0 0.0
      %4096 = vmatmul.mubr.f32.gmra.mrb[0].mxu0 %v3181
      %v4097 = vpop.f32.mrb[0].mxu0
      %v4098 = vadd.f32 %v1982, %v4097
      %v4099 = vpop.f32.mrb[0].mxu0
      %4100 = vmatprep.mubr.f32.mxu0 0.0
      %4101 = vmatmul.mubr.f32.gmra.mrb[0].mxu0 %v3184
      %v4102 = vpop.f32.mrb[0].mxu0
      %v4103 = vadd.f32 %v1987, %v4102
      %v4104 = vpop.f32.mrb[0].mxu0
      %4105 = vmatprep.mubr.f32.mxu0 0.0
      %4106 = vmatmul.mubr.f32.gmra.mrb[0].mxu0 %v3187
      %v4107 = vpop.f32.mrb[0].mxu0
      %v4108 = vadd.f32 %v1992, %v4107
      %v4109 = vpop.f32.mrb[0].mxu0
      %4110 = vmatprep.mubr.f32.mxu0 0.0
      %4111 = vmatmul.mubr.f32.gmra.mrb[0].mxu0 %v3190
      %v4112 = vpop.f32.mrb[0].mxu0
      %v4113 = vadd.f32 %v1997, %v4112
      %v4114 = vpop.f32.mrb[0].mxu0
      %4115 = vmatprep.mubr.f32.mxu0 0.0
      %4116 = vmatmul.mubr.f32.gmra.mrb[0].mxu0 %v3193
      %v4117 = vpop.f32.mrb[0].mxu0
      %v4118 = vadd.f32 %v2002, %v4117
      %v4119 = vpop.f32.mrb[0].mxu0
      %4120 = vmatprep.mubr.f32.mxu0 0.0
      %4121 = vmatmul.mubr.f32.gmra.mrb[0].mxu0 %v3196
      %v4122 = vpop.f32.mrb[0].mxu0
      %v4123 = vadd.f32 %v2007, %v4122
      %v4124 = vpop.f32.mrb[0].mxu0
      %4125 = vmatprep.mubr.f32.mxu0 0.0
      %4126 = vmatmul.mubr.f32.gmra.mrb[0].mxu0 %v3199
      %v4127 = vpop.f32.mrb[0].mxu0
      %v4128 = vadd.f32 %v2012, %v4127
      %v4129 = vpop.f32.mrb[0].mxu0
      %4130 = vmatprep.mubr.f32.mxu0 0.0
      %4131 = vmatmul.mubr.f32.gmra.mrb[0].mxu0 %v3202
      %v4132 = vpop.f32.mrb[0].mxu0
      %v4133 = vadd.f32 %v2017, %v4132
      %v4134 = vpop.f32.mrb[0].mxu0
      %4135 = vmatprep.mubr.f32.mxu0 0.0
      %4136 = vmatmul.mubr.f32.gmra.mrb[0].mxu0 %v3205
      %v4137 = vpop.f32.mrb[0].mxu0
      %v4138 = vadd.f32 %v2022, %v4137
      %v4139 = vpop.f32.mrb[0].mxu0
      %4140 = vmatprep.mubr.f32.mxu0 0.0
      %4141 = vmatmul.mubr.f32.gmra.mrb[0].mxu0 %v3208
      %v4142 = vpop.f32.mrb[0].mxu0
      %v4143 = vadd.f32 %v2027, %v4142
      %v4144 = vpop.f32.mrb[0].mxu0
      %4145 = vmatprep.mubr.f32.mxu0 0.0
      %4146 = vmatmul.mubr.f32.gmra.mrb[0].mxu0 %v3211
      %v4147 = vpop.f32.mrb[0].mxu0
      %v4148 = vadd.f32 %v2032, %v4147
      %v4149 = vpop.f32.mrb[0].mxu0
      %4150 = vmatprep.mubr.f32.mxu0 0.0
      %4151 = vmatmul.mubr.f32.gmra.mrb[0].mxu0 %v3214
      %v4152 = vpop.f32.mrb[0].mxu0
      %v4153 = vadd.f32 %v2037, %v4152
      %v4154 = vpop.f32.mrb[0].mxu0
      %4155 = vmatprep.mubr.f32.mxu0 0.0
      %4156 = vmatmul.mubr.f32.gmra.mrb[0].mxu0 %v3217
      %v4157 = vpop.f32.mrb[0].mxu0
      %v4158 = vadd.f32 %v2042, %v4157
      %v4159 = vpop.f32.mrb[0].mxu0
      %4160 = vmatprep.mubr.f32.mxu0 0.0
      %4161 = vmatmul.mubr.f32.gmra.mrb[0].mxu0 %v3220
      %v4162 = vpop.f32.mrb[0].mxu0
      %v4163 = vadd.f32 %v2047, %v4162
      %v4164 = vpop.f32.mrb[0].mxu0
      %4165 = vmatprep.mubr.f32.mxu0 0.0
      %4166 = vmatmul.mubr.f32.gmra.mrb[0].mxu0 %v3223
      %v4167 = vpop.f32.mrb[0].mxu0
      %v4168 = vadd.f32 %v2052, %v4167
      %v4169 = vpop.f32.mrb[0].mxu0
      %4170 = vmatprep.mubr.f32.mxu0 0.0
      %4171 = vmatmul.mubr.f32.gmra.mrb[0].mxu0 %v3226
      %v4172 = vpop.f32.mrb[0].mxu0
      %v4173 = vadd.f32 %v2057, %v4172
      %v4174 = vpop.f32.mrb[0].mxu0
      %4175 = vmatprep.mubr.f32.mxu0 0.0
      %4176 = vmatmul.mubr.f32.gmra.mrb[0].mxu0 %v3229
      %v4177 = vpop.f32.mrb[0].mxu0
      %v4178 = vadd.f32 %v2062, %v4177
      %v4179 = vpop.f32.mrb[0].mxu0
      %4180 = vmatprep.mubr.f32.mxu0 0.0
      %4181 = vmatmul.mubr.f32.gmra.mrb[0].mxu0 %v3232
      %v4182 = vpop.f32.mrb[0].mxu0
      %v4183 = vadd.f32 %v2067, %v4182
      %v4184 = vpop.f32.mrb[0].mxu0
      %4185 = vmatprep.mubr.f32.mxu0 0.0
      %4186 = vmatmul.mubr.f32.gmra.mrb[0].mxu0 %v3235
      %v4187 = vpop.f32.mrb[0].mxu0
      %v4188 = vadd.f32 %v2072, %v4187
      %v4189 = vpop.f32.mrb[0].mxu0
      %4190 = vmatprep.mubr.f32.mxu0 0.0
      %4191 = vmatmul.mubr.f32.gmra.mrb[0].mxu0 %v3238
      %v4192 = vpop.f32.mrb[0].mxu0
      %v4193 = vadd.f32 %v2077, %v4192
      %v4194 = vpop.f32.mrb[0].mxu0
      %4195 = vmatprep.mubr.f32.mxu0 0.0
      %4196 = vmatmul.mubr.f32.gmra.mrb[0].mxu0 %v3241
      %v4197 = vpop.f32.mrb[0].mxu0
      %v4198 = vadd.f32 %v2082, %v4197
      %v4199 = vpop.f32.mrb[0].mxu0
      %4200 = vmatprep.mubr.f32.mxu0 0.0
      %4201 = vmatmul.mubr.f32.gmra.mrb[0].mxu0 %v3244
      %v4202 = vpop.f32.mrb[0].mxu0
      %v4203 = vadd.f32 %v2087, %v4202
      %v4204 = vpop.f32.mrb[0].mxu0
      %4205 = vmatprep.mubr.f32.mxu0 0.0
      %4206 = vmatmul.mubr.f32.gmra.mrb[0].mxu0 %v3247
      %v4207 = vpop.f32.mrb[0].mxu0
      %v4208 = vadd.f32 %v2092, %v4207
      %v4209 = vpop.f32.mrb[0].mxu0
      %4210 = vmatprep.mubr.f32.mxu0 0.0
      %4211 = vmatmul.mubr.f32.gmra.mrb[0].mxu0 %v3250
      %v4212 = vpop.f32.mrb[0].mxu0
      %v4213 = vadd.f32 %v2097, %v4212
      %v4214 = vpop.f32.mrb[0].mxu0
      %4215 = vmatprep.mubr.f32.mxu0 0.0
      %4216 = vmatmul.mubr.f32.gmra.mrb[0].mxu0 %v3253
      %v4217 = vpop.f32.mrb[0].mxu0
      %v4218 = vadd.f32 %v2102, %v4217
      %v4219 = vpop.f32.mrb[0].mxu0
      %4220 = vmatprep.mubr.f32.mxu0 0.0
      %4221 = vmatmul.mubr.f32.gmra.mrb[0].mxu0 %v3256
      %v4222 = vpop.f32.mrb[0].mxu0
      %v4223 = vadd.f32 %v2107, %v4222
      %v4224 = vpop.f32.mrb[0].mxu0
      %4225 = vmatprep.mubr.f32.mxu0 0.0
      %4226 = vmatmul.mubr.f32.gmra.mrb[0].mxu0 %v3259
      %v4227 = vpop.f32.mrb[0].mxu0
      %v4228 = vadd.f32 %v2112, %v4227
      %v4229 = vpop.f32.mrb[0].mxu0
      %4230 = vmatprep.mubr.f32.mxu0 0.0
      %4231 = vmatmul.mubr.f32.gmra.mrb[0].mxu0 %v3262
      %v4232 = vpop.f32.mrb[0].mxu0
      %v4233 = vadd.f32 %v2117, %v4232
      %v4234 = vpop.f32.mrb[0].mxu0
      %4235 = vmatprep.mubr.f32.mxu0 0.0
      %4236 = vmatmul.mubr.f32.gmra.mrb[0].mxu0 %v3265
      %v4237 = vpop.f32.mrb[0].mxu0
      %v4238 = vadd.f32 %v2122, %v4237
      %v4239 = vpop.f32.mrb[0].mxu0
      %4240 = vmatprep.mubr.f32.mxu0 0.0
      %4241 = vmatmul.mubr.f32.gmra.mrb[0].mxu0 %v3268
      %v4242 = vpop.f32.mrb[0].mxu0
      %v4243 = vadd.f32 %v2127, %v4242
      %v4244 = vpop.f32.mrb[0].mxu0
      %4245 = vmatprep.mubr.f32.mxu0 0.0
      %4246 = vmatmul.mubr.f32.gmra.mrb[0].mxu0 %v3271
      %v4247 = vpop.f32.mrb[0].mxu0
      %v4248 = vadd.f32 %v2132, %v4247
      %v4249 = vpop.f32.mrb[0].mxu0
      %4250 = vmatprep.mubr.f32.mxu0 0.0
      %4251 = vmatmul.mubr.f32.gmra.mrb[0].mxu0 %v3274
      %v4252 = vpop.f32.mrb[0].mxu0
      %v4253 = vadd.f32 %v2137, %v4252
      %v4254 = vpop.f32.mrb[0].mxu0
      %4255 = vmatprep.mubr.f32.mxu0 0.0
      %4256 = vmatmul.mubr.f32.gmra.mrb[0].mxu0 %v3277
      %v4257 = vpop.f32.mrb[0].mxu0
      %v4258 = vadd.f32 %v2142, %v4257
      %v4259 = vpop.f32.mrb[0].mxu0
      %4260 = vmatprep.mubr.f32.mxu0 0.0
      %4261 = vmatmul.mubr.f32.gmra.mrb[0].mxu0 %v3280
      %v4262 = vpop.f32.mrb[0].mxu0
      %v4263 = vadd.f32 %v2147, %v4262
      %v4264 = vpop.f32.mrb[0].mxu0
      %4265 = vmatprep.mubr.f32.mxu0 0.0
      %4266 = vmatmul.mubr.f32.gmra.mrb[0].mxu0 %v3283
      %v4267 = vpop.f32.mrb[0].mxu0
      %v4268 = vadd.f32 %v2152, %v4267
      %v4269 = vpop.f32.mrb[0].mxu0
      %4270 = vmatprep.mubr.f32.mxu0 0.0
      %4271 = vmatmul.mubr.f32.gmra.mrb[0].mxu0 %v3286
      %v4272 = vpop.f32.mrb[0].mxu0
      %v4273 = vadd.f32 %v2157, %v4272
      %v4274 = vpop.f32.mrb[0].mxu0
      %4275 = vmatprep.mubr.f32.mxu0 0.0
      %4276 = vmatmul.mubr.f32.gmra.mrb[0].mxu0 %v3289
      %v4277 = vpop.f32.mrb[0].mxu0
      %v4278 = vadd.f32 %v2162, %v4277
      %v4279 = vpop.f32.mrb[0].mxu0
      %4280 = vmatprep.mubr.f32.mxu0 0.0
      %4281 = vmatmul.mubr.f32.gmra.mrb[0].mxu0 %v3292
      %v4282 = vpop.f32.mrb[0].mxu0
      %v4283 = vadd.f32 %v2167, %v4282
      %v4284 = vpop.f32.mrb[0].mxu0
      %4285 = vmatprep.mubr.f32.mxu0 0.0
      %4286 = vmatmul.mubr.f32.gmra.mrb[0].mxu0 %v3295
      %v4287 = vpop.f32.mrb[0].mxu0
      %v4288 = vadd.f32 %v2172, %v4287
      %v4289 = vpop.f32.mrb[0].mxu0
      %4290 = vmatprep.mubr.f32.mxu0 0.0
      %4291 = vmatmul.mubr.f32.gmra.mrb[0].mxu0 %v3298
      %v4292 = vpop.f32.mrb[0].mxu0
      %v4293 = vadd.f32 %v2177, %v4292
      %v4294 = vpop.f32.mrb[0].mxu0
      %4295 = vmatprep.mubr.f32.mxu0 0.0
      %4296 = vmatmul.mubr.f32.gmra.mrb[0].mxu0 %v3301
      %v4297 = vpop.f32.mrb[0].mxu0
      %v4298 = vadd.f32 %v2182, %v4297
      %v4299 = vpop.f32.mrb[0].mxu0
      %4300 = vmatprep.mubr.f32.mxu0 0.0
      %4301 = vmatmul.mubr.f32.gmra.mrb[0].mxu0 %v3304
      %v4302 = vpop.f32.mrb[0].mxu0
      %v4303 = vadd.f32 %v2187, %v4302
      %v4304 = vpop.f32.mrb[0].mxu0
      %4305 = vmatprep.mubr.f32.mxu0 0.0
      %4306 = vmatmul.mubr.f32.gmra.mrb[0].mxu0 %v3307
      %v4307 = vpop.f32.mrb[0].mxu0
      %v4308 = vadd.f32 %v2192, %v4307
      %v4309 = vpop.f32.mrb[0].mxu0
      %4310 = vmatprep.mubr.f32.mxu0 0.0
      %4311 = vmatmul.mubr.f32.gmra.mrb[0].mxu0 %v3310
      %v4312 = vpop.f32.mrb[0].mxu0
      %v4313 = vadd.f32 %v2197, %v4312
      %v4314 = vpop.f32.mrb[0].mxu0
      %4315 = vmatprep.mubr.f32.mxu0 0.0
      %4316 = vmatmul.mubr.f32.gmra.mrb[0].mxu0 %v3313
      %v4317 = vpop.f32.mrb[0].mxu0
      %v4318 = vadd.f32 %v2202, %v4317
      %v4319 = vpop.f32.mrb[0].mxu0
      %4320 = vmatprep.mubr.f32.mxu0 0.0
      %4321 = vmatmul.mubr.f32.gmra.mrb[0].mxu0 %v3316
      %v4322 = vpop.f32.mrb[0].mxu0
      %v4323 = vadd.f32 %v2207, %v4322
      %v4324 = vpop.f32.mrb[0].mxu0
      %4325 = vmatprep.mubr.f32.mxu0 0.0
      %4326 = vmatmul.mubr.f32.gmra.mrb[0].mxu0 %v3319
      %v4327 = vpop.f32.mrb[0].mxu0
      %v4328 = vadd.f32 %v2212, %v4327
      %v4329 = vpop.f32.mrb[0].mxu0
      %4330 = vmatprep.mubr.f32.mxu0 0.0
      %4331 = vmatmul.mubr.f32.gmra.mrb[0].mxu0 %v3322
      %v4332 = vpop.f32.mrb[0].mxu0
      %v4333 = vadd.f32 %v2217, %v4332
      %v4334 = vpop.f32.mrb[0].mxu0
      %4335 = vmatprep.mubr.f32.mxu0 0.0
      %4336 = vmatmul.mubr.f32.gmra.mrb[0].mxu0 %v3325
      %v4337 = vpop.f32.mrb[0].mxu0
      %v4338 = vadd.f32 %v2222, %v4337
      %v4339 = vpop.f32.mrb[0].mxu0
      %4340 = vmatprep.mubr.f32.mxu0 0.0
      %4341 = vmatmul.mubr.f32.gmra.mrb[0].mxu0 %v3328
      %v4342 = vpop.f32.mrb[0].mxu0
      %v4343 = vadd.f32 %v2227, %v4342
      %v4344 = vpop.f32.mrb[0].mxu0
      %4345 = vmatprep.mubr.f32.mxu0 0.0
      %4346 = vmatmul.mubr.f32.gmra.mrb[0].mxu0 %v3331
      %v4347 = vpop.f32.mrb[0].mxu0
      %v4348 = vadd.f32 %v2232, %v4347
      %v4349 = vpop.f32.mrb[0].mxu0
      %4350 = vmatprep.mubr.f32.mxu0 0.0
      %4351 = vmatmul.mubr.f32.gmra.mrb[0].mxu0 %v3334
      %v4352 = vpop.f32.mrb[0].mxu0
      %v4353 = vadd.f32 %v2237, %v4352
      %v4354 = vpop.f32.mrb[0].mxu0
      %4355 = vmatprep.mubr.f32.mxu0 0.0
      %4356 = vmatmul.mubr.f32.gmra.mrb[0].mxu0 %v3337
      %v4357 = vpop.f32.mrb[0].mxu0
      %v4358 = vadd.f32 %v2242, %v4357
      %v4359 = vpop.f32.mrb[0].mxu0
      %4360 = vmatprep.mubr.f32.mxu0 0.0
      %4361 = vmatmul.mubr.f32.gmra.mrb[0].mxu0 %v3340
      %v4362 = vpop.f32.mrb[0].mxu0
      %v4363 = vadd.f32 %v2247, %v4362
      %v4364 = vpop.f32.mrb[0].mxu0
      %4365 = vmatprep.mubr.f32.mxu0 0.0
      %4366 = vmatmul.mubr.f32.gmra.mrb[0].mxu0 %v3343
      %v4367 = vpop.f32.mrb[0].mxu0
      %v4368 = vadd.f32 %v2252, %v4367
      %v4369 = vpop.f32.mrb[0].mxu0
      %4370 = vmatprep.mubr.f32.mxu0 0.0
      %4371 = vmatmul.mubr.f32.gmra.mrb[0].mxu0 %v3346
      %v4372 = vpop.f32.mrb[0].mxu0
      %v4373 = vadd.f32 %v2257, %v4372
      %v4374 = vpop.f32.mrb[0].mxu0
      %4375 = vmatprep.mubr.f32.mxu0 0.0
      %4376 = vmatmul.mubr.f32.gmra.mrb[0].mxu0 %v3349
      %v4377 = vpop.f32.mrb[0].mxu0
      %v4378 = vadd.f32 %v2262, %v4377
      %v4379 = vpop.f32.mrb[0].mxu0
      %4380 = vmatprep.mubr.f32.mxu0 0.0
      %4381 = vmatmul.mubr.f32.gmra.mrb[0].mxu0 %v3352
      %v4382 = vpop.f32.mrb[0].mxu0
      %v4383 = vadd.f32 %v2267, %v4382
      %v4384 = vpop.f32.mrb[0].mxu0
      %4385 = vmatprep.mubr.f32.mxu0 0.0
      %4386 = vmatmul.mubr.f32.gmra.mrb[0].mxu0 %v3355
      %v4387 = vpop.f32.mrb[0].mxu0
      %v4388 = vadd.f32 %v2272, %v4387
      %v4389 = vpop.f32.mrb[0].mxu0
      %4390 = vmatprep.mubr.f32.mxu0 0.0
      %4391 = vmatmul.mubr.f32.gmra.mrb[0].mxu0 %v3358
      %v4392 = vpop.f32.mrb[0].mxu0
      %v4393 = vadd.f32 %v2277, %v4392
      %v4394 = vpop.f32.mrb[0].mxu0
      %4395 = vmatprep.mubr.f32.mxu0 0.0
      %4396 = vmatmul.mubr.f32.gmra.mrb[0].mxu0 %v3361
      %v4397 = vpop.f32.mrb[0].mxu0
      %v4398 = vadd.f32 %v2282, %v4397
      %v4399 = vpop.f32.mrb[0].mxu0
      %4400 = vmatprep.mubr.f32.mxu0 0.0
      %4401 = vmatmul.mubr.f32.gmra.mrb[0].mxu0 %v3364
      %v4402 = vpop.f32.mrb[0].mxu0
      %v4403 = vadd.f32 %v2287, %v4402
      %v4404 = vpop.f32.mrb[0].mxu0
      %4405 = vmatprep.mubr.f32.mxu0 0.0
      %4406 = vmatmul.mubr.f32.gmra.mrb[0].mxu0 %v3367
      %v4407 = vpop.f32.mrb[0].mxu0
      %v4408 = vadd.f32 %v2292, %v4407
      %v4409 = vpop.f32.mrb[0].mxu0
      %4410 = vmatprep.mubr.f32.mxu0 0.0
      %4411 = vmatmul.mubr.f32.gmra.mrb[0].mxu0 %v3370
      %v4412 = vpop.f32.mrb[0].mxu0
      %v4413 = vadd.f32 %v2297, %v4412
      %v4414 = vpop.f32.mrb[0].mxu0
      %4415 = vmatprep.mubr.f32.mxu0 0.0
      %4416 = vmatmul.mubr.f32.gmra.mrb[0].mxu0 %v3373
      %v4417 = vpop.f32.mrb[0].mxu0
      %v4418 = vadd.f32 %v2302, %v4417
      %v4419 = vpop.f32.mrb[0].mxu0
      %4420 = vmatprep.mubr.f32.mxu0 0.0
      %4421 = vmatmul.mubr.f32.gmra.mrb[0].mxu0 %v3376
      %v4422 = vpop.f32.mrb[0].mxu0
      %v4423 = vadd.f32 %v2307, %v4422
      %v4424 = vpop.f32.mrb[0].mxu0
      %4425 = vmatprep.mubr.f32.mxu0 0.0
      %4426 = vmatmul.mubr.f32.gmra.mrb[0].mxu0 %v3379
      %v4427 = vpop.f32.mrb[0].mxu0
      %v4428 = vadd.f32 %v2312, %v4427
      %v4429 = vpop.f32.mrb[0].mxu0
      %4430 = vmatprep.mubr.f32.mxu0 0.0
      %4431 = vmatmul.mubr.f32.gmra.mrb[0].mxu0 %v3382
      %v4432 = vpop.f32.mrb[0].mxu0
      %v4433 = vadd.f32 %v2317, %v4432
      %v4434 = vpop.f32.mrb[0].mxu0
      %4435 = vmatprep.mubr.f32.mxu0 0.0
      %4436 = vmatmul.mubr.f32.gmra.mrb[0].mxu0 %v3385
      %v4437 = vpop.f32.mrb[0].mxu0
      %v4438 = vadd.f32 %v2322, %v4437
      %v4439 = vpop.f32.mrb[0].mxu0
      %4440 = vmatprep.mubr.f32.mxu0 0.0
      %4441 = vmatmul.mubr.f32.gmra.mrb[0].mxu0 %v3388
      %v4442 = vpop.f32.mrb[0].mxu0
      %v4443 = vadd.f32 %v2327, %v4442
      %v4444 = vpop.f32.mrb[0].mxu0
      %4445 = vmatprep.mubr.f32.mxu0 0.0
      %4446 = vmatmul.mubr.f32.gmra.mrb[0].mxu0 %v3391
      %v4447 = vpop.f32.mrb[0].mxu0
      %v4448 = vadd.f32 %v2332, %v4447
      %v4449 = vpop.f32.mrb[0].mxu0
      %4450 = vmatprep.mubr.f32.mxu0 0.0
      %4451 = vmatmul.mubr.f32.gmra.mrb[0].mxu0 %v3394
      %v4452 = vpop.f32.mrb[0].mxu0
      %v4453 = vadd.f32 %v2337, %v4452
      %v4454 = vpop.f32.mrb[0].mxu0
      %4455 = vmatprep.mubr.f32.mxu0 0.0
      %4456 = vmatmul.mubr.f32.gmra.mrb[0].mxu0 %v3397
      %v4457 = vpop.f32.mrb[0].mxu0
      %v4458 = vadd.f32 %v2342, %v4457
      %v4459 = vpop.f32.mrb[0].mxu0
      %4460 = vmatprep.mubr.f32.mxu0 0.0
      %4461 = vmatmul.mubr.f32.gmra.mrb[0].mxu0 %v3400
      %v4462 = vpop.f32.mrb[0].mxu0
      %v4463 = vadd.f32 %v2347, %v4462
      %v4464 = vpop.f32.mrb[0].mxu0
      %4465 = vmatprep.mubr.f32.mxu0 0.0
      %4466 = vmatmul.mubr.f32.gmra.mrb[0].mxu0 %v3403
      %v4467 = vpop.f32.mrb[0].mxu0
      %v4468 = vadd.f32 %v2352, %v4467
      %v4469 = vpop.f32.mrb[0].mxu0
      %4470 = vmatprep.mubr.f32.mxu0 0.0
      %4471 = vmatmul.mubr.f32.gmra.mrb[0].mxu0 %v3406
      %v4472 = vpop.f32.mrb[0].mxu0
      %v4473 = vadd.f32 %v2357, %v4472
      %v4474 = vpop.f32.mrb[0].mxu0
      %4475 = vmatprep.mubr.f32.mxu0 0.0
      %4476 = vmatmul.mubr.f32.gmra.mrb[0].mxu0 %v3409
      %v4477 = vpop.f32.mrb[0].mxu0
      %v4478 = vadd.f32 %v2362, %v4477
      %v4479 = vpop.f32.mrb[0].mxu0
      %4480 = vmatprep.mubr.f32.mxu0 0.0
      %4481 = vmatmul.mubr.f32.gmra.mrb[0].mxu0 %v3412
      %v4482 = vpop.f32.mrb[0].mxu0
      %v4483 = vadd.f32 %v2367, %v4482
      %v4484 = vpop.f32.mrb[0].mxu0
      %4485 = vmatprep.mubr.f32.mxu0 0.0
      %4486 = vmatmul.mubr.f32.gmra.mrb[0].mxu0 %v3415
      %v4487 = vpop.f32.mrb[0].mxu0
      %v4488 = vadd.f32 %v2372, %v4487
      %v4489 = vpop.f32.mrb[0].mxu0
      %4490 = vmatprep.mubr.f32.mxu0 0.0
      %4491 = vmatmul.mubr.f32.gmra.mrb[0].mxu0 %v3418
      %v4492 = vpop.f32.mrb[0].mxu0
      %v4493 = vadd.f32 %v2377, %v4492
      %v4494 = vpop.f32.mrb[0].mxu0
      %4495 = vmatprep.mubr.f32.mxu0 0.0
      %4496 = vmatmul.mubr.f32.gmra.mrb[0].mxu0 %v3421
      %v4497 = vpop.f32.mrb[0].mxu0
      %v4498 = vadd.f32 %v2382, %v4497
      %v4499 = vpop.f32.mrb[0].mxu0
      %4500 = vmatprep.mubr.f32.mxu0 0.0
      %4501 = vmatmul.mubr.f32.gmra.mrb[0].mxu0 %v3424
      %v4502 = vpop.f32.mrb[0].mxu0
      %v4503 = vadd.f32 %v2387, %v4502
      %v4504 = vpop.f32.mrb[0].mxu0
      %4505 = vmatprep.mubr.f32.mxu0 0.0
      %4506 = vmatmul.mubr.f32.gmra.mrb[0].mxu0 %v3427
      %v4507 = vpop.f32.mrb[0].mxu0
      %v4508 = vadd.f32 %v2392, %v4507
      %v4509 = vpop.f32.mrb[0].mxu0
      %4510 = vmatprep.mubr.f32.mxu0 0.0
      %4511 = vmatmul.mubr.f32.gmra.mrb[0].mxu0 %v3430
      %v4512 = vpop.f32.mrb[0].mxu0
      %v4513 = vadd.f32 %v2397, %v4512
      %v4514 = vpop.f32.mrb[0].mxu0
      %4515 = vmatprep.mubr.f32.mxu0 0.0
      %4516 = vmatmul.mubr.f32.gmra.mrb[0].mxu0 %v3433
      %v4517 = vpop.f32.mrb[0].mxu0
      %v4518 = vadd.f32 %v2402, %v4517
      %v4519 = vpop.f32.mrb[0].mxu0
      %4520 = vmatprep.mubr.f32.mxu0 0.0
      %4521 = vmatmul.mubr.f32.gmra.mrb[0].mxu0 %v3436
      %v4522 = vpop.f32.mrb[0].mxu0
      %v4523 = vadd.f32 %v2407, %v4522
      %v4524 = vpop.f32.mrb[0].mxu0
      %4525 = vmatprep.mubr.f32.mxu0 0.0
      %4526 = vmatmul.mubr.f32.gmra.mrb[0].mxu0 %v3439
      %v4527 = vpop.f32.mrb[0].mxu0
      %v4528 = vadd.f32 %v2412, %v4527
      %v4529 = vpop.f32.mrb[0].mxu0
      %4530 = vmatprep.mubr.f32.mxu0 0.0
      %4531 = vmatmul.mubr.f32.gmra.mrb[0].mxu0 %v3442
      %v4532 = vpop.f32.mrb[0].mxu0
      %v4533 = vadd.f32 %v2417, %v4532
      %v4534 = vpop.f32.mrb[0].mxu0
      %4535 = vmatprep.mubr.f32.mxu0 0.0
      %4536 = vmatmul.mubr.f32.gmra.mrb[0].mxu0 %v3445
      %v4537 = vpop.f32.mrb[0].mxu0
      %v4538 = vadd.f32 %v2422, %v4537
      %v4539 = vpop.f32.mrb[0].mxu0
      %4540 = vmatprep.mubr.f32.mxu0 0.0
      %4541 = vmatmul.mubr.f32.gmra.mrb[0].mxu0 %v3448
      %v4542 = vpop.f32.mrb[0].mxu0
      %v4543 = vadd.f32 %v2427, %v4542
      %v4544 = vpop.f32.mrb[0].mxu0
      %4545 = vmatprep.mubr.f32.mxu0 0.0
      %4546 = vmatmul.mubr.f32.gmra.mrb[0].mxu0 %v3451
      %v4547 = vpop.f32.mrb[0].mxu0
      %v4548 = vadd.f32 %v2432, %v4547
      %v4549 = vpop.f32.mrb[0].mxu0
      %4550 = vmatprep.mubr.f32.mxu0 0.0
      %4551 = vmatmul.mubr.f32.gmra.mrb[0].mxu0 %v3454
      %v4552 = vpop.f32.mrb[0].mxu0
      %v4553 = vadd.f32 %v2437, %v4552
      %v4554 = vpop.f32.mrb[0].mxu0
      %4555 = vmatprep.mubr.f32.mxu0 0.0
      %4556 = vmatmul.mubr.f32.gmra.mrb[0].mxu0 %v3457
      %v4557 = vpop.f32.mrb[0].mxu0
      %v4558 = vadd.f32 %v2442, %v4557
      %v4559 = vpop.f32.mrb[0].mxu0
      %4560 = vmatprep.mubr.f32.mxu0 0.0
      %4561 = vmatmul.mubr.f32.gmra.mrb[0].mxu0 %v3460
      %v4562 = vpop.f32.mrb[0].mxu0
      %v4563 = vadd.f32 %v2447, %v4562
      %v4564 = vpop.f32.mrb[0].mxu0
      %4565 = vmatprep.mubr.f32.mxu0 0.0
      %4566 = vmatmul.mubr.f32.gmra.mrb[0].mxu0 %v3463
      %v4567 = vpop.f32.mrb[0].mxu0
      %v4568 = vadd.f32 %v2452, %v4567
      %v4569 = vpop.f32.mrb[0].mxu0
      %4570 = vmatprep.mubr.f32.mxu0 0.0
      %4571 = vmatmul.mubr.f32.gmra.mrb[0].mxu0 %v3466
      %v4572 = vpop.f32.mrb[0].mxu0
      %v4573 = vadd.f32 %v2457, %v4572
      %v4574 = vpop.f32.mrb[0].mxu0
      %4575 = vmatprep.mubr.f32.mxu0 0.0
      %4576 = vmatmul.mubr.f32.gmra.mrb[0].mxu0 %v3469
      %v4577 = vpop.f32.mrb[0].mxu0
      %v4578 = vadd.f32 %v2462, %v4577
      %v4579 = vpop.f32.mrb[0].mxu0
      %4580 = vmatprep.mubr.f32.mxu0 0.0
      %4581 = vmatmul.mubr.f32.gmra.mrb[0].mxu0 %v3472
      %v4582 = vpop.f32.mrb[0].mxu0
      %v4583 = vadd.f32 %v2467, %v4582
      %v4584 = vpop.f32.mrb[0].mxu0
      %4585 = vmatprep.mubr.f32.mxu0 0.0
      %4586 = vmatmul.mubr.f32.gmra.mrb[0].mxu0 %v3475
      %v4587 = vpop.f32.mrb[0].mxu0
      %v4588 = vadd.f32 %v2472, %v4587
      %v4589 = vpop.f32.mrb[0].mxu0
      %4590 = vmatprep.mubr.f32.mxu0 0.0
      %4591 = vmatmul.mubr.f32.gmra.mrb[0].mxu0 %v3478
      %v4592 = vpop.f32.mrb[0].mxu0
      %v4593 = vadd.f32 %v2477, %v4592
      %v4594 = vpop.f32.mrb[0].mxu0
      %4595 = vmatprep.mubr.f32.mxu0 0.0
      %4596 = vmatmul.mubr.f32.gmra.mrb[0].mxu0 %v3481
      %v4597 = vpop.f32.mrb[0].mxu0
      %v4598 = vadd.f32 %v2482, %v4597
      %v4599 = vpop.f32.mrb[0].mxu0
      %4600 = vmatprep.mubr.f32.mxu0 0.0
      %4601 = vmatmul.mubr.f32.gmra.mrb[0].mxu0 %v3484
      %v4602 = vpop.f32.mrb[0].mxu0
      %v4603 = vadd.f32 %v2487, %v4602
      %v4604 = vpop.f32.mrb[0].mxu0
      %4605 = vmatprep.mubr.f32.mxu0 0.0
      %4606 = vmatmul.mubr.f32.gmra.mrb[0].mxu0 %v3487
      %v4607 = vpop.f32.mrb[0].mxu0
      %v4608 = vadd.f32 %v2492, %v4607
      %v4609 = vpop.f32.mrb[0].mxu0
      %4610 = vmatprep.mubr.f32.mxu0 0.0
      %4611 = vmatmul.mubr.f32.gmra.mrb[0].mxu0 %v3490
      %v4612 = vpop.f32.mrb[0].mxu0
      %v4613 = vadd.f32 %v2497, %v4612
      %v4614 = vpop.f32.mrb[0].mxu0
      %4615 = vmatprep.mubr.f32.mxu0 0.0
      %4616 = vmatmul.mubr.f32.gmra.mrb[0].mxu0 %v3493
      %v4617 = vpop.f32.mrb[0].mxu0
      %v4618 = vadd.f32 %v2502, %v4617
      %v4619 = vpop.f32.mrb[0].mxu0
      %4620 = vmatprep.mubr.f32.mxu0 0.0
      %4621 = vmatmul.mubr.f32.gmra.mrb[0].mxu0 %v3496
      %v4622 = vpop.f32.mrb[0].mxu0
      %v4623 = vadd.f32 %v2507, %v4622
      %v4624 = vpop.f32.mrb[0].mxu0
      %4625 = vmatprep.mubr.f32.mxu0 0.0
      %4626 = vmatmul.mubr.f32.gmra.mrb[0].mxu0 %v3499
      %v4627 = vpop.f32.mrb[0].mxu0
      %v4628 = vadd.f32 %v2512, %v4627
      %v4629 = vpop.f32.mrb[0].mxu0
      %4630 = vmatprep.mubr.f32.mxu0 0.0
      %4631 = vmatmul.mubr.f32.gmra.mrb[0].mxu0 %v3502
      %v4632 = vpop.f32.mrb[0].mxu0
      %v4633 = vadd.f32 %v2517, %v4632
      %v4634 = vpop.f32.mrb[0].mxu0
      %4635 = vmatprep.mubr.f32.mxu0 0.0
      %4636 = vmatmul.mubr.f32.gmra.mrb[0].mxu0 %v3505
      %v4637 = vpop.f32.mrb[0].mxu0
      %v4638 = vadd.f32 %v2522, %v4637
      %v4639 = vpop.f32.mrb[0].mxu0
      %4640 = vmatprep.mubr.f32.mxu0 0.0
      %4641 = vmatmul.mubr.f32.gmra.mrb[0].mxu0 %v3508
      %v4642 = vpop.f32.mrb[0].mxu0
      %v4643 = vadd.f32 %v2527, %v4642
      %v4644 = vpop.f32.mrb[0].mxu0
      %4645 = vmatprep.mubr.f32.mxu0 0.0
      %4646 = vmatmul.mubr.f32.gmra.mrb[0].mxu0 %v3511
      %v4647 = vpop.f32.mrb[0].mxu0
      %v4648 = vadd.f32 %v2532, %v4647
      %v4649 = vpop.f32.mrb[0].mxu0
      %4650 = vmatprep.mubr.f32.mxu0 0.0
      %4651 = vmatmul.mubr.f32.gmra.mrb[0].mxu0 %v3514
      %v4652 = vpop.f32.mrb[0].mxu0
      %v4653 = vadd.f32 %v2537, %v4652
      %v4654 = vpop.f32.mrb[0].mxu0
      %4655 = vmatprep.mubr.f32.mxu0 0.0
      %4656 = vmatmul.mubr.f32.gmra.mrb[0].mxu0 %v3517
      %v4657 = vpop.f32.mrb[0].mxu0
      %v4658 = vadd.f32 %v2542, %v4657
      %v4659 = vpop.f32.mrb[0].mxu0
      %4660 = vmatprep.mubr.f32.mxu0 0.0
      %4661 = vmatmul.mubr.f32.gmra.mrb[0].mxu0 %v3520
      %v4662 = vpop.f32.mrb[0].mxu0
      %v4663 = vadd.f32 %v2547, %v4662
      %v4664 = vpop.f32.mrb[0].mxu0
      %4665 = vmatprep.mubr.f32.mxu0 0.0
      %4666 = vmatmul.mubr.f32.gmra.mrb[0].mxu0 %v3523
      %v4667 = vpop.f32.mrb[0].mxu0
      %v4668 = vadd.f32 %v2552, %v4667
      %v4669 = vpop.f32.mrb[0].mxu0
      %4670 = vmatprep.mubr.f32.mxu0 0.0
      %4671 = vmatmul.mubr.f32.gmra.mrb[0].mxu0 %v3526
      %v4672 = vpop.f32.mrb[0].mxu0
      %v4673 = vadd.f32 %v2557, %v4672
      %v4674 = vpop.f32.mrb[0].mxu0
      %4675 = vmatprep.mubr.f32.mxu0 0.0
      %4676 = vmatmul.mubr.f32.gmra.mrb[0].mxu0 %v3529
      %v4677 = vpop.f32.mrb[0].mxu0
      %v4678 = vadd.f32 %v2562, %v4677
      %v4679 = vpop.f32.mrb[0].mxu0
      %4680 = vmatprep.mubr.f32.mxu0 0.0
      %4681 = vmatmul.mubr.f32.gmra.mrb[0].mxu0 %v3532
      %v4682 = vpop.f32.mrb[0].mxu0
      %v4683 = vadd.f32 %v2567, %v4682
      %v4684 = vpop.f32.mrb[0].mxu0
      %4685 = vmatprep.mubr.f32.mxu0 0.0
      %4686 = vmatmul.mubr.f32.gmra.mrb[0].mxu0 %v3535
      %v4687 = vpop.f32.mrb[0].mxu0
      %v4688 = vadd.f32 %v2572, %v4687
      %v4689 = vpop.f32.mrb[0].mxu0
      %4690 = vmatprep.mubr.f32.mxu0 0.0
      %4691 = vmatmul.mubr.f32.gmra.mrb[0].mxu0 %v3538
      %v4692 = vpop.f32.mrb[0].mxu0
      %v4693 = vadd.f32 %v2577, %v4692
      %v4694 = vpop.f32.mrb[0].mxu0
      %4695 = vmatprep.mubr.f32.mxu0 0.0
      %4696 = vmatmul.mubr.f32.gmra.mrb[0].mxu0 %v3541
      %v4697 = vpop.f32.mrb[0].mxu0
      %v4698 = vadd.f32 %v2582, %v4697
      %v4699 = vpop.f32.mrb[0].mxu0
      %4700 = vmatprep.mubr.f32.mxu0 0.0
      %4701 = vmatmul.mubr.f32.gmra.mrb[0].mxu0 %v3544
      %v4702 = vpop.f32.mrb[0].mxu0
      %v4703 = vadd.f32 %v2587, %v4702
      %v4704 = vpop.f32.mrb[0].mxu0
      %4705 = vmatprep.mubr.f32.mxu0 0.0
      %4706 = vmatmul.mubr.f32.gmra.mrb[0].mxu0 %v3547
      %v4707 = vpop.f32.mrb[0].mxu0
      %v4708 = vadd.f32 %v2592, %v4707
      %v4709 = vpop.f32.mrb[0].mxu0
      %4710 = vmatprep.mubr.f32.mxu0 0.0
      %4711 = vmatmul.mubr.f32.gmra.mrb[0].mxu0 %v3550
      %v4712 = vpop.f32.mrb[0].mxu0
      %v4713 = vadd.f32 %v2597, %v4712
      %v4714 = vpop.f32.mrb[0].mxu0
      %4715 = vmatprep.mubr.f32.mxu0 0.0
      %4716 = vmatmul.mubr.f32.gmra.mrb[0].mxu0 %v3553
      %v4717 = vpop.f32.mrb[0].mxu0
      %v4718 = vadd.f32 %v2602, %v4717
      %v4719 = vpop.f32.mrb[0].mxu0
      %4720 = vmatprep.mubr.f32.mxu0 0.0
      %4721 = vmatmul.mubr.f32.gmra.mrb[0].mxu0 %v3556
      %v4722 = vpop.f32.mrb[0].mxu0
      %v4723 = vadd.f32 %v2607, %v4722
      %v4724 = vpop.f32.mrb[0].mxu0
      %4725 = vmatprep.mubr.f32.mxu0 0.0
      %4726 = vmatmul.mubr.f32.gmra.mrb[0].mxu0 %v3559
      %v4727 = vpop.f32.mrb[0].mxu0
      %v4728 = vadd.f32 %v2612, %v4727
      %v4729 = vpop.f32.mrb[0].mxu0
      %4730 = vmatprep.mubr.f32.mxu0 0.0
      %4731 = vmatmul.mubr.f32.gmra.mrb[0].mxu0 %v3562
      %v4732 = vpop.f32.mrb[0].mxu0
      %v4733 = vadd.f32 %v2617, %v4732
      %v4734 = vpop.f32.mrb[0].mxu0
      %4735 = vmatprep.mubr.f32.mxu0 0.0
      %4736 = vmatmul.mubr.f32.gmra.mrb[0].mxu0 %v3565
      %v4737 = vpop.f32.mrb[0].mxu0
      %v4738 = vadd.f32 %v2622, %v4737
      %v4739 = vpop.f32.mrb[0].mxu0
      %4740 = vmatprep.mubr.f32.mxu0 0.0
      %4741 = vmatmul.mubr.f32.gmra.mrb[0].mxu0 %v3568
      %v4742 = vpop.f32.mrb[0].mxu0
      %v4743 = vadd.f32 %v2627, %v4742
      %v4744 = vpop.f32.mrb[0].mxu0
      %4745 = vmatprep.mubr.f32.mxu0 0.0
      %4746 = vmatmul.mubr.f32.gmra.mrb[0].mxu0 %v3571
      %v4747 = vpop.f32.mrb[0].mxu0
      %v4748 = vadd.f32 %v2632, %v4747
      %v4749 = vpop.f32.mrb[0].mxu0
      %4750 = vmatprep.mubr.f32.mxu0 0.0
      %4751 = vmatmul.mubr.f32.gmra.mrb[0].mxu0 %v3574
      %v4752 = vpop.f32.mrb[0].mxu0
      %v4753 = vadd.f32 %v2637, %v4752
      %v4754 = vpop.f32.mrb[0].mxu0
      %4755 = vmatprep.mubr.f32.mxu0 0.0
      %4756 = vmatmul.mubr.f32.gmra.mrb[0].mxu0 %v3577
      %v4757 = vpop.f32.mrb[0].mxu0
      %v4758 = vadd.f32 %v2642, %v4757
      %v4759 = vpop.f32.mrb[0].mxu0
      %4760 = vmatprep.mubr.f32.mxu0 0.0
      %4761 = vmatmul.mubr.f32.gmra.mrb[0].mxu0 %v3580
      %v4762 = vpop.f32.mrb[0].mxu0
      %v4763 = vadd.f32 %v2647, %v4762
      %v4764 = vpop.f32.mrb[0].mxu0
      %4765 = vmatprep.mubr.f32.mxu0 0.0
      %4766 = vmatmul.mubr.f32.gmra.mrb[0].mxu0 %v3583
      %v4767 = vpop.f32.mrb[0].mxu0
      %v4768 = vadd.f32 %v2652, %v4767
      %v4769 = vpop.f32.mrb[0].mxu0
      %4770 = vmatprep.mubr.f32.mxu0 0.0
      %4771 = vmatmul.mubr.f32.gmra.mrb[0].mxu0 %v3586
      %v4772 = vpop.f32.mrb[0].mxu0
      %v4773 = vadd.f32 %v2657, %v4772
      %v4774 = vpop.f32.mrb[0].mxu0
      %4775 = vmatprep.mubr.f32.mxu0 0.0
      %4776 = vmatmul.mubr.f32.gmra.mrb[0].mxu0 %v3589
      %v4777 = vpop.f32.mrb[0].mxu0
      %v4778 = vadd.f32 %v2662, %v4777
      %v4779 = vpop.f32.mrb[0].mxu0
      %4780 = vmatprep.mubr.f32.mxu0 0.0
      %4781 = vmatmul.mubr.f32.gmra.mrb[0].mxu0 %v3592
      %v4782 = vpop.f32.mrb[0].mxu0
      %v4783 = vadd.f32 %v2667, %v4782
      %v4784 = vpop.f32.mrb[0].mxu0
      %4785 = vmatprep.mubr.f32.mxu0 0.0
      %4786 = vmatmul.mubr.f32.gmra.mrb[0].mxu0 %v3595
      %v4787 = vpop.f32.mrb[0].mxu0
      %v4788 = vadd.f32 %v2672, %v4787
      %v4789 = vpop.f32.mrb[0].mxu0
      %4790 = vmatprep.mubr.f32.mxu0 0.0
      %4791 = vmatmul.mubr.f32.gmra.mrb[0].mxu0 %v3598
      %v4792 = vpop.f32.mrb[0].mxu0
      %v4793 = vadd.f32 %v2677, %v4792
      %v4794 = vpop.f32.mrb[0].mxu0
      %4795 = vmatprep.mubr.f32.mxu0 0.0
      %4796 = vmatmul.mubr.f32.gmra.mrb[0].mxu0 %v3601
      %v4797 = vpop.f32.mrb[0].mxu0
      %v4798 = vadd.f32 %v2682, %v4797
      %v4799 = vpop.f32.mrb[0].mxu0
      %4800 = vmatprep.mubr.f32.mxu0 0.0
      %4801 = vmatmul.mubr.f32.gmra.mrb[0].mxu0 %v3604
      %v4802 = vpop.f32.mrb[0].mxu0
      %v4803 = vadd.f32 %v2687, %v4802
      %v4804 = vpop.f32.mrb[0].mxu0
      %4805 = vmatprep.mubr.f32.mxu0 0.0
      %4806 = vmatmul.mubr.f32.gmra.mrb[0].mxu0 %v3607
      %v4807 = vpop.f32.mrb[0].mxu0
      %v4808 = vadd.f32 %v2692, %v4807
      %v4809 = vpop.f32.mrb[0].mxu0
      %4810 = vmatprep.mubr.f32.mxu0 0.0
      %4811 = vmatmul.mubr.f32.gmra.mrb[0].mxu0 %v3610
      %v4812 = vpop.f32.mrb[0].mxu0
      %v4813 = vadd.f32 %v2697, %v4812
      %v4814 = vpop.f32.mrb[0].mxu0
      %4815 = vmatprep.mubr.f32.mxu0 0.0
      %4816 = vmatmul.mubr.f32.gmra.mrb[0].mxu0 %v3613
      %v4817 = vpop.f32.mrb[0].mxu0
      %v4818 = vadd.f32 %v2702, %v4817
      %v4819 = vpop.f32.mrb[0].mxu0
      %4820 = vmatprep.mubr.f32.mxu0 0.0
      %4821 = vmatmul.mubr.f32.gmra.mrb[0].mxu0 %v3616
      %v4822 = vpop.f32.mrb[0].mxu0
      %v4823 = vadd.f32 %v2707, %v4822
      %v4824 = vpop.f32.mrb[0].mxu0
      %4825 = vmatprep.mubr.f32.mxu0 0.0
      %4826 = vmatmul.mubr.f32.gmra.mrb[0].mxu0 %v3619
      %v4827 = vpop.f32.mrb[0].mxu0
      %v4828 = vadd.f32 %v2712, %v4827
      %v4829 = vpop.f32.mrb[0].mxu0
      %4830 = vmatprep.mubr.f32.mxu0 0.0
      %4831 = vmatmul.mubr.f32.gmra.mrb[0].mxu0 %v3622
      %v4832 = vpop.f32.mrb[0].mxu0
      %v4833 = vadd.f32 %v2717, %v4832
      %v4834 = vpop.f32.mrb[0].mxu0
      %4835 = vmatprep.mubr.f32.mxu0 0.0
      %4836 = vmatmul.mubr.f32.gmra.mrb[0].mxu0 %v3625
      %v4837 = vpop.f32.mrb[0].mxu0
      %v4838 = vadd.f32 %v2722, %v4837
      %v4839 = vpop.f32.mrb[0].mxu0
      %4840 = vmatprep.mubr.f32.mxu0 0.0
      %4841 = vmatmul.mubr.f32.gmra.mrb[0].mxu0 %v3628
      %v4842 = vpop.f32.mrb[0].mxu0
      %v4843 = vadd.f32 %v2727, %v4842
      %v4844 = vpop.f32.mrb[0].mxu0
      %4845 = vmatprep.mubr.f32.mxu0 0.0
      %4846 = vmatmul.mubr.f32.gmra.mrb[0].mxu0 %v3631
      %v4847 = vpop.f32.mrb[0].mxu0
      %v4848 = vadd.f32 %v2732, %v4847
      %v4849 = vpop.f32.mrb[0].mxu0
      %4850 = vmatprep.mubr.f32.mxu0 0.0
      %4851 = vmatmul.mubr.f32.gmra.mrb[0].mxu0 %v3634
      %v4852 = vpop.f32.mrb[0].mxu0
      %v4853 = vadd.f32 %v2737, %v4852
      %v4854 = vpop.f32.mrb[0].mxu0
      %4855 = vmatprep.mubr.f32.mxu0 0.0
      %4856 = vmatmul.mubr.f32.gmra.mrb[0].mxu0 %v3637
      %v4857 = vpop.f32.mrb[0].mxu0
      %v4858 = vadd.f32 %v2742, %v4857
      %v4859 = vpop.f32.mrb[0].mxu0
      %4860 = vmatprep.mubr.f32.mxu0 0.0
      %4861 = vmatmul.mubr.f32.gmra.mrb[0].mxu0 %v3640
      %v4862 = vpop.f32.mrb[0].mxu0
      %v4863 = vadd.f32 %v2747, %v4862
      %v4864 = vpop.f32.mrb[0].mxu0
      %4865 = vmatprep.mubr.f32.mxu0 0.0
      %4866 = vmatmul.mubr.f32.gmra.mrb[0].mxu0 %v3643
      %v4867 = vpop.f32.mrb[0].mxu0
      %v4868 = vadd.f32 %v2752, %v4867
      %v4869 = vpop.f32.mrb[0].mxu0
      %4870 = vmatprep.mubr.f32.mxu0 0.0
      %4871 = vmatmul.mubr.f32.gmra.mrb[0].mxu0 %v3646
      %v4872 = vpop.f32.mrb[0].mxu0
      %v4873 = vadd.f32 %v2757, %v4872
      %v4874 = vpop.f32.mrb[0].mxu0
      %4875 = vmatprep.mubr.f32.mxu0 0.0
      %4876 = vmatmul.mubr.f32.gmra.mrb[0].mxu0 %v3649
      %v4877 = vpop.f32.mrb[0].mxu0
      %v4878 = vadd.f32 %v2762, %v4877
      %v4879 = vpop.f32.mrb[0].mxu0
      %4880 = vmatprep.mubr.f32.mxu0 0.0
      %4881 = vmatmul.mubr.f32.gmra.mrb[0].mxu0 %v3652
      %v4882 = vpop.f32.mrb[0].mxu0
      %v4883 = vadd.f32 %v2767, %v4882
      %v4884 = vpop.f32.mrb[0].mxu0
      %4885 = vmatprep.mubr.f32.mxu0 0.0
      %4886 = vmatmul.mubr.f32.gmra.mrb[0].mxu0 %v3655
      %v4887 = vpop.f32.mrb[0].mxu0
      %v4888 = vadd.f32 %v2772, %v4887
      %v4889 = vpop.f32.mrb[0].mxu0
      %4890 = vmatprep.mubr.f32.mxu0 0.0
      %4891 = vmatmul.mubr.f32.gmra.mrb[0].mxu0 %v3658
      %v4892 = vpop.f32.mrb[0].mxu0
      %v4893 = vadd.f32 %v2777, %v4892
      %v4894 = vpop.f32.mrb[0].mxu0
      %4895 = vmatprep.mubr.f32.mxu0 0.0
      %4896 = vmatmul.mubr.f32.gmra.mrb[0].mxu0 %v3661
      %v4897 = vpop.f32.mrb[0].mxu0
      %v4898 = vadd.f32 %v2782, %v4897
      %v4899 = vpop.f32.mrb[0].mxu0
      %4900 = vmatprep.mubr.f32.mxu0 0.0
      %4901 = vmatmul.mubr.f32.gmra.mrb[0].mxu0 %v3664
      %v4902 = vpop.f32.mrb[0].mxu0
      %v4903 = vadd.f32 %v2787, %v4902
      %v4904 = vpop.f32.mrb[0].mxu0
      %4905 = vmatprep.mubr.f32.mxu0 0.0
      %4906 = vmatmul.mubr.f32.gmra.mrb[0].mxu0 %v3667
      %v4907 = vpop.f32.mrb[0].mxu0
      %v4908 = vadd.f32 %v2792, %v4907
      %v4909 = vpop.f32.mrb[0].mxu0
      %4910 = vmatprep.mubr.f32.mxu0 0.0
      %4911 = vmatmul.mubr.f32.gmra.mrb[0].mxu0 %v3670
      %v4912 = vpop.f32.mrb[0].mxu0
      %v4913 = vadd.f32 %v2797, %v4912
      %v4914 = vpop.f32.mrb[0].mxu0
      %4915 = vmatprep.mubr.f32.mxu0 0.0
      %4916 = vmatmul.mubr.f32.gmra.mrb[0].mxu0 %v3673
      %v4917 = vpop.f32.mrb[0].mxu0
      %v4918 = vadd.f32 %v2802, %v4917
      %v4919 = vpop.f32.mrb[0].mxu0
      %4920 = vmatprep.mubr.f32.mxu0 0.0
      %4921 = vmatmul.mubr.f32.gmra.mrb[0].mxu0 %v3676
      %v4922 = vpop.f32.mrb[0].mxu0
      %v4923 = vadd.f32 %v2807, %v4922
      %v4924 = vpop.f32.mrb[0].mxu0
      %4925 = vmatprep.mubr.f32.mxu0 0.0
      %4926 = vmatmul.mubr.f32.gmra.mrb[0].mxu0 %v3679
      %v4927 = vpop.f32.mrb[0].mxu0
      %v4928 = vadd.f32 %v2812, %v4927
      %v4929 = vpop.f32.mrb[0].mxu0
      %4930 = vmatprep.mubr.f32.mxu0 0.0
      %4931 = vmatmul.mubr.f32.gmra.mrb[0].mxu0 %v3682
      %v4932 = vpop.f32.mrb[0].mxu0
      %v4933 = vadd.f32 %v2817, %v4932
      %v4934 = vpop.f32.mrb[0].mxu0
      %4935 = vmatprep.mubr.f32.mxu0 0.0
      %4936 = vmatmul.mubr.f32.gmra.mrb[0].mxu0 %v3685
      %v4937 = vpop.f32.mrb[0].mxu0
      %v4938 = vadd.f32 %v2822, %v4937
      %v4939 = vpop.f32.mrb[0].mxu0
      %4940 = vmatprep.mubr.f32.mxu0 0.0
      %4941 = vmatmul.mubr.f32.gmra.mrb[0].mxu0 %v3688
      %v4942 = vpop.f32.mrb[0].mxu0
      %v4943 = vadd.f32 %v2827, %v4942
      %v4944 = vpop.f32.mrb[0].mxu0
      %4945 = vmatprep.mubr.f32.mxu0 0.0
      %4946 = vmatmul.mubr.f32.gmra.mrb[0].mxu0 %v3691
      %v4947 = vpop.f32.mrb[0].mxu0
      %v4948 = vadd.f32 %v2832, %v4947
      %v4949 = vpop.f32.mrb[0].mxu0
      %4950 = vmatprep.mubr.f32.mxu0 0.0
      %4951 = vmatmul.mubr.f32.gmra.mrb[0].mxu0 %v3694
      %v4952 = vpop.f32.mrb[0].mxu0
      %v4953 = vadd.f32 %v2837, %v4952
      %v4954 = vpop.f32.mrb[0].mxu0
      %4955 = vmatprep.mubr.f32.mxu0 0.0
      %4956 = vmatmul.mubr.f32.gmra.mrb[0].mxu0 %v3697
      %v4957 = vpop.f32.mrb[0].mxu0
      %v4958 = vadd.f32 %v2842, %v4957
      %v4959 = vpop.f32.mrb[0].mxu0
      %4960 = vmatprep.mubr.f32.mxu0 0.0
      %4961 = vmatmul.mubr.f32.gmra.mrb[0].mxu0 %v3700
      %v4962 = vpop.f32.mrb[0].mxu0
      %v4963 = vadd.f32 %v2847, %v4962
      %v4964 = vpop.f32.mrb[0].mxu0
      %4965 = vmatprep.mubr.f32.mxu0 0.0
      %4966 = vmatmul.mubr.f32.gmra.mrb[0].mxu0 %v3703
      %v4967 = vpop.f32.mrb[0].mxu0
      %v4968 = vadd.f32 %v2852, %v4967
      %v4969 = vpop.f32.mrb[0].mxu0
      %4970 = vmatprep.mubr.f32.mxu0 0.0
      %4971 = vmatmul.mubr.f32.gmra.mrb[0].mxu0 %v3706
      %v4972 = vpop.f32.mrb[0].mxu0
      %v4973 = vadd.f32 %v2857, %v4972
      %v4974 = vpop.f32.mrb[0].mxu0
      %4975 = vmatprep.mubr.f32.mxu0 0.0
      %4976 = vmatmul.mubr.f32.gmra.mrb[0].mxu0 %v3709
      %v4977 = vpop.f32.mrb[0].mxu0
      %v4978 = vadd.f32 %v2862, %v4977
      %v4979 = vpop.f32.mrb[0].mxu0
      %4980 = vmatprep.mubr.f32.mxu0 0.0
      %4981 = vmatmul.mubr.f32.gmra.mrb[0].mxu0 %v3712
      %v4982 = vpop.f32.mrb[0].mxu0
      %v4983 = vadd.f32 %v2867, %v4982
      %v4984 = vpop.f32.mrb[0].mxu0
      %4985 = vmatprep.mubr.f32.mxu0 0.0
      %4986 = vmatmul.mubr.f32.gmra.mrb[0].mxu0 %v3715
      %v4987 = vpop.f32.mrb[0].mxu0
      %v4988 = vadd.f32 %v2872, %v4987
      %v4989 = vpop.f32.mrb[0].mxu0
      %4990 = vmatprep.mubr.f32.mxu0 0.0
      %4991 = vmatmul.mubr.f32.gmra.mrb[0].mxu0 %v3718
      %v4992 = vpop.f32.mrb[0].mxu0
      %v4993 = vadd.f32 %v2877, %v4992
      %v4994 = vpop.f32.mrb[0].mxu0
      %4995 = vmatprep.mubr.f32.mxu0 0.0
      %4996 = vmatmul.mubr.f32.gmra.mrb[0].mxu0 %v3721
      %v4997 = vpop.f32.mrb[0].mxu0
      %v4998 = vadd.f32 %v2882, %v4997
      %v4999 = vpop.f32.mrb[0].mxu0
      %5000 = vmatprep.mubr.f32.mxu0 0.0
      %5001 = vmatmul.mubr.f32.gmra.mrb[0].mxu0 %v3724
      %v5002 = vpop.f32.mrb[0].mxu0
      %v5003 = vadd.f32 %v2887, %v5002
      %v5004 = vpop.f32.mrb[0].mxu0
      %5005 = vmatprep.mubr.f32.mxu0 0.0
      %5006 = vmatmul.mubr.f32.gmra.mrb[0].mxu0 %v3727
      %v5007 = vpop.f32.mrb[0].mxu0
      %v5008 = vadd.f32 %v2892, %v5007
      %v5009 = vpop.f32.mrb[0].mxu0
      %5010 = vmatprep.mubr.f32.mxu0 0.0
      %5011 = vmatmul.mubr.f32.gmra.mrb[0].mxu0 %v3730
      %v5012 = vpop.f32.mrb[0].mxu0
      %v5013 = vadd.f32 %v2897, %v5012
      %v5014 = vpop.f32.mrb[0].mxu0
      %5015 = vmatprep.mubr.f32.mxu0 0.0
      %5016 = vmatmul.mubr.f32.gmra.mrb[0].mxu0 %v3733
      %v5017 = vpop.f32.mrb[0].mxu0
      %v5018 = vadd.f32 %v2902, %v5017
      %v5019 = vpop.f32.mrb[0].mxu0
      %5020 = vmatprep.mubr.f32.mxu0 0.0
      %5021 = vmatmul.mubr.f32.gmra.mrb[0].mxu0 %v3736
      %v5022 = vpop.f32.mrb[0].mxu0
      %v5023 = vadd.f32 %v2907, %v5022
      %v5024 = vpop.f32.mrb[0].mxu0
      %5025 = vmatprep.mubr.f32.mxu0 0.0
      %5026 = vmatmul.mubr.f32.gmra.mrb[0].mxu0 %v3739
      %v5027 = vpop.f32.mrb[0].mxu0
      %v5028 = vadd.f32 %v2912, %v5027
      %v5029 = vpop.f32.mrb[0].mxu0
      %5030 = vmatprep.mubr.f32.mxu0 0.0
      %5031 = vmatmul.mubr.f32.gmra.mrb[0].mxu0 %v3742
      %v5032 = vpop.f32.mrb[0].mxu0
      %v5033 = vadd.f32 %v2917, %v5032
      %v5034 = vpop.f32.mrb[0].mxu0
      %5035 = vmatprep.mubr.f32.mxu0 0.0
      %5036 = vmatmul.mubr.f32.gmra.mrb[0].mxu0 %v3745
      %v5037 = vpop.f32.mrb[0].mxu0
      %v5038 = vadd.f32 %v2922, %v5037
      %v5039 = vpop.f32.mrb[0].mxu0
      %5040 = vmatprep.mubr.f32.mxu0 0.0
      %5041 = vmatmul.mubr.f32.gmra.mrb[0].mxu0 %v3748
      %v5042 = vpop.f32.mrb[0].mxu0
      %v5043 = vadd.f32 %v2927, %v5042
      %v5044 = vpop.f32.mrb[0].mxu0
      %5045 = vmatprep.mubr.f32.mxu0 0.0
      %5046 = vmatmul.mubr.f32.gmra.mrb[0].mxu0 %v3751
      %v5047 = vpop.f32.mrb[0].mxu0
      %v5048 = vadd.f32 %v2932, %v5047
      %v5049 = vpop.f32.mrb[0].mxu0
      %5050 = vmatprep.mubr.f32.mxu0 0.0
      %5051 = vmatmul.mubr.f32.gmra.mrb[0].mxu0 %v3754
      %v5052 = vpop.f32.mrb[0].mxu0
      %v5053 = vadd.f32 %v2937, %v5052
      %v5054 = vpop.f32.mrb[0].mxu0
      %5055 = vmatprep.mubr.f32.mxu0 0.0
      %5056 = vmatmul.mubr.f32.gmra.mrb[0].mxu0 %v3757
      %v5057 = vpop.f32.mrb[0].mxu0
      %v5058 = vadd.f32 %v2942, %v5057
      %v5059 = vpop.f32.mrb[0].mxu0
      %5060 = vmatprep.mubr.f32.mxu0 0.0
      %5061 = vmatmul.mubr.f32.gmra.mrb[0].mxu0 %v3760
      %v5062 = vpop.f32.mrb[0].mxu0
      %v5063 = vadd.f32 %v2947, %v5062
      %v5064 = vpop.f32.mrb[0].mxu0
      %5065 = vmatprep.mubr.f32.mxu0 0.0
      %5066 = vmatmul.mubr.f32.gmra.mrb[0].mxu0 %v3763
      %v5067 = vpop.f32.mrb[0].mxu0
      %v5068 = vadd.f32 %v2952, %v5067
      %v5069 = vpop.f32.mrb[0].mxu0
      %5070 = vmatprep.mubr.f32.mxu0 0.0
      %5071 = vmatmul.mubr.f32.gmra.mrb[0].mxu0 %v3766
      %v5072 = vpop.f32.mrb[0].mxu0
      %v5073 = vadd.f32 %v2957, %v5072
      %v5074 = vpop.f32.mrb[0].mxu0
      %5075 = vmatprep.mubr.f32.mxu0 0.0
      %5076 = vmatmul.mubr.f32.gmra.mrb[0].mxu0 %v3769
      %v5077 = vpop.f32.mrb[0].mxu0
      %v5078 = vadd.f32 %v2962, %v5077
      %v5079 = vpop.f32.mrb[0].mxu0
      %5080 = vmatprep.mubr.f32.mxu0 0.0
      %5081 = vmatmul.mubr.f32.gmra.mrb[0].mxu0 %v3772
      %v5082 = vpop.f32.mrb[0].mxu0
      %v5083 = vadd.f32 %v2967, %v5082
      %v5084 = vpop.f32.mrb[0].mxu0
      %5085 = vmatprep.mubr.f32.mxu0 0.0
      %5086 = vmatmul.mubr.f32.gmra.mrb[0].mxu0 %v3775
      %v5087 = vpop.f32.mrb[0].mxu0
      %v5088 = vadd.f32 %v2972, %v5087
      %v5089 = vpop.f32.mrb[0].mxu0
      %5090 = vmatprep.mubr.f32.mxu0 0.0
      %5091 = vmatmul.mubr.f32.gmra.mrb[0].mxu0 %v3778
      %v5092 = vpop.f32.mrb[0].mxu0
      %v5093 = vadd.f32 %v2977, %v5092
      %v5094 = vpop.f32.mrb[0].mxu0
      %5095 = vmatprep.mubr.f32.mxu0 0.0
      %5096 = vmatmul.mubr.f32.gmra.mrb[0].mxu0 %v3781
      %v5097 = vpop.f32.mrb[0].mxu0
      %v5098 = vadd.f32 %v2982, %v5097
      %v5099 = vpop.f32.mrb[0].mxu0
      %5100 = vmatprep.mubr.f32.mxu0 0.0
      %5101 = vmatmul.mubr.f32.gmra.mrb[0].mxu0 %v3784
      %v5102 = vpop.f32.mrb[0].mxu0
      %v5103 = vadd.f32 %v2987, %v5102
      %v5104 = vpop.f32.mrb[0].mxu0
      %5105 = vmatprep.mubr.f32.mxu0 0.0
      %5106 = vmatmul.mubr.f32.gmra.mrb[0].mxu0 %v3787
      %v5107 = vpop.f32.mrb[0].mxu0
      %v5108 = vadd.f32 %v2992, %v5107
      %v5109 = vpop.f32.mrb[0].mxu0
      %5110 = vmatprep.mubr.f32.mxu0 0.0
      %5111 = vmatmul.mubr.f32.gmra.mrb[0].mxu0 %v3790
      %v5112 = vpop.f32.mrb[0].mxu0
      %v5113 = vadd.f32 %v2997, %v5112
      %v5114 = vpop.f32.mrb[0].mxu0
      %5115 = vmatprep.mubr.f32.mxu0 0.0
      %5116 = vmatmul.mubr.f32.gmra.mrb[0].mxu0 %v3793
      %v5117 = vpop.f32.mrb[0].mxu0
      %v5118 = vadd.f32 %v3002, %v5117
      %v5119 = vpop.f32.mrb[0].mxu0
      %5120 = vmatprep.mubr.f32.mxu0 0.0
      %5121 = vmatmul.mubr.f32.gmra.mrb[0].mxu0 %v3796
      %v5122 = vpop.f32.mrb[0].mxu0
      %v5123 = vadd.f32 %v3007, %v5122
      %v5124 = vpop.f32.mrb[0].mxu0
      %5125 = vmatprep.mubr.f32.mxu0 0.0
      %5126 = vmatmul.mubr.f32.gmra.mrb[0].mxu0 %v3799
      %v5127 = vpop.f32.mrb[0].mxu0
      %v5128 = vadd.f32 %v3012, %v5127
      %v5129 = vpop.f32.mrb[0].mxu0
      %5130 = vmatprep.mubr.f32.mxu0 0.0
      %5131 = vmatmul.mubr.f32.gmra.mrb[0].mxu0 %v3802
      %v5132 = vpop.f32.mrb[0].mxu0
      %v5133 = vadd.f32 %v3017, %v5132
      %v5134 = vpop.f32.mrb[0].mxu0
      %5135 = vmatprep.mubr.f32.mxu0 0.0
      %5136 = vmatmul.mubr.f32.gmra.mrb[0].mxu0 %v3805
      %v5137 = vpop.f32.mrb[0].mxu0
      %v5138 = vadd.f32 %v3022, %v5137
      %v5139 = vpop.f32.mrb[0].mxu0
      %5140 = vmatprep.mubr.f32.mxu0 0.0
      %5141 = vmatmul.mubr.f32.gmra.mrb[0].mxu0 %v3808
      %v5142 = vpop.f32.mrb[0].mxu0
      %v5143 = vadd.f32 %v3027, %v5142
      %v5144 = vpop.f32.mrb[0].mxu0
      %5145 = vmatprep.mubr.f32.mxu0 0.0
      %5146 = vmatmul.mubr.f32.gmra.mrb[0].mxu0 %v3811
      %v5147 = vpop.f32.mrb[0].mxu0
      %v5148 = vadd.f32 %v3032, %v5147
      %v5149 = vpop.f32.mrb[0].mxu0
      %5150 = vmatprep.mubr.f32.mxu0 0.0
      %5151 = vmatmul.mubr.f32.gmra.mrb[0].mxu0 %v3814
      %v5152 = vpop.f32.mrb[0].mxu0
      %v5153 = vadd.f32 %v3037, %v5152
      %v5154 = vpop.f32.mrb[0].mxu0
      %5155 = vmatprep.mubr.f32.mxu0 0.0
      %5156 = vmatmul.mubr.f32.gmra.mrb[0].mxu0 %v3817
      %v5157 = vpop.f32.mrb[0].mxu0
      %v5158 = vadd.f32 %v3042, %v5157
      %v5159 = vpop.f32.mrb[0].mxu0
      %5160 = vmatprep.mubr.f32.mxu0 0.0
      %5161 = vmatmul.mubr.f32.gmra.mrb[0].mxu0 %v3820
      %v5162 = vpop.f32.mrb[0].mxu0
      %v5163 = vadd.f32 %v3047, %v5162
      %v5164 = vpop.f32.mrb[0].mxu0
      %5165 = vmatprep.mubr.f32.mxu0 0.0
      %5166 = vmatmul.mubr.f32.gmra.mrb[0].mxu0 %v3823
      %v5167 = vpop.f32.mrb[0].mxu0
      %v5168 = vadd.f32 %v3052, %v5167
      %v5169 = vpop.f32.mrb[0].mxu0
      %5170 = vmatprep.mubr.f32.mxu0 0.0
      %5171 = vmatmul.mubr.f32.gmra.mrb[0].mxu0 %v3826
      %v5172 = vpop.f32.mrb[0].mxu0
      %v5173 = vadd.f32 %v3057, %v5172
      %v5174 = vpop.f32.mrb[0].mxu0
      %5175 = vdwg.mxu0
      %s5176 = scalar_lea.vmem %s1, 2
      %v5177 = vld [vmem:[%s5176] sm:$0x1]
      %v5179 = vsel %vm942, %v683, 0
      %v5182 = vsel %vm942, %v684, 0
      %v5185 = vsel %vm942, %v685, 0
      %v5188 = vsel %vm942, %v686, 0
      %v5191 = vsel %vm942, %v687, 0
      %v5194 = vsel %vm942, %v688, 0
      %v5197 = vsel %vm942, %v689, 0
      %v5200 = vsel %vm942, %v690, 0
      %v5203 = vsel %vm942, %v691, 0
      %v5206 = vsel %vm942, %v692, 0
      %v5209 = vsel %vm942, %v693, 0
      %v5212 = vsel %vm942, %v694, 0
      %v5215 = vsel %vm942, %v695, 0
      %v5218 = vsel %vm942, %v696, 0
      %v5221 = vsel %vm942, %v697, 0
      %v5224 = vsel %vm942, %v698, 0
      %v5227 = vsel %vm942, %v699, 0
      %v5230 = vsel %vm942, %v700, 0
      %v5233 = vsel %vm942, %v701, 0
      %v5236 = vsel %vm942, %v702, 0
      %v5239 = vsel %vm942, %v703, 0
      %v5242 = vsel %vm942, %v704, 0
      %v5245 = vsel %vm942, %v705, 0
      %v5248 = vsel %vm942, %v706, 0
      %v5251 = vsel %vm942, %v707, 0
      %v5254 = vsel %vm942, %v708, 0
      %v5257 = vsel %vm942, %v709, 0
      %v5260 = vsel %vm942, %v710, 0
      %v5263 = vsel %vm942, %v711, 0
      %v5266 = vsel %vm942, %v712, 0
      %v5269 = vsel %vm942, %v713, 0
      %v5272 = vsel %vm942, %v714, 0
      %v5275 = vsel %vm942, %v715, 0
      %v5278 = vsel %vm942, %v716, 0
      %v5281 = vsel %vm942, %v717, 0
      %v5284 = vsel %vm942, %v718, 0
      %v5287 = vsel %vm942, %v719, 0
      %v5290 = vsel %vm942, %v720, 0
      %v5293 = vsel %vm942, %v721, 0
      %v5296 = vsel %vm942, %v722, 0
      %v5299 = vsel %vm942, %v723, 0
      %v5302 = vsel %vm942, %v724, 0
      %v5305 = vsel %vm942, %v725, 0
      %v5308 = vsel %vm942, %v726, 0
      %v5311 = vsel %vm942, %v727, 0
      %v5314 = vsel %vm942, %v728, 0
      %v5317 = vsel %vm942, %v729, 0
      %v5320 = vsel %vm942, %v730, 0
      %v5323 = vsel %vm942, %v731, 0
      %v5326 = vsel %vm942, %v732, 0
      %v5329 = vsel %vm942, %v733, 0
      %v5332 = vsel %vm942, %v734, 0
      %v5335 = vsel %vm942, %v735, 0
      %v5338 = vsel %vm942, %v736, 0
      %v5341 = vsel %vm942, %v737, 0
      %v5344 = vsel %vm942, %v738, 0
      %v5347 = vsel %vm942, %v739, 0
      %v5350 = vsel %vm942, %v740, 0
      %v5353 = vsel %vm942, %v741, 0
      %v5356 = vsel %vm942, %v742, 0
      %v5359 = vsel %vm942, %v743, 0
      %v5362 = vsel %vm942, %v744, 0
      %v5365 = vsel %vm942, %v745, 0
      %v5368 = vsel %vm942, %v746, 0
      %v5371 = vsel %vm942, %v747, 0
      %v5374 = vsel %vm942, %v748, 0
      %v5377 = vsel %vm942, %v749, 0
      %v5380 = vsel %vm942, %v750, 0
      %v5383 = vsel %vm942, %v751, 0
      %v5386 = vsel %vm942, %v752, 0
      %v5389 = vsel %vm942, %v753, 0
      %v5392 = vsel %vm942, %v754, 0
      %v5395 = vsel %vm942, %v755, 0
      %v5398 = vsel %vm942, %v756, 0
      %v5401 = vsel %vm942, %v757, 0
      %v5404 = vsel %vm942, %v758, 0
      %v5407 = vsel %vm942, %v759, 0
      %v5410 = vsel %vm942, %v760, 0
      %v5413 = vsel %vm942, %v761, 0
      %v5416 = vsel %vm942, %v762, 0
      %v5419 = vsel %vm942, %v763, 0
      %v5422 = vsel %vm942, %v764, 0
      %v5425 = vsel %vm942, %v765, 0
      %v5428 = vsel %vm942, %v766, 0
      %v5431 = vsel %vm942, %v767, 0
      %v5434 = vsel %vm942, %v768, 0
      %v5437 = vsel %vm942, %v769, 0
      %v5440 = vsel %vm942, %v770, 0
      %v5443 = vsel %vm942, %v771, 0
      %v5446 = vsel %vm942, %v772, 0
      %v5449 = vsel %vm942, %v773, 0
      %v5452 = vsel %vm942, %v774, 0
      %v5455 = vsel %vm942, %v775, 0
      %v5458 = vsel %vm942, %v776, 0
      %v5461 = vsel %vm942, %v777, 0
      %v5464 = vsel %vm942, %v778, 0
      %v5467 = vsel %vm942, %v779, 0
      %v5470 = vsel %vm942, %v780, 0
      %v5473 = vsel %vm942, %v781, 0
      %v5476 = vsel %vm942, %v782, 0
      %v5479 = vsel %vm942, %v783, 0
      %v5482 = vsel %vm942, %v784, 0
      %v5485 = vsel %vm942, %v785, 0
      %v5488 = vsel %vm942, %v786, 0
      %v5491 = vsel %vm942, %v787, 0
      %v5494 = vsel %vm942, %v788, 0
      %v5497 = vsel %vm942, %v789, 0
      %v5500 = vsel %vm942, %v790, 0
      %v5503 = vsel %vm942, %v791, 0
      %v5506 = vsel %vm942, %v792, 0
      %v5509 = vsel %vm942, %v793, 0
      %v5512 = vsel %vm942, %v794, 0
      %v5515 = vsel %vm942, %v795, 0
      %v5518 = vsel %vm942, %v796, 0
      %v5521 = vsel %vm942, %v797, 0
      %v5524 = vsel %vm942, %v798, 0
      %v5527 = vsel %vm942, %v799, 0
      %v5530 = vsel %vm942, %v800, 0
      %v5533 = vsel %vm942, %v801, 0
      %v5536 = vsel %vm942, %v802, 0
      %v5539 = vsel %vm942, %v803, 0
      %v5542 = vsel %vm942, %v804, 0
      %v5545 = vsel %vm942, %v805, 0
      %v5548 = vsel %vm942, %v806, 0
      %v5551 = vsel %vm942, %v807, 0
      %v5554 = vsel %vm942, %v808, 0
      %v5557 = vsel %vm942, %v809, 0
      %v5560 = vsel %vm942, %v810, 0
      %v5563 = vsel %vm942, %v811, 0
      %v5566 = vsel %vm942, %v812, 0
      %v5569 = vsel %vm942, %v813, 0
      %v5572 = vsel %vm942, %v814, 0
      %v5575 = vsel %vm942, %v815, 0
      %v5578 = vsel %vm942, %v816, 0
      %v5581 = vsel %vm942, %v817, 0
      %v5584 = vsel %vm942, %v818, 0
      %v5587 = vsel %vm942, %v819, 0
      %v5590 = vsel %vm942, %v820, 0
      %v5593 = vsel %vm942, %v821, 0
      %v5596 = vsel %vm942, %v822, 0
      %v5599 = vsel %vm942, %v823, 0
      %v5602 = vsel %vm942, %v824, 0
      %v5605 = vsel %vm942, %v825, 0
      %v5608 = vsel %vm942, %v826, 0
      %v5611 = vsel %vm942, %v827, 0
      %v5614 = vsel %vm942, %v828, 0
      %v5617 = vsel %vm942, %v829, 0
      %v5620 = vsel %vm942, %v830, 0
      %v5623 = vsel %vm942, %v831, 0
      %v5626 = vsel %vm942, %v832, 0
      %v5629 = vsel %vm942, %v833, 0
      %v5632 = vsel %vm942, %v834, 0
      %v5635 = vsel %vm942, %v835, 0
      %v5638 = vsel %vm942, %v836, 0
      %v5641 = vsel %vm942, %v837, 0
      %v5644 = vsel %vm942, %v838, 0
      %v5647 = vsel %vm942, %v839, 0
      %v5650 = vsel %vm942, %v840, 0
      %v5653 = vsel %vm942, %v841, 0
      %v5656 = vsel %vm942, %v842, 0
      %v5659 = vsel %vm942, %v843, 0
      %v5662 = vsel %vm942, %v844, 0
      %v5665 = vsel %vm942, %v845, 0
      %v5668 = vsel %vm942, %v846, 0
      %v5671 = vsel %vm942, %v847, 0
      %v5674 = vsel %vm942, %v848, 0
      %v5677 = vsel %vm942, %v849, 0
      %v5680 = vsel %vm942, %v850, 0
      %v5683 = vsel %vm942, %v851, 0
      %v5686 = vsel %vm942, %v852, 0
      %v5689 = vsel %vm942, %v853, 0
      %v5692 = vsel %vm942, %v854, 0
      %v5695 = vsel %vm942, %v855, 0
      %v5698 = vsel %vm942, %v856, 0
      %v5701 = vsel %vm942, %v857, 0
      %v5704 = vsel %vm942, %v858, 0
      %v5707 = vsel %vm942, %v859, 0
      %v5710 = vsel %vm942, %v860, 0
      %v5713 = vsel %vm942, %v861, 0
      %v5716 = vsel %vm942, %v862, 0
      %v5719 = vsel %vm942, %v863, 0
      %v5722 = vsel %vm942, %v864, 0
      %v5725 = vsel %vm942, %v865, 0
      %v5728 = vsel %vm942, %v866, 0
      %v5731 = vsel %vm942, %v867, 0
      %v5734 = vsel %vm942, %v868, 0
      %v5737 = vsel %vm942, %v869, 0
      %v5740 = vsel %vm942, %v870, 0
      %v5743 = vsel %vm942, %v871, 0
      %v5746 = vsel %vm942, %v872, 0
      %v5749 = vsel %vm942, %v873, 0
      %v5752 = vsel %vm942, %v874, 0
      %v5755 = vsel %vm942, %v875, 0
      %v5758 = vsel %vm942, %v876, 0
      %v5761 = vsel %vm942, %v877, 0
      %v5764 = vsel %vm942, %v878, 0
      %v5767 = vsel %vm942, %v879, 0
      %v5770 = vsel %vm942, %v880, 0
      %v5773 = vsel %vm942, %v881, 0
      %v5776 = vsel %vm942, %v882, 0
      %v5779 = vsel %vm942, %v883, 0
      %v5782 = vsel %vm942, %v884, 0
      %v5785 = vsel %vm942, %v885, 0
      %v5788 = vsel %vm942, %v886, 0
      %v5791 = vsel %vm942, %v887, 0
      %v5794 = vsel %vm942, %v888, 0
      %v5797 = vsel %vm942, %v889, 0
      %v5800 = vsel %vm942, %v890, 0
      %v5803 = vsel %vm942, %v891, 0
      %v5806 = vsel %vm942, %v892, 0
      %v5809 = vsel %vm942, %v893, 0
      %v5812 = vsel %vm942, %v894, 0
      %v5815 = vsel %vm942, %v895, 0
      %v5818 = vsel %vm942, %v896, 0
      %v5821 = vsel %vm942, %v897, 0
      %v5824 = vsel %vm942, %v898, 0
      %v5827 = vsel %vm942, %v899, 0
      %v5830 = vsel %vm942, %v900, 0
      %v5833 = vsel %vm942, %v901, 0
      %v5836 = vsel %vm942, %v902, 0
      %v5839 = vsel %vm942, %v903, 0
      %v5842 = vsel %vm942, %v904, 0
      %v5845 = vsel %vm942, %v905, 0
      %v5848 = vsel %vm942, %v906, 0
      %v5851 = vsel %vm942, %v907, 0
      %v5854 = vsel %vm942, %v908, 0
      %v5857 = vsel %vm942, %v909, 0
      %v5860 = vsel %vm942, %v910, 0
      %v5863 = vsel %vm942, %v911, 0
      %v5866 = vsel %vm942, %v912, 0
      %v5869 = vsel %vm942, %v913, 0
      %v5872 = vsel %vm942, %v914, 0
      %v5875 = vsel %vm942, %v915, 0
      %v5878 = vsel %vm942, %v916, 0
      %v5881 = vsel %vm942, %v917, 0
      %v5884 = vsel %vm942, %v918, 0
      %v5887 = vsel %vm942, %v919, 0
      %v5890 = vsel %vm942, %v920, 0
      %v5893 = vsel %vm942, %v921, 0
      %v5896 = vsel %vm942, %v922, 0
      %v5899 = vsel %vm942, %v923, 0
      %v5902 = vsel %vm942, %v924, 0
      %v5905 = vsel %vm942, %v925, 0
      %v5908 = vsel %vm942, %v926, 0
      %v5911 = vsel %vm942, %v927, 0
      %v5914 = vsel %vm942, %v928, 0
      %v5917 = vsel %vm942, %v929, 0
      %v5920 = vsel %vm942, %v930, 0
      %v5923 = vsel %vm942, %v931, 0
      %v5926 = vsel %vm942, %v932, 0
      %v5929 = vsel %vm942, %v933, 0
      %v5932 = vsel %vm942, %v934, 0
      %v5935 = vsel %vm942, %v935, 0
      %v5938 = vsel %vm942, %v936, 0
      %v5941 = vsel %vm942, %v937, 0
      %v5944 = vsel %vm942, %v938, 0
      %v5947 = vsel %vm1711, %v5177, 0
      %5949 = vmatprep.subr.mxu0 0.0
      %5950 = vmatpush1.msra.mxu0 %v5947
      %5951 = vmatprep.subr.mxu0 0.0
      %5952 = vmatpush1.msra.mxu0 0.0
      %5953 = vmatprep.subr.mxu0 0.0
      %5954 = vmatpush1.msra.mxu0 0.0
      %5955 = vmatprep.subr.mxu0 0.0
      %5956 = vmatpush1.msra.mxu0 0.0
      %5957 = vmatprep.subr.mxu0 0.0
      %5958 = vmatpush1.msra.mxu0 0.0
      %5959 = vmatprep.subr.mxu0 0.0
      %5960 = vmatpush1.msra.mxu0 0.0
      %5961 = vmatprep.subr.mxu0 0.0
      %5962 = vmatpush1.msra.mxu0 0.0
      %5963 = vmatprep.subr.mxu0 0.0
      %5964 = vmatpush1.msra.mxu0 0.0
      %5965 = vmatprep.subr.mxu0 0.0
      %5966 = vmatpush1.msra.mxu0 0.0
      %5967 = vmatprep.subr.mxu0 0.0
      %5968 = vmatpush1.msra.mxu0 0.0
      %5969 = vmatprep.subr.mxu0 0.0
      %5970 = vmatpush1.msra.mxu0 0.0
      %5971 = vmatprep.subr.mxu0 0.0
      %5972 = vmatpush1.msra.mxu0 0.0
      %5973 = vmatprep.subr.mxu0 0.0
      %5974 = vmatpush1.msra.mxu0 0.0
      %5975 = vmatprep.subr.mxu0 0.0
      %5976 = vmatpush1.msra.mxu0 0.0
      %5977 = vmatprep.subr.mxu0 0.0
      %5978 = vmatpush1.msra.mxu0 0.0
      %5979 = vmatprep.subr.mxu0 0.0
      %5980 = vmatpush1.msra.mxu0 0.0
      %5981 = vmatprep.subr.mxu0 0.0
      %5982 = vmatpush1.msra.mxu0 0.0
      %5983 = vmatprep.subr.mxu0 0.0
      %5984 = vmatpush1.msra.mxu0 0.0
      %5985 = vmatprep.subr.mxu0 0.0
      %5986 = vmatpush1.msra.mxu0 0.0
      %5987 = vmatprep.subr.mxu0 0.0
      %5988 = vmatpush1.msra.mxu0 0.0
      %5989 = vmatprep.subr.mxu0 0.0
      %5990 = vmatpush1.msra.mxu0 0.0
      %5991 = vmatprep.subr.mxu0 0.0
      %5992 = vmatpush1.msra.mxu0 0.0
      %5993 = vmatprep.subr.mxu0 0.0
      %5994 = vmatpush1.msra.mxu0 0.0
      %5995 = vmatprep.subr.mxu0 0.0
      %5996 = vmatpush1.msra.mxu0 0.0
      %5997 = vmatprep.subr.mxu0 0.0
      %5998 = vmatpush1.msra.mxu0 0.0
      %5999 = vmatprep.subr.mxu0 0.0
      %6000 = vmatpush1.msra.mxu0 0.0
      %6001 = vmatprep.subr.mxu0 0.0
      %6002 = vmatpush1.msra.mxu0 0.0
      %6003 = vmatprep.subr.mxu0 0.0
      %6004 = vmatpush1.msra.mxu0 0.0
      %6005 = vmatprep.subr.mxu0 0.0
      %6006 = vmatpush1.msra.mxu0 0.0
      %6007 = vmatprep.subr.mxu0 0.0
      %6008 = vmatpush1.msra.mxu0 0.0
      %6009 = vmatprep.subr.mxu0 0.0
      %6010 = vmatpush1.msra.mxu0 0.0
      %6011 = vmatprep.subr.mxu0 0.0
      %6012 = vmatpush1.msra.mxu0 0.0
      %6013 = vmatprep.mubr.f32.mxu0 0.0
      %6014 = vmatmul.mubr.f32.gmra.mrb[0].mxu0 %v5179
      %v6015 = vpop.f32.mrb[0].mxu0
      %v6016 = vadd.f32 0.0, %v6015
      %v6017 = vpop.f32.mrb[0].mxu0
      %6018 = vmatprep.mubr.f32.mxu0 0.0
      %6019 = vmatmul.mubr.f32.gmra.mrb[0].mxu0 %v5182
      %v6020 = vpop.f32.mrb[0].mxu0
      %v6021 = vadd.f32 0.0, %v6020
      %v6022 = vpop.f32.mrb[0].mxu0
      %6023 = vmatprep.mubr.f32.mxu0 0.0
      %6024 = vmatmul.mubr.f32.gmra.mrb[0].mxu0 %v5185
      %v6025 = vpop.f32.mrb[0].mxu0
      %v6026 = vadd.f32 0.0, %v6025
      %v6027 = vpop.f32.mrb[0].mxu0
      %6028 = vmatprep.mubr.f32.mxu0 0.0
      %6029 = vmatmul.mubr.f32.gmra.mrb[0].mxu0 %v5188
      %v6030 = vpop.f32.mrb[0].mxu0
      %v6031 = vadd.f32 0.0, %v6030
      %v6032 = vpop.f32.mrb[0].mxu0
      %6033 = vmatprep.mubr.f32.mxu0 0.0
      %6034 = vmatmul.mubr.f32.gmra.mrb[0].mxu0 %v5191
      %v6035 = vpop.f32.mrb[0].mxu0
      %v6036 = vadd.f32 0.0, %v6035
      %v6037 = vpop.f32.mrb[0].mxu0
      %6038 = vmatprep.mubr.f32.mxu0 0.0
      %6039 = vmatmul.mubr.f32.gmra.mrb[0].mxu0 %v5194
      %v6040 = vpop.f32.mrb[0].mxu0
      %v6041 = vadd.f32 0.0, %v6040
      %v6042 = vpop.f32.mrb[0].mxu0
      %6043 = vmatprep.mubr.f32.mxu0 0.0
      %6044 = vmatmul.mubr.f32.gmra.mrb[0].mxu0 %v5197
      %v6045 = vpop.f32.mrb[0].mxu0
      %v6046 = vadd.f32 0.0, %v6045
      %v6047 = vpop.f32.mrb[0].mxu0
      %6048 = vmatprep.mubr.f32.mxu0 0.0
      %6049 = vmatmul.mubr.f32.gmra.mrb[0].mxu0 %v5200
      %v6050 = vpop.f32.mrb[0].mxu0
      %v6051 = vadd.f32 0.0, %v6050
      %v6052 = vpop.f32.mrb[0].mxu0
      %6053 = vmatprep.mubr.f32.mxu0 0.0
      %6054 = vmatmul.mubr.f32.gmra.mrb[0].mxu0 %v5203
      %v6055 = vpop.f32.mrb[0].mxu0
      %v6056 = vadd.f32 0.0, %v6055
      %v6057 = vpop.f32.mrb[0].mxu0
      %6058 = vmatprep.mubr.f32.mxu0 0.0
      %6059 = vmatmul.mubr.f32.gmra.mrb[0].mxu0 %v5206
      %v6060 = vpop.f32.mrb[0].mxu0
      %v6061 = vadd.f32 0.0, %v6060
      %v6062 = vpop.f32.mrb[0].mxu0
      %6063 = vmatprep.mubr.f32.mxu0 0.0
      %6064 = vmatmul.mubr.f32.gmra.mrb[0].mxu0 %v5209
      %v6065 = vpop.f32.mrb[0].mxu0
      %v6066 = vadd.f32 0.0, %v6065
      %v6067 = vpop.f32.mrb[0].mxu0
      %6068 = vmatprep.mubr.f32.mxu0 0.0
      %6069 = vmatmul.mubr.f32.gmra.mrb[0].mxu0 %v5212
      %v6070 = vpop.f32.mrb[0].mxu0
      %v6071 = vadd.f32 0.0, %v6070
      %v6072 = vpop.f32.mrb[0].mxu0
      %6073 = vmatprep.mubr.f32.mxu0 0.0
      %6074 = vmatmul.mubr.f32.gmra.mrb[0].mxu0 %v5215
      %v6075 = vpop.f32.mrb[0].mxu0
      %v6076 = vadd.f32 0.0, %v6075
      %v6077 = vpop.f32.mrb[0].mxu0
      %6078 = vmatprep.mubr.f32.mxu0 0.0
      %6079 = vmatmul.mubr.f32.gmra.mrb[0].mxu0 %v5218
      %v6080 = vpop.f32.mrb[0].mxu0
      %v6081 = vadd.f32 0.0, %v6080
      %v6082 = vpop.f32.mrb[0].mxu0
      %6083 = vmatprep.mubr.f32.mxu0 0.0
      %6084 = vmatmul.mubr.f32.gmra.mrb[0].mxu0 %v5221
      %v6085 = vpop.f32.mrb[0].mxu0
      %v6086 = vadd.f32 0.0, %v6085
      %v6087 = vpop.f32.mrb[0].mxu0
      %6088 = vmatprep.mubr.f32.mxu0 0.0
      %6089 = vmatmul.mubr.f32.gmra.mrb[0].mxu0 %v5224
      %v6090 = vpop.f32.mrb[0].mxu0
      %v6091 = vadd.f32 0.0, %v6090
      %v6092 = vpop.f32.mrb[0].mxu0
      %6093 = vmatprep.mubr.f32.mxu0 0.0
      %6094 = vmatmul.mubr.f32.gmra.mrb[0].mxu0 %v5227
      %v6095 = vpop.f32.mrb[0].mxu0
      %v6096 = vadd.f32 0.0, %v6095
      %v6097 = vpop.f32.mrb[0].mxu0
      %6098 = vmatprep.mubr.f32.mxu0 0.0
      %6099 = vmatmul.mubr.f32.gmra.mrb[0].mxu0 %v5230
      %v6100 = vpop.f32.mrb[0].mxu0
      %v6101 = vadd.f32 0.0, %v6100
      %v6102 = vpop.f32.mrb[0].mxu0
      %6103 = vmatprep.mubr.f32.mxu0 0.0
      %6104 = vmatmul.mubr.f32.gmra.mrb[0].mxu0 %v5233
      %v6105 = vpop.f32.mrb[0].mxu0
      %v6106 = vadd.f32 0.0, %v6105
      %v6107 = vpop.f32.mrb[0].mxu0
      %6108 = vmatprep.mubr.f32.mxu0 0.0
      %6109 = vmatmul.mubr.f32.gmra.mrb[0].mxu0 %v5236
      %v6110 = vpop.f32.mrb[0].mxu0
      %v6111 = vadd.f32 0.0, %v6110
      %v6112 = vpop.f32.mrb[0].mxu0
      %6113 = vmatprep.mubr.f32.mxu0 0.0
      %6114 = vmatmul.mubr.f32.gmra.mrb[0].mxu0 %v5239
      %v6115 = vpop.f32.mrb[0].mxu0
      %v6116 = vadd.f32 0.0, %v6115
      %v6117 = vpop.f32.mrb[0].mxu0
      %6118 = vmatprep.mubr.f32.mxu0 0.0
      %6119 = vmatmul.mubr.f32.gmra.mrb[0].mxu0 %v5242
      %v6120 = vpop.f32.mrb[0].mxu0
      %v6121 = vadd.f32 0.0, %v6120
      %v6122 = vpop.f32.mrb[0].mxu0
      %6123 = vmatprep.mubr.f32.mxu0 0.0
      %6124 = vmatmul.mubr.f32.gmra.mrb[0].mxu0 %v5245
      %v6125 = vpop.f32.mrb[0].mxu0
      %v6126 = vadd.f32 0.0, %v6125
      %v6127 = vpop.f32.mrb[0].mxu0
      %6128 = vmatprep.mubr.f32.mxu0 0.0
      %6129 = vmatmul.mubr.f32.gmra.mrb[0].mxu0 %v5248
      %v6130 = vpop.f32.mrb[0].mxu0
      %v6131 = vadd.f32 0.0, %v6130
      %v6132 = vpop.f32.mrb[0].mxu0
      %6133 = vmatprep.mubr.f32.mxu0 0.0
      %6134 = vmatmul.mubr.f32.gmra.mrb[0].mxu0 %v5251
      %v6135 = vpop.f32.mrb[0].mxu0
      %v6136 = vadd.f32 0.0, %v6135
      %v6137 = vpop.f32.mrb[0].mxu0
      %6138 = vmatprep.mubr.f32.mxu0 0.0
      %6139 = vmatmul.mubr.f32.gmra.mrb[0].mxu0 %v5254
      %v6140 = vpop.f32.mrb[0].mxu0
      %v6141 = vadd.f32 0.0, %v6140
      %v6142 = vpop.f32.mrb[0].mxu0
      %6143 = vmatprep.mubr.f32.mxu0 0.0
      %6144 = vmatmul.mubr.f32.gmra.mrb[0].mxu0 %v5257
      %v6145 = vpop.f32.mrb[0].mxu0
      %v6146 = vadd.f32 0.0, %v6145
      %v6147 = vpop.f32.mrb[0].mxu0
      %6148 = vmatprep.mubr.f32.mxu0 0.0
      %6149 = vmatmul.mubr.f32.gmra.mrb[0].mxu0 %v5260
      %v6150 = vpop.f32.mrb[0].mxu0
      %v6151 = vadd.f32 0.0, %v6150
      %v6152 = vpop.f32.mrb[0].mxu0
      %6153 = vmatprep.mubr.f32.mxu0 0.0
      %6154 = vmatmul.mubr.f32.gmra.mrb[0].mxu0 %v5263
      %v6155 = vpop.f32.mrb[0].mxu0
      %v6156 = vadd.f32 0.0, %v6155
      %v6157 = vpop.f32.mrb[0].mxu0
      %6158 = vmatprep.mubr.f32.mxu0 0.0
      %6159 = vmatmul.mubr.f32.gmra.mrb[0].mxu0 %v5266
      %v6160 = vpop.f32.mrb[0].mxu0
      %v6161 = vadd.f32 0.0, %v6160
      %v6162 = vpop.f32.mrb[0].mxu0
      %6163 = vmatprep.mubr.f32.mxu0 0.0
      %6164 = vmatmul.mubr.f32.gmra.mrb[0].mxu0 %v5269
      %v6165 = vpop.f32.mrb[0].mxu0
      %v6166 = vadd.f32 0.0, %v6165
      %v6167 = vpop.f32.mrb[0].mxu0
      %6168 = vmatprep.mubr.f32.mxu0 0.0
      %6169 = vmatmul.mubr.f32.gmra.mrb[0].mxu0 %v5272
      %v6170 = vpop.f32.mrb[0].mxu0
      %v6171 = vadd.f32 0.0, %v6170
      %v6172 = vpop.f32.mrb[0].mxu0
      %6173 = vmatprep.mubr.f32.mxu0 0.0
      %6174 = vmatmul.mubr.f32.gmra.mrb[0].mxu0 %v5275
      %v6175 = vpop.f32.mrb[0].mxu0
      %v6176 = vadd.f32 0.0, %v6175
      %v6177 = vpop.f32.mrb[0].mxu0
      %6178 = vmatprep.mubr.f32.mxu0 0.0
      %6179 = vmatmul.mubr.f32.gmra.mrb[0].mxu0 %v5278
      %v6180 = vpop.f32.mrb[0].mxu0
      %v6181 = vadd.f32 0.0, %v6180
      %v6182 = vpop.f32.mrb[0].mxu0
      %6183 = vmatprep.mubr.f32.mxu0 0.0
      %6184 = vmatmul.mubr.f32.gmra.mrb[0].mxu0 %v5281
      %v6185 = vpop.f32.mrb[0].mxu0
      %v6186 = vadd.f32 0.0, %v6185
      %v6187 = vpop.f32.mrb[0].mxu0
      %6188 = vmatprep.mubr.f32.mxu0 0.0
      %6189 = vmatmul.mubr.f32.gmra.mrb[0].mxu0 %v5284
      %v6190 = vpop.f32.mrb[0].mxu0
      %v6191 = vadd.f32 0.0, %v6190
      %v6192 = vpop.f32.mrb[0].mxu0
      %6193 = vmatprep.mubr.f32.mxu0 0.0
      %6194 = vmatmul.mubr.f32.gmra.mrb[0].mxu0 %v5287
      %v6195 = vpop.f32.mrb[0].mxu0
      %v6196 = vadd.f32 0.0, %v6195
      %v6197 = vpop.f32.mrb[0].mxu0
      %6198 = vmatprep.mubr.f32.mxu0 0.0
      %6199 = vmatmul.mubr.f32.gmra.mrb[0].mxu0 %v5290
      %v6200 = vpop.f32.mrb[0].mxu0
      %v6201 = vadd.f32 0.0, %v6200
      %v6202 = vpop.f32.mrb[0].mxu0
      %6203 = vmatprep.mubr.f32.mxu0 0.0
      %6204 = vmatmul.mubr.f32.gmra.mrb[0].mxu0 %v5293
      %v6205 = vpop.f32.mrb[0].mxu0
      %v6206 = vadd.f32 0.0, %v6205
      %v6207 = vpop.f32.mrb[0].mxu0
      %6208 = vmatprep.mubr.f32.mxu0 0.0
      %6209 = vmatmul.mubr.f32.gmra.mrb[0].mxu0 %v5296
      %v6210 = vpop.f32.mrb[0].mxu0
      %v6211 = vadd.f32 0.0, %v6210
      %v6212 = vpop.f32.mrb[0].mxu0
      %6213 = vmatprep.mubr.f32.mxu0 0.0
      %6214 = vmatmul.mubr.f32.gmra.mrb[0].mxu0 %v5299
      %v6215 = vpop.f32.mrb[0].mxu0
      %v6216 = vadd.f32 0.0, %v6215
      %v6217 = vpop.f32.mrb[0].mxu0
      %6218 = vmatprep.mubr.f32.mxu0 0.0
      %6219 = vmatmul.mubr.f32.gmra.mrb[0].mxu0 %v5302
      %v6220 = vpop.f32.mrb[0].mxu0
      %v6221 = vadd.f32 0.0, %v6220
      %v6222 = vpop.f32.mrb[0].mxu0
      %6223 = vmatprep.mubr.f32.mxu0 0.0
      %6224 = vmatmul.mubr.f32.gmra.mrb[0].mxu0 %v5305
      %v6225 = vpop.f32.mrb[0].mxu0
      %v6226 = vadd.f32 0.0, %v6225
      %v6227 = vpop.f32.mrb[0].mxu0
      %6228 = vmatprep.mubr.f32.mxu0 0.0
      %6229 = vmatmul.mubr.f32.gmra.mrb[0].mxu0 %v5308
      %v6230 = vpop.f32.mrb[0].mxu0
      %v6231 = vadd.f32 0.0, %v6230
      %v6232 = vpop.f32.mrb[0].mxu0
      %6233 = vmatprep.mubr.f32.mxu0 0.0
      %6234 = vmatmul.mubr.f32.gmra.mrb[0].mxu0 %v5311
      %v6235 = vpop.f32.mrb[0].mxu0
      %v6236 = vadd.f32 0.0, %v6235
      %v6237 = vpop.f32.mrb[0].mxu0
      %6238 = vmatprep.mubr.f32.mxu0 0.0
      %6239 = vmatmul.mubr.f32.gmra.mrb[0].mxu0 %v5314
      %v6240 = vpop.f32.mrb[0].mxu0
      %v6241 = vadd.f32 0.0, %v6240
      %v6242 = vpop.f32.mrb[0].mxu0
      %6243 = vmatprep.mubr.f32.mxu0 0.0
      %6244 = vmatmul.mubr.f32.gmra.mrb[0].mxu0 %v5317
      %v6245 = vpop.f32.mrb[0].mxu0
      %v6246 = vadd.f32 0.0, %v6245
      %v6247 = vpop.f32.mrb[0].mxu0
      %6248 = vmatprep.mubr.f32.mxu0 0.0
      %6249 = vmatmul.mubr.f32.gmra.mrb[0].mxu0 %v5320
      %v6250 = vpop.f32.mrb[0].mxu0
      %v6251 = vadd.f32 0.0, %v6250
      %v6252 = vpop.f32.mrb[0].mxu0
      %6253 = vmatprep.mubr.f32.mxu0 0.0
      %6254 = vmatmul.mubr.f32.gmra.mrb[0].mxu0 %v5323
      %v6255 = vpop.f32.mrb[0].mxu0
      %v6256 = vadd.f32 0.0, %v6255
      %v6257 = vpop.f32.mrb[0].mxu0
      %6258 = vmatprep.mubr.f32.mxu0 0.0
      %6259 = vmatmul.mubr.f32.gmra.mrb[0].mxu0 %v5326
      %v6260 = vpop.f32.mrb[0].mxu0
      %v6261 = vadd.f32 0.0, %v6260
      %v6262 = vpop.f32.mrb[0].mxu0
      %6263 = vmatprep.mubr.f32.mxu0 0.0
      %6264 = vmatmul.mubr.f32.gmra.mrb[0].mxu0 %v5329
      %v6265 = vpop.f32.mrb[0].mxu0
      %v6266 = vadd.f32 0.0, %v6265
      %v6267 = vpop.f32.mrb[0].mxu0
      %6268 = vmatprep.mubr.f32.mxu0 0.0
      %6269 = vmatmul.mubr.f32.gmra.mrb[0].mxu0 %v5332
      %v6270 = vpop.f32.mrb[0].mxu0
      %v6271 = vadd.f32 0.0, %v6270
      %v6272 = vpop.f32.mrb[0].mxu0
      %6273 = vmatprep.mubr.f32.mxu0 0.0
      %6274 = vmatmul.mubr.f32.gmra.mrb[0].mxu0 %v5335
      %v6275 = vpop.f32.mrb[0].mxu0
      %v6276 = vadd.f32 0.0, %v6275
      %v6277 = vpop.f32.mrb[0].mxu0
      %6278 = vmatprep.mubr.f32.mxu0 0.0
      %6279 = vmatmul.mubr.f32.gmra.mrb[0].mxu0 %v5338
      %v6280 = vpop.f32.mrb[0].mxu0
      %v6281 = vadd.f32 0.0, %v6280
      %v6282 = vpop.f32.mrb[0].mxu0
      %6283 = vmatprep.mubr.f32.mxu0 0.0
      %6284 = vmatmul.mubr.f32.gmra.mrb[0].mxu0 %v5341
      %v6285 = vpop.f32.mrb[0].mxu0
      %v6286 = vadd.f32 0.0, %v6285
      %v6287 = vpop.f32.mrb[0].mxu0
      %6288 = vmatprep.mubr.f32.mxu0 0.0
      %6289 = vmatmul.mubr.f32.gmra.mrb[0].mxu0 %v5344
      %v6290 = vpop.f32.mrb[0].mxu0
      %v6291 = vadd.f32 0.0, %v6290
      %v6292 = vpop.f32.mrb[0].mxu0
      %6293 = vmatprep.mubr.f32.mxu0 0.0
      %6294 = vmatmul.mubr.f32.gmra.mrb[0].mxu0 %v5347
      %v6295 = vpop.f32.mrb[0].mxu0
      %v6296 = vadd.f32 0.0, %v6295
      %v6297 = vpop.f32.mrb[0].mxu0
      %6298 = vmatprep.mubr.f32.mxu0 0.0
      %6299 = vmatmul.mubr.f32.gmra.mrb[0].mxu0 %v5350
      %v6300 = vpop.f32.mrb[0].mxu0
      %v6301 = vadd.f32 0.0, %v6300
      %v6302 = vpop.f32.mrb[0].mxu0
      %6303 = vmatprep.mubr.f32.mxu0 0.0
      %6304 = vmatmul.mubr.f32.gmra.mrb[0].mxu0 %v5353
      %v6305 = vpop.f32.mrb[0].mxu0
      %v6306 = vadd.f32 0.0, %v6305
      %v6307 = vpop.f32.mrb[0].mxu0
      %6308 = vmatprep.mubr.f32.mxu0 0.0
      %6309 = vmatmul.mubr.f32.gmra.mrb[0].mxu0 %v5356
      %v6310 = vpop.f32.mrb[0].mxu0
      %v6311 = vadd.f32 0.0, %v6310
      %v6312 = vpop.f32.mrb[0].mxu0
      %6313 = vmatprep.mubr.f32.mxu0 0.0
      %6314 = vmatmul.mubr.f32.gmra.mrb[0].mxu0 %v5359
      %v6315 = vpop.f32.mrb[0].mxu0
      %v6316 = vadd.f32 0.0, %v6315
      %v6317 = vpop.f32.mrb[0].mxu0
      %6318 = vmatprep.mubr.f32.mxu0 0.0
      %6319 = vmatmul.mubr.f32.gmra.mrb[0].mxu0 %v5362
      %v6320 = vpop.f32.mrb[0].mxu0
      %v6321 = vadd.f32 0.0, %v6320
      %v6322 = vpop.f32.mrb[0].mxu0
      %6323 = vmatprep.mubr.f32.mxu0 0.0
      %6324 = vmatmul.mubr.f32.gmra.mrb[0].mxu0 %v5365
      %v6325 = vpop.f32.mrb[0].mxu0
      %v6326 = vadd.f32 0.0, %v6325
      %v6327 = vpop.f32.mrb[0].mxu0
      %6328 = vmatprep.mubr.f32.mxu0 0.0
      %6329 = vmatmul.mubr.f32.gmra.mrb[0].mxu0 %v5368
      %v6330 = vpop.f32.mrb[0].mxu0
      %v6331 = vadd.f32 0.0, %v6330
      %v6332 = vpop.f32.mrb[0].mxu0
      %6333 = vmatprep.mubr.f32.mxu0 0.0
      %6334 = vmatmul.mubr.f32.gmra.mrb[0].mxu0 %v5371
      %v6335 = vpop.f32.mrb[0].mxu0
      %v6336 = vadd.f32 0.0, %v6335
      %v6337 = vpop.f32.mrb[0].mxu0
      %6338 = vmatprep.mubr.f32.mxu0 0.0
      %6339 = vmatmul.mubr.f32.gmra.mrb[0].mxu0 %v5374
      %v6340 = vpop.f32.mrb[0].mxu0
      %v6341 = vadd.f32 0.0, %v6340
      %v6342 = vpop.f32.mrb[0].mxu0
      %6343 = vmatprep.mubr.f32.mxu0 0.0
      %6344 = vmatmul.mubr.f32.gmra.mrb[0].mxu0 %v5377
      %v6345 = vpop.f32.mrb[0].mxu0
      %v6346 = vadd.f32 0.0, %v6345
      %v6347 = vpop.f32.mrb[0].mxu0
      %6348 = vmatprep.mubr.f32.mxu0 0.0
      %6349 = vmatmul.mubr.f32.gmra.mrb[0].mxu0 %v5380
      %v6350 = vpop.f32.mrb[0].mxu0
      %v6351 = vadd.f32 0.0, %v6350
      %v6352 = vpop.f32.mrb[0].mxu0
      %6353 = vmatprep.mubr.f32.mxu0 0.0
      %6354 = vmatmul.mubr.f32.gmra.mrb[0].mxu0 %v5383
      %v6355 = vpop.f32.mrb[0].mxu0
      %v6356 = vadd.f32 0.0, %v6355
      %v6357 = vpop.f32.mrb[0].mxu0
      %6358 = vmatprep.mubr.f32.mxu0 0.0
      %6359 = vmatmul.mubr.f32.gmra.mrb[0].mxu0 %v5386
      %v6360 = vpop.f32.mrb[0].mxu0
      %v6361 = vadd.f32 0.0, %v6360
      %v6362 = vpop.f32.mrb[0].mxu0
      %6363 = vmatprep.mubr.f32.mxu0 0.0
      %6364 = vmatmul.mubr.f32.gmra.mrb[0].mxu0 %v5389
      %v6365 = vpop.f32.mrb[0].mxu0
      %v6366 = vadd.f32 0.0, %v6365
      %v6367 = vpop.f32.mrb[0].mxu0
      %6368 = vmatprep.mubr.f32.mxu0 0.0
      %6369 = vmatmul.mubr.f32.gmra.mrb[0].mxu0 %v5392
      %v6370 = vpop.f32.mrb[0].mxu0
      %v6371 = vadd.f32 0.0, %v6370
      %v6372 = vpop.f32.mrb[0].mxu0
      %6373 = vmatprep.mubr.f32.mxu0 0.0
      %6374 = vmatmul.mubr.f32.gmra.mrb[0].mxu0 %v5395
      %v6375 = vpop.f32.mrb[0].mxu0
      %v6376 = vadd.f32 0.0, %v6375
      %v6377 = vpop.f32.mrb[0].mxu0
      %6378 = vmatprep.mubr.f32.mxu0 0.0
      %6379 = vmatmul.mubr.f32.gmra.mrb[0].mxu0 %v5398
      %v6380 = vpop.f32.mrb[0].mxu0
      %v6381 = vadd.f32 0.0, %v6380
      %v6382 = vpop.f32.mrb[0].mxu0
      %6383 = vmatprep.mubr.f32.mxu0 0.0
      %6384 = vmatmul.mubr.f32.gmra.mrb[0].mxu0 %v5401
      %v6385 = vpop.f32.mrb[0].mxu0
      %v6386 = vadd.f32 0.0, %v6385
      %v6387 = vpop.f32.mrb[0].mxu0
      %6388 = vmatprep.mubr.f32.mxu0 0.0
      %6389 = vmatmul.mubr.f32.gmra.mrb[0].mxu0 %v5404
      %v6390 = vpop.f32.mrb[0].mxu0
      %v6391 = vadd.f32 0.0, %v6390
      %v6392 = vpop.f32.mrb[0].mxu0
      %6393 = vmatprep.mubr.f32.mxu0 0.0
      %6394 = vmatmul.mubr.f32.gmra.mrb[0].mxu0 %v5407
      %v6395 = vpop.f32.mrb[0].mxu0
      %v6396 = vadd.f32 0.0, %v6395
      %v6397 = vpop.f32.mrb[0].mxu0
      %6398 = vmatprep.mubr.f32.mxu0 0.0
      %6399 = vmatmul.mubr.f32.gmra.mrb[0].mxu0 %v5410
      %v6400 = vpop.f32.mrb[0].mxu0
      %v6401 = vadd.f32 0.0, %v6400
      %v6402 = vpop.f32.mrb[0].mxu0
      %6403 = vmatprep.mubr.f32.mxu0 0.0
      %6404 = vmatmul.mubr.f32.gmra.mrb[0].mxu0 %v5413
      %v6405 = vpop.f32.mrb[0].mxu0
      %v6406 = vadd.f32 0.0, %v6405
      %v6407 = vpop.f32.mrb[0].mxu0
      %6408 = vmatprep.mubr.f32.mxu0 0.0
      %6409 = vmatmul.mubr.f32.gmra.mrb[0].mxu0 %v5416
      %v6410 = vpop.f32.mrb[0].mxu0
      %v6411 = vadd.f32 0.0, %v6410
      %v6412 = vpop.f32.mrb[0].mxu0
      %6413 = vmatprep.mubr.f32.mxu0 0.0
      %6414 = vmatmul.mubr.f32.gmra.mrb[0].mxu0 %v5419
      %v6415 = vpop.f32.mrb[0].mxu0
      %v6416 = vadd.f32 0.0, %v6415
      %v6417 = vpop.f32.mrb[0].mxu0
      %6418 = vmatprep.mubr.f32.mxu0 0.0
      %6419 = vmatmul.mubr.f32.gmra.mrb[0].mxu0 %v5422
      %v6420 = vpop.f32.mrb[0].mxu0
      %v6421 = vadd.f32 0.0, %v6420
      %v6422 = vpop.f32.mrb[0].mxu0
      %6423 = vmatprep.mubr.f32.mxu0 0.0
      %6424 = vmatmul.mubr.f32.gmra.mrb[0].mxu0 %v5425
      %v6425 = vpop.f32.mrb[0].mxu0
      %v6426 = vadd.f32 0.0, %v6425
      %v6427 = vpop.f32.mrb[0].mxu0
      %6428 = vmatprep.mubr.f32.mxu0 0.0
      %6429 = vmatmul.mubr.f32.gmra.mrb[0].mxu0 %v5428
      %v6430 = vpop.f32.mrb[0].mxu0
      %v6431 = vadd.f32 0.0, %v6430
      %v6432 = vpop.f32.mrb[0].mxu0
      %6433 = vmatprep.mubr.f32.mxu0 0.0
      %6434 = vmatmul.mubr.f32.gmra.mrb[0].mxu0 %v5431
      %v6435 = vpop.f32.mrb[0].mxu0
      %v6436 = vadd.f32 0.0, %v6435
      %v6437 = vpop.f32.mrb[0].mxu0
      %6438 = vmatprep.mubr.f32.mxu0 0.0
      %6439 = vmatmul.mubr.f32.gmra.mrb[0].mxu0 %v5434
      %v6440 = vpop.f32.mrb[0].mxu0
      %v6441 = vadd.f32 0.0, %v6440
      %v6442 = vpop.f32.mrb[0].mxu0
      %6443 = vmatprep.mubr.f32.mxu0 0.0
      %6444 = vmatmul.mubr.f32.gmra.mrb[0].mxu0 %v5437
      %v6445 = vpop.f32.mrb[0].mxu0
      %v6446 = vadd.f32 0.0, %v6445
      %v6447 = vpop.f32.mrb[0].mxu0
      %6448 = vmatprep.mubr.f32.mxu0 0.0
      %6449 = vmatmul.mubr.f32.gmra.mrb[0].mxu0 %v5440
      %v6450 = vpop.f32.mrb[0].mxu0
      %v6451 = vadd.f32 0.0, %v6450
      %v6452 = vpop.f32.mrb[0].mxu0
      %6453 = vmatprep.mubr.f32.mxu0 0.0
      %6454 = vmatmul.mubr.f32.gmra.mrb[0].mxu0 %v5443
      %v6455 = vpop.f32.mrb[0].mxu0
      %v6456 = vadd.f32 0.0, %v6455
      %v6457 = vpop.f32.mrb[0].mxu0
      %6458 = vmatprep.mubr.f32.mxu0 0.0
      %6459 = vmatmul.mubr.f32.gmra.mrb[0].mxu0 %v5446
      %v6460 = vpop.f32.mrb[0].mxu0
      %v6461 = vadd.f32 0.0, %v6460
      %v6462 = vpop.f32.mrb[0].mxu0
      %6463 = vmatprep.mubr.f32.mxu0 0.0
      %6464 = vmatmul.mubr.f32.gmra.mrb[0].mxu0 %v5449
      %v6465 = vpop.f32.mrb[0].mxu0
      %v6466 = vadd.f32 0.0, %v6465
      %v6467 = vpop.f32.mrb[0].mxu0
      %6468 = vmatprep.mubr.f32.mxu0 0.0
      %6469 = vmatmul.mubr.f32.gmra.mrb[0].mxu0 %v5452
      %v6470 = vpop.f32.mrb[0].mxu0
      %v6471 = vadd.f32 0.0, %v6470
      %v6472 = vpop.f32.mrb[0].mxu0
      %6473 = vmatprep.mubr.f32.mxu0 0.0
      %6474 = vmatmul.mubr.f32.gmra.mrb[0].mxu0 %v5455
      %v6475 = vpop.f32.mrb[0].mxu0
      %v6476 = vadd.f32 0.0, %v6475
      %v6477 = vpop.f32.mrb[0].mxu0
      %6478 = vmatprep.mubr.f32.mxu0 0.0
      %6479 = vmatmul.mubr.f32.gmra.mrb[0].mxu0 %v5458
      %v6480 = vpop.f32.mrb[0].mxu0
      %v6481 = vadd.f32 0.0, %v6480
      %v6482 = vpop.f32.mrb[0].mxu0
      %6483 = vmatprep.mubr.f32.mxu0 0.0
      %6484 = vmatmul.mubr.f32.gmra.mrb[0].mxu0 %v5461
      %v6485 = vpop.f32.mrb[0].mxu0
      %v6486 = vadd.f32 0.0, %v6485
      %v6487 = vpop.f32.mrb[0].mxu0
      %6488 = vmatprep.mubr.f32.mxu0 0.0
      %6489 = vmatmul.mubr.f32.gmra.mrb[0].mxu0 %v5464
      %v6490 = vpop.f32.mrb[0].mxu0
      %v6491 = vadd.f32 0.0, %v6490
      %v6492 = vpop.f32.mrb[0].mxu0
      %6493 = vmatprep.mubr.f32.mxu0 0.0
      %6494 = vmatmul.mubr.f32.gmra.mrb[0].mxu0 %v5467
      %v6495 = vpop.f32.mrb[0].mxu0
      %v6496 = vadd.f32 0.0, %v6495
      %v6497 = vpop.f32.mrb[0].mxu0
      %6498 = vmatprep.mubr.f32.mxu0 0.0
      %6499 = vmatmul.mubr.f32.gmra.mrb[0].mxu0 %v5470
      %v6500 = vpop.f32.mrb[0].mxu0
      %v6501 = vadd.f32 0.0, %v6500
      %v6502 = vpop.f32.mrb[0].mxu0
      %6503 = vmatprep.mubr.f32.mxu0 0.0
      %6504 = vmatmul.mubr.f32.gmra.mrb[0].mxu0 %v5473
      %v6505 = vpop.f32.mrb[0].mxu0
      %v6506 = vadd.f32 0.0, %v6505
      %v6507 = vpop.f32.mrb[0].mxu0
      %6508 = vmatprep.mubr.f32.mxu0 0.0
      %6509 = vmatmul.mubr.f32.gmra.mrb[0].mxu0 %v5476
      %v6510 = vpop.f32.mrb[0].mxu0
      %v6511 = vadd.f32 0.0, %v6510
      %v6512 = vpop.f32.mrb[0].mxu0
      %6513 = vmatprep.mubr.f32.mxu0 0.0
      %6514 = vmatmul.mubr.f32.gmra.mrb[0].mxu0 %v5479
      %v6515 = vpop.f32.mrb[0].mxu0
      %v6516 = vadd.f32 0.0, %v6515
      %v6517 = vpop.f32.mrb[0].mxu0
      %6518 = vmatprep.mubr.f32.mxu0 0.0
      %6519 = vmatmul.mubr.f32.gmra.mrb[0].mxu0 %v5482
      %v6520 = vpop.f32.mrb[0].mxu0
      %v6521 = vadd.f32 0.0, %v6520
      %v6522 = vpop.f32.mrb[0].mxu0
      %6523 = vmatprep.mubr.f32.mxu0 0.0
      %6524 = vmatmul.mubr.f32.gmra.mrb[0].mxu0 %v5485
      %v6525 = vpop.f32.mrb[0].mxu0
      %v6526 = vadd.f32 0.0, %v6525
      %v6527 = vpop.f32.mrb[0].mxu0
      %6528 = vmatprep.mubr.f32.mxu0 0.0
      %6529 = vmatmul.mubr.f32.gmra.mrb[0].mxu0 %v5488
      %v6530 = vpop.f32.mrb[0].mxu0
      %v6531 = vadd.f32 0.0, %v6530
      %v6532 = vpop.f32.mrb[0].mxu0
      %6533 = vmatprep.mubr.f32.mxu0 0.0
      %6534 = vmatmul.mubr.f32.gmra.mrb[0].mxu0 %v5491
      %v6535 = vpop.f32.mrb[0].mxu0
      %v6536 = vadd.f32 0.0, %v6535
      %v6537 = vpop.f32.mrb[0].mxu0
      %6538 = vmatprep.mubr.f32.mxu0 0.0
      %6539 = vmatmul.mubr.f32.gmra.mrb[0].mxu0 %v5494
      %v6540 = vpop.f32.mrb[0].mxu0
      %v6541 = vadd.f32 0.0, %v6540
      %v6542 = vpop.f32.mrb[0].mxu0
      %6543 = vmatprep.mubr.f32.mxu0 0.0
      %6544 = vmatmul.mubr.f32.gmra.mrb[0].mxu0 %v5497
      %v6545 = vpop.f32.mrb[0].mxu0
      %v6546 = vadd.f32 0.0, %v6545
      %v6547 = vpop.f32.mrb[0].mxu0
      %6548 = vmatprep.mubr.f32.mxu0 0.0
      %6549 = vmatmul.mubr.f32.gmra.mrb[0].mxu0 %v5500
      %v6550 = vpop.f32.mrb[0].mxu0
      %v6551 = vadd.f32 0.0, %v6550
      %v6552 = vpop.f32.mrb[0].mxu0
      %6553 = vmatprep.mubr.f32.mxu0 0.0
      %6554 = vmatmul.mubr.f32.gmra.mrb[0].mxu0 %v5503
      %v6555 = vpop.f32.mrb[0].mxu0
      %v6556 = vadd.f32 0.0, %v6555
      %v6557 = vpop.f32.mrb[0].mxu0
      %6558 = vmatprep.mubr.f32.mxu0 0.0
      %6559 = vmatmul.mubr.f32.gmra.mrb[0].mxu0 %v5506
      %v6560 = vpop.f32.mrb[0].mxu0
      %v6561 = vadd.f32 0.0, %v6560
      %v6562 = vpop.f32.mrb[0].mxu0
      %6563 = vmatprep.mubr.f32.mxu0 0.0
      %6564 = vmatmul.mubr.f32.gmra.mrb[0].mxu0 %v5509
      %v6565 = vpop.f32.mrb[0].mxu0
      %v6566 = vadd.f32 0.0, %v6565
      %v6567 = vpop.f32.mrb[0].mxu0
      %6568 = vmatprep.mubr.f32.mxu0 0.0
      %6569 = vmatmul.mubr.f32.gmra.mrb[0].mxu0 %v5512
      %v6570 = vpop.f32.mrb[0].mxu0
      %v6571 = vadd.f32 0.0, %v6570
      %v6572 = vpop.f32.mrb[0].mxu0
      %6573 = vmatprep.mubr.f32.mxu0 0.0
      %6574 = vmatmul.mubr.f32.gmra.mrb[0].mxu0 %v5515
      %v6575 = vpop.f32.mrb[0].mxu0
      %v6576 = vadd.f32 0.0, %v6575
      %v6577 = vpop.f32.mrb[0].mxu0
      %6578 = vmatprep.mubr.f32.mxu0 0.0
      %6579 = vmatmul.mubr.f32.gmra.mrb[0].mxu0 %v5518
      %v6580 = vpop.f32.mrb[0].mxu0
      %v6581 = vadd.f32 0.0, %v6580
      %v6582 = vpop.f32.mrb[0].mxu0
      %6583 = vmatprep.mubr.f32.mxu0 0.0
      %6584 = vmatmul.mubr.f32.gmra.mrb[0].mxu0 %v5521
      %v6585 = vpop.f32.mrb[0].mxu0
      %v6586 = vadd.f32 0.0, %v6585
      %v6587 = vpop.f32.mrb[0].mxu0
      %6588 = vmatprep.mubr.f32.mxu0 0.0
      %6589 = vmatmul.mubr.f32.gmra.mrb[0].mxu0 %v5524
      %v6590 = vpop.f32.mrb[0].mxu0
      %v6591 = vadd.f32 0.0, %v6590
      %v6592 = vpop.f32.mrb[0].mxu0
      %6593 = vmatprep.mubr.f32.mxu0 0.0
      %6594 = vmatmul.mubr.f32.gmra.mrb[0].mxu0 %v5527
      %v6595 = vpop.f32.mrb[0].mxu0
      %v6596 = vadd.f32 0.0, %v6595
      %v6597 = vpop.f32.mrb[0].mxu0
      %6598 = vmatprep.mubr.f32.mxu0 0.0
      %6599 = vmatmul.mubr.f32.gmra.mrb[0].mxu0 %v5530
      %v6600 = vpop.f32.mrb[0].mxu0
      %v6601 = vadd.f32 0.0, %v6600
      %v6602 = vpop.f32.mrb[0].mxu0
      %6603 = vmatprep.mubr.f32.mxu0 0.0
      %6604 = vmatmul.mubr.f32.gmra.mrb[0].mxu0 %v5533
      %v6605 = vpop.f32.mrb[0].mxu0
      %v6606 = vadd.f32 0.0, %v6605
      %v6607 = vpop.f32.mrb[0].mxu0
      %6608 = vmatprep.mubr.f32.mxu0 0.0
      %6609 = vmatmul.mubr.f32.gmra.mrb[0].mxu0 %v5536
      %v6610 = vpop.f32.mrb[0].mxu0
      %v6611 = vadd.f32 0.0, %v6610
      %v6612 = vpop.f32.mrb[0].mxu0
      %6613 = vmatprep.mubr.f32.mxu0 0.0
      %6614 = vmatmul.mubr.f32.gmra.mrb[0].mxu0 %v5539
      %v6615 = vpop.f32.mrb[0].mxu0
      %v6616 = vadd.f32 0.0, %v6615
      %v6617 = vpop.f32.mrb[0].mxu0
      %6618 = vmatprep.mubr.f32.mxu0 0.0
      %6619 = vmatmul.mubr.f32.gmra.mrb[0].mxu0 %v5542
      %v6620 = vpop.f32.mrb[0].mxu0
      %v6621 = vadd.f32 0.0, %v6620
      %v6622 = vpop.f32.mrb[0].mxu0
      %6623 = vmatprep.mubr.f32.mxu0 0.0
      %6624 = vmatmul.mubr.f32.gmra.mrb[0].mxu0 %v5545
      %v6625 = vpop.f32.mrb[0].mxu0
      %v6626 = vadd.f32 0.0, %v6625
      %v6627 = vpop.f32.mrb[0].mxu0
      %6628 = vmatprep.mubr.f32.mxu0 0.0
      %6629 = vmatmul.mubr.f32.gmra.mrb[0].mxu0 %v5548
      %v6630 = vpop.f32.mrb[0].mxu0
      %v6631 = vadd.f32 0.0, %v6630
      %v6632 = vpop.f32.mrb[0].mxu0
      %6633 = vmatprep.mubr.f32.mxu0 0.0
      %6634 = vmatmul.mubr.f32.gmra.mrb[0].mxu0 %v5551
      %v6635 = vpop.f32.mrb[0].mxu0
      %v6636 = vadd.f32 0.0, %v6635
      %v6637 = vpop.f32.mrb[0].mxu0
      %6638 = vmatprep.mubr.f32.mxu0 0.0
      %6639 = vmatmul.mubr.f32.gmra.mrb[0].mxu0 %v5554
      %v6640 = vpop.f32.mrb[0].mxu0
      %v6641 = vadd.f32 0.0, %v6640
      %v6642 = vpop.f32.mrb[0].mxu0
      %6643 = vmatprep.mubr.f32.mxu0 0.0
      %6644 = vmatmul.mubr.f32.gmra.mrb[0].mxu0 %v5557
      %v6645 = vpop.f32.mrb[0].mxu0
      %v6646 = vadd.f32 0.0, %v6645
      %v6647 = vpop.f32.mrb[0].mxu0
      %6648 = vmatprep.mubr.f32.mxu0 0.0
      %6649 = vmatmul.mubr.f32.gmra.mrb[0].mxu0 %v5560
      %v6650 = vpop.f32.mrb[0].mxu0
      %v6651 = vadd.f32 0.0, %v6650
      %v6652 = vpop.f32.mrb[0].mxu0
      %6653 = vmatprep.mubr.f32.mxu0 0.0
      %6654 = vmatmul.mubr.f32.gmra.mrb[0].mxu0 %v5563
      %v6655 = vpop.f32.mrb[0].mxu0
      %v6656 = vadd.f32 0.0, %v6655
      %v6657 = vpop.f32.mrb[0].mxu0
      %6658 = vmatprep.mubr.f32.mxu0 0.0
      %6659 = vmatmul.mubr.f32.gmra.mrb[0].mxu0 %v5566
      %v6660 = vpop.f32.mrb[0].mxu0
      %v6661 = vadd.f32 0.0, %v6660
      %v6662 = vpop.f32.mrb[0].mxu0
      %6663 = vmatprep.mubr.f32.mxu0 0.0
      %6664 = vmatmul.mubr.f32.gmra.mrb[0].mxu0 %v5569
      %v6665 = vpop.f32.mrb[0].mxu0
      %v6666 = vadd.f32 0.0, %v6665
      %v6667 = vpop.f32.mrb[0].mxu0
      %6668 = vmatprep.mubr.f32.mxu0 0.0
      %6669 = vmatmul.mubr.f32.gmra.mrb[0].mxu0 %v5572
      %v6670 = vpop.f32.mrb[0].mxu0
      %v6671 = vadd.f32 0.0, %v6670
      %v6672 = vpop.f32.mrb[0].mxu0
      %6673 = vmatprep.mubr.f32.mxu0 0.0
      %6674 = vmatmul.mubr.f32.gmra.mrb[0].mxu0 %v5575
      %v6675 = vpop.f32.mrb[0].mxu0
      %v6676 = vadd.f32 0.0, %v6675
      %v6677 = vpop.f32.mrb[0].mxu0
      %6678 = vmatprep.mubr.f32.mxu0 0.0
      %6679 = vmatmul.mubr.f32.gmra.mrb[0].mxu0 %v5578
      %v6680 = vpop.f32.mrb[0].mxu0
      %v6681 = vadd.f32 0.0, %v6680
      %v6682 = vpop.f32.mrb[0].mxu0
      %6683 = vmatprep.mubr.f32.mxu0 0.0
      %6684 = vmatmul.mubr.f32.gmra.mrb[0].mxu0 %v5581
      %v6685 = vpop.f32.mrb[0].mxu0
      %v6686 = vadd.f32 0.0, %v6685
      %v6687 = vpop.f32.mrb[0].mxu0
      %6688 = vmatprep.mubr.f32.mxu0 0.0
      %6689 = vmatmul.mubr.f32.gmra.mrb[0].mxu0 %v5584
      %v6690 = vpop.f32.mrb[0].mxu0
      %v6691 = vadd.f32 0.0, %v6690
      %v6692 = vpop.f32.mrb[0].mxu0
      %6693 = vmatprep.mubr.f32.mxu0 0.0
      %6694 = vmatmul.mubr.f32.gmra.mrb[0].mxu0 %v5587
      %v6695 = vpop.f32.mrb[0].mxu0
      %v6696 = vadd.f32 0.0, %v6695
      %v6697 = vpop.f32.mrb[0].mxu0
      %6698 = vmatprep.mubr.f32.mxu0 0.0
      %6699 = vmatmul.mubr.f32.gmra.mrb[0].mxu0 %v5590
      %v6700 = vpop.f32.mrb[0].mxu0
      %v6701 = vadd.f32 0.0, %v6700
      %v6702 = vpop.f32.mrb[0].mxu0
      %6703 = vmatprep.mubr.f32.mxu0 0.0
      %6704 = vmatmul.mubr.f32.gmra.mrb[0].mxu0 %v5593
      %v6705 = vpop.f32.mrb[0].mxu0
      %v6706 = vadd.f32 0.0, %v6705
      %v6707 = vpop.f32.mrb[0].mxu0
      %6708 = vmatprep.mubr.f32.mxu0 0.0
      %6709 = vmatmul.mubr.f32.gmra.mrb[0].mxu0 %v5596
      %v6710 = vpop.f32.mrb[0].mxu0
      %v6711 = vadd.f32 0.0, %v6710
      %v6712 = vpop.f32.mrb[0].mxu0
      %6713 = vmatprep.mubr.f32.mxu0 0.0
      %6714 = vmatmul.mubr.f32.gmra.mrb[0].mxu0 %v5599
      %v6715 = vpop.f32.mrb[0].mxu0
      %v6716 = vadd.f32 0.0, %v6715
      %v6717 = vpop.f32.mrb[0].mxu0
      %6718 = vmatprep.mubr.f32.mxu0 0.0
      %6719 = vmatmul.mubr.f32.gmra.mrb[0].mxu0 %v5602
      %v6720 = vpop.f32.mrb[0].mxu0
      %v6721 = vadd.f32 0.0, %v6720
      %v6722 = vpop.f32.mrb[0].mxu0
      %6723 = vmatprep.mubr.f32.mxu0 0.0
      %6724 = vmatmul.mubr.f32.gmra.mrb[0].mxu0 %v5605
      %v6725 = vpop.f32.mrb[0].mxu0
      %v6726 = vadd.f32 0.0, %v6725
      %v6727 = vpop.f32.mrb[0].mxu0
      %6728 = vmatprep.mubr.f32.mxu0 0.0
      %6729 = vmatmul.mubr.f32.gmra.mrb[0].mxu0 %v5608
      %v6730 = vpop.f32.mrb[0].mxu0
      %v6731 = vadd.f32 0.0, %v6730
      %v6732 = vpop.f32.mrb[0].mxu0
      %6733 = vmatprep.mubr.f32.mxu0 0.0
      %6734 = vmatmul.mubr.f32.gmra.mrb[0].mxu0 %v5611
      %v6735 = vpop.f32.mrb[0].mxu0
      %v6736 = vadd.f32 0.0, %v6735
      %v6737 = vpop.f32.mrb[0].mxu0
      %6738 = vmatprep.mubr.f32.mxu0 0.0
      %6739 = vmatmul.mubr.f32.gmra.mrb[0].mxu0 %v5614
      %v6740 = vpop.f32.mrb[0].mxu0
      %v6741 = vadd.f32 0.0, %v6740
      %v6742 = vpop.f32.mrb[0].mxu0
      %6743 = vmatprep.mubr.f32.mxu0 0.0
      %6744 = vmatmul.mubr.f32.gmra.mrb[0].mxu0 %v5617
      %v6745 = vpop.f32.mrb[0].mxu0
      %v6746 = vadd.f32 0.0, %v6745
      %v6747 = vpop.f32.mrb[0].mxu0
      %6748 = vmatprep.mubr.f32.mxu0 0.0
      %6749 = vmatmul.mubr.f32.gmra.mrb[0].mxu0 %v5620
      %v6750 = vpop.f32.mrb[0].mxu0
      %v6751 = vadd.f32 0.0, %v6750
      %v6752 = vpop.f32.mrb[0].mxu0
      %6753 = vmatprep.mubr.f32.mxu0 0.0
      %6754 = vmatmul.mubr.f32.gmra.mrb[0].mxu0 %v5623
      %v6755 = vpop.f32.mrb[0].mxu0
      %v6756 = vadd.f32 0.0, %v6755
      %v6757 = vpop.f32.mrb[0].mxu0
      %6758 = vmatprep.mubr.f32.mxu0 0.0
      %6759 = vmatmul.mubr.f32.gmra.mrb[0].mxu0 %v5626
      %v6760 = vpop.f32.mrb[0].mxu0
      %v6761 = vadd.f32 0.0, %v6760
      %v6762 = vpop.f32.mrb[0].mxu0
      %6763 = vmatprep.mubr.f32.mxu0 0.0
      %6764 = vmatmul.mubr.f32.gmra.mrb[0].mxu0 %v5629
      %v6765 = vpop.f32.mrb[0].mxu0
      %v6766 = vadd.f32 0.0, %v6765
      %v6767 = vpop.f32.mrb[0].mxu0
      %6768 = vmatprep.mubr.f32.mxu0 0.0
      %6769 = vmatmul.mubr.f32.gmra.mrb[0].mxu0 %v5632
      %v6770 = vpop.f32.mrb[0].mxu0
      %v6771 = vadd.f32 0.0, %v6770
      %v6772 = vpop.f32.mrb[0].mxu0
      %6773 = vmatprep.mubr.f32.mxu0 0.0
      %6774 = vmatmul.mubr.f32.gmra.mrb[0].mxu0 %v5635
      %v6775 = vpop.f32.mrb[0].mxu0
      %v6776 = vadd.f32 0.0, %v6775
      %v6777 = vpop.f32.mrb[0].mxu0
      %6778 = vmatprep.mubr.f32.mxu0 0.0
      %6779 = vmatmul.mubr.f32.gmra.mrb[0].mxu0 %v5638
      %v6780 = vpop.f32.mrb[0].mxu0
      %v6781 = vadd.f32 0.0, %v6780
      %v6782 = vpop.f32.mrb[0].mxu0
      %6783 = vmatprep.mubr.f32.mxu0 0.0
      %6784 = vmatmul.mubr.f32.gmra.mrb[0].mxu0 %v5641
      %v6785 = vpop.f32.mrb[0].mxu0
      %v6786 = vadd.f32 0.0, %v6785
      %v6787 = vpop.f32.mrb[0].mxu0
      %6788 = vmatprep.mubr.f32.mxu0 0.0
      %6789 = vmatmul.mubr.f32.gmra.mrb[0].mxu0 %v5644
      %v6790 = vpop.f32.mrb[0].mxu0
      %v6791 = vadd.f32 0.0, %v6790
      %v6792 = vpop.f32.mrb[0].mxu0
      %6793 = vmatprep.mubr.f32.mxu0 0.0
      %6794 = vmatmul.mubr.f32.gmra.mrb[0].mxu0 %v5647
      %v6795 = vpop.f32.mrb[0].mxu0
      %v6796 = vadd.f32 0.0, %v6795
      %v6797 = vpop.f32.mrb[0].mxu0
      %6798 = vmatprep.mubr.f32.mxu0 0.0
      %6799 = vmatmul.mubr.f32.gmra.mrb[0].mxu0 %v5650
      %v6800 = vpop.f32.mrb[0].mxu0
      %v6801 = vadd.f32 0.0, %v6800
      %v6802 = vpop.f32.mrb[0].mxu0
      %6803 = vmatprep.mubr.f32.mxu0 0.0
      %6804 = vmatmul.mubr.f32.gmra.mrb[0].mxu0 %v5653
      %v6805 = vpop.f32.mrb[0].mxu0
      %v6806 = vadd.f32 0.0, %v6805
      %v6807 = vpop.f32.mrb[0].mxu0
      %6808 = vmatprep.mubr.f32.mxu0 0.0
      %6809 = vmatmul.mubr.f32.gmra.mrb[0].mxu0 %v5656
      %v6810 = vpop.f32.mrb[0].mxu0
      %v6811 = vadd.f32 0.0, %v6810
      %v6812 = vpop.f32.mrb[0].mxu0
      %6813 = vmatprep.mubr.f32.mxu0 0.0
      %6814 = vmatmul.mubr.f32.gmra.mrb[0].mxu0 %v5659
      %v6815 = vpop.f32.mrb[0].mxu0
      %v6816 = vadd.f32 0.0, %v6815
      %v6817 = vpop.f32.mrb[0].mxu0
      %6818 = vmatprep.mubr.f32.mxu0 0.0
      %6819 = vmatmul.mubr.f32.gmra.mrb[0].mxu0 %v5662
      %v6820 = vpop.f32.mrb[0].mxu0
      %v6821 = vadd.f32 0.0, %v6820
      %v6822 = vpop.f32.mrb[0].mxu0
      %6823 = vmatprep.mubr.f32.mxu0 0.0
      %6824 = vmatmul.mubr.f32.gmra.mrb[0].mxu0 %v5665
      %v6825 = vpop.f32.mrb[0].mxu0
      %v6826 = vadd.f32 0.0, %v6825
      %v6827 = vpop.f32.mrb[0].mxu0
      %6828 = vmatprep.mubr.f32.mxu0 0.0
      %6829 = vmatmul.mubr.f32.gmra.mrb[0].mxu0 %v5668
      %v6830 = vpop.f32.mrb[0].mxu0
      %v6831 = vadd.f32 0.0, %v6830
      %v6832 = vpop.f32.mrb[0].mxu0
      %6833 = vmatprep.mubr.f32.mxu0 0.0
      %6834 = vmatmul.mubr.f32.gmra.mrb[0].mxu0 %v5671
      %v6835 = vpop.f32.mrb[0].mxu0
      %v6836 = vadd.f32 0.0, %v6835
      %v6837 = vpop.f32.mrb[0].mxu0
      %6838 = vmatprep.mubr.f32.mxu0 0.0
      %6839 = vmatmul.mubr.f32.gmra.mrb[0].mxu0 %v5674
      %v6840 = vpop.f32.mrb[0].mxu0
      %v6841 = vadd.f32 0.0, %v6840
      %v6842 = vpop.f32.mrb[0].mxu0
      %6843 = vmatprep.mubr.f32.mxu0 0.0
      %6844 = vmatmul.mubr.f32.gmra.mrb[0].mxu0 %v5677
      %v6845 = vpop.f32.mrb[0].mxu0
      %v6846 = vadd.f32 0.0, %v6845
      %v6847 = vpop.f32.mrb[0].mxu0
      %6848 = vmatprep.mubr.f32.mxu0 0.0
      %6849 = vmatmul.mubr.f32.gmra.mrb[0].mxu0 %v5680
      %v6850 = vpop.f32.mrb[0].mxu0
      %v6851 = vadd.f32 0.0, %v6850
      %v6852 = vpop.f32.mrb[0].mxu0
      %6853 = vmatprep.mubr.f32.mxu0 0.0
      %6854 = vmatmul.mubr.f32.gmra.mrb[0].mxu0 %v5683
      %v6855 = vpop.f32.mrb[0].mxu0
      %v6856 = vadd.f32 0.0, %v6855
      %v6857 = vpop.f32.mrb[0].mxu0
      %6858 = vmatprep.mubr.f32.mxu0 0.0
      %6859 = vmatmul.mubr.f32.gmra.mrb[0].mxu0 %v5686
      %v6860 = vpop.f32.mrb[0].mxu0
      %v6861 = vadd.f32 0.0, %v6860
      %v6862 = vpop.f32.mrb[0].mxu0
      %6863 = vmatprep.mubr.f32.mxu0 0.0
      %6864 = vmatmul.mubr.f32.gmra.mrb[0].mxu0 %v5689
      %v6865 = vpop.f32.mrb[0].mxu0
      %v6866 = vadd.f32 0.0, %v6865
      %v6867 = vpop.f32.mrb[0].mxu0
      %6868 = vmatprep.mubr.f32.mxu0 0.0
      %6869 = vmatmul.mubr.f32.gmra.mrb[0].mxu0 %v5692
      %v6870 = vpop.f32.mrb[0].mxu0
      %v6871 = vadd.f32 0.0, %v6870
      %v6872 = vpop.f32.mrb[0].mxu0
      %6873 = vmatprep.mubr.f32.mxu0 0.0
      %6874 = vmatmul.mubr.f32.gmra.mrb[0].mxu0 %v5695
      %v6875 = vpop.f32.mrb[0].mxu0
      %v6876 = vadd.f32 0.0, %v6875
      %v6877 = vpop.f32.mrb[0].mxu0
      %6878 = vmatprep.mubr.f32.mxu0 0.0
      %6879 = vmatmul.mubr.f32.gmra.mrb[0].mxu0 %v5698
      %v6880 = vpop.f32.mrb[0].mxu0
      %v6881 = vadd.f32 0.0, %v6880
      %v6882 = vpop.f32.mrb[0].mxu0
      %6883 = vmatprep.mubr.f32.mxu0 0.0
      %6884 = vmatmul.mubr.f32.gmra.mrb[0].mxu0 %v5701
      %v6885 = vpop.f32.mrb[0].mxu0
      %v6886 = vadd.f32 0.0, %v6885
      %v6887 = vpop.f32.mrb[0].mxu0
      %6888 = vmatprep.mubr.f32.mxu0 0.0
      %6889 = vmatmul.mubr.f32.gmra.mrb[0].mxu0 %v5704
      %v6890 = vpop.f32.mrb[0].mxu0
      %v6891 = vadd.f32 0.0, %v6890
      %v6892 = vpop.f32.mrb[0].mxu0
      %6893 = vmatprep.mubr.f32.mxu0 0.0
      %6894 = vmatmul.mubr.f32.gmra.mrb[0].mxu0 %v5707
      %v6895 = vpop.f32.mrb[0].mxu0
      %v6896 = vadd.f32 0.0, %v6895
      %v6897 = vpop.f32.mrb[0].mxu0
      %6898 = vmatprep.mubr.f32.mxu0 0.0
      %6899 = vmatmul.mubr.f32.gmra.mrb[0].mxu0 %v5710
      %v6900 = vpop.f32.mrb[0].mxu0
      %v6901 = vadd.f32 0.0, %v6900
      %v6902 = vpop.f32.mrb[0].mxu0
      %6903 = vmatprep.mubr.f32.mxu0 0.0
      %6904 = vmatmul.mubr.f32.gmra.mrb[0].mxu0 %v5713
      %v6905 = vpop.f32.mrb[0].mxu0
      %v6906 = vadd.f32 0.0, %v6905
      %v6907 = vpop.f32.mrb[0].mxu0
      %6908 = vmatprep.mubr.f32.mxu0 0.0
      %6909 = vmatmul.mubr.f32.gmra.mrb[0].mxu0 %v5716
      %v6910 = vpop.f32.mrb[0].mxu0
      %v6911 = vadd.f32 0.0, %v6910
      %v6912 = vpop.f32.mrb[0].mxu0
      %6913 = vmatprep.mubr.f32.mxu0 0.0
      %6914 = vmatmul.mubr.f32.gmra.mrb[0].mxu0 %v5719
      %v6915 = vpop.f32.mrb[0].mxu0
      %v6916 = vadd.f32 0.0, %v6915
      %v6917 = vpop.f32.mrb[0].mxu0
      %6918 = vmatprep.mubr.f32.mxu0 0.0
      %6919 = vmatmul.mubr.f32.gmra.mrb[0].mxu0 %v5722
      %v6920 = vpop.f32.mrb[0].mxu0
      %v6921 = vadd.f32 0.0, %v6920
      %v6922 = vpop.f32.mrb[0].mxu0
      %6923 = vmatprep.mubr.f32.mxu0 0.0
      %6924 = vmatmul.mubr.f32.gmra.mrb[0].mxu0 %v5725
      %v6925 = vpop.f32.mrb[0].mxu0
      %v6926 = vadd.f32 0.0, %v6925
      %v6927 = vpop.f32.mrb[0].mxu0
      %6928 = vmatprep.mubr.f32.mxu0 0.0
      %6929 = vmatmul.mubr.f32.gmra.mrb[0].mxu0 %v5728
      %v6930 = vpop.f32.mrb[0].mxu0
      %v6931 = vadd.f32 0.0, %v6930
      %v6932 = vpop.f32.mrb[0].mxu0
      %6933 = vmatprep.mubr.f32.mxu0 0.0
      %6934 = vmatmul.mubr.f32.gmra.mrb[0].mxu0 %v5731
      %v6935 = vpop.f32.mrb[0].mxu0
      %v6936 = vadd.f32 0.0, %v6935
      %v6937 = vpop.f32.mrb[0].mxu0
      %6938 = vmatprep.mubr.f32.mxu0 0.0
      %6939 = vmatmul.mubr.f32.gmra.mrb[0].mxu0 %v5734
      %v6940 = vpop.f32.mrb[0].mxu0
      %v6941 = vadd.f32 0.0, %v6940
      %v6942 = vpop.f32.mrb[0].mxu0
      %6943 = vmatprep.mubr.f32.mxu0 0.0
      %6944 = vmatmul.mubr.f32.gmra.mrb[0].mxu0 %v5737
      %v6945 = vpop.f32.mrb[0].mxu0
      %v6946 = vadd.f32 0.0, %v6945
      %v6947 = vpop.f32.mrb[0].mxu0
      %6948 = vmatprep.mubr.f32.mxu0 0.0
      %6949 = vmatmul.mubr.f32.gmra.mrb[0].mxu0 %v5740
      %v6950 = vpop.f32.mrb[0].mxu0
      %v6951 = vadd.f32 0.0, %v6950
      %v6952 = vpop.f32.mrb[0].mxu0
      %6953 = vmatprep.mubr.f32.mxu0 0.0
      %6954 = vmatmul.mubr.f32.gmra.mrb[0].mxu0 %v5743
      %v6955 = vpop.f32.mrb[0].mxu0
      %v6956 = vadd.f32 0.0, %v6955
      %v6957 = vpop.f32.mrb[0].mxu0
      %6958 = vmatprep.mubr.f32.mxu0 0.0
      %6959 = vmatmul.mubr.f32.gmra.mrb[0].mxu0 %v5746
      %v6960 = vpop.f32.mrb[0].mxu0
      %v6961 = vadd.f32 0.0, %v6960
      %v6962 = vpop.f32.mrb[0].mxu0
      %6963 = vmatprep.mubr.f32.mxu0 0.0
      %6964 = vmatmul.mubr.f32.gmra.mrb[0].mxu0 %v5749
      %v6965 = vpop.f32.mrb[0].mxu0
      %v6966 = vadd.f32 0.0, %v6965
      %v6967 = vpop.f32.mrb[0].mxu0
      %6968 = vmatprep.mubr.f32.mxu0 0.0
      %6969 = vmatmul.mubr.f32.gmra.mrb[0].mxu0 %v5752
      %v6970 = vpop.f32.mrb[0].mxu0
      %v6971 = vadd.f32 0.0, %v6970
      %v6972 = vpop.f32.mrb[0].mxu0
      %6973 = vmatprep.mubr.f32.mxu0 0.0
      %6974 = vmatmul.mubr.f32.gmra.mrb[0].mxu0 %v5755
      %v6975 = vpop.f32.mrb[0].mxu0
      %v6976 = vadd.f32 0.0, %v6975
      %v6977 = vpop.f32.mrb[0].mxu0
      %6978 = vmatprep.mubr.f32.mxu0 0.0
      %6979 = vmatmul.mubr.f32.gmra.mrb[0].mxu0 %v5758
      %v6980 = vpop.f32.mrb[0].mxu0
      %v6981 = vadd.f32 0.0, %v6980
      %v6982 = vpop.f32.mrb[0].mxu0
      %6983 = vmatprep.mubr.f32.mxu0 0.0
      %6984 = vmatmul.mubr.f32.gmra.mrb[0].mxu0 %v5761
      %v6985 = vpop.f32.mrb[0].mxu0
      %v6986 = vadd.f32 0.0, %v6985
      %v6987 = vpop.f32.mrb[0].mxu0
      %6988 = vmatprep.mubr.f32.mxu0 0.0
      %6989 = vmatmul.mubr.f32.gmra.mrb[0].mxu0 %v5764
      %v6990 = vpop.f32.mrb[0].mxu0
      %v6991 = vadd.f32 0.0, %v6990
      %v6992 = vpop.f32.mrb[0].mxu0
      %6993 = vmatprep.mubr.f32.mxu0 0.0
      %6994 = vmatmul.mubr.f32.gmra.mrb[0].mxu0 %v5767
      %v6995 = vpop.f32.mrb[0].mxu0
      %v6996 = vadd.f32 0.0, %v6995
      %v6997 = vpop.f32.mrb[0].mxu0
      %6998 = vmatprep.mubr.f32.mxu0 0.0
      %6999 = vmatmul.mubr.f32.gmra.mrb[0].mxu0 %v5770
      %v7000 = vpop.f32.mrb[0].mxu0
      %v7001 = vadd.f32 0.0, %v7000
      %v7002 = vpop.f32.mrb[0].mxu0
      %7003 = vmatprep.mubr.f32.mxu0 0.0
      %7004 = vmatmul.mubr.f32.gmra.mrb[0].mxu0 %v5773
      %v7005 = vpop.f32.mrb[0].mxu0
      %v7006 = vadd.f32 0.0, %v7005
      %v7007 = vpop.f32.mrb[0].mxu0
      %7008 = vmatprep.mubr.f32.mxu0 0.0
      %7009 = vmatmul.mubr.f32.gmra.mrb[0].mxu0 %v5776
      %v7010 = vpop.f32.mrb[0].mxu0
      %v7011 = vadd.f32 0.0, %v7010
      %v7012 = vpop.f32.mrb[0].mxu0
      %7013 = vmatprep.mubr.f32.mxu0 0.0
      %7014 = vmatmul.mubr.f32.gmra.mrb[0].mxu0 %v5779
      %v7015 = vpop.f32.mrb[0].mxu0
      %v7016 = vadd.f32 0.0, %v7015
      %v7017 = vpop.f32.mrb[0].mxu0
      %7018 = vmatprep.mubr.f32.mxu0 0.0
      %7019 = vmatmul.mubr.f32.gmra.mrb[0].mxu0 %v5782
      %v7020 = vpop.f32.mrb[0].mxu0
      %v7021 = vadd.f32 0.0, %v7020
      %v7022 = vpop.f32.mrb[0].mxu0
      %7023 = vmatprep.mubr.f32.mxu0 0.0
      %7024 = vmatmul.mubr.f32.gmra.mrb[0].mxu0 %v5785
      %v7025 = vpop.f32.mrb[0].mxu0
      %v7026 = vadd.f32 0.0, %v7025
      %v7027 = vpop.f32.mrb[0].mxu0
      %7028 = vmatprep.mubr.f32.mxu0 0.0
      %7029 = vmatmul.mubr.f32.gmra.mrb[0].mxu0 %v5788
      %v7030 = vpop.f32.mrb[0].mxu0
      %v7031 = vadd.f32 0.0, %v7030
      %v7032 = vpop.f32.mrb[0].mxu0
      %7033 = vmatprep.mubr.f32.mxu0 0.0
      %7034 = vmatmul.mubr.f32.gmra.mrb[0].mxu0 %v5791
      %v7035 = vpop.f32.mrb[0].mxu0
      %v7036 = vadd.f32 0.0, %v7035
      %v7037 = vpop.f32.mrb[0].mxu0
      %7038 = vmatprep.mubr.f32.mxu0 0.0
      %7039 = vmatmul.mubr.f32.gmra.mrb[0].mxu0 %v5794
      %v7040 = vpop.f32.mrb[0].mxu0
      %v7041 = vadd.f32 0.0, %v7040
      %v7042 = vpop.f32.mrb[0].mxu0
      %7043 = vmatprep.mubr.f32.mxu0 0.0
      %7044 = vmatmul.mubr.f32.gmra.mrb[0].mxu0 %v5797
      %v7045 = vpop.f32.mrb[0].mxu0
      %v7046 = vadd.f32 0.0, %v7045
      %v7047 = vpop.f32.mrb[0].mxu0
      %7048 = vmatprep.mubr.f32.mxu0 0.0
      %7049 = vmatmul.mubr.f32.gmra.mrb[0].mxu0 %v5800
      %v7050 = vpop.f32.mrb[0].mxu0
      %v7051 = vadd.f32 0.0, %v7050
      %v7052 = vpop.f32.mrb[0].mxu0
      %7053 = vmatprep.mubr.f32.mxu0 0.0
      %7054 = vmatmul.mubr.f32.gmra.mrb[0].mxu0 %v5803
      %v7055 = vpop.f32.mrb[0].mxu0
      %v7056 = vadd.f32 0.0, %v7055
      %v7057 = vpop.f32.mrb[0].mxu0
      %7058 = vmatprep.mubr.f32.mxu0 0.0
      %7059 = vmatmul.mubr.f32.gmra.mrb[0].mxu0 %v5806
      %v7060 = vpop.f32.mrb[0].mxu0
      %v7061 = vadd.f32 0.0, %v7060
      %v7062 = vpop.f32.mrb[0].mxu0
      %7063 = vmatprep.mubr.f32.mxu0 0.0
      %7064 = vmatmul.mubr.f32.gmra.mrb[0].mxu0 %v5809
      %v7065 = vpop.f32.mrb[0].mxu0
      %v7066 = vadd.f32 0.0, %v7065
      %v7067 = vpop.f32.mrb[0].mxu0
      %7068 = vmatprep.mubr.f32.mxu0 0.0
      %7069 = vmatmul.mubr.f32.gmra.mrb[0].mxu0 %v5812
      %v7070 = vpop.f32.mrb[0].mxu0
      %v7071 = vadd.f32 0.0, %v7070
      %v7072 = vpop.f32.mrb[0].mxu0
      %7073 = vmatprep.mubr.f32.mxu0 0.0
      %7074 = vmatmul.mubr.f32.gmra.mrb[0].mxu0 %v5815
      %v7075 = vpop.f32.mrb[0].mxu0
      %v7076 = vadd.f32 0.0, %v7075
      %v7077 = vpop.f32.mrb[0].mxu0
      %7078 = vmatprep.mubr.f32.mxu0 0.0
      %7079 = vmatmul.mubr.f32.gmra.mrb[0].mxu0 %v5818
      %v7080 = vpop.f32.mrb[0].mxu0
      %v7081 = vadd.f32 0.0, %v7080
      %v7082 = vpop.f32.mrb[0].mxu0
      %7083 = vmatprep.mubr.f32.mxu0 0.0
      %7084 = vmatmul.mubr.f32.gmra.mrb[0].mxu0 %v5821
      %v7085 = vpop.f32.mrb[0].mxu0
      %v7086 = vadd.f32 0.0, %v7085
      %v7087 = vpop.f32.mrb[0].mxu0
      %7088 = vmatprep.mubr.f32.mxu0 0.0
      %7089 = vmatmul.mubr.f32.gmra.mrb[0].mxu0 %v5824
      %v7090 = vpop.f32.mrb[0].mxu0
      %v7091 = vadd.f32 0.0, %v7090
      %v7092 = vpop.f32.mrb[0].mxu0
      %7093 = vmatprep.mubr.f32.mxu0 0.0
      %7094 = vmatmul.mubr.f32.gmra.mrb[0].mxu0 %v5827
      %v7095 = vpop.f32.mrb[0].mxu0
      %v7096 = vadd.f32 0.0, %v7095
      %v7097 = vpop.f32.mrb[0].mxu0
      %7098 = vmatprep.mubr.f32.mxu0 0.0
      %7099 = vmatmul.mubr.f32.gmra.mrb[0].mxu0 %v5830
      %v7100 = vpop.f32.mrb[0].mxu0
      %v7101 = vadd.f32 0.0, %v7100
      %v7102 = vpop.f32.mrb[0].mxu0
      %7103 = vmatprep.mubr.f32.mxu0 0.0
      %7104 = vmatmul.mubr.f32.gmra.mrb[0].mxu0 %v5833
      %v7105 = vpop.f32.mrb[0].mxu0
      %v7106 = vadd.f32 0.0, %v7105
      %v7107 = vpop.f32.mrb[0].mxu0
      %7108 = vmatprep.mubr.f32.mxu0 0.0
      %7109 = vmatmul.mubr.f32.gmra.mrb[0].mxu0 %v5836
      %v7110 = vpop.f32.mrb[0].mxu0
      %v7111 = vadd.f32 0.0, %v7110
      %v7112 = vpop.f32.mrb[0].mxu0
      %7113 = vmatprep.mubr.f32.mxu0 0.0
      %7114 = vmatmul.mubr.f32.gmra.mrb[0].mxu0 %v5839
      %v7115 = vpop.f32.mrb[0].mxu0
      %v7116 = vadd.f32 0.0, %v7115
      %v7117 = vpop.f32.mrb[0].mxu0
      %7118 = vmatprep.mubr.f32.mxu0 0.0
      %7119 = vmatmul.mubr.f32.gmra.mrb[0].mxu0 %v5842
      %v7120 = vpop.f32.mrb[0].mxu0
      %v7121 = vadd.f32 0.0, %v7120
      %v7122 = vpop.f32.mrb[0].mxu0
      %7123 = vmatprep.mubr.f32.mxu0 0.0
      %7124 = vmatmul.mubr.f32.gmra.mrb[0].mxu0 %v5845
      %v7125 = vpop.f32.mrb[0].mxu0
      %v7126 = vadd.f32 0.0, %v7125
      %v7127 = vpop.f32.mrb[0].mxu0
      %7128 = vmatprep.mubr.f32.mxu0 0.0
      %7129 = vmatmul.mubr.f32.gmra.mrb[0].mxu0 %v5848
      %v7130 = vpop.f32.mrb[0].mxu0
      %v7131 = vadd.f32 0.0, %v7130
      %v7132 = vpop.f32.mrb[0].mxu0
      %7133 = vmatprep.mubr.f32.mxu0 0.0
      %7134 = vmatmul.mubr.f32.gmra.mrb[0].mxu0 %v5851
      %v7135 = vpop.f32.mrb[0].mxu0
      %v7136 = vadd.f32 0.0, %v7135
      %v7137 = vpop.f32.mrb[0].mxu0
      %7138 = vmatprep.mubr.f32.mxu0 0.0
      %7139 = vmatmul.mubr.f32.gmra.mrb[0].mxu0 %v5854
      %v7140 = vpop.f32.mrb[0].mxu0
      %v7141 = vadd.f32 0.0, %v7140
      %v7142 = vpop.f32.mrb[0].mxu0
      %7143 = vmatprep.mubr.f32.mxu0 0.0
      %7144 = vmatmul.mubr.f32.gmra.mrb[0].mxu0 %v5857
      %v7145 = vpop.f32.mrb[0].mxu0
      %v7146 = vadd.f32 0.0, %v7145
      %v7147 = vpop.f32.mrb[0].mxu0
      %7148 = vmatprep.mubr.f32.mxu0 0.0
      %7149 = vmatmul.mubr.f32.gmra.mrb[0].mxu0 %v5860
      %v7150 = vpop.f32.mrb[0].mxu0
      %v7151 = vadd.f32 0.0, %v7150
      %v7152 = vpop.f32.mrb[0].mxu0
      %7153 = vmatprep.mubr.f32.mxu0 0.0
      %7154 = vmatmul.mubr.f32.gmra.mrb[0].mxu0 %v5863
      %v7155 = vpop.f32.mrb[0].mxu0
      %v7156 = vadd.f32 0.0, %v7155
      %v7157 = vpop.f32.mrb[0].mxu0
      %7158 = vmatprep.mubr.f32.mxu0 0.0
      %7159 = vmatmul.mubr.f32.gmra.mrb[0].mxu0 %v5866
      %v7160 = vpop.f32.mrb[0].mxu0
      %v7161 = vadd.f32 0.0, %v7160
      %v7162 = vpop.f32.mrb[0].mxu0
      %7163 = vmatprep.mubr.f32.mxu0 0.0
      %7164 = vmatmul.mubr.f32.gmra.mrb[0].mxu0 %v5869
      %v7165 = vpop.f32.mrb[0].mxu0
      %v7166 = vadd.f32 0.0, %v7165
      %v7167 = vpop.f32.mrb[0].mxu0
      %7168 = vmatprep.mubr.f32.mxu0 0.0
      %7169 = vmatmul.mubr.f32.gmra.mrb[0].mxu0 %v5872
      %v7170 = vpop.f32.mrb[0].mxu0
      %v7171 = vadd.f32 0.0, %v7170
      %v7172 = vpop.f32.mrb[0].mxu0
      %7173 = vmatprep.mubr.f32.mxu0 0.0
      %7174 = vmatmul.mubr.f32.gmra.mrb[0].mxu0 %v5875
      %v7175 = vpop.f32.mrb[0].mxu0
      %v7176 = vadd.f32 0.0, %v7175
      %v7177 = vpop.f32.mrb[0].mxu0
      %7178 = vmatprep.mubr.f32.mxu0 0.0
      %7179 = vmatmul.mubr.f32.gmra.mrb[0].mxu0 %v5878
      %v7180 = vpop.f32.mrb[0].mxu0
      %v7181 = vadd.f32 0.0, %v7180
      %v7182 = vpop.f32.mrb[0].mxu0
      %7183 = vmatprep.mubr.f32.mxu0 0.0
      %7184 = vmatmul.mubr.f32.gmra.mrb[0].mxu0 %v5881
      %v7185 = vpop.f32.mrb[0].mxu0
      %v7186 = vadd.f32 0.0, %v7185
      %v7187 = vpop.f32.mrb[0].mxu0
      %7188 = vmatprep.mubr.f32.mxu0 0.0
      %7189 = vmatmul.mubr.f32.gmra.mrb[0].mxu0 %v5884
      %v7190 = vpop.f32.mrb[0].mxu0
      %v7191 = vadd.f32 0.0, %v7190
      %v7192 = vpop.f32.mrb[0].mxu0
      %7193 = vmatprep.mubr.f32.mxu0 0.0
      %7194 = vmatmul.mubr.f32.gmra.mrb[0].mxu0 %v5887
      %v7195 = vpop.f32.mrb[0].mxu0
      %v7196 = vadd.f32 0.0, %v7195
      %v7197 = vpop.f32.mrb[0].mxu0
      %7198 = vmatprep.mubr.f32.mxu0 0.0
      %7199 = vmatmul.mubr.f32.gmra.mrb[0].mxu0 %v5890
      %v7200 = vpop.f32.mrb[0].mxu0
      %v7201 = vadd.f32 0.0, %v7200
      %v7202 = vpop.f32.mrb[0].mxu0
      %7203 = vmatprep.mubr.f32.mxu0 0.0
      %7204 = vmatmul.mubr.f32.gmra.mrb[0].mxu0 %v5893
      %v7205 = vpop.f32.mrb[0].mxu0
      %v7206 = vadd.f32 0.0, %v7205
      %v7207 = vpop.f32.mrb[0].mxu0
      %7208 = vmatprep.mubr.f32.mxu0 0.0
      %7209 = vmatmul.mubr.f32.gmra.mrb[0].mxu0 %v5896
      %v7210 = vpop.f32.mrb[0].mxu0
      %v7211 = vadd.f32 0.0, %v7210
      %v7212 = vpop.f32.mrb[0].mxu0
      %7213 = vmatprep.mubr.f32.mxu0 0.0
      %7214 = vmatmul.mubr.f32.gmra.mrb[0].mxu0 %v5899
      %v7215 = vpop.f32.mrb[0].mxu0
      %v7216 = vadd.f32 0.0, %v7215
      %v7217 = vpop.f32.mrb[0].mxu0
      %7218 = vmatprep.mubr.f32.mxu0 0.0
      %7219 = vmatmul.mubr.f32.gmra.mrb[0].mxu0 %v5902
      %v7220 = vpop.f32.mrb[0].mxu0
      %v7221 = vadd.f32 0.0, %v7220
      %v7222 = vpop.f32.mrb[0].mxu0
      %7223 = vmatprep.mubr.f32.mxu0 0.0
      %7224 = vmatmul.mubr.f32.gmra.mrb[0].mxu0 %v5905
      %v7225 = vpop.f32.mrb[0].mxu0
      %v7226 = vadd.f32 0.0, %v7225
      %v7227 = vpop.f32.mrb[0].mxu0
      %7228 = vmatprep.mubr.f32.mxu0 0.0
      %7229 = vmatmul.mubr.f32.gmra.mrb[0].mxu0 %v5908
      %v7230 = vpop.f32.mrb[0].mxu0
      %v7231 = vadd.f32 0.0, %v7230
      %v7232 = vpop.f32.mrb[0].mxu0
      %7233 = vmatprep.mubr.f32.mxu0 0.0
      %7234 = vmatmul.mubr.f32.gmra.mrb[0].mxu0 %v5911
      %v7235 = vpop.f32.mrb[0].mxu0
      %v7236 = vadd.f32 0.0, %v7235
      %v7237 = vpop.f32.mrb[0].mxu0
      %7238 = vmatprep.mubr.f32.mxu0 0.0
      %7239 = vmatmul.mubr.f32.gmra.mrb[0].mxu0 %v5914
      %v7240 = vpop.f32.mrb[0].mxu0
      %v7241 = vadd.f32 0.0, %v7240
      %v7242 = vpop.f32.mrb[0].mxu0
      %7243 = vmatprep.mubr.f32.mxu0 0.0
      %7244 = vmatmul.mubr.f32.gmra.mrb[0].mxu0 %v5917
      %v7245 = vpop.f32.mrb[0].mxu0
      %v7246 = vadd.f32 0.0, %v7245
      %v7247 = vpop.f32.mrb[0].mxu0
      %7248 = vmatprep.mubr.f32.mxu0 0.0
      %7249 = vmatmul.mubr.f32.gmra.mrb[0].mxu0 %v5920
      %v7250 = vpop.f32.mrb[0].mxu0
      %v7251 = vadd.f32 0.0, %v7250
      %v7252 = vpop.f32.mrb[0].mxu0
      %7253 = vmatprep.mubr.f32.mxu0 0.0
      %7254 = vmatmul.mubr.f32.gmra.mrb[0].mxu0 %v5923
      %v7255 = vpop.f32.mrb[0].mxu0
      %v7256 = vadd.f32 0.0, %v7255
      %v7257 = vpop.f32.mrb[0].mxu0
      %7258 = vmatprep.mubr.f32.mxu0 0.0
      %7259 = vmatmul.mubr.f32.gmra.mrb[0].mxu0 %v5926
      %v7260 = vpop.f32.mrb[0].mxu0
      %v7261 = vadd.f32 0.0, %v7260
      %v7262 = vpop.f32.mrb[0].mxu0
      %7263 = vmatprep.mubr.f32.mxu0 0.0
      %7264 = vmatmul.mubr.f32.gmra.mrb[0].mxu0 %v5929
      %v7265 = vpop.f32.mrb[0].mxu0
      %v7266 = vadd.f32 0.0, %v7265
      %v7267 = vpop.f32.mrb[0].mxu0
      %7268 = vmatprep.mubr.f32.mxu0 0.0
      %7269 = vmatmul.mubr.f32.gmra.mrb[0].mxu0 %v5932
      %v7270 = vpop.f32.mrb[0].mxu0
      %v7271 = vadd.f32 0.0, %v7270
      %v7272 = vpop.f32.mrb[0].mxu0
      %7273 = vmatprep.mubr.f32.mxu0 0.0
      %7274 = vmatmul.mubr.f32.gmra.mrb[0].mxu0 %v5935
      %v7275 = vpop.f32.mrb[0].mxu0
      %v7276 = vadd.f32 0.0, %v7275
      %v7277 = vpop.f32.mrb[0].mxu0
      %7278 = vmatprep.mubr.f32.mxu0 0.0
      %7279 = vmatmul.mubr.f32.gmra.mrb[0].mxu0 %v5938
      %v7280 = vpop.f32.mrb[0].mxu0
      %v7281 = vadd.f32 0.0, %v7280
      %v7282 = vpop.f32.mrb[0].mxu0
      %7283 = vmatprep.mubr.f32.mxu0 0.0
      %7284 = vmatmul.mubr.f32.gmra.mrb[0].mxu0 %v5941
      %v7285 = vpop.f32.mrb[0].mxu0
      %v7286 = vadd.f32 0.0, %v7285
      %v7287 = vpop.f32.mrb[0].mxu0
      %7288 = vmatprep.mubr.f32.mxu0 0.0
      %7289 = vmatmul.mubr.f32.gmra.mrb[0].mxu0 %v5944
      %v7290 = vpop.f32.mrb[0].mxu0
      %v7291 = vadd.f32 0.0, %v7290
      %v7292 = vpop.f32.mrb[0].mxu0
      %7293 = vdwg.mxu0
      %v7294 = vadd.f32 %v3898, %v6016
      %v7295 = vadd.f32 %v3903, %v6021
      %v7296 = vadd.f32 %v3908, %v6026
      %v7297 = vadd.f32 %v3913, %v6031
      %v7298 = vadd.f32 %v3918, %v6036
      %v7299 = vadd.f32 %v3923, %v6041
      %v7300 = vadd.f32 %v3928, %v6046
      %v7301 = vadd.f32 %v3933, %v6051
      %v7302 = vadd.f32 %v3938, %v6056
      %v7303 = vadd.f32 %v3943, %v6061
      %v7304 = vadd.f32 %v3948, %v6066
      %v7305 = vadd.f32 %v3953, %v6071
      %v7306 = vadd.f32 %v3958, %v6076
      %v7307 = vadd.f32 %v3963, %v6081
      %v7308 = vadd.f32 %v3968, %v6086
      %v7309 = vadd.f32 %v3973, %v6091
      %v7310 = vadd.f32 %v3978, %v6096
      %v7311 = vadd.f32 %v3983, %v6101
      %v7312 = vadd.f32 %v3988, %v6106
      %v7313 = vadd.f32 %v3993, %v6111
      %v7314 = vadd.f32 %v3998, %v6116
      %v7315 = vadd.f32 %v4003, %v6121
      %v7316 = vadd.f32 %v4008, %v6126
      %v7317 = vadd.f32 %v4013, %v6131
      %v7318 = vadd.f32 %v4018, %v6136
      %v7319 = vadd.f32 %v4023, %v6141
      %v7320 = vadd.f32 %v4028, %v6146
      %v7321 = vadd.f32 %v4033, %v6151
      %v7322 = vadd.f32 %v4038, %v6156
      %v7323 = vadd.f32 %v4043, %v6161
      %v7324 = vadd.f32 %v4048, %v6166
      %v7325 = vadd.f32 %v4053, %v6171
      %v7326 = vadd.f32 %v4058, %v6176
      %v7327 = vadd.f32 %v4063, %v6181
      %v7328 = vadd.f32 %v4068, %v6186
      %v7329 = vadd.f32 %v4073, %v6191
      %v7330 = vadd.f32 %v4078, %v6196
      %v7331 = vadd.f32 %v4083, %v6201
      %v7332 = vadd.f32 %v4088, %v6206
      %v7333 = vadd.f32 %v4093, %v6211
      %v7334 = vadd.f32 %v4098, %v6216
      %v7335 = vadd.f32 %v4103, %v6221
      %v7336 = vadd.f32 %v4108, %v6226
      %v7337 = vadd.f32 %v4113, %v6231
      %v7338 = vadd.f32 %v4118, %v6236
      %v7339 = vadd.f32 %v4123, %v6241
      %v7340 = vadd.f32 %v4128, %v6246
      %v7341 = vadd.f32 %v4133, %v6251
      %v7342 = vadd.f32 %v4138, %v6256
      %v7343 = vadd.f32 %v4143, %v6261
      %v7344 = vadd.f32 %v4148, %v6266
      %v7345 = vadd.f32 %v4153, %v6271
      %v7346 = vadd.f32 %v4158, %v6276
      %v7347 = vadd.f32 %v4163, %v6281
      %v7348 = vadd.f32 %v4168, %v6286
      %v7349 = vadd.f32 %v4173, %v6291
      %v7350 = vadd.f32 %v4178, %v6296
      %v7351 = vadd.f32 %v4183, %v6301
      %v7352 = vadd.f32 %v4188, %v6306
      %v7353 = vadd.f32 %v4193, %v6311
      %v7354 = vadd.f32 %v4198, %v6316
      %v7355 = vadd.f32 %v4203, %v6321
      %v7356 = vadd.f32 %v4208, %v6326
      %v7357 = vadd.f32 %v4213, %v6331
      %v7358 = vadd.f32 %v4218, %v6336
      %v7359 = vadd.f32 %v4223, %v6341
      %v7360 = vadd.f32 %v4228, %v6346
      %v7361 = vadd.f32 %v4233, %v6351
      %v7362 = vadd.f32 %v4238, %v6356
      %v7363 = vadd.f32 %v4243, %v6361
      %v7364 = vadd.f32 %v4248, %v6366
      %v7365 = vadd.f32 %v4253, %v6371
      %v7366 = vadd.f32 %v4258, %v6376
      %v7367 = vadd.f32 %v4263, %v6381
      %v7368 = vadd.f32 %v4268, %v6386
      %v7369 = vadd.f32 %v4273, %v6391
      %v7370 = vadd.f32 %v4278, %v6396
      %v7371 = vadd.f32 %v4283, %v6401
      %v7372 = vadd.f32 %v4288, %v6406
      %v7373 = vadd.f32 %v4293, %v6411
      %v7374 = vadd.f32 %v4298, %v6416
      %v7375 = vadd.f32 %v4303, %v6421
      %v7376 = vadd.f32 %v4308, %v6426
      %v7377 = vadd.f32 %v4313, %v6431
      %v7378 = vadd.f32 %v4318, %v6436
      %v7379 = vadd.f32 %v4323, %v6441
      %v7380 = vadd.f32 %v4328, %v6446
      %v7381 = vadd.f32 %v4333, %v6451
      %v7382 = vadd.f32 %v4338, %v6456
      %v7383 = vadd.f32 %v4343, %v6461
      %v7384 = vadd.f32 %v4348, %v6466
      %v7385 = vadd.f32 %v4353, %v6471
      %v7386 = vadd.f32 %v4358, %v6476
      %v7387 = vadd.f32 %v4363, %v6481
      %v7388 = vadd.f32 %v4368, %v6486
      %v7389 = vadd.f32 %v4373, %v6491
      %v7390 = vadd.f32 %v4378, %v6496
      %v7391 = vadd.f32 %v4383, %v6501
      %v7392 = vadd.f32 %v4388, %v6506
      %v7393 = vadd.f32 %v4393, %v6511
      %v7394 = vadd.f32 %v4398, %v6516
      %v7395 = vadd.f32 %v4403, %v6521
      %v7396 = vadd.f32 %v4408, %v6526
      %v7397 = vadd.f32 %v4413, %v6531
      %v7398 = vadd.f32 %v4418, %v6536
      %v7399 = vadd.f32 %v4423, %v6541
      %v7400 = vadd.f32 %v4428, %v6546
      %v7401 = vadd.f32 %v4433, %v6551
      %v7402 = vadd.f32 %v4438, %v6556
      %v7403 = vadd.f32 %v4443, %v6561
      %v7404 = vadd.f32 %v4448, %v6566
      %v7405 = vadd.f32 %v4453, %v6571
      %v7406 = vadd.f32 %v4458, %v6576
      %v7407 = vadd.f32 %v4463, %v6581
      %v7408 = vadd.f32 %v4468, %v6586
      %v7409 = vadd.f32 %v4473, %v6591
      %v7410 = vadd.f32 %v4478, %v6596
      %v7411 = vadd.f32 %v4483, %v6601
      %v7412 = vadd.f32 %v4488, %v6606
      %v7413 = vadd.f32 %v4493, %v6611
      %v7414 = vadd.f32 %v4498, %v6616
      %v7415 = vadd.f32 %v4503, %v6621
      %v7416 = vadd.f32 %v4508, %v6626
      %v7417 = vadd.f32 %v4513, %v6631
      %v7418 = vadd.f32 %v4518, %v6636
      %v7419 = vadd.f32 %v4523, %v6641
      %v7420 = vadd.f32 %v4528, %v6646
      %v7421 = vadd.f32 %v4533, %v6651
      %v7422 = vadd.f32 %v4538, %v6656
      %v7423 = vadd.f32 %v4543, %v6661
      %v7424 = vadd.f32 %v4548, %v6666
      %v7425 = vadd.f32 %v4553, %v6671
      %v7426 = vadd.f32 %v4558, %v6676
      %v7427 = vadd.f32 %v4563, %v6681
      %v7428 = vadd.f32 %v4568, %v6686
      %v7429 = vadd.f32 %v4573, %v6691
      %v7430 = vadd.f32 %v4578, %v6696
      %v7431 = vadd.f32 %v4583, %v6701
      %v7432 = vadd.f32 %v4588, %v6706
      %v7433 = vadd.f32 %v4593, %v6711
      %v7434 = vadd.f32 %v4598, %v6716
      %v7435 = vadd.f32 %v4603, %v6721
      %v7436 = vadd.f32 %v4608, %v6726
      %v7437 = vadd.f32 %v4613, %v6731
      %v7438 = vadd.f32 %v4618, %v6736
      %v7439 = vadd.f32 %v4623, %v6741
      %v7440 = vadd.f32 %v4628, %v6746
      %v7441 = vadd.f32 %v4633, %v6751
      %v7442 = vadd.f32 %v4638, %v6756
      %v7443 = vadd.f32 %v4643, %v6761
      %v7444 = vadd.f32 %v4648, %v6766
      %v7445 = vadd.f32 %v4653, %v6771
      %v7446 = vadd.f32 %v4658, %v6776
      %v7447 = vadd.f32 %v4663, %v6781
      %v7448 = vadd.f32 %v4668, %v6786
      %v7449 = vadd.f32 %v4673, %v6791
      %v7450 = vadd.f32 %v4678, %v6796
      %v7451 = vadd.f32 %v4683, %v6801
      %v7452 = vadd.f32 %v4688, %v6806
      %v7453 = vadd.f32 %v4693, %v6811
      %v7454 = vadd.f32 %v4698, %v6816
      %v7455 = vadd.f32 %v4703, %v6821
      %v7456 = vadd.f32 %v4708, %v6826
      %v7457 = vadd.f32 %v4713, %v6831
      %v7458 = vadd.f32 %v4718, %v6836
      %v7459 = vadd.f32 %v4723, %v6841
      %v7460 = vadd.f32 %v4728, %v6846
      %v7461 = vadd.f32 %v4733, %v6851
      %v7462 = vadd.f32 %v4738, %v6856
      %v7463 = vadd.f32 %v4743, %v6861
      %v7464 = vadd.f32 %v4748, %v6866
      %v7465 = vadd.f32 %v4753, %v6871
      %v7466 = vadd.f32 %v4758, %v6876
      %v7467 = vadd.f32 %v4763, %v6881
      %v7468 = vadd.f32 %v4768, %v6886
      %v7469 = vadd.f32 %v4773, %v6891
      %v7470 = vadd.f32 %v4778, %v6896
      %v7471 = vadd.f32 %v4783, %v6901
      %v7472 = vadd.f32 %v4788, %v6906
      %v7473 = vadd.f32 %v4793, %v6911
      %v7474 = vadd.f32 %v4798, %v6916
      %v7475 = vadd.f32 %v4803, %v6921
      %v7476 = vadd.f32 %v4808, %v6926
      %v7477 = vadd.f32 %v4813, %v6931
      %v7478 = vadd.f32 %v4818, %v6936
      %v7479 = vadd.f32 %v4823, %v6941
      %v7480 = vadd.f32 %v4828, %v6946
      %v7481 = vadd.f32 %v4833, %v6951
      %v7482 = vadd.f32 %v4838, %v6956
      %v7483 = vadd.f32 %v4843, %v6961
      %v7484 = vadd.f32 %v4848, %v6966
      %v7485 = vadd.f32 %v4853, %v6971
      %v7486 = vadd.f32 %v4858, %v6976
      %v7487 = vadd.f32 %v4863, %v6981
      %v7488 = vadd.f32 %v4868, %v6986
      %v7489 = vadd.f32 %v4873, %v6991
      %v7490 = vadd.f32 %v4878, %v6996
      %v7491 = vadd.f32 %v4883, %v7001
      %v7492 = vadd.f32 %v4888, %v7006
      %v7493 = vadd.f32 %v4893, %v7011
      %v7494 = vadd.f32 %v4898, %v7016
      %v7495 = vadd.f32 %v4903, %v7021
      %v7496 = vadd.f32 %v4908, %v7026
      %v7497 = vadd.f32 %v4913, %v7031
      %v7498 = vadd.f32 %v4918, %v7036
      %v7499 = vadd.f32 %v4923, %v7041
      %v7500 = vadd.f32 %v4928, %v7046
      %v7501 = vadd.f32 %v4933, %v7051
      %v7502 = vadd.f32 %v4938, %v7056
      %v7503 = vadd.f32 %v4943, %v7061
      %v7504 = vadd.f32 %v4948, %v7066
      %v7505 = vadd.f32 %v4953, %v7071
      %v7506 = vadd.f32 %v4958, %v7076
      %v7507 = vadd.f32 %v4963, %v7081
      %v7508 = vadd.f32 %v4968, %v7086
      %v7509 = vadd.f32 %v4973, %v7091
      %v7510 = vadd.f32 %v4978, %v7096
      %v7511 = vadd.f32 %v4983, %v7101
      %v7512 = vadd.f32 %v4988, %v7106
      %v7513 = vadd.f32 %v4993, %v7111
      %v7514 = vadd.f32 %v4998, %v7116
      %v7515 = vadd.f32 %v5003, %v7121
      %v7516 = vadd.f32 %v5008, %v7126
      %v7517 = vadd.f32 %v5013, %v7131
      %v7518 = vadd.f32 %v5018, %v7136
      %v7519 = vadd.f32 %v5023, %v7141
      %v7520 = vadd.f32 %v5028, %v7146
      %v7521 = vadd.f32 %v5033, %v7151
      %v7522 = vadd.f32 %v5038, %v7156
      %v7523 = vadd.f32 %v5043, %v7161
      %v7524 = vadd.f32 %v5048, %v7166
      %v7525 = vadd.f32 %v5053, %v7171
      %v7526 = vadd.f32 %v5058, %v7176
      %v7527 = vadd.f32 %v5063, %v7181
      %v7528 = vadd.f32 %v5068, %v7186
      %v7529 = vadd.f32 %v5073, %v7191
      %v7530 = vadd.f32 %v5078, %v7196
      %v7531 = vadd.f32 %v5083, %v7201
      %v7532 = vadd.f32 %v5088, %v7206
      %v7533 = vadd.f32 %v5093, %v7211
      %v7534 = vadd.f32 %v5098, %v7216
      %v7535 = vadd.f32 %v5103, %v7221
      %v7536 = vadd.f32 %v5108, %v7226
      %v7537 = vadd.f32 %v5113, %v7231
      %v7538 = vadd.f32 %v5118, %v7236
      %v7539 = vadd.f32 %v5123, %v7241
      %v7540 = vadd.f32 %v5128, %v7246
      %v7541 = vadd.f32 %v5133, %v7251
      %v7542 = vadd.f32 %v5138, %v7256
      %v7543 = vadd.f32 %v5143, %v7261
      %v7544 = vadd.f32 %v5148, %v7266
      %v7545 = vadd.f32 %v5153, %v7271
      %v7546 = vadd.f32 %v5158, %v7276
      %v7547 = vadd.f32 %v5163, %v7281
      %v7548 = vadd.f32 %v5168, %v7286
      %v7549 = vadd.f32 %v5173, %v7291
      %v7550 = vld [vmem:[%s2] sm:$0x1]
      %v7552 = vlaneseq
      %v7553 = vshrl.u32 %v7552, 7
      %v7554 = vsub.s32 0, %v7553
      %v7555 = vrot.slane %v7550, %v7554
      %v7557 = vadd.f32 %v7294, %v7555
      %v7558 = vadd.f32 %v7295, %v7555
      %v7559 = vadd.f32 %v7296, %v7555
      %v7560 = vadd.f32 %v7297, %v7555
      %v7561 = vadd.f32 %v7298, %v7555
      %v7562 = vadd.f32 %v7299, %v7555
      %v7563 = vadd.f32 %v7300, %v7555
      %v7564 = vadd.f32 %v7301, %v7555
      %v7565 = vadd.f32 %v7302, %v7555
      %v7566 = vadd.f32 %v7303, %v7555
      %v7567 = vadd.f32 %v7304, %v7555
      %v7568 = vadd.f32 %v7305, %v7555
      %v7569 = vadd.f32 %v7306, %v7555
      %v7570 = vadd.f32 %v7307, %v7555
      %v7571 = vadd.f32 %v7308, %v7555
      %v7572 = vadd.f32 %v7309, %v7555
      %v7573 = vadd.f32 %v7310, %v7555
      %v7574 = vadd.f32 %v7311, %v7555
      %v7575 = vadd.f32 %v7312, %v7555
      %v7576 = vadd.f32 %v7313, %v7555
      %v7577 = vadd.f32 %v7314, %v7555
      %v7578 = vadd.f32 %v7315, %v7555
      %v7579 = vadd.f32 %v7316, %v7555
      %v7580 = vadd.f32 %v7317, %v7555
      %v7581 = vadd.f32 %v7318, %v7555
      %v7582 = vadd.f32 %v7319, %v7555
      %v7583 = vadd.f32 %v7320, %v7555
      %v7584 = vadd.f32 %v7321, %v7555
      %v7585 = vadd.f32 %v7322, %v7555
      %v7586 = vadd.f32 %v7323, %v7555
      %v7587 = vadd.f32 %v7324, %v7555
      %v7588 = vadd.f32 %v7325, %v7555
      %v7589 = vadd.f32 %v7326, %v7555
      %v7590 = vadd.f32 %v7327, %v7555
      %v7591 = vadd.f32 %v7328, %v7555
      %v7592 = vadd.f32 %v7329, %v7555
      %v7593 = vadd.f32 %v7330, %v7555
      %v7594 = vadd.f32 %v7331, %v7555
      %v7595 = vadd.f32 %v7332, %v7555
      %v7596 = vadd.f32 %v7333, %v7555
      %v7597 = vadd.f32 %v7334, %v7555
      %v7598 = vadd.f32 %v7335, %v7555
      %v7599 = vadd.f32 %v7336, %v7555
      %v7600 = vadd.f32 %v7337, %v7555
      %v7601 = vadd.f32 %v7338, %v7555
      %v7602 = vadd.f32 %v7339, %v7555
      %v7603 = vadd.f32 %v7340, %v7555
      %v7604 = vadd.f32 %v7341, %v7555
      %v7605 = vadd.f32 %v7342, %v7555
      %v7606 = vadd.f32 %v7343, %v7555
      %v7607 = vadd.f32 %v7344, %v7555
      %v7608 = vadd.f32 %v7345, %v7555
      %v7609 = vadd.f32 %v7346, %v7555
      %v7610 = vadd.f32 %v7347, %v7555
      %v7611 = vadd.f32 %v7348, %v7555
      %v7612 = vadd.f32 %v7349, %v7555
      %v7613 = vadd.f32 %v7350, %v7555
      %v7614 = vadd.f32 %v7351, %v7555
      %v7615 = vadd.f32 %v7352, %v7555
      %v7616 = vadd.f32 %v7353, %v7555
      %v7617 = vadd.f32 %v7354, %v7555
      %v7618 = vadd.f32 %v7355, %v7555
      %v7619 = vadd.f32 %v7356, %v7555
      %v7620 = vadd.f32 %v7357, %v7555
      %v7621 = vadd.f32 %v7358, %v7555
      %v7622 = vadd.f32 %v7359, %v7555
      %v7623 = vadd.f32 %v7360, %v7555
      %v7624 = vadd.f32 %v7361, %v7555
      %v7625 = vadd.f32 %v7362, %v7555
      %v7626 = vadd.f32 %v7363, %v7555
      %v7627 = vadd.f32 %v7364, %v7555
      %v7628 = vadd.f32 %v7365, %v7555
      %v7629 = vadd.f32 %v7366, %v7555
      %v7630 = vadd.f32 %v7367, %v7555
      %v7631 = vadd.f32 %v7368, %v7555
      %v7632 = vadd.f32 %v7369, %v7555
      %v7633 = vadd.f32 %v7370, %v7555
      %v7634 = vadd.f32 %v7371, %v7555
      %v7635 = vadd.f32 %v7372, %v7555
      %v7636 = vadd.f32 %v7373, %v7555
      %v7637 = vadd.f32 %v7374, %v7555
      %v7638 = vadd.f32 %v7375, %v7555
      %v7639 = vadd.f32 %v7376, %v7555
      %v7640 = vadd.f32 %v7377, %v7555
      %v7641 = vadd.f32 %v7378, %v7555
      %v7642 = vadd.f32 %v7379, %v7555
      %v7643 = vadd.f32 %v7380, %v7555
      %v7644 = vadd.f32 %v7381, %v7555
      %v7645 = vadd.f32 %v7382, %v7555
      %v7646 = vadd.f32 %v7383, %v7555
      %v7647 = vadd.f32 %v7384, %v7555
      %v7648 = vadd.f32 %v7385, %v7555
      %v7649 = vadd.f32 %v7386, %v7555
      %v7650 = vadd.f32 %v7387, %v7555
      %v7651 = vadd.f32 %v7388, %v7555
      %v7652 = vadd.f32 %v7389, %v7555
      %v7653 = vadd.f32 %v7390, %v7555
      %v7654 = vadd.f32 %v7391, %v7555
      %v7655 = vadd.f32 %v7392, %v7555
      %v7656 = vadd.f32 %v7393, %v7555
      %v7657 = vadd.f32 %v7394, %v7555
      %v7658 = vadd.f32 %v7395, %v7555
      %v7659 = vadd.f32 %v7396, %v7555
      %v7660 = vadd.f32 %v7397, %v7555
      %v7661 = vadd.f32 %v7398, %v7555
      %v7662 = vadd.f32 %v7399, %v7555
      %v7663 = vadd.f32 %v7400, %v7555
      %v7664 = vadd.f32 %v7401, %v7555
      %v7665 = vadd.f32 %v7402, %v7555
      %v7666 = vadd.f32 %v7403, %v7555
      %v7667 = vadd.f32 %v7404, %v7555
      %v7668 = vadd.f32 %v7405, %v7555
      %v7669 = vadd.f32 %v7406, %v7555
      %v7670 = vadd.f32 %v7407, %v7555
      %v7671 = vadd.f32 %v7408, %v7555
      %v7672 = vadd.f32 %v7409, %v7555
      %v7673 = vadd.f32 %v7410, %v7555
      %v7674 = vadd.f32 %v7411, %v7555
      %v7675 = vadd.f32 %v7412, %v7555
      %v7676 = vadd.f32 %v7413, %v7555
      %v7677 = vadd.f32 %v7414, %v7555
      %v7678 = vadd.f32 %v7415, %v7555
      %v7679 = vadd.f32 %v7416, %v7555
      %v7680 = vadd.f32 %v7417, %v7555
      %v7681 = vadd.f32 %v7418, %v7555
      %v7682 = vadd.f32 %v7419, %v7555
      %v7683 = vadd.f32 %v7420, %v7555
      %v7684 = vadd.f32 %v7421, %v7555
      %v7685 = vadd.f32 %v7422, %v7555
      %v7686 = vadd.f32 %v7423, %v7555
      %v7687 = vadd.f32 %v7424, %v7555
      %v7688 = vadd.f32 %v7425, %v7555
      %v7689 = vadd.f32 %v7426, %v7555
      %v7690 = vadd.f32 %v7427, %v7555
      %v7691 = vadd.f32 %v7428, %v7555
      %v7692 = vadd.f32 %v7429, %v7555
      %v7693 = vadd.f32 %v7430, %v7555
      %v7694 = vadd.f32 %v7431, %v7555
      %v7695 = vadd.f32 %v7432, %v7555
      %v7696 = vadd.f32 %v7433, %v7555
      %v7697 = vadd.f32 %v7434, %v7555
      %v7698 = vadd.f32 %v7435, %v7555
      %v7699 = vadd.f32 %v7436, %v7555
      %v7700 = vadd.f32 %v7437, %v7555
      %v7701 = vadd.f32 %v7438, %v7555
      %v7702 = vadd.f32 %v7439, %v7555
      %v7703 = vadd.f32 %v7440, %v7555
      %v7704 = vadd.f32 %v7441, %v7555
      %v7705 = vadd.f32 %v7442, %v7555
      %v7706 = vadd.f32 %v7443, %v7555
      %v7707 = vadd.f32 %v7444, %v7555
      %v7708 = vadd.f32 %v7445, %v7555
      %v7709 = vadd.f32 %v7446, %v7555
      %v7710 = vadd.f32 %v7447, %v7555
      %v7711 = vadd.f32 %v7448, %v7555
      %v7712 = vadd.f32 %v7449, %v7555
      %v7713 = vadd.f32 %v7450, %v7555
      %v7714 = vadd.f32 %v7451, %v7555
      %v7715 = vadd.f32 %v7452, %v7555
      %v7716 = vadd.f32 %v7453, %v7555
      %v7717 = vadd.f32 %v7454, %v7555
      %v7718 = vadd.f32 %v7455, %v7555
      %v7719 = vadd.f32 %v7456, %v7555
      %v7720 = vadd.f32 %v7457, %v7555
      %v7721 = vadd.f32 %v7458, %v7555
      %v7722 = vadd.f32 %v7459, %v7555
      %v7723 = vadd.f32 %v7460, %v7555
      %v7724 = vadd.f32 %v7461, %v7555
      %v7725 = vadd.f32 %v7462, %v7555
      %v7726 = vadd.f32 %v7463, %v7555
      %v7727 = vadd.f32 %v7464, %v7555
      %v7728 = vadd.f32 %v7465, %v7555
      %v7729 = vadd.f32 %v7466, %v7555
      %v7730 = vadd.f32 %v7467, %v7555
      %v7731 = vadd.f32 %v7468, %v7555
      %v7732 = vadd.f32 %v7469, %v7555
      %v7733 = vadd.f32 %v7470, %v7555
      %v7734 = vadd.f32 %v7471, %v7555
      %v7735 = vadd.f32 %v7472, %v7555
      %v7736 = vadd.f32 %v7473, %v7555
      %v7737 = vadd.f32 %v7474, %v7555
      %v7738 = vadd.f32 %v7475, %v7555
      %v7739 = vadd.f32 %v7476, %v7555
      %v7740 = vadd.f32 %v7477, %v7555
      %v7741 = vadd.f32 %v7478, %v7555
      %v7742 = vadd.f32 %v7479, %v7555
      %v7743 = vadd.f32 %v7480, %v7555
      %v7744 = vadd.f32 %v7481, %v7555
      %v7745 = vadd.f32 %v7482, %v7555
      %v7746 = vadd.f32 %v7483, %v7555
      %v7747 = vadd.f32 %v7484, %v7555
      %v7748 = vadd.f32 %v7485, %v7555
      %v7749 = vadd.f32 %v7486, %v7555
      %v7750 = vadd.f32 %v7487, %v7555
      %v7751 = vadd.f32 %v7488, %v7555
      %v7752 = vadd.f32 %v7489, %v7555
      %v7753 = vadd.f32 %v7490, %v7555
      %v7754 = vadd.f32 %v7491, %v7555
      %v7755 = vadd.f32 %v7492, %v7555
      %v7756 = vadd.f32 %v7493, %v7555
      %v7757 = vadd.f32 %v7494, %v7555
      %v7758 = vadd.f32 %v7495, %v7555
      %v7759 = vadd.f32 %v7496, %v7555
      %v7760 = vadd.f32 %v7497, %v7555
      %v7761 = vadd.f32 %v7498, %v7555
      %v7762 = vadd.f32 %v7499, %v7555
      %v7763 = vadd.f32 %v7500, %v7555
      %v7764 = vadd.f32 %v7501, %v7555
      %v7765 = vadd.f32 %v7502, %v7555
      %v7766 = vadd.f32 %v7503, %v7555
      %v7767 = vadd.f32 %v7504, %v7555
      %v7768 = vadd.f32 %v7505, %v7555
      %v7769 = vadd.f32 %v7506, %v7555
      %v7770 = vadd.f32 %v7507, %v7555
      %v7771 = vadd.f32 %v7508, %v7555
      %v7772 = vadd.f32 %v7509, %v7555
      %v7773 = vadd.f32 %v7510, %v7555
      %v7774 = vadd.f32 %v7511, %v7555
      %v7775 = vadd.f32 %v7512, %v7555
      %v7776 = vadd.f32 %v7513, %v7555
      %v7777 = vadd.f32 %v7514, %v7555
      %v7778 = vadd.f32 %v7515, %v7555
      %v7779 = vadd.f32 %v7516, %v7555
      %v7780 = vadd.f32 %v7517, %v7555
      %v7781 = vadd.f32 %v7518, %v7555
      %v7782 = vadd.f32 %v7519, %v7555
      %v7783 = vadd.f32 %v7520, %v7555
      %v7784 = vadd.f32 %v7521, %v7555
      %v7785 = vadd.f32 %v7522, %v7555
      %v7786 = vadd.f32 %v7523, %v7555
      %v7787 = vadd.f32 %v7524, %v7555
      %v7788 = vadd.f32 %v7525, %v7555
      %v7789 = vadd.f32 %v7526, %v7555
      %v7790 = vadd.f32 %v7527, %v7555
      %v7791 = vadd.f32 %v7528, %v7555
      %v7792 = vadd.f32 %v7529, %v7555
      %v7793 = vadd.f32 %v7530, %v7555
      %v7794 = vadd.f32 %v7531, %v7555
      %v7795 = vadd.f32 %v7532, %v7555
      %v7796 = vadd.f32 %v7533, %v7555
      %v7797 = vadd.f32 %v7534, %v7555
      %v7798 = vadd.f32 %v7535, %v7555
      %v7799 = vadd.f32 %v7536, %v7555
      %v7800 = vadd.f32 %v7537, %v7555
      %v7801 = vadd.f32 %v7538, %v7555
      %v7802 = vadd.f32 %v7539, %v7555
      %v7803 = vadd.f32 %v7540, %v7555
      %v7804 = vadd.f32 %v7541, %v7555
      %v7805 = vadd.f32 %v7542, %v7555
      %v7806 = vadd.f32 %v7543, %v7555
      %v7807 = vadd.f32 %v7544, %v7555
      %v7808 = vadd.f32 %v7545, %v7555
      %v7809 = vadd.f32 %v7546, %v7555
      %v7810 = vadd.f32 %v7547, %v7555
      %v7811 = vadd.f32 %v7548, %v7555
      %v7812 = vadd.f32 %v7549, %v7555
      %v7813 = vmax.f32 %v7557, 0.0
      %v7814 = vmax.f32 %v7558, 0.0
      %v7815 = vmax.f32 %v7559, 0.0
      %v7816 = vmax.f32 %v7560, 0.0
      %v7817 = vmax.f32 %v7561, 0.0
      %v7818 = vmax.f32 %v7562, 0.0
      %v7819 = vmax.f32 %v7563, 0.0
      %v7820 = vmax.f32 %v7564, 0.0
      %v7821 = vmax.f32 %v7565, 0.0
      %v7822 = vmax.f32 %v7566, 0.0
      %v7823 = vmax.f32 %v7567, 0.0
      %v7824 = vmax.f32 %v7568, 0.0
      %v7825 = vmax.f32 %v7569, 0.0
      %v7826 = vmax.f32 %v7570, 0.0
      %v7827 = vmax.f32 %v7571, 0.0
      %v7828 = vmax.f32 %v7572, 0.0
      %v7829 = vmax.f32 %v7573, 0.0
      %v7830 = vmax.f32 %v7574, 0.0
      %v7831 = vmax.f32 %v7575, 0.0
      %v7832 = vmax.f32 %v7576, 0.0
      %v7833 = vmax.f32 %v7577, 0.0
      %v7834 = vmax.f32 %v7578, 0.0
      %v7835 = vmax.f32 %v7579, 0.0
      %v7836 = vmax.f32 %v7580, 0.0
      %v7837 = vmax.f32 %v7581, 0.0
      %v7838 = vmax.f32 %v7582, 0.0
      %v7839 = vmax.f32 %v7583, 0.0
      %v7840 = vmax.f32 %v7584, 0.0
      %v7841 = vmax.f32 %v7585, 0.0
      %v7842 = vmax.f32 %v7586, 0.0
      %v7843 = vmax.f32 %v7587, 0.0
      %v7844 = vmax.f32 %v7588, 0.0
      %v7845 = vmax.f32 %v7589, 0.0
      %v7846 = vmax.f32 %v7590, 0.0
      %v7847 = vmax.f32 %v7591, 0.0
      %v7848 = vmax.f32 %v7592, 0.0
      %v7849 = vmax.f32 %v7593, 0.0
      %v7850 = vmax.f32 %v7594, 0.0
      %v7851 = vmax.f32 %v7595, 0.0
      %v7852 = vmax.f32 %v7596, 0.0
      %v7853 = vmax.f32 %v7597, 0.0
      %v7854 = vmax.f32 %v7598, 0.0
      %v7855 = vmax.f32 %v7599, 0.0
      %v7856 = vmax.f32 %v7600, 0.0
      %v7857 = vmax.f32 %v7601, 0.0
      %v7858 = vmax.f32 %v7602, 0.0
      %v7859 = vmax.f32 %v7603, 0.0
      %v7860 = vmax.f32 %v7604, 0.0
      %v7861 = vmax.f32 %v7605, 0.0
      %v7862 = vmax.f32 %v7606, 0.0
      %v7863 = vmax.f32 %v7607, 0.0
      %v7864 = vmax.f32 %v7608, 0.0
      %v7865 = vmax.f32 %v7609, 0.0
      %v7866 = vmax.f32 %v7610, 0.0
      %v7867 = vmax.f32 %v7611, 0.0
      %v7868 = vmax.f32 %v7612, 0.0
      %v7869 = vmax.f32 %v7613, 0.0
      %v7870 = vmax.f32 %v7614, 0.0
      %v7871 = vmax.f32 %v7615, 0.0
      %v7872 = vmax.f32 %v7616, 0.0
      %v7873 = vmax.f32 %v7617, 0.0
      %v7874 = vmax.f32 %v7618, 0.0
      %v7875 = vmax.f32 %v7619, 0.0
      %v7876 = vmax.f32 %v7620, 0.0
      %v7877 = vmax.f32 %v7621, 0.0
      %v7878 = vmax.f32 %v7622, 0.0
      %v7879 = vmax.f32 %v7623, 0.0
      %v7880 = vmax.f32 %v7624, 0.0
      %v7881 = vmax.f32 %v7625, 0.0
      %v7882 = vmax.f32 %v7626, 0.0
      %v7883 = vmax.f32 %v7627, 0.0
      %v7884 = vmax.f32 %v7628, 0.0
      %v7885 = vmax.f32 %v7629, 0.0
      %v7886 = vmax.f32 %v7630, 0.0
      %v7887 = vmax.f32 %v7631, 0.0
      %v7888 = vmax.f32 %v7632, 0.0
      %v7889 = vmax.f32 %v7633, 0.0
      %v7890 = vmax.f32 %v7634, 0.0
      %v7891 = vmax.f32 %v7635, 0.0
      %v7892 = vmax.f32 %v7636, 0.0
      %v7893 = vmax.f32 %v7637, 0.0
      %v7894 = vmax.f32 %v7638, 0.0
      %v7895 = vmax.f32 %v7639, 0.0
      %v7896 = vmax.f32 %v7640, 0.0
      %v7897 = vmax.f32 %v7641, 0.0
      %v7898 = vmax.f32 %v7642, 0.0
      %v7899 = vmax.f32 %v7643, 0.0
      %v7900 = vmax.f32 %v7644, 0.0
      %v7901 = vmax.f32 %v7645, 0.0
      %v7902 = vmax.f32 %v7646, 0.0
      %v7903 = vmax.f32 %v7647, 0.0
      %v7904 = vmax.f32 %v7648, 0.0
      %v7905 = vmax.f32 %v7649, 0.0
      %v7906 = vmax.f32 %v7650, 0.0
      %v7907 = vmax.f32 %v7651, 0.0
      %v7908 = vmax.f32 %v7652, 0.0
      %v7909 = vmax.f32 %v7653, 0.0
      %v7910 = vmax.f32 %v7654, 0.0
      %v7911 = vmax.f32 %v7655, 0.0
      %v7912 = vmax.f32 %v7656, 0.0
      %v7913 = vmax.f32 %v7657, 0.0
      %v7914 = vmax.f32 %v7658, 0.0
      %v7915 = vmax.f32 %v7659, 0.0
      %v7916 = vmax.f32 %v7660, 0.0
      %v7917 = vmax.f32 %v7661, 0.0
      %v7918 = vmax.f32 %v7662, 0.0
      %v7919 = vmax.f32 %v7663, 0.0
      %v7920 = vmax.f32 %v7664, 0.0
      %v7921 = vmax.f32 %v7665, 0.0
      %v7922 = vmax.f32 %v7666, 0.0
      %v7923 = vmax.f32 %v7667, 0.0
      %v7924 = vmax.f32 %v7668, 0.0
      %v7925 = vmax.f32 %v7669, 0.0
      %v7926 = vmax.f32 %v7670, 0.0
      %v7927 = vmax.f32 %v7671, 0.0
      %v7928 = vmax.f32 %v7672, 0.0
      %v7929 = vmax.f32 %v7673, 0.0
      %v7930 = vmax.f32 %v7674, 0.0
      %v7931 = vmax.f32 %v7675, 0.0
      %v7932 = vmax.f32 %v7676, 0.0
      %v7933 = vmax.f32 %v7677, 0.0
      %v7934 = vmax.f32 %v7678, 0.0
      %v7935 = vmax.f32 %v7679, 0.0
      %v7936 = vmax.f32 %v7680, 0.0
      %v7937 = vmax.f32 %v7681, 0.0
      %v7938 = vmax.f32 %v7682, 0.0
      %v7939 = vmax.f32 %v7683, 0.0
      %v7940 = vmax.f32 %v7684, 0.0
      %v7941 = vmax.f32 %v7685, 0.0
      %v7942 = vmax.f32 %v7686, 0.0
      %v7943 = vmax.f32 %v7687, 0.0
      %v7944 = vmax.f32 %v7688, 0.0
      %v7945 = vmax.f32 %v7689, 0.0
      %v7946 = vmax.f32 %v7690, 0.0
      %v7947 = vmax.f32 %v7691, 0.0
      %v7948 = vmax.f32 %v7692, 0.0
      %v7949 = vmax.f32 %v7693, 0.0
      %v7950 = vmax.f32 %v7694, 0.0
      %v7951 = vmax.f32 %v7695, 0.0
      %v7952 = vmax.f32 %v7696, 0.0
      %v7953 = vmax.f32 %v7697, 0.0
      %v7954 = vmax.f32 %v7698, 0.0
      %v7955 = vmax.f32 %v7699, 0.0
      %v7956 = vmax.f32 %v7700, 0.0
      %v7957 = vmax.f32 %v7701, 0.0
      %v7958 = vmax.f32 %v7702, 0.0
      %v7959 = vmax.f32 %v7703, 0.0
      %v7960 = vmax.f32 %v7704, 0.0
      %v7961 = vmax.f32 %v7705, 0.0
      %v7962 = vmax.f32 %v7706, 0.0
      %v7963 = vmax.f32 %v7707, 0.0
      %v7964 = vmax.f32 %v7708, 0.0
      %v7965 = vmax.f32 %v7709, 0.0
      %v7966 = vmax.f32 %v7710, 0.0
      %v7967 = vmax.f32 %v7711, 0.0
      %v7968 = vmax.f32 %v7712, 0.0
      %v7969 = vmax.f32 %v7713, 0.0
      %v7970 = vmax.f32 %v7714, 0.0
      %v7971 = vmax.f32 %v7715, 0.0
      %v7972 = vmax.f32 %v7716, 0.0
      %v7973 = vmax.f32 %v7717, 0.0
      %v7974 = vmax.f32 %v7718, 0.0
      %v7975 = vmax.f32 %v7719, 0.0
      %v7976 = vmax.f32 %v7720, 0.0
      %v7977 = vmax.f32 %v7721, 0.0
      %v7978 = vmax.f32 %v7722, 0.0
      %v7979 = vmax.f32 %v7723, 0.0
      %v7980 = vmax.f32 %v7724, 0.0
      %v7981 = vmax.f32 %v7725, 0.0
      %v7982 = vmax.f32 %v7726, 0.0
      %v7983 = vmax.f32 %v7727, 0.0
      %v7984 = vmax.f32 %v7728, 0.0
      %v7985 = vmax.f32 %v7729, 0.0
      %v7986 = vmax.f32 %v7730, 0.0
      %v7987 = vmax.f32 %v7731, 0.0
      %v7988 = vmax.f32 %v7732, 0.0
      %v7989 = vmax.f32 %v7733, 0.0
      %v7990 = vmax.f32 %v7734, 0.0
      %v7991 = vmax.f32 %v7735, 0.0
      %v7992 = vmax.f32 %v7736, 0.0
      %v7993 = vmax.f32 %v7737, 0.0
      %v7994 = vmax.f32 %v7738, 0.0
      %v7995 = vmax.f32 %v7739, 0.0
      %v7996 = vmax.f32 %v7740, 0.0
      %v7997 = vmax.f32 %v7741, 0.0
      %v7998 = vmax.f32 %v7742, 0.0
      %v7999 = vmax.f32 %v7743, 0.0
      %v8000 = vmax.f32 %v7744, 0.0
      %v8001 = vmax.f32 %v7745, 0.0
      %v8002 = vmax.f32 %v7746, 0.0
      %v8003 = vmax.f32 %v7747, 0.0
      %v8004 = vmax.f32 %v7748, 0.0
      %v8005 = vmax.f32 %v7749, 0.0
      %v8006 = vmax.f32 %v7750, 0.0
      %v8007 = vmax.f32 %v7751, 0.0
      %v8008 = vmax.f32 %v7752, 0.0
      %v8009 = vmax.f32 %v7753, 0.0
      %v8010 = vmax.f32 %v7754, 0.0
      %v8011 = vmax.f32 %v7755, 0.0
      %v8012 = vmax.f32 %v7756, 0.0
      %v8013 = vmax.f32 %v7757, 0.0
      %v8014 = vmax.f32 %v7758, 0.0
      %v8015 = vmax.f32 %v7759, 0.0
      %v8016 = vmax.f32 %v7760, 0.0
      %v8017 = vmax.f32 %v7761, 0.0
      %v8018 = vmax.f32 %v7762, 0.0
      %v8019 = vmax.f32 %v7763, 0.0
      %v8020 = vmax.f32 %v7764, 0.0
      %v8021 = vmax.f32 %v7765, 0.0
      %v8022 = vmax.f32 %v7766, 0.0
      %v8023 = vmax.f32 %v7767, 0.0
      %v8024 = vmax.f32 %v7768, 0.0
      %v8025 = vmax.f32 %v7769, 0.0
      %v8026 = vmax.f32 %v7770, 0.0
      %v8027 = vmax.f32 %v7771, 0.0
      %v8028 = vmax.f32 %v7772, 0.0
      %v8029 = vmax.f32 %v7773, 0.0
      %v8030 = vmax.f32 %v7774, 0.0
      %v8031 = vmax.f32 %v7775, 0.0
      %v8032 = vmax.f32 %v7776, 0.0
      %v8033 = vmax.f32 %v7777, 0.0
      %v8034 = vmax.f32 %v7778, 0.0
      %v8035 = vmax.f32 %v7779, 0.0
      %v8036 = vmax.f32 %v7780, 0.0
      %v8037 = vmax.f32 %v7781, 0.0
      %v8038 = vmax.f32 %v7782, 0.0
      %v8039 = vmax.f32 %v7783, 0.0
      %v8040 = vmax.f32 %v7784, 0.0
      %v8041 = vmax.f32 %v7785, 0.0
      %v8042 = vmax.f32 %v7786, 0.0
      %v8043 = vmax.f32 %v7787, 0.0
      %v8044 = vmax.f32 %v7788, 0.0
      %v8045 = vmax.f32 %v7789, 0.0
      %v8046 = vmax.f32 %v7790, 0.0
      %v8047 = vmax.f32 %v7791, 0.0
      %v8048 = vmax.f32 %v7792, 0.0
      %v8049 = vmax.f32 %v7793, 0.0
      %v8050 = vmax.f32 %v7794, 0.0
      %v8051 = vmax.f32 %v7795, 0.0
      %v8052 = vmax.f32 %v7796, 0.0
      %v8053 = vmax.f32 %v7797, 0.0
      %v8054 = vmax.f32 %v7798, 0.0
      %v8055 = vmax.f32 %v7799, 0.0
      %v8056 = vmax.f32 %v7800, 0.0
      %v8057 = vmax.f32 %v7801, 0.0
      %v8058 = vmax.f32 %v7802, 0.0
      %v8059 = vmax.f32 %v7803, 0.0
      %v8060 = vmax.f32 %v7804, 0.0
      %v8061 = vmax.f32 %v7805, 0.0
      %v8062 = vmax.f32 %v7806, 0.0
      %v8063 = vmax.f32 %v7807, 0.0
      %v8064 = vmax.f32 %v7808, 0.0
      %v8065 = vmax.f32 %v7809, 0.0
      %v8066 = vmax.f32 %v7810, 0.0
      %v8067 = vmax.f32 %v7811, 0.0
      %v8068 = vmax.f32 %v7812, 0.0
      %vm8069 = vcmask 523264
      %8070 = vst.msk [vmem:[#allocation2] sm:$0xff] %vm8069, %v7813
      %8071 = vst.msk [vmem:[#allocation2 + $0x8] sm:$0xff] %vm8069, %v7814
      %8072 = vst.msk [vmem:[#allocation2 + $0x10] sm:$0xff] %vm8069, %v7815
      %8073 = vst.msk [vmem:[#allocation2 + $0x18] sm:$0xff] %vm8069, %v7816
      %8074 = vst.msk [vmem:[#allocation2 + $0x20] sm:$0xff] %vm8069, %v7817
      %8075 = vst.msk [vmem:[#allocation2 + $0x28] sm:$0xff] %vm8069, %v7818
      %8076 = vst.msk [vmem:[#allocation2 + $0x30] sm:$0xff] %vm8069, %v7819
      %8077 = vst.msk [vmem:[#allocation2 + $0x38] sm:$0xff] %vm8069, %v7820
      %8078 = vst.msk [vmem:[#allocation2 + $0x40] sm:$0xff] %vm8069, %v7821
      %8079 = vst.msk [vmem:[#allocation2 + $0x48] sm:$0xff] %vm8069, %v7822
      %8080 = vst.msk [vmem:[#allocation2 + $0x50] sm:$0xff] %vm8069, %v7823
      %8081 = vst.msk [vmem:[#allocation2 + $0x58] sm:$0xff] %vm8069, %v7824
      %8082 = vst.msk [vmem:[#allocation2 + $0x60] sm:$0xff] %vm8069, %v7825
      %8083 = vst.msk [vmem:[#allocation2 + $0x68] sm:$0xff] %vm8069, %v7826
      %8084 = vst.msk [vmem:[#allocation2 + $0x70] sm:$0xff] %vm8069, %v7827
      %8085 = vst.msk [vmem:[#allocation2 + $0x78] sm:$0xff] %vm8069, %v7828
      %8086 = vst.msk [vmem:[#allocation2 + $0x80] sm:$0xff] %vm8069, %v7829
      %8087 = vst.msk [vmem:[#allocation2 + $0x88] sm:$0xff] %vm8069, %v7830
      %8088 = vst.msk [vmem:[#allocation2 + $0x90] sm:$0xff] %vm8069, %v7831
      %8089 = vst.msk [vmem:[#allocation2 + $0x98] sm:$0xff] %vm8069, %v7832
      %8090 = vst.msk [vmem:[#allocation2 + $0xa0] sm:$0xff] %vm8069, %v7833
      %8091 = vst.msk [vmem:[#allocation2 + $0xa8] sm:$0xff] %vm8069, %v7834
      %8092 = vst.msk [vmem:[#allocation2 + $0xb0] sm:$0xff] %vm8069, %v7835
      %8093 = vst.msk [vmem:[#allocation2 + $0xb8] sm:$0xff] %vm8069, %v7836
      %8094 = vst.msk [vmem:[#allocation2 + $0xc0] sm:$0xff] %vm8069, %v7837
      %8095 = vst.msk [vmem:[#allocation2 + $0xc8] sm:$0xff] %vm8069, %v7838
      %8096 = vst.msk [vmem:[#allocation2 + $0xd0] sm:$0xff] %vm8069, %v7839
      %8097 = vst.msk [vmem:[#allocation2 + $0xd8] sm:$0xff] %vm8069, %v7840
      %8098 = vst.msk [vmem:[#allocation2 + $0xe0] sm:$0xff] %vm8069, %v7841
      %8099 = vst.msk [vmem:[#allocation2 + $0xe8] sm:$0xff] %vm8069, %v7842
      %8100 = vst.msk [vmem:[#allocation2 + $0xf0] sm:$0xff] %vm8069, %v7843
      %8101 = vst.msk [vmem:[#allocation2 + $0xf8] sm:$0xff] %vm8069, %v7844
      %8102 = vst.msk [vmem:[#allocation2 + $0x100] sm:$0xff] %vm8069, %v7845
      %8103 = vst.msk [vmem:[#allocation2 + $0x108] sm:$0xff] %vm8069, %v7846
      %8104 = vst.msk [vmem:[#allocation2 + $0x110] sm:$0xff] %vm8069, %v7847
      %8105 = vst.msk [vmem:[#allocation2 + $0x118] sm:$0xff] %vm8069, %v7848
      %8106 = vst.msk [vmem:[#allocation2 + $0x120] sm:$0xff] %vm8069, %v7849
      %8107 = vst.msk [vmem:[#allocation2 + $0x128] sm:$0xff] %vm8069, %v7850
      %8108 = vst.msk [vmem:[#allocation2 + $0x130] sm:$0xff] %vm8069, %v7851
      %8109 = vst.msk [vmem:[#allocation2 + $0x138] sm:$0xff] %vm8069, %v7852
      %8110 = vst.msk [vmem:[#allocation2 + $0x140] sm:$0xff] %vm8069, %v7853
      %8111 = vst.msk [vmem:[#allocation2 + $0x148] sm:$0xff] %vm8069, %v7854
      %8112 = vst.msk [vmem:[#allocation2 + $0x150] sm:$0xff] %vm8069, %v7855
      %8113 = vst.msk [vmem:[#allocation2 + $0x158] sm:$0xff] %vm8069, %v7856
      %8114 = vst.msk [vmem:[#allocation2 + $0x160] sm:$0xff] %vm8069, %v7857
      %8115 = vst.msk [vmem:[#allocation2 + $0x168] sm:$0xff] %vm8069, %v7858
      %8116 = vst.msk [vmem:[#allocation2 + $0x170] sm:$0xff] %vm8069, %v7859
      %8117 = vst.msk [vmem:[#allocation2 + $0x178] sm:$0xff] %vm8069, %v7860
      %8118 = vst.msk [vmem:[#allocation2 + $0x180] sm:$0xff] %vm8069, %v7861
      %8119 = vst.msk [vmem:[#allocation2 + $0x188] sm:$0xff] %vm8069, %v7862
      %8120 = vst.msk [vmem:[#allocation2 + $0x190] sm:$0xff] %vm8069, %v7863
      %8121 = vst.msk [vmem:[#allocation2 + $0x198] sm:$0xff] %vm8069, %v7864
      %8122 = vst.msk [vmem:[#allocation2 + $0x1a0] sm:$0xff] %vm8069, %v7865
      %8123 = vst.msk [vmem:[#allocation2 + $0x1a8] sm:$0xff] %vm8069, %v7866
      %8124 = vst.msk [vmem:[#allocation2 + $0x1b0] sm:$0xff] %vm8069, %v7867
      %8125 = vst.msk [vmem:[#allocation2 + $0x1b8] sm:$0xff] %vm8069, %v7868
      %8126 = vst.msk [vmem:[#allocation2 + $0x1c0] sm:$0xff] %vm8069, %v7869
      %8127 = vst.msk [vmem:[#allocation2 + $0x1c8] sm:$0xff] %vm8069, %v7870
      %8128 = vst.msk [vmem:[#allocation2 + $0x1d0] sm:$0xff] %vm8069, %v7871
      %8129 = vst.msk [vmem:[#allocation2 + $0x1d8] sm:$0xff] %vm8069, %v7872
      %8130 = vst.msk [vmem:[#allocation2 + $0x1e0] sm:$0xff] %vm8069, %v7873
      %8131 = vst.msk [vmem:[#allocation2 + $0x1e8] sm:$0xff] %vm8069, %v7874
      %8132 = vst.msk [vmem:[#allocation2 + $0x1f0] sm:$0xff] %vm8069, %v7875
      %8133 = vst.msk [vmem:[#allocation2 + $0x1f8] sm:$0xff] %vm8069, %v7876
      %8134 = vst.msk [vmem:[#allocation2 + $0x200] sm:$0xff] %vm8069, %v7877
      %8135 = vst.msk [vmem:[#allocation2 + $0x208] sm:$0xff] %vm8069, %v7878
      %8136 = vst.msk [vmem:[#allocation2 + $0x210] sm:$0xff] %vm8069, %v7879
      %8137 = vst.msk [vmem:[#allocation2 + $0x218] sm:$0xff] %vm8069, %v7880
      %8138 = vst.msk [vmem:[#allocation2 + $0x220] sm:$0xff] %vm8069, %v7881
      %8139 = vst.msk [vmem:[#allocation2 + $0x228] sm:$0xff] %vm8069, %v7882
      %8140 = vst.msk [vmem:[#allocation2 + $0x230] sm:$0xff] %vm8069, %v7883
      %8141 = vst.msk [vmem:[#allocation2 + $0x238] sm:$0xff] %vm8069, %v7884
      %8142 = vst.msk [vmem:[#allocation2 + $0x240] sm:$0xff] %vm8069, %v7885
      %8143 = vst.msk [vmem:[#allocation2 + $0x248] sm:$0xff] %vm8069, %v7886
      %8144 = vst.msk [vmem:[#allocation2 + $0x250] sm:$0xff] %vm8069, %v7887
      %8145 = vst.msk [vmem:[#allocation2 + $0x258] sm:$0xff] %vm8069, %v7888
      %8146 = vst.msk [vmem:[#allocation2 + $0x260] sm:$0xff] %vm8069, %v7889
      %8147 = vst.msk [vmem:[#allocation2 + $0x268] sm:$0xff] %vm8069, %v7890
      %8148 = vst.msk [vmem:[#allocation2 + $0x270] sm:$0xff] %vm8069, %v7891
      %8149 = vst.msk [vmem:[#allocation2 + $0x278] sm:$0xff] %vm8069, %v7892
      %8150 = vst.msk [vmem:[#allocation2 + $0x280] sm:$0xff] %vm8069, %v7893
      %8151 = vst.msk [vmem:[#allocation2 + $0x288] sm:$0xff] %vm8069, %v7894
      %8152 = vst.msk [vmem:[#allocation2 + $0x290] sm:$0xff] %vm8069, %v7895
      %8153 = vst.msk [vmem:[#allocation2 + $0x298] sm:$0xff] %vm8069, %v7896
      %8154 = vst.msk [vmem:[#allocation2 + $0x2a0] sm:$0xff] %vm8069, %v7897
      %8155 = vst.msk [vmem:[#allocation2 + $0x2a8] sm:$0xff] %vm8069, %v7898
      %8156 = vst.msk [vmem:[#allocation2 + $0x2b0] sm:$0xff] %vm8069, %v7899
      %8157 = vst.msk [vmem:[#allocation2 + $0x2b8] sm:$0xff] %vm8069, %v7900
      %8158 = vst.msk [vmem:[#allocation2 + $0x2c0] sm:$0xff] %vm8069, %v7901
      %8159 = vst.msk [vmem:[#allocation2 + $0x2c8] sm:$0xff] %vm8069, %v7902
      %8160 = vst.msk [vmem:[#allocation2 + $0x2d0] sm:$0xff] %vm8069, %v7903
      %8161 = vst.msk [vmem:[#allocation2 + $0x2d8] sm:$0xff] %vm8069, %v7904
      %8162 = vst.msk [vmem:[#allocation2 + $0x2e0] sm:$0xff] %vm8069, %v7905
      %8163 = vst.msk [vmem:[#allocation2 + $0x2e8] sm:$0xff] %vm8069, %v7906
      %8164 = vst.msk [vmem:[#allocation2 + $0x2f0] sm:$0xff] %vm8069, %v7907
      %8165 = vst.msk [vmem:[#allocation2 + $0x2f8] sm:$0xff] %vm8069, %v7908
      %8166 = vst.msk [vmem:[#allocation2 + $0x300] sm:$0xff] %vm8069, %v7909
      %8167 = vst.msk [vmem:[#allocation2 + $0x308] sm:$0xff] %vm8069, %v7910
      %8168 = vst.msk [vmem:[#allocation2 + $0x310] sm:$0xff] %vm8069, %v7911
      %8169 = vst.msk [vmem:[#allocation2 + $0x318] sm:$0xff] %vm8069, %v7912
      %8170 = vst.msk [vmem:[#allocation2 + $0x320] sm:$0xff] %vm8069, %v7913
      %8171 = vst.msk [vmem:[#allocation2 + $0x328] sm:$0xff] %vm8069, %v7914
      %8172 = vst.msk [vmem:[#allocation2 + $0x330] sm:$0xff] %vm8069, %v7915
      %8173 = vst.msk [vmem:[#allocation2 + $0x338] sm:$0xff] %vm8069, %v7916
      %8174 = vst.msk [vmem:[#allocation2 + $0x340] sm:$0xff] %vm8069, %v7917
      %8175 = vst.msk [vmem:[#allocation2 + $0x348] sm:$0xff] %vm8069, %v7918
      %8176 = vst.msk [vmem:[#allocation2 + $0x350] sm:$0xff] %vm8069, %v7919
      %8177 = vst.msk [vmem:[#allocation2 + $0x358] sm:$0xff] %vm8069, %v7920
      %8178 = vst.msk [vmem:[#allocation2 + $0x360] sm:$0xff] %vm8069, %v7921
      %8179 = vst.msk [vmem:[#allocation2 + $0x368] sm:$0xff] %vm8069, %v7922
      %8180 = vst.msk [vmem:[#allocation2 + $0x370] sm:$0xff] %vm8069, %v7923
      %8181 = vst.msk [vmem:[#allocation2 + $0x378] sm:$0xff] %vm8069, %v7924
      %8182 = vst.msk [vmem:[#allocation2 + $0x380] sm:$0xff] %vm8069, %v7925
      %8183 = vst.msk [vmem:[#allocation2 + $0x388] sm:$0xff] %vm8069, %v7926
      %8184 = vst.msk [vmem:[#allocation2 + $0x390] sm:$0xff] %vm8069, %v7927
      %8185 = vst.msk [vmem:[#allocation2 + $0x398] sm:$0xff] %vm8069, %v7928
      %8186 = vst.msk [vmem:[#allocation2 + $0x3a0] sm:$0xff] %vm8069, %v7929
      %8187 = vst.msk [vmem:[#allocation2 + $0x3a8] sm:$0xff] %vm8069, %v7930
      %8188 = vst.msk [vmem:[#allocation2 + $0x3b0] sm:$0xff] %vm8069, %v7931
      %8189 = vst.msk [vmem:[#allocation2 + $0x3b8] sm:$0xff] %vm8069, %v7932
      %8190 = vst.msk [vmem:[#allocation2 + $0x3c0] sm:$0xff] %vm8069, %v7933
      %8191 = vst.msk [vmem:[#allocation2 + $0x3c8] sm:$0xff] %vm8069, %v7934
      %8192 = vst.msk [vmem:[#allocation2 + $0x3d0] sm:$0xff] %vm8069, %v7935
      %8193 = vst.msk [vmem:[#allocation2 + $0x3d8] sm:$0xff] %vm8069, %v7936
      %8194 = vst.msk [vmem:[#allocation2 + $0x3e0] sm:$0xff] %vm8069, %v7937
      %8195 = vst.msk [vmem:[#allocation2 + $0x3e8] sm:$0xff] %vm8069, %v7938
      %8196 = vst.msk [vmem:[#allocation2 + $0x3f0] sm:$0xff] %vm8069, %v7939
      %8197 = vst.msk [vmem:[#allocation2 + $0x3f8] sm:$0xff] %vm8069, %v7940
      %8198 = vst.msk [vmem:[#allocation2 + $0x400] sm:$0xff] %vm8069, %v7941
      %8199 = vst.msk [vmem:[#allocation2 + $0x408] sm:$0xff] %vm8069, %v7942
      %8200 = vst.msk [vmem:[#allocation2 + $0x410] sm:$0xff] %vm8069, %v7943
      %8201 = vst.msk [vmem:[#allocation2 + $0x418] sm:$0xff] %vm8069, %v7944
      %8202 = vst.msk [vmem:[#allocation2 + $0x420] sm:$0xff] %vm8069, %v7945
      %8203 = vst.msk [vmem:[#allocation2 + $0x428] sm:$0xff] %vm8069, %v7946
      %8204 = vst.msk [vmem:[#allocation2 + $0x430] sm:$0xff] %vm8069, %v7947
      %8205 = vst.msk [vmem:[#allocation2 + $0x438] sm:$0xff] %vm8069, %v7948
      %8206 = vst.msk [vmem:[#allocation2 + $0x440] sm:$0xff] %vm8069, %v7949
      %8207 = vst.msk [vmem:[#allocation2 + $0x448] sm:$0xff] %vm8069, %v7950
      %8208 = vst.msk [vmem:[#allocation2 + $0x450] sm:$0xff] %vm8069, %v7951
      %8209 = vst.msk [vmem:[#allocation2 + $0x458] sm:$0xff] %vm8069, %v7952
      %8210 = vst.msk [vmem:[#allocation2 + $0x460] sm:$0xff] %vm8069, %v7953
      %8211 = vst.msk [vmem:[#allocation2 + $0x468] sm:$0xff] %vm8069, %v7954
      %8212 = vst.msk [vmem:[#allocation2 + $0x470] sm:$0xff] %vm8069, %v7955
      %8213 = vst.msk [vmem:[#allocation2 + $0x478] sm:$0xff] %vm8069, %v7956
      %8214 = vst.msk [vmem:[#allocation2 + $0x480] sm:$0xff] %vm8069, %v7957
      %8215 = vst.msk [vmem:[#allocation2 + $0x488] sm:$0xff] %vm8069, %v7958
      %8216 = vst.msk [vmem:[#allocation2 + $0x490] sm:$0xff] %vm8069, %v7959
      %8217 = vst.msk [vmem:[#allocation2 + $0x498] sm:$0xff] %vm8069, %v7960
      %8218 = vst.msk [vmem:[#allocation2 + $0x4a0] sm:$0xff] %vm8069, %v7961
      %8219 = vst.msk [vmem:[#allocation2 + $0x4a8] sm:$0xff] %vm8069, %v7962
      %8220 = vst.msk [vmem:[#allocation2 + $0x4b0] sm:$0xff] %vm8069, %v7963
      %8221 = vst.msk [vmem:[#allocation2 + $0x4b8] sm:$0xff] %vm8069, %v7964
      %8222 = vst.msk [vmem:[#allocation2 + $0x4c0] sm:$0xff] %vm8069, %v7965
      %8223 = vst.msk [vmem:[#allocation2 + $0x4c8] sm:$0xff] %vm8069, %v7966
      %8224 = vst.msk [vmem:[#allocation2 + $0x4d0] sm:$0xff] %vm8069, %v7967
      %8225 = vst.msk [vmem:[#allocation2 + $0x4d8] sm:$0xff] %vm8069, %v7968
      %8226 = vst.msk [vmem:[#allocation2 + $0x4e0] sm:$0xff] %vm8069, %v7969
      %8227 = vst.msk [vmem:[#allocation2 + $0x4e8] sm:$0xff] %vm8069, %v7970
      %8228 = vst.msk [vmem:[#allocation2 + $0x4f0] sm:$0xff] %vm8069, %v7971
      %8229 = vst.msk [vmem:[#allocation2 + $0x4f8] sm:$0xff] %vm8069, %v7972
      %8230 = vst.msk [vmem:[#allocation2 + $0x500] sm:$0xff] %vm8069, %v7973
      %8231 = vst.msk [vmem:[#allocation2 + $0x508] sm:$0xff] %vm8069, %v7974
      %8232 = vst.msk [vmem:[#allocation2 + $0x510] sm:$0xff] %vm8069, %v7975
      %8233 = vst.msk [vmem:[#allocation2 + $0x518] sm:$0xff] %vm8069, %v7976
      %8234 = vst.msk [vmem:[#allocation2 + $0x520] sm:$0xff] %vm8069, %v7977
      %8235 = vst.msk [vmem:[#allocation2 + $0x528] sm:$0xff] %vm8069, %v7978
      %8236 = vst.msk [vmem:[#allocation2 + $0x530] sm:$0xff] %vm8069, %v7979
      %8237 = vst.msk [vmem:[#allocation2 + $0x538] sm:$0xff] %vm8069, %v7980
      %8238 = vst.msk [vmem:[#allocation2 + $0x540] sm:$0xff] %vm8069, %v7981
      %8239 = vst.msk [vmem:[#allocation2 + $0x548] sm:$0xff] %vm8069, %v7982
      %8240 = vst.msk [vmem:[#allocation2 + $0x550] sm:$0xff] %vm8069, %v7983
      %8241 = vst.msk [vmem:[#allocation2 + $0x558] sm:$0xff] %vm8069, %v7984
      %8242 = vst.msk [vmem:[#allocation2 + $0x560] sm:$0xff] %vm8069, %v7985
      %8243 = vst.msk [vmem:[#allocation2 + $0x568] sm:$0xff] %vm8069, %v7986
      %8244 = vst.msk [vmem:[#allocation2 + $0x570] sm:$0xff] %vm8069, %v7987
      %8245 = vst.msk [vmem:[#allocation2 + $0x578] sm:$0xff] %vm8069, %v7988
      %8246 = vst.msk [vmem:[#allocation2 + $0x580] sm:$0xff] %vm8069, %v7989
      %8247 = vst.msk [vmem:[#allocation2 + $0x588] sm:$0xff] %vm8069, %v7990
      %8248 = vst.msk [vmem:[#allocation2 + $0x590] sm:$0xff] %vm8069, %v7991
      %8249 = vst.msk [vmem:[#allocation2 + $0x598] sm:$0xff] %vm8069, %v7992
      %8250 = vst.msk [vmem:[#allocation2 + $0x5a0] sm:$0xff] %vm8069, %v7993
      %8251 = vst.msk [vmem:[#allocation2 + $0x5a8] sm:$0xff] %vm8069, %v7994
      %8252 = vst.msk [vmem:[#allocation2 + $0x5b0] sm:$0xff] %vm8069, %v7995
      %8253 = vst.msk [vmem:[#allocation2 + $0x5b8] sm:$0xff] %vm8069, %v7996
      %8254 = vst.msk [vmem:[#allocation2 + $0x5c0] sm:$0xff] %vm8069, %v7997
      %8255 = vst.msk [vmem:[#allocation2 + $0x5c8] sm:$0xff] %vm8069, %v7998
      %8256 = vst.msk [vmem:[#allocation2 + $0x5d0] sm:$0xff] %vm8069, %v7999
      %8257 = vst.msk [vmem:[#allocation2 + $0x5d8] sm:$0xff] %vm8069, %v8000
      %8258 = vst.msk [vmem:[#allocation2 + $0x5e0] sm:$0xff] %vm8069, %v8001
      %8259 = vst.msk [vmem:[#allocation2 + $0x5e8] sm:$0xff] %vm8069, %v8002
      %8260 = vst.msk [vmem:[#allocation2 + $0x5f0] sm:$0xff] %vm8069, %v8003
      %8261 = vst.msk [vmem:[#allocation2 + $0x5f8] sm:$0xff] %vm8069, %v8004
      %8262 = vst.msk [vmem:[#allocation2 + $0x600] sm:$0xff] %vm8069, %v8005
      %8263 = vst.msk [vmem:[#allocation2 + $0x608] sm:$0xff] %vm8069, %v8006
      %8264 = vst.msk [vmem:[#allocation2 + $0x610] sm:$0xff] %vm8069, %v8007
      %8265 = vst.msk [vmem:[#allocation2 + $0x618] sm:$0xff] %vm8069, %v8008
      %8266 = vst.msk [vmem:[#allocation2 + $0x620] sm:$0xff] %vm8069, %v8009
      %8267 = vst.msk [vmem:[#allocation2 + $0x628] sm:$0xff] %vm8069, %v8010
      %8268 = vst.msk [vmem:[#allocation2 + $0x630] sm:$0xff] %vm8069, %v8011
      %8269 = vst.msk [vmem:[#allocation2 + $0x638] sm:$0xff] %vm8069, %v8012
      %8270 = vst.msk [vmem:[#allocation2 + $0x640] sm:$0xff] %vm8069, %v8013
      %8271 = vst.msk [vmem:[#allocation2 + $0x648] sm:$0xff] %vm8069, %v8014
      %8272 = vst.msk [vmem:[#allocation2 + $0x650] sm:$0xff] %vm8069, %v8015
      %8273 = vst.msk [vmem:[#allocation2 + $0x658] sm:$0xff] %vm8069, %v8016
      %8274 = vst.msk [vmem:[#allocation2 + $0x660] sm:$0xff] %vm8069, %v8017
      %8275 = vst.msk [vmem:[#allocation2 + $0x668] sm:$0xff] %vm8069, %v8018
      %8276 = vst.msk [vmem:[#allocation2 + $0x670] sm:$0xff] %vm8069, %v8019
      %8277 = vst.msk [vmem:[#allocation2 + $0x678] sm:$0xff] %vm8069, %v8020
      %8278 = vst.msk [vmem:[#allocation2 + $0x680] sm:$0xff] %vm8069, %v8021
      %8279 = vst.msk [vmem:[#allocation2 + $0x688] sm:$0xff] %vm8069, %v8022
      %8280 = vst.msk [vmem:[#allocation2 + $0x690] sm:$0xff] %vm8069, %v8023
      %8281 = vst.msk [vmem:[#allocation2 + $0x698] sm:$0xff] %vm8069, %v8024
      %8282 = vst.msk [vmem:[#allocation2 + $0x6a0] sm:$0xff] %vm8069, %v8025
      %8283 = vst.msk [vmem:[#allocation2 + $0x6a8] sm:$0xff] %vm8069, %v8026
      %8284 = vst.msk [vmem:[#allocation2 + $0x6b0] sm:$0xff] %vm8069, %v8027
      %8285 = vst.msk [vmem:[#allocation2 + $0x6b8] sm:$0xff] %vm8069, %v8028
      %8286 = vst.msk [vmem:[#allocation2 + $0x6c0] sm:$0xff] %vm8069, %v8029
      %8287 = vst.msk [vmem:[#allocation2 + $0x6c8] sm:$0xff] %vm8069, %v8030
      %8288 = vst.msk [vmem:[#allocation2 + $0x6d0] sm:$0xff] %vm8069, %v8031
      %8289 = vst.msk [vmem:[#allocation2 + $0x6d8] sm:$0xff] %vm8069, %v8032
      %8290 = vst.msk [vmem:[#allocation2 + $0x6e0] sm:$0xff] %vm8069, %v8033
      %8291 = vst.msk [vmem:[#allocation2 + $0x6e8] sm:$0xff] %vm8069, %v8034
      %8292 = vst.msk [vmem:[#allocation2 + $0x6f0] sm:$0xff] %vm8069, %v8035
      %8293 = vst.msk [vmem:[#allocation2 + $0x6f8] sm:$0xff] %vm8069, %v8036
      %8294 = vst.msk [vmem:[#allocation2 + $0x700] sm:$0xff] %vm8069, %v8037
      %8295 = vst.msk [vmem:[#allocation2 + $0x708] sm:$0xff] %vm8069, %v8038
      %8296 = vst.msk [vmem:[#allocation2 + $0x710] sm:$0xff] %vm8069, %v8039
      %8297 = vst.msk [vmem:[#allocation2 + $0x718] sm:$0xff] %vm8069, %v8040
      %8298 = vst.msk [vmem:[#allocation2 + $0x720] sm:$0xff] %vm8069, %v8041
      %8299 = vst.msk [vmem:[#allocation2 + $0x728] sm:$0xff] %vm8069, %v8042
      %8300 = vst.msk [vmem:[#allocation2 + $0x730] sm:$0xff] %vm8069, %v8043
      %8301 = vst.msk [vmem:[#allocation2 + $0x738] sm:$0xff] %vm8069, %v8044
      %8302 = vst.msk [vmem:[#allocation2 + $0x740] sm:$0xff] %vm8069, %v8045
      %8303 = vst.msk [vmem:[#allocation2 + $0x748] sm:$0xff] %vm8069, %v8046
      %8304 = vst.msk [vmem:[#allocation2 + $0x750] sm:$0xff] %vm8069, %v8047
      %8305 = vst.msk [vmem:[#allocation2 + $0x758] sm:$0xff] %vm8069, %v8048
      %8306 = vst.msk [vmem:[#allocation2 + $0x760] sm:$0xff] %vm8069, %v8049
      %8307 = vst.msk [vmem:[#allocation2 + $0x768] sm:$0xff] %vm8069, %v8050
      %8308 = vst.msk [vmem:[#allocation2 + $0x770] sm:$0xff] %vm8069, %v8051
      %8309 = vst.msk [vmem:[#allocation2 + $0x778] sm:$0xff] %vm8069, %v8052
      %8310 = vst.msk [vmem:[#allocation2 + $0x780] sm:$0xff] %vm8069, %v8053
      %8311 = vst.msk [vmem:[#allocation2 + $0x788] sm:$0xff] %vm8069, %v8054
      %8312 = vst.msk [vmem:[#allocation2 + $0x790] sm:$0xff] %vm8069, %v8055
      %8313 = vst.msk [vmem:[#allocation2 + $0x798] sm:$0xff] %vm8069, %v8056
      %8314 = vst.msk [vmem:[#allocation2 + $0x7a0] sm:$0xff] %vm8069, %v8057
      %8315 = vst.msk [vmem:[#allocation2 + $0x7a8] sm:$0xff] %vm8069, %v8058
      %8316 = vst.msk [vmem:[#allocation2 + $0x7b0] sm:$0xff] %vm8069, %v8059
      %8317 = vst.msk [vmem:[#allocation2 + $0x7b8] sm:$0xff] %vm8069, %v8060
      %8318 = vst.msk [vmem:[#allocation2 + $0x7c0] sm:$0xff] %vm8069, %v8061
      %8319 = vst.msk [vmem:[#allocation2 + $0x7c8] sm:$0xff] %vm8069, %v8062
      %8320 = vst.msk [vmem:[#allocation2 + $0x7d0] sm:$0xff] %vm8069, %v8063
      %8321 = vst.msk [vmem:[#allocation2 + $0x7d8] sm:$0xff] %vm8069, %v8064
      %8322 = vst.msk [vmem:[#allocation2 + $0x7e0] sm:$0xff] %vm8069, %v8065
      %8323 = vst.msk [vmem:[#allocation2 + $0x7e8] sm:$0xff] %vm8069, %v8066
      %8324 = vst.msk [vmem:[#allocation2 + $0x7f0] sm:$0xff] %vm8069, %v8067
      %8325 = vst.msk [vmem:[#allocation2 + $0x7f8] sm:$0xff] %vm8069, %v8068
      %v8326 = vld [vmem:[#allocation2] ss:$2 sm:$0xff]
      %s8327 = scalar_lea.vmem [#allocation2], 16
      %v8328 = vld [vmem:[%s8327] ss:$2 sm:$0xff]
      %s8329 = scalar_lea.vmem [#allocation2], 32
      %v8330 = vld [vmem:[%s8329] ss:$2 sm:$0xff]
      %s8331 = scalar_lea.vmem [#allocation2], 48
      %v8332 = vld [vmem:[%s8331] ss:$2 sm:$0xff]
      %s8333 = scalar_lea.vmem [#allocation2], 64
      %v8334 = vld [vmem:[%s8333] ss:$2 sm:$0xff]
      %s8335 = scalar_lea.vmem [#allocation2], 80
      %v8336 = vld [vmem:[%s8335] ss:$2 sm:$0xff]
      %s8337 = scalar_lea.vmem [#allocation2], 96
      %v8338 = vld [vmem:[%s8337] ss:$2 sm:$0xff]
      %s8339 = scalar_lea.vmem [#allocation2], 112
      %v8340 = vld [vmem:[%s8339] ss:$2 sm:$0xff]
      %s8341 = scalar_lea.vmem [#allocation2], 128
      %v8342 = vld [vmem:[%s8341] ss:$2 sm:$0xff]
      %s8343 = scalar_lea.vmem [#allocation2], 144
      %v8344 = vld [vmem:[%s8343] ss:$2 sm:$0xff]
      %s8345 = scalar_lea.vmem [#allocation2], 160
      %v8346 = vld [vmem:[%s8345] ss:$2 sm:$0xff]
      %s8347 = scalar_lea.vmem [#allocation2], 176
      %v8348 = vld [vmem:[%s8347] ss:$2 sm:$0xff]
      %s8349 = scalar_lea.vmem [#allocation2], 192
      %v8350 = vld [vmem:[%s8349] ss:$2 sm:$0xff]
      %s8351 = scalar_lea.vmem [#allocation2], 208
      %v8352 = vld [vmem:[%s8351] ss:$2 sm:$0xff]
      %s8353 = scalar_lea.vmem [#allocation2], 224
      %v8354 = vld [vmem:[%s8353] ss:$2 sm:$0xff]
      %s8355 = scalar_lea.vmem [#allocation2], 240
      %v8356 = vld [vmem:[%s8355] ss:$2 sm:$0xff]
      %s8357 = scalar_lea.vmem [#allocation2], 256
      %v8358 = vld [vmem:[%s8357] ss:$2 sm:$0xff]
      %s8359 = scalar_lea.vmem [#allocation2], 272
      %v8360 = vld [vmem:[%s8359] ss:$2 sm:$0xff]
      %s8361 = scalar_lea.vmem [#allocation2], 288
      %v8362 = vld [vmem:[%s8361] ss:$2 sm:$0xff]
      %s8363 = scalar_lea.vmem [#allocation2], 304
      %v8364 = vld [vmem:[%s8363] ss:$2 sm:$0xff]
      %s8365 = scalar_lea.vmem [#allocation2], 320
      %v8366 = vld [vmem:[%s8365] ss:$2 sm:$0xff]
      %s8367 = scalar_lea.vmem [#allocation2], 336
      %v8368 = vld [vmem:[%s8367] ss:$2 sm:$0xff]
      %s8369 = scalar_lea.vmem [#allocation2], 352
      %v8370 = vld [vmem:[%s8369] ss:$2 sm:$0xff]
      %s8371 = scalar_lea.vmem [#allocation2], 368
      %v8372 = vld [vmem:[%s8371] ss:$2 sm:$0xff]
      %s8373 = scalar_lea.vmem [#allocation2], 384
      %v8374 = vld [vmem:[%s8373] ss:$2 sm:$0xff]
      %s8375 = scalar_lea.vmem [#allocation2], 400
      %v8376 = vld [vmem:[%s8375] ss:$2 sm:$0xff]
      %s8377 = scalar_lea.vmem [#allocation2], 416
      %v8378 = vld [vmem:[%s8377] ss:$2 sm:$0xff]
      %s8379 = scalar_lea.vmem [#allocation2], 432
      %v8380 = vld [vmem:[%s8379] ss:$2 sm:$0xff]
      %s8381 = scalar_lea.vmem [#allocation2], 448
      %v8382 = vld [vmem:[%s8381] ss:$2 sm:$0xff]
      %s8383 = scalar_lea.vmem [#allocation2], 464
      %v8384 = vld [vmem:[%s8383] ss:$2 sm:$0xff]
      %s8385 = scalar_lea.vmem [#allocation2], 480
      %v8386 = vld [vmem:[%s8385] ss:$2 sm:$0xff]
      %s8387 = scalar_lea.vmem [#allocation2], 496
      %v8388 = vld [vmem:[%s8387] ss:$2 sm:$0xff]
      %s8389 = scalar_lea.vmem [#allocation2], 512
      %v8390 = vld [vmem:[%s8389] ss:$2 sm:$0xff]
      %s8391 = scalar_lea.vmem [#allocation2], 528
      %v8392 = vld [vmem:[%s8391] ss:$2 sm:$0xff]
      %s8393 = scalar_lea.vmem [#allocation2], 544
      %v8394 = vld [vmem:[%s8393] ss:$2 sm:$0xff]
      %s8395 = scalar_lea.vmem [#allocation2], 560
      %v8396 = vld [vmem:[%s8395] ss:$2 sm:$0xff]
      %s8397 = scalar_lea.vmem [#allocation2], 576
      %v8398 = vld [vmem:[%s8397] ss:$2 sm:$0xff]
      %s8399 = scalar_lea.vmem [#allocation2], 592
      %v8400 = vld [vmem:[%s8399] ss:$2 sm:$0xff]
      %s8401 = scalar_lea.vmem [#allocation2], 608
      %v8402 = vld [vmem:[%s8401] ss:$2 sm:$0xff]
      %s8403 = scalar_lea.vmem [#allocation2], 624
      %v8404 = vld [vmem:[%s8403] ss:$2 sm:$0xff]
      %s8405 = scalar_lea.vmem [#allocation2], 640
      %v8406 = vld [vmem:[%s8405] ss:$2 sm:$0xff]
      %s8407 = scalar_lea.vmem [#allocation2], 656
      %v8408 = vld [vmem:[%s8407] ss:$2 sm:$0xff]
      %s8409 = scalar_lea.vmem [#allocation2], 672
      %v8410 = vld [vmem:[%s8409] ss:$2 sm:$0xff]
      %s8411 = scalar_lea.vmem [#allocation2], 688
      %v8412 = vld [vmem:[%s8411] ss:$2 sm:$0xff]
      %s8413 = scalar_lea.vmem [#allocation2], 704
      %v8414 = vld [vmem:[%s8413] ss:$2 sm:$0xff]
      %s8415 = scalar_lea.vmem [#allocation2], 720
      %v8416 = vld [vmem:[%s8415] ss:$2 sm:$0xff]
      %s8417 = scalar_lea.vmem [#allocation2], 736
      %v8418 = vld [vmem:[%s8417] ss:$2 sm:$0xff]
      %s8419 = scalar_lea.vmem [#allocation2], 752
      %v8420 = vld [vmem:[%s8419] ss:$2 sm:$0xff]
      %s8421 = scalar_lea.vmem [#allocation2], 768
      %v8422 = vld [vmem:[%s8421] ss:$2 sm:$0xff]
      %s8423 = scalar_lea.vmem [#allocation2], 784
      %v8424 = vld [vmem:[%s8423] ss:$2 sm:$0xff]
      %s8425 = scalar_lea.vmem [#allocation2], 800
      %v8426 = vld [vmem:[%s8425] ss:$2 sm:$0xff]
      %s8427 = scalar_lea.vmem [#allocation2], 816
      %v8428 = vld [vmem:[%s8427] ss:$2 sm:$0xff]
      %s8429 = scalar_lea.vmem [#allocation2], 832
      %v8430 = vld [vmem:[%s8429] ss:$2 sm:$0xff]
      %s8431 = scalar_lea.vmem [#allocation2], 848
      %v8432 = vld [vmem:[%s8431] ss:$2 sm:$0xff]
      %s8433 = scalar_lea.vmem [#allocation2], 864
      %v8434 = vld [vmem:[%s8433] ss:$2 sm:$0xff]
      %s8435 = scalar_lea.vmem [#allocation2], 880
      %v8436 = vld [vmem:[%s8435] ss:$2 sm:$0xff]
      %s8437 = scalar_lea.vmem [#allocation2], 896
      %v8438 = vld [vmem:[%s8437] ss:$2 sm:$0xff]
      %s8439 = scalar_lea.vmem [#allocation2], 912
      %v8440 = vld [vmem:[%s8439] ss:$2 sm:$0xff]
      %s8441 = scalar_lea.vmem [#allocation2], 928
      %v8442 = vld [vmem:[%s8441] ss:$2 sm:$0xff]
      %s8443 = scalar_lea.vmem [#allocation2], 944
      %v8444 = vld [vmem:[%s8443] ss:$2 sm:$0xff]
      %s8445 = scalar_lea.vmem [#allocation2], 960
      %v8446 = vld [vmem:[%s8445] ss:$2 sm:$0xff]
      %s8447 = scalar_lea.vmem [#allocation2], 976
      %v8448 = vld [vmem:[%s8447] ss:$2 sm:$0xff]
      %s8449 = scalar_lea.vmem [#allocation2], 992
      %v8450 = vld [vmem:[%s8449] ss:$2 sm:$0xff]
      %s8451 = scalar_lea.vmem [#allocation2], 1008
      %v8452 = vld [vmem:[%s8451] ss:$2 sm:$0xff]
      %s8453 = scalar_lea.vmem [#allocation2], 1024
      %v8454 = vld [vmem:[%s8453] ss:$2 sm:$0xff]
      %s8455 = scalar_lea.vmem [#allocation2], 1040
      %v8456 = vld [vmem:[%s8455] ss:$2 sm:$0xff]
      %s8457 = scalar_lea.vmem [#allocation2], 1056
      %v8458 = vld [vmem:[%s8457] ss:$2 sm:$0xff]
      %s8459 = scalar_lea.vmem [#allocation2], 1072
      %v8460 = vld [vmem:[%s8459] ss:$2 sm:$0xff]
      %s8461 = scalar_lea.vmem [#allocation2], 1088
      %v8462 = vld [vmem:[%s8461] ss:$2 sm:$0xff]
      %s8463 = scalar_lea.vmem [#allocation2], 1104
      %v8464 = vld [vmem:[%s8463] ss:$2 sm:$0xff]
      %s8465 = scalar_lea.vmem [#allocation2], 1120
      %v8466 = vld [vmem:[%s8465] ss:$2 sm:$0xff]
      %s8467 = scalar_lea.vmem [#allocation2], 1136
      %v8468 = vld [vmem:[%s8467] ss:$2 sm:$0xff]
      %s8469 = scalar_lea.vmem [#allocation2], 1152
      %v8470 = vld [vmem:[%s8469] ss:$2 sm:$0xff]
      %s8471 = scalar_lea.vmem [#allocation2], 1168
      %v8472 = vld [vmem:[%s8471] ss:$2 sm:$0xff]
      %s8473 = scalar_lea.vmem [#allocation2], 1184
      %v8474 = vld [vmem:[%s8473] ss:$2 sm:$0xff]
      %s8475 = scalar_lea.vmem [#allocation2], 1200
      %v8476 = vld [vmem:[%s8475] ss:$2 sm:$0xff]
      %s8477 = scalar_lea.vmem [#allocation2], 1216
      %v8478 = vld [vmem:[%s8477] ss:$2 sm:$0xff]
      %s8479 = scalar_lea.vmem [#allocation2], 1232
      %v8480 = vld [vmem:[%s8479] ss:$2 sm:$0xff]
      %s8481 = scalar_lea.vmem [#allocation2], 1248
      %v8482 = vld [vmem:[%s8481] ss:$2 sm:$0xff]
      %s8483 = scalar_lea.vmem [#allocation2], 1264
      %v8484 = vld [vmem:[%s8483] ss:$2 sm:$0xff]
      %s8485 = scalar_lea.vmem [#allocation2], 1280
      %v8486 = vld [vmem:[%s8485] ss:$2 sm:$0xff]
      %s8487 = scalar_lea.vmem [#allocation2], 1296
      %v8488 = vld [vmem:[%s8487] ss:$2 sm:$0xff]
      %s8489 = scalar_lea.vmem [#allocation2], 1312
      %v8490 = vld [vmem:[%s8489] ss:$2 sm:$0xff]
      %s8491 = scalar_lea.vmem [#allocation2], 1328
      %v8492 = vld [vmem:[%s8491] ss:$2 sm:$0xff]
      %s8493 = scalar_lea.vmem [#allocation2], 1344
      %v8494 = vld [vmem:[%s8493] ss:$2 sm:$0xff]
      %s8495 = scalar_lea.vmem [#allocation2], 1360
      %v8496 = vld [vmem:[%s8495] ss:$2 sm:$0xff]
      %s8497 = scalar_lea.vmem [#allocation2], 1376
      %v8498 = vld [vmem:[%s8497] ss:$2 sm:$0xff]
      %s8499 = scalar_lea.vmem [#allocation2], 1392
      %v8500 = vld [vmem:[%s8499] ss:$2 sm:$0xff]
      %s8501 = scalar_lea.vmem [#allocation2], 1408
      %v8502 = vld [vmem:[%s8501] ss:$2 sm:$0xff]
      %s8503 = scalar_lea.vmem [#allocation2], 1424
      %v8504 = vld [vmem:[%s8503] ss:$2 sm:$0xff]
      %s8505 = scalar_lea.vmem [#allocation2], 1440
      %v8506 = vld [vmem:[%s8505] ss:$2 sm:$0xff]
      %s8507 = scalar_lea.vmem [#allocation2], 1456
      %v8508 = vld [vmem:[%s8507] ss:$2 sm:$0xff]
      %s8509 = scalar_lea.vmem [#allocation2], 1472
      %v8510 = vld [vmem:[%s8509] ss:$2 sm:$0xff]
      %s8511 = scalar_lea.vmem [#allocation2], 1488
      %v8512 = vld [vmem:[%s8511] ss:$2 sm:$0xff]
      %s8513 = scalar_lea.vmem [#allocation2], 1504
      %v8514 = vld [vmem:[%s8513] ss:$2 sm:$0xff]
      %s8515 = scalar_lea.vmem [#allocation2], 1520
      %v8516 = vld [vmem:[%s8515] ss:$2 sm:$0xff]
      %s8517 = scalar_lea.vmem [#allocation2], 1536
      %v8518 = vld [vmem:[%s8517] ss:$2 sm:$0xff]
      %s8519 = scalar_lea.vmem [#allocation2], 1552
      %v8520 = vld [vmem:[%s8519] ss:$2 sm:$0xff]
      %s8521 = scalar_lea.vmem [#allocation2], 1568
      %v8522 = vld [vmem:[%s8521] ss:$2 sm:$0xff]
      %s8523 = scalar_lea.vmem [#allocation2], 1584
      %v8524 = vld [vmem:[%s8523] ss:$2 sm:$0xff]
      %s8525 = scalar_lea.vmem [#allocation2], 1600
      %v8526 = vld [vmem:[%s8525] ss:$2 sm:$0xff]
      %s8527 = scalar_lea.vmem [#allocation2], 1616
      %v8528 = vld [vmem:[%s8527] ss:$2 sm:$0xff]
      %s8529 = scalar_lea.vmem [#allocation2], 1632
      %v8530 = vld [vmem:[%s8529] ss:$2 sm:$0xff]
      %s8531 = scalar_lea.vmem [#allocation2], 1648
      %v8532 = vld [vmem:[%s8531] ss:$2 sm:$0xff]
      %s8533 = scalar_lea.vmem [#allocation2], 1664
      %v8534 = vld [vmem:[%s8533] ss:$2 sm:$0xff]
      %s8535 = scalar_lea.vmem [#allocation2], 1680
      %v8536 = vld [vmem:[%s8535] ss:$2 sm:$0xff]
      %s8537 = scalar_lea.vmem [#allocation2], 1696
      %v8538 = vld [vmem:[%s8537] ss:$2 sm:$0xff]
      %s8539 = scalar_lea.vmem [#allocation2], 1712
      %v8540 = vld [vmem:[%s8539] ss:$2 sm:$0xff]
      %s8541 = scalar_lea.vmem [#allocation2], 1728
      %v8542 = vld [vmem:[%s8541] ss:$2 sm:$0xff]
      %s8543 = scalar_lea.vmem [#allocation2], 1744
      %v8544 = vld [vmem:[%s8543] ss:$2 sm:$0xff]
      %s8545 = scalar_lea.vmem [#allocation2], 1760
      %v8546 = vld [vmem:[%s8545] ss:$2 sm:$0xff]
      %s8547 = scalar_lea.vmem [#allocation2], 1776
      %v8548 = vld [vmem:[%s8547] ss:$2 sm:$0xff]
      %s8549 = scalar_lea.vmem [#allocation2], 1792
      %v8550 = vld [vmem:[%s8549] ss:$2 sm:$0xff]
      %s8551 = scalar_lea.vmem [#allocation2], 1808
      %v8552 = vld [vmem:[%s8551] ss:$2 sm:$0xff]
      %s8553 = scalar_lea.vmem [#allocation2], 1824
      %v8554 = vld [vmem:[%s8553] ss:$2 sm:$0xff]
      %s8555 = scalar_lea.vmem [#allocation2], 1840
      %v8556 = vld [vmem:[%s8555] ss:$2 sm:$0xff]
      %s8557 = scalar_lea.vmem [#allocation2], 1856
      %v8558 = vld [vmem:[%s8557] ss:$2 sm:$0xff]
      %s8559 = scalar_lea.vmem [#allocation2], 1872
      %v8560 = vld [vmem:[%s8559] ss:$2 sm:$0xff]
      %s8561 = scalar_lea.vmem [#allocation2], 1888
      %v8562 = vld [vmem:[%s8561] ss:$2 sm:$0xff]
      %s8563 = scalar_lea.vmem [#allocation2], 1904
      %v8564 = vld [vmem:[%s8563] ss:$2 sm:$0xff]
      %s8565 = scalar_lea.vmem [#allocation2], 1920
      %v8566 = vld [vmem:[%s8565] ss:$2 sm:$0xff]
      %s8567 = scalar_lea.vmem [#allocation2], 1936
      %v8568 = vld [vmem:[%s8567] ss:$2 sm:$0xff]
      %s8569 = scalar_lea.vmem [#allocation2], 1952
      %v8570 = vld [vmem:[%s8569] ss:$2 sm:$0xff]
      %s8571 = scalar_lea.vmem [#allocation2], 1968
      %v8572 = vld [vmem:[%s8571] ss:$2 sm:$0xff]
      %s8573 = scalar_lea.vmem [#allocation2], 1984
      %v8574 = vld [vmem:[%s8573] ss:$2 sm:$0xff]
      %s8575 = scalar_lea.vmem [#allocation2], 2000
      %v8576 = vld [vmem:[%s8575] ss:$2 sm:$0xff]
      %s8577 = scalar_lea.vmem [#allocation2], 2016
      %v8578 = vld [vmem:[%s8577] ss:$2 sm:$0xff]
      %s8579 = scalar_lea.vmem [#allocation2], 2032
      %v8580 = vld [vmem:[%s8579] ss:$2 sm:$0xff]
      %s8581 = scalar_lea.vmem [#allocation2], 1
      %v8582 = vld [vmem:[%s8581] ss:$2 sm:$0xff]
      %s8583 = scalar_lea.vmem [#allocation2], 17
      %v8584 = vld [vmem:[%s8583] ss:$2 sm:$0xff]
      %s8585 = scalar_lea.vmem [#allocation2], 33
      %v8586 = vld [vmem:[%s8585] ss:$2 sm:$0xff]
      %s8587 = scalar_lea.vmem [#allocation2], 49
      %v8588 = vld [vmem:[%s8587] ss:$2 sm:$0xff]
      %s8589 = scalar_lea.vmem [#allocation2], 65
      %v8590 = vld [vmem:[%s8589] ss:$2 sm:$0xff]
      %s8591 = scalar_lea.vmem [#allocation2], 81
      %v8592 = vld [vmem:[%s8591] ss:$2 sm:$0xff]
      %s8593 = scalar_lea.vmem [#allocation2], 97
      %v8594 = vld [vmem:[%s8593] ss:$2 sm:$0xff]
      %s8595 = scalar_lea.vmem [#allocation2], 113
      %v8596 = vld [vmem:[%s8595] ss:$2 sm:$0xff]
      %s8597 = scalar_lea.vmem [#allocation2], 129
      %v8598 = vld [vmem:[%s8597] ss:$2 sm:$0xff]
      %s8599 = scalar_lea.vmem [#allocation2], 145
      %v8600 = vld [vmem:[%s8599] ss:$2 sm:$0xff]
      %s8601 = scalar_lea.vmem [#allocation2], 161
      %v8602 = vld [vmem:[%s8601] ss:$2 sm:$0xff]
      %s8603 = scalar_lea.vmem [#allocation2], 177
      %v8604 = vld [vmem:[%s8603] ss:$2 sm:$0xff]
      %s8605 = scalar_lea.vmem [#allocation2], 193
      %v8606 = vld [vmem:[%s8605] ss:$2 sm:$0xff]
      %s8607 = scalar_lea.vmem [#allocation2], 209
      %v8608 = vld [vmem:[%s8607] ss:$2 sm:$0xff]
      %s8609 = scalar_lea.vmem [#allocation2], 225
      %v8610 = vld [vmem:[%s8609] ss:$2 sm:$0xff]
      %s8611 = scalar_lea.vmem [#allocation2], 241
      %v8612 = vld [vmem:[%s8611] ss:$2 sm:$0xff]
      %s8613 = scalar_lea.vmem [#allocation2], 257
      %v8614 = vld [vmem:[%s8613] ss:$2 sm:$0xff]
      %s8615 = scalar_lea.vmem [#allocation2], 273
      %v8616 = vld [vmem:[%s8615] ss:$2 sm:$0xff]
      %s8617 = scalar_lea.vmem [#allocation2], 289
      %v8618 = vld [vmem:[%s8617] ss:$2 sm:$0xff]
      %s8619 = scalar_lea.vmem [#allocation2], 305
      %v8620 = vld [vmem:[%s8619] ss:$2 sm:$0xff]
      %s8621 = scalar_lea.vmem [#allocation2], 321
      %v8622 = vld [vmem:[%s8621] ss:$2 sm:$0xff]
      %s8623 = scalar_lea.vmem [#allocation2], 337
      %v8624 = vld [vmem:[%s8623] ss:$2 sm:$0xff]
      %s8625 = scalar_lea.vmem [#allocation2], 353
      %v8626 = vld [vmem:[%s8625] ss:$2 sm:$0xff]
      %s8627 = scalar_lea.vmem [#allocation2], 369
      %v8628 = vld [vmem:[%s8627] ss:$2 sm:$0xff]
      %s8629 = scalar_lea.vmem [#allocation2], 385
      %v8630 = vld [vmem:[%s8629] ss:$2 sm:$0xff]
      %s8631 = scalar_lea.vmem [#allocation2], 401
      %v8632 = vld [vmem:[%s8631] ss:$2 sm:$0xff]
      %s8633 = scalar_lea.vmem [#allocation2], 417
      %v8634 = vld [vmem:[%s8633] ss:$2 sm:$0xff]
      %s8635 = scalar_lea.vmem [#allocation2], 433
      %v8636 = vld [vmem:[%s8635] ss:$2 sm:$0xff]
      %s8637 = scalar_lea.vmem [#allocation2], 449
      %v8638 = vld [vmem:[%s8637] ss:$2 sm:$0xff]
      %s8639 = scalar_lea.vmem [#allocation2], 465
      %v8640 = vld [vmem:[%s8639] ss:$2 sm:$0xff]
      %s8641 = scalar_lea.vmem [#allocation2], 481
      %v8642 = vld [vmem:[%s8641] ss:$2 sm:$0xff]
      %s8643 = scalar_lea.vmem [#allocation2], 497
      %v8644 = vld [vmem:[%s8643] ss:$2 sm:$0xff]
      %s8645 = scalar_lea.vmem [#allocation2], 513
      %v8646 = vld [vmem:[%s8645] ss:$2 sm:$0xff]
      %s8647 = scalar_lea.vmem [#allocation2], 529
      %v8648 = vld [vmem:[%s8647] ss:$2 sm:$0xff]
      %s8649 = scalar_lea.vmem [#allocation2], 545
      %v8650 = vld [vmem:[%s8649] ss:$2 sm:$0xff]
      %s8651 = scalar_lea.vmem [#allocation2], 561
      %v8652 = vld [vmem:[%s8651] ss:$2 sm:$0xff]
      %s8653 = scalar_lea.vmem [#allocation2], 577
      %v8654 = vld [vmem:[%s8653] ss:$2 sm:$0xff]
      %s8655 = scalar_lea.vmem [#allocation2], 593
      %v8656 = vld [vmem:[%s8655] ss:$2 sm:$0xff]
      %s8657 = scalar_lea.vmem [#allocation2], 609
      %v8658 = vld [vmem:[%s8657] ss:$2 sm:$0xff]
      %s8659 = scalar_lea.vmem [#allocation2], 625
      %v8660 = vld [vmem:[%s8659] ss:$2 sm:$0xff]
      %s8661 = scalar_lea.vmem [#allocation2], 641
      %v8662 = vld [vmem:[%s8661] ss:$2 sm:$0xff]
      %s8663 = scalar_lea.vmem [#allocation2], 657
      %v8664 = vld [vmem:[%s8663] ss:$2 sm:$0xff]
      %s8665 = scalar_lea.vmem [#allocation2], 673
      %v8666 = vld [vmem:[%s8665] ss:$2 sm:$0xff]
      %s8667 = scalar_lea.vmem [#allocation2], 689
      %v8668 = vld [vmem:[%s8667] ss:$2 sm:$0xff]
      %s8669 = scalar_lea.vmem [#allocation2], 705
      %v8670 = vld [vmem:[%s8669] ss:$2 sm:$0xff]
      %s8671 = scalar_lea.vmem [#allocation2], 721
      %v8672 = vld [vmem:[%s8671] ss:$2 sm:$0xff]
      %s8673 = scalar_lea.vmem [#allocation2], 737
      %v8674 = vld [vmem:[%s8673] ss:$2 sm:$0xff]
      %s8675 = scalar_lea.vmem [#allocation2], 753
      %v8676 = vld [vmem:[%s8675] ss:$2 sm:$0xff]
      %s8677 = scalar_lea.vmem [#allocation2], 769
      %v8678 = vld [vmem:[%s8677] ss:$2 sm:$0xff]
      %s8679 = scalar_lea.vmem [#allocation2], 785
      %v8680 = vld [vmem:[%s8679] ss:$2 sm:$0xff]
      %s8681 = scalar_lea.vmem [#allocation2], 801
      %v8682 = vld [vmem:[%s8681] ss:$2 sm:$0xff]
      %s8683 = scalar_lea.vmem [#allocation2], 817
      %v8684 = vld [vmem:[%s8683] ss:$2 sm:$0xff]
      %s8685 = scalar_lea.vmem [#allocation2], 833
      %v8686 = vld [vmem:[%s8685] ss:$2 sm:$0xff]
      %s8687 = scalar_lea.vmem [#allocation2], 849
      %v8688 = vld [vmem:[%s8687] ss:$2 sm:$0xff]
      %s8689 = scalar_lea.vmem [#allocation2], 865
      %v8690 = vld [vmem:[%s8689] ss:$2 sm:$0xff]
      %s8691 = scalar_lea.vmem [#allocation2], 881
      %v8692 = vld [vmem:[%s8691] ss:$2 sm:$0xff]
      %s8693 = scalar_lea.vmem [#allocation2], 897
      %v8694 = vld [vmem:[%s8693] ss:$2 sm:$0xff]
      %s8695 = scalar_lea.vmem [#allocation2], 913
      %v8696 = vld [vmem:[%s8695] ss:$2 sm:$0xff]
      %s8697 = scalar_lea.vmem [#allocation2], 929
      %v8698 = vld [vmem:[%s8697] ss:$2 sm:$0xff]
      %s8699 = scalar_lea.vmem [#allocation2], 945
      %v8700 = vld [vmem:[%s8699] ss:$2 sm:$0xff]
      %s8701 = scalar_lea.vmem [#allocation2], 961
      %v8702 = vld [vmem:[%s8701] ss:$2 sm:$0xff]
      %s8703 = scalar_lea.vmem [#allocation2], 977
      %v8704 = vld [vmem:[%s8703] ss:$2 sm:$0xff]
      %s8705 = scalar_lea.vmem [#allocation2], 993
      %v8706 = vld [vmem:[%s8705] ss:$2 sm:$0xff]
      %s8707 = scalar_lea.vmem [#allocation2], 1009
      %v8708 = vld [vmem:[%s8707] ss:$2 sm:$0xff]
      %s8709 = scalar_lea.vmem [#allocation2], 1025
      %v8710 = vld [vmem:[%s8709] ss:$2 sm:$0xff]
      %s8711 = scalar_lea.vmem [#allocation2], 1041
      %v8712 = vld [vmem:[%s8711] ss:$2 sm:$0xff]
      %s8713 = scalar_lea.vmem [#allocation2], 1057
      %v8714 = vld [vmem:[%s8713] ss:$2 sm:$0xff]
      %s8715 = scalar_lea.vmem [#allocation2], 1073
      %v8716 = vld [vmem:[%s8715] ss:$2 sm:$0xff]
      %s8717 = scalar_lea.vmem [#allocation2], 1089
      %v8718 = vld [vmem:[%s8717] ss:$2 sm:$0xff]
      %s8719 = scalar_lea.vmem [#allocation2], 1105
      %v8720 = vld [vmem:[%s8719] ss:$2 sm:$0xff]
      %s8721 = scalar_lea.vmem [#allocation2], 1121
      %v8722 = vld [vmem:[%s8721] ss:$2 sm:$0xff]
      %s8723 = scalar_lea.vmem [#allocation2], 1137
      %v8724 = vld [vmem:[%s8723] ss:$2 sm:$0xff]
      %s8725 = scalar_lea.vmem [#allocation2], 1153
      %v8726 = vld [vmem:[%s8725] ss:$2 sm:$0xff]
      %s8727 = scalar_lea.vmem [#allocation2], 1169
      %v8728 = vld [vmem:[%s8727] ss:$2 sm:$0xff]
      %s8729 = scalar_lea.vmem [#allocation2], 1185
      %v8730 = vld [vmem:[%s8729] ss:$2 sm:$0xff]
      %s8731 = scalar_lea.vmem [#allocation2], 1201
      %v8732 = vld [vmem:[%s8731] ss:$2 sm:$0xff]
      %s8733 = scalar_lea.vmem [#allocation2], 1217
      %v8734 = vld [vmem:[%s8733] ss:$2 sm:$0xff]
      %s8735 = scalar_lea.vmem [#allocation2], 1233
      %v8736 = vld [vmem:[%s8735] ss:$2 sm:$0xff]
      %s8737 = scalar_lea.vmem [#allocation2], 1249
      %v8738 = vld [vmem:[%s8737] ss:$2 sm:$0xff]
      %s8739 = scalar_lea.vmem [#allocation2], 1265
      %v8740 = vld [vmem:[%s8739] ss:$2 sm:$0xff]
      %s8741 = scalar_lea.vmem [#allocation2], 1281
      %v8742 = vld [vmem:[%s8741] ss:$2 sm:$0xff]
      %s8743 = scalar_lea.vmem [#allocation2], 1297
      %v8744 = vld [vmem:[%s8743] ss:$2 sm:$0xff]
      %s8745 = scalar_lea.vmem [#allocation2], 1313
      %v8746 = vld [vmem:[%s8745] ss:$2 sm:$0xff]
      %s8747 = scalar_lea.vmem [#allocation2], 1329
      %v8748 = vld [vmem:[%s8747] ss:$2 sm:$0xff]
      %s8749 = scalar_lea.vmem [#allocation2], 1345
      %v8750 = vld [vmem:[%s8749] ss:$2 sm:$0xff]
      %s8751 = scalar_lea.vmem [#allocation2], 1361
      %v8752 = vld [vmem:[%s8751] ss:$2 sm:$0xff]
      %s8753 = scalar_lea.vmem [#allocation2], 1377
      %v8754 = vld [vmem:[%s8753] ss:$2 sm:$0xff]
      %s8755 = scalar_lea.vmem [#allocation2], 1393
      %v8756 = vld [vmem:[%s8755] ss:$2 sm:$0xff]
      %s8757 = scalar_lea.vmem [#allocation2], 1409
      %v8758 = vld [vmem:[%s8757] ss:$2 sm:$0xff]
      %s8759 = scalar_lea.vmem [#allocation2], 1425
      %v8760 = vld [vmem:[%s8759] ss:$2 sm:$0xff]
      %s8761 = scalar_lea.vmem [#allocation2], 1441
      %v8762 = vld [vmem:[%s8761] ss:$2 sm:$0xff]
      %s8763 = scalar_lea.vmem [#allocation2], 1457
      %v8764 = vld [vmem:[%s8763] ss:$2 sm:$0xff]
      %s8765 = scalar_lea.vmem [#allocation2], 1473
      %v8766 = vld [vmem:[%s8765] ss:$2 sm:$0xff]
      %s8767 = scalar_lea.vmem [#allocation2], 1489
      %v8768 = vld [vmem:[%s8767] ss:$2 sm:$0xff]
      %s8769 = scalar_lea.vmem [#allocation2], 1505
      %v8770 = vld [vmem:[%s8769] ss:$2 sm:$0xff]
      %s8771 = scalar_lea.vmem [#allocation2], 1521
      %v8772 = vld [vmem:[%s8771] ss:$2 sm:$0xff]
      %s8773 = scalar_lea.vmem [#allocation2], 1537
      %v8774 = vld [vmem:[%s8773] ss:$2 sm:$0xff]
      %s8775 = scalar_lea.vmem [#allocation2], 1553
      %v8776 = vld [vmem:[%s8775] ss:$2 sm:$0xff]
      %s8777 = scalar_lea.vmem [#allocation2], 1569
      %v8778 = vld [vmem:[%s8777] ss:$2 sm:$0xff]
      %s8779 = scalar_lea.vmem [#allocation2], 1585
      %v8780 = vld [vmem:[%s8779] ss:$2 sm:$0xff]
      %s8781 = scalar_lea.vmem [#allocation2], 1601
      %v8782 = vld [vmem:[%s8781] ss:$2 sm:$0xff]
      %s8783 = scalar_lea.vmem [#allocation2], 1617
      %v8784 = vld [vmem:[%s8783] ss:$2 sm:$0xff]
      %s8785 = scalar_lea.vmem [#allocation2], 1633
      %v8786 = vld [vmem:[%s8785] ss:$2 sm:$0xff]
      %s8787 = scalar_lea.vmem [#allocation2], 1649
      %v8788 = vld [vmem:[%s8787] ss:$2 sm:$0xff]
      %s8789 = scalar_lea.vmem [#allocation2], 1665
      %v8790 = vld [vmem:[%s8789] ss:$2 sm:$0xff]
      %s8791 = scalar_lea.vmem [#allocation2], 1681
      %v8792 = vld [vmem:[%s8791] ss:$2 sm:$0xff]
      %s8793 = scalar_lea.vmem [#allocation2], 1697
      %v8794 = vld [vmem:[%s8793] ss:$2 sm:$0xff]
      %s8795 = scalar_lea.vmem [#allocation2], 1713
      %v8796 = vld [vmem:[%s8795] ss:$2 sm:$0xff]
      %s8797 = scalar_lea.vmem [#allocation2], 1729
      %v8798 = vld [vmem:[%s8797] ss:$2 sm:$0xff]
      %s8799 = scalar_lea.vmem [#allocation2], 1745
      %v8800 = vld [vmem:[%s8799] ss:$2 sm:$0xff]
      %s8801 = scalar_lea.vmem [#allocation2], 1761
      %v8802 = vld [vmem:[%s8801] ss:$2 sm:$0xff]
      %s8803 = scalar_lea.vmem [#allocation2], 1777
      %v8804 = vld [vmem:[%s8803] ss:$2 sm:$0xff]
      %s8805 = scalar_lea.vmem [#allocation2], 1793
      %v8806 = vld [vmem:[%s8805] ss:$2 sm:$0xff]
      %s8807 = scalar_lea.vmem [#allocation2], 1809
      %v8808 = vld [vmem:[%s8807] ss:$2 sm:$0xff]
      %s8809 = scalar_lea.vmem [#allocation2], 1825
      %v8810 = vld [vmem:[%s8809] ss:$2 sm:$0xff]
      %s8811 = scalar_lea.vmem [#allocation2], 1841
      %v8812 = vld [vmem:[%s8811] ss:$2 sm:$0xff]
      %s8813 = scalar_lea.vmem [#allocation2], 1857
      %v8814 = vld [vmem:[%s8813] ss:$2 sm:$0xff]
      %s8815 = scalar_lea.vmem [#allocation2], 1873
      %v8816 = vld [vmem:[%s8815] ss:$2 sm:$0xff]
      %s8817 = scalar_lea.vmem [#allocation2], 1889
      %v8818 = vld [vmem:[%s8817] ss:$2 sm:$0xff]
      %s8819 = scalar_lea.vmem [#allocation2], 1905
      %v8820 = vld [vmem:[%s8819] ss:$2 sm:$0xff]
      %s8821 = scalar_lea.vmem [#allocation2], 1921
      %v8822 = vld [vmem:[%s8821] ss:$2 sm:$0xff]
      %s8823 = scalar_lea.vmem [#allocation2], 1937
      %v8824 = vld [vmem:[%s8823] ss:$2 sm:$0xff]
      %s8825 = scalar_lea.vmem [#allocation2], 1953
      %v8826 = vld [vmem:[%s8825] ss:$2 sm:$0xff]
      %s8827 = scalar_lea.vmem [#allocation2], 1969
      %v8828 = vld [vmem:[%s8827] ss:$2 sm:$0xff]
      %s8829 = scalar_lea.vmem [#allocation2], 1985
      %v8830 = vld [vmem:[%s8829] ss:$2 sm:$0xff]
      %s8831 = scalar_lea.vmem [#allocation2], 2001
      %v8832 = vld [vmem:[%s8831] ss:$2 sm:$0xff]
      %s8833 = scalar_lea.vmem [#allocation2], 2017
      %v8834 = vld [vmem:[%s8833] ss:$2 sm:$0xff]
      %s8835 = scalar_lea.vmem [#allocation2], 2033
      %v8836 = vld [vmem:[%s8835] ss:$2 sm:$0xff]
      %v8837 = vmax.f32 %v8326, %v8582
      %v8838 = vmax.f32 %v8328, %v8584
      %v8839 = vmax.f32 %v8330, %v8586
      %v8840 = vmax.f32 %v8332, %v8588
      %v8841 = vmax.f32 %v8334, %v8590
      %v8842 = vmax.f32 %v8336, %v8592
      %v8843 = vmax.f32 %v8338, %v8594
      %v8844 = vmax.f32 %v8340, %v8596
      %v8845 = vmax.f32 %v8342, %v8598
      %v8846 = vmax.f32 %v8344, %v8600
      %v8847 = vmax.f32 %v8346, %v8602
      %v8848 = vmax.f32 %v8348, %v8604
      %v8849 = vmax.f32 %v8350, %v8606
      %v8850 = vmax.f32 %v8352, %v8608
      %v8851 = vmax.f32 %v8354, %v8610
      %v8852 = vmax.f32 %v8356, %v8612
      %v8853 = vmax.f32 %v8358, %v8614
      %v8854 = vmax.f32 %v8360, %v8616
      %v8855 = vmax.f32 %v8362, %v8618
      %v8856 = vmax.f32 %v8364, %v8620
      %v8857 = vmax.f32 %v8366, %v8622
      %v8858 = vmax.f32 %v8368, %v8624
      %v8859 = vmax.f32 %v8370, %v8626
      %v8860 = vmax.f32 %v8372, %v8628
      %v8861 = vmax.f32 %v8374, %v8630
      %v8862 = vmax.f32 %v8376, %v8632
      %v8863 = vmax.f32 %v8378, %v8634
      %v8864 = vmax.f32 %v8380, %v8636
      %v8865 = vmax.f32 %v8382, %v8638
      %v8866 = vmax.f32 %v8384, %v8640
      %v8867 = vmax.f32 %v8386, %v8642
      %v8868 = vmax.f32 %v8388, %v8644
      %v8869 = vmax.f32 %v8390, %v8646
      %v8870 = vmax.f32 %v8392, %v8648
      %v8871 = vmax.f32 %v8394, %v8650
      %v8872 = vmax.f32 %v8396, %v8652
      %v8873 = vmax.f32 %v8398, %v8654
      %v8874 = vmax.f32 %v8400, %v8656
      %v8875 = vmax.f32 %v8402, %v8658
      %v8876 = vmax.f32 %v8404, %v8660
      %v8877 = vmax.f32 %v8406, %v8662
      %v8878 = vmax.f32 %v8408, %v8664
      %v8879 = vmax.f32 %v8410, %v8666
      %v8880 = vmax.f32 %v8412, %v8668
      %v8881 = vmax.f32 %v8414, %v8670
      %v8882 = vmax.f32 %v8416, %v8672
      %v8883 = vmax.f32 %v8418, %v8674
      %v8884 = vmax.f32 %v8420, %v8676
      %v8885 = vmax.f32 %v8422, %v8678
      %v8886 = vmax.f32 %v8424, %v8680
      %v8887 = vmax.f32 %v8426, %v8682
      %v8888 = vmax.f32 %v8428, %v8684
      %v8889 = vmax.f32 %v8430, %v8686
      %v8890 = vmax.f32 %v8432, %v8688
      %v8891 = vmax.f32 %v8434, %v8690
      %v8892 = vmax.f32 %v8436, %v8692
      %v8893 = vmax.f32 %v8438, %v8694
      %v8894 = vmax.f32 %v8440, %v8696
      %v8895 = vmax.f32 %v8442, %v8698
      %v8896 = vmax.f32 %v8444, %v8700
      %v8897 = vmax.f32 %v8446, %v8702
      %v8898 = vmax.f32 %v8448, %v8704
      %v8899 = vmax.f32 %v8450, %v8706
      %v8900 = vmax.f32 %v8452, %v8708
      %v8901 = vmax.f32 %v8454, %v8710
      %v8902 = vmax.f32 %v8456, %v8712
      %v8903 = vmax.f32 %v8458, %v8714
      %v8904 = vmax.f32 %v8460, %v8716
      %v8905 = vmax.f32 %v8462, %v8718
      %v8906 = vmax.f32 %v8464, %v8720
      %v8907 = vmax.f32 %v8466, %v8722
      %v8908 = vmax.f32 %v8468, %v8724
      %v8909 = vmax.f32 %v8470, %v8726
      %v8910 = vmax.f32 %v8472, %v8728
      %v8911 = vmax.f32 %v8474, %v8730
      %v8912 = vmax.f32 %v8476, %v8732
      %v8913 = vmax.f32 %v8478, %v8734
      %v8914 = vmax.f32 %v8480, %v8736
      %v8915 = vmax.f32 %v8482, %v8738
      %v8916 = vmax.f32 %v8484, %v8740
      %v8917 = vmax.f32 %v8486, %v8742
      %v8918 = vmax.f32 %v8488, %v8744
      %v8919 = vmax.f32 %v8490, %v8746
      %v8920 = vmax.f32 %v8492, %v8748
      %v8921 = vmax.f32 %v8494, %v8750
      %v8922 = vmax.f32 %v8496, %v8752
      %v8923 = vmax.f32 %v8498, %v8754
      %v8924 = vmax.f32 %v8500, %v8756
      %v8925 = vmax.f32 %v8502, %v8758
      %v8926 = vmax.f32 %v8504, %v8760
      %v8927 = vmax.f32 %v8506, %v8762
      %v8928 = vmax.f32 %v8508, %v8764
      %v8929 = vmax.f32 %v8510, %v8766
      %v8930 = vmax.f32 %v8512, %v8768
      %v8931 = vmax.f32 %v8514, %v8770
      %v8932 = vmax.f32 %v8516, %v8772
      %v8933 = vmax.f32 %v8518, %v8774
      %v8934 = vmax.f32 %v8520, %v8776
      %v8935 = vmax.f32 %v8522, %v8778
      %v8936 = vmax.f32 %v8524, %v8780
      %v8937 = vmax.f32 %v8526, %v8782
      %v8938 = vmax.f32 %v8528, %v8784
      %v8939 = vmax.f32 %v8530, %v8786
      %v8940 = vmax.f32 %v8532, %v8788
      %v8941 = vmax.f32 %v8534, %v8790
      %v8942 = vmax.f32 %v8536, %v8792
      %v8943 = vmax.f32 %v8538, %v8794
      %v8944 = vmax.f32 %v8540, %v8796
      %v8945 = vmax.f32 %v8542, %v8798
      %v8946 = vmax.f32 %v8544, %v8800
      %v8947 = vmax.f32 %v8546, %v8802
      %v8948 = vmax.f32 %v8548, %v8804
      %v8949 = vmax.f32 %v8550, %v8806
      %v8950 = vmax.f32 %v8552, %v8808
      %v8951 = vmax.f32 %v8554, %v8810
      %v8952 = vmax.f32 %v8556, %v8812
      %v8953 = vmax.f32 %v8558, %v8814
      %v8954 = vmax.f32 %v8560, %v8816
      %v8955 = vmax.f32 %v8562, %v8818
      %v8956 = vmax.f32 %v8564, %v8820
      %v8957 = vmax.f32 %v8566, %v8822
      %v8958 = vmax.f32 %v8568, %v8824
      %v8959 = vmax.f32 %v8570, %v8826
      %v8960 = vmax.f32 %v8572, %v8828
      %v8961 = vmax.f32 %v8574, %v8830
      %v8962 = vmax.f32 %v8576, %v8832
      %v8963 = vmax.f32 %v8578, %v8834
      %v8964 = vmax.f32 %v8580, %v8836
      %8965 = vst.msk [vmem:[%s170] sm:$0xff] %vm8069, 0.0
      %8966 = vst.msk [vmem:[%s170 + $0x408] sm:$0xff] %vm8069, 0.0
      %8967 = vst.msk [vmem:[%s170 + $0x8] sm:$0xff] %vm8069, %v8837
      %8968 = vst.msk [vmem:[%s170 + $0x10] sm:$0xff] %vm8069, %v8838
      %8969 = vst.msk [vmem:[%s170 + $0x18] sm:$0xff] %vm8069, %v8839
      %8970 = vst.msk [vmem:[%s170 + $0x20] sm:$0xff] %vm8069, %v8840
      %8971 = vst.msk [vmem:[%s170 + $0x28] sm:$0xff] %vm8069, %v8841
      %8972 = vst.msk [vmem:[%s170 + $0x30] sm:$0xff] %vm8069, %v8842
      %8973 = vst.msk [vmem:[%s170 + $0x38] sm:$0xff] %vm8069, %v8843
      %8974 = vst.msk [vmem:[%s170 + $0x40] sm:$0xff] %vm8069, %v8844
      %8975 = vst.msk [vmem:[%s170 + $0x48] sm:$0xff] %vm8069, %v8845
      %8976 = vst.msk [vmem:[%s170 + $0x50] sm:$0xff] %vm8069, %v8846
      %8977 = vst.msk [vmem:[%s170 + $0x58] sm:$0xff] %vm8069, %v8847
      %8978 = vst.msk [vmem:[%s170 + $0x60] sm:$0xff] %vm8069, %v8848
      %8979 = vst.msk [vmem:[%s170 + $0x68] sm:$0xff] %vm8069, %v8849
      %8980 = vst.msk [vmem:[%s170 + $0x70] sm:$0xff] %vm8069, %v8850
      %8981 = vst.msk [vmem:[%s170 + $0x78] sm:$0xff] %vm8069, %v8851
      %8982 = vst.msk [vmem:[%s170 + $0x80] sm:$0xff] %vm8069, %v8852
      %8983 = vst.msk [vmem:[%s170 + $0x88] sm:$0xff] %vm8069, %v8853
      %8984 = vst.msk [vmem:[%s170 + $0x90] sm:$0xff] %vm8069, %v8854
      %8985 = vst.msk [vmem:[%s170 + $0x98] sm:$0xff] %vm8069, %v8855
      %8986 = vst.msk [vmem:[%s170 + $0xa0] sm:$0xff] %vm8069, %v8856
      %8987 = vst.msk [vmem:[%s170 + $0xa8] sm:$0xff] %vm8069, %v8857
      %8988 = vst.msk [vmem:[%s170 + $0xb0] sm:$0xff] %vm8069, %v8858
      %8989 = vst.msk [vmem:[%s170 + $0xb8] sm:$0xff] %vm8069, %v8859
      %8990 = vst.msk [vmem:[%s170 + $0xc0] sm:$0xff] %vm8069, %v8860
      %8991 = vst.msk [vmem:[%s170 + $0xc8] sm:$0xff] %vm8069, %v8861
      %8992 = vst.msk [vmem:[%s170 + $0xd0] sm:$0xff] %vm8069, %v8862
      %8993 = vst.msk [vmem:[%s170 + $0xd8] sm:$0xff] %vm8069, %v8863
      %8994 = vst.msk [vmem:[%s170 + $0xe0] sm:$0xff] %vm8069, %v8864
      %8995 = vst.msk [vmem:[%s170 + $0xe8] sm:$0xff] %vm8069, %v8865
      %8996 = vst.msk [vmem:[%s170 + $0xf0] sm:$0xff] %vm8069, %v8866
      %8997 = vst.msk [vmem:[%s170 + $0xf8] sm:$0xff] %vm8069, %v8867
      %8998 = vst.msk [vmem:[%s170 + $0x100] sm:$0xff] %vm8069, %v8868
      %8999 = vst.msk [vmem:[%s170 + $0x108] sm:$0xff] %vm8069, %v8869
      %9000 = vst.msk [vmem:[%s170 + $0x110] sm:$0xff] %vm8069, %v8870
      %9001 = vst.msk [vmem:[%s170 + $0x118] sm:$0xff] %vm8069, %v8871
      %9002 = vst.msk [vmem:[%s170 + $0x120] sm:$0xff] %vm8069, %v8872
      %9003 = vst.msk [vmem:[%s170 + $0x128] sm:$0xff] %vm8069, %v8873
      %9004 = vst.msk [vmem:[%s170 + $0x130] sm:$0xff] %vm8069, %v8874
      %9005 = vst.msk [vmem:[%s170 + $0x138] sm:$0xff] %vm8069, %v8875
      %9006 = vst.msk [vmem:[%s170 + $0x140] sm:$0xff] %vm8069, %v8876
      %9007 = vst.msk [vmem:[%s170 + $0x148] sm:$0xff] %vm8069, %v8877
      %9008 = vst.msk [vmem:[%s170 + $0x150] sm:$0xff] %vm8069, %v8878
      %9009 = vst.msk [vmem:[%s170 + $0x158] sm:$0xff] %vm8069, %v8879
      %9010 = vst.msk [vmem:[%s170 + $0x160] sm:$0xff] %vm8069, %v8880
      %9011 = vst.msk [vmem:[%s170 + $0x168] sm:$0xff] %vm8069, %v8881
      %9012 = vst.msk [vmem:[%s170 + $0x170] sm:$0xff] %vm8069, %v8882
      %9013 = vst.msk [vmem:[%s170 + $0x178] sm:$0xff] %vm8069, %v8883
      %9014 = vst.msk [vmem:[%s170 + $0x180] sm:$0xff] %vm8069, %v8884
      %9015 = vst.msk [vmem:[%s170 + $0x188] sm:$0xff] %vm8069, %v8885
      %9016 = vst.msk [vmem:[%s170 + $0x190] sm:$0xff] %vm8069, %v8886
      %9017 = vst.msk [vmem:[%s170 + $0x198] sm:$0xff] %vm8069, %v8887
      %9018 = vst.msk [vmem:[%s170 + $0x1a0] sm:$0xff] %vm8069, %v8888
      %9019 = vst.msk [vmem:[%s170 + $0x1a8] sm:$0xff] %vm8069, %v8889
      %9020 = vst.msk [vmem:[%s170 + $0x1b0] sm:$0xff] %vm8069, %v8890
      %9021 = vst.msk [vmem:[%s170 + $0x1b8] sm:$0xff] %vm8069, %v8891
      %9022 = vst.msk [vmem:[%s170 + $0x1c0] sm:$0xff] %vm8069, %v8892
      %9023 = vst.msk [vmem:[%s170 + $0x1c8] sm:$0xff] %vm8069, %v8893
      %9024 = vst.msk [vmem:[%s170 + $0x1d0] sm:$0xff] %vm8069, %v8894
      %9025 = vst.msk [vmem:[%s170 + $0x1d8] sm:$0xff] %vm8069, %v8895
      %9026 = vst.msk [vmem:[%s170 + $0x1e0] sm:$0xff] %vm8069, %v8896
      %9027 = vst.msk [vmem:[%s170 + $0x1e8] sm:$0xff] %vm8069, %v8897
      %9028 = vst.msk [vmem:[%s170 + $0x1f0] sm:$0xff] %vm8069, %v8898
      %9029 = vst.msk [vmem:[%s170 + $0x1f8] sm:$0xff] %vm8069, %v8899
      %9030 = vst.msk [vmem:[%s170 + $0x200] sm:$0xff] %vm8069, %v8900
      %9031 = vst.msk [vmem:[%s170 + $0x208] sm:$0xff] %vm8069, %v8901
      %9032 = vst.msk [vmem:[%s170 + $0x210] sm:$0xff] %vm8069, %v8902
      %9033 = vst.msk [vmem:[%s170 + $0x218] sm:$0xff] %vm8069, %v8903
      %9034 = vst.msk [vmem:[%s170 + $0x220] sm:$0xff] %vm8069, %v8904
      %9035 = vst.msk [vmem:[%s170 + $0x228] sm:$0xff] %vm8069, %v8905
      %9036 = vst.msk [vmem:[%s170 + $0x230] sm:$0xff] %vm8069, %v8906
      %9037 = vst.msk [vmem:[%s170 + $0x238] sm:$0xff] %vm8069, %v8907
      %9038 = vst.msk [vmem:[%s170 + $0x240] sm:$0xff] %vm8069, %v8908
      %9039 = vst.msk [vmem:[%s170 + $0x248] sm:$0xff] %vm8069, %v8909
      %9040 = vst.msk [vmem:[%s170 + $0x250] sm:$0xff] %vm8069, %v8910
      %9041 = vst.msk [vmem:[%s170 + $0x258] sm:$0xff] %vm8069, %v8911
      %9042 = vst.msk [vmem:[%s170 + $0x260] sm:$0xff] %vm8069, %v8912
      %9043 = vst.msk [vmem:[%s170 + $0x268] sm:$0xff] %vm8069, %v8913
      %9044 = vst.msk [vmem:[%s170 + $0x270] sm:$0xff] %vm8069, %v8914
      %9045 = vst.msk [vmem:[%s170 + $0x278] sm:$0xff] %vm8069, %v8915
      %9046 = vst.msk [vmem:[%s170 + $0x280] sm:$0xff] %vm8069, %v8916
      %9047 = vst.msk [vmem:[%s170 + $0x288] sm:$0xff] %vm8069, %v8917
      %9048 = vst.msk [vmem:[%s170 + $0x290] sm:$0xff] %vm8069, %v8918
      %9049 = vst.msk [vmem:[%s170 + $0x298] sm:$0xff] %vm8069, %v8919
      %9050 = vst.msk [vmem:[%s170 + $0x2a0] sm:$0xff] %vm8069, %v8920
      %9051 = vst.msk [vmem:[%s170 + $0x2a8] sm:$0xff] %vm8069, %v8921
      %9052 = vst.msk [vmem:[%s170 + $0x2b0] sm:$0xff] %vm8069, %v8922
      %9053 = vst.msk [vmem:[%s170 + $0x2b8] sm:$0xff] %vm8069, %v8923
      %9054 = vst.msk [vmem:[%s170 + $0x2c0] sm:$0xff] %vm8069, %v8924
      %9055 = vst.msk [vmem:[%s170 + $0x2c8] sm:$0xff] %vm8069, %v8925
      %9056 = vst.msk [vmem:[%s170 + $0x2d0] sm:$0xff] %vm8069, %v8926
      %9057 = vst.msk [vmem:[%s170 + $0x2d8] sm:$0xff] %vm8069, %v8927
      %9058 = vst.msk [vmem:[%s170 + $0x2e0] sm:$0xff] %vm8069, %v8928
      %9059 = vst.msk [vmem:[%s170 + $0x2e8] sm:$0xff] %vm8069, %v8929
      %9060 = vst.msk [vmem:[%s170 + $0x2f0] sm:$0xff] %vm8069, %v8930
      %9061 = vst.msk [vmem:[%s170 + $0x2f8] sm:$0xff] %vm8069, %v8931
      %9062 = vst.msk [vmem:[%s170 + $0x300] sm:$0xff] %vm8069, %v8932
      %9063 = vst.msk [vmem:[%s170 + $0x308] sm:$0xff] %vm8069, %v8933
      %9064 = vst.msk [vmem:[%s170 + $0x310] sm:$0xff] %vm8069, %v8934
      %9065 = vst.msk [vmem:[%s170 + $0x318] sm:$0xff] %vm8069, %v8935
      %9066 = vst.msk [vmem:[%s170 + $0x320] sm:$0xff] %vm8069, %v8936
      %9067 = vst.msk [vmem:[%s170 + $0x328] sm:$0xff] %vm8069, %v8937
      %9068 = vst.msk [vmem:[%s170 + $0x330] sm:$0xff] %vm8069, %v8938
      %9069 = vst.msk [vmem:[%s170 + $0x338] sm:$0xff] %vm8069, %v8939
      %9070 = vst.msk [vmem:[%s170 + $0x340] sm:$0xff] %vm8069, %v8940
      %9071 = vst.msk [vmem:[%s170 + $0x348] sm:$0xff] %vm8069, %v8941
      %9072 = vst.msk [vmem:[%s170 + $0x350] sm:$0xff] %vm8069, %v8942
      %9073 = vst.msk [vmem:[%s170 + $0x358] sm:$0xff] %vm8069, %v8943
      %9074 = vst.msk [vmem:[%s170 + $0x360] sm:$0xff] %vm8069, %v8944
      %9075 = vst.msk [vmem:[%s170 + $0x368] sm:$0xff] %vm8069, %v8945
      %9076 = vst.msk [vmem:[%s170 + $0x370] sm:$0xff] %vm8069, %v8946
      %9077 = vst.msk [vmem:[%s170 + $0x378] sm:$0xff] %vm8069, %v8947
      %9078 = vst.msk [vmem:[%s170 + $0x380] sm:$0xff] %vm8069, %v8948
      %9079 = vst.msk [vmem:[%s170 + $0x388] sm:$0xff] %vm8069, %v8949
      %9080 = vst.msk [vmem:[%s170 + $0x390] sm:$0xff] %vm8069, %v8950
      %9081 = vst.msk [vmem:[%s170 + $0x398] sm:$0xff] %vm8069, %v8951
      %9082 = vst.msk [vmem:[%s170 + $0x3a0] sm:$0xff] %vm8069, %v8952
      %9083 = vst.msk [vmem:[%s170 + $0x3a8] sm:$0xff] %vm8069, %v8953
      %9084 = vst.msk [vmem:[%s170 + $0x3b0] sm:$0xff] %vm8069, %v8954
      %9085 = vst.msk [vmem:[%s170 + $0x3b8] sm:$0xff] %vm8069, %v8955
      %9086 = vst.msk [vmem:[%s170 + $0x3c0] sm:$0xff] %vm8069, %v8956
      %9087 = vst.msk [vmem:[%s170 + $0x3c8] sm:$0xff] %vm8069, %v8957
      %9088 = vst.msk [vmem:[%s170 + $0x3d0] sm:$0xff] %vm8069, %v8958
      %9089 = vst.msk [vmem:[%s170 + $0x3d8] sm:$0xff] %vm8069, %v8959
      %9090 = vst.msk [vmem:[%s170 + $0x3e0] sm:$0xff] %vm8069, %v8960
      %9091 = vst.msk [vmem:[%s170 + $0x3e8] sm:$0xff] %vm8069, %v8961
      %9092 = vst.msk [vmem:[%s170 + $0x3f0] sm:$0xff] %vm8069, %v8962
      %9093 = vst.msk [vmem:[%s170 + $0x3f8] sm:$0xff] %vm8069, %v8963
      %9094 = vst.msk [vmem:[%s170 + $0x400] sm:$0xff] %vm8069, %v8964
      %p9095 = scmp.lt.s32.totalorder %s14, 1
      %s9096 = scalar_select %p9095, %s14, 1
      %s9097 = smul.addr %s9096, 130
      %s9098 = smul.addr %s9097, 8
      %s9099 = scalar_lea.vmem %s3, %s9098
      // Predicated region
      $region33: #{tpu_custom_call.1} parent=31 // pred_check
        %p9100 = pneg %p100
      $region34: #{tpu_custom_call.1} parent=31 // pred_check_branch
        %9102 = sbr.rel (%p9100) target = $region36
      $region35: #{tpu_custom_call.1} parent=31 // pred_region
        _
      $region36: #{tpu_custom_call.1} parent=31 // pred_fallthru
        _
    $region32: #{tpu_custom_call.1} parent=5 // pred_fallthru
      _
    %p9103 = scmp.le.s32.totalorder 2, %s9
    // Predicated region
    $region37: #{tpu_custom_call.1} parent=5 // pred_check
      %p9104 = pneg %p9103
    $region38: #{tpu_custom_call.1} parent=5 // pred_check_branch
      %9106 = sbr.rel (%p9104) target = $region40
    $region39: #{tpu_custom_call.1} parent=5 // pred_region
      %s9107 = ssub.s32 %s9, 2
      // Predicated region
      $region41: #{tpu_custom_call.1} parent=39 // pred_check
        %p9108 = pneg %p106
      $region42: #{tpu_custom_call.1} parent=39 // pred_check_branch
        %9110 = sbr.rel (%p9108) target = $region44
      $region43: #{tpu_custom_call.1} parent=39 // pred_region
        %p9111 = scmp.lt.s32.totalorder %s15, 1
        %s9112 = scalar_select %p9111, %s15, 1
        %s9113 = smul.addr %s9112, 130
        %s9114 = smul.addr %s9113, 8
        %s9115 = scalar_lea.vmem %s3, %s9114
      $region44: #{tpu_custom_call.1} parent=39 // pred_fallthru
        _
    $region40: #{tpu_custom_call.1} parent=5 // pred_fallthru
      _
  $region6: #{tpu_custom_call.1} parent=0 // loop_footer
    %s13 = sadd.s32 1, %s9
  $region7: #{tpu_custom_call.1} parent=0 // loop_footer_branch
    %8 = sbr.rel target = $region3
  $region8: #{tpu_custom_call.1} parent=0 // loop_exit
    _

</llo_original>
